<compile_context>
chip_gen: v5e
topology: v5e:2x2
jax: 0.10.0
libtpu: 0.0.40
codegen_flags: <defaults>
</compile_context>

<pallas_src>
import jax
import jax.numpy as jnp
import numpy as np
from jax import lax
from jax.experimental import pallas as pl
from jax.experimental.pallas import tpu as pltpu


def _round_up(x, m):
    return (x + m - 1) // m * m


# ----------------------------- Pallas kernels ------------------------------

def conv_relu_pool_kernel(p_ref, w_ref, b_ref, o_ref):
    """Lane-dense conv + ReLU + 2x2 max-pool.

    p_ref: (4, K, TN) bf16   im2col patches, one slab per 2x2 pool-window member
    w_ref: (C_out, K) bf16   conv weight, (c_out, k) orientation
    b_ref: (C_out, 1) f32    bias (broadcast along lanes)
    o_ref: (C_out, TN) bf16  pooled activations; lanes enumerate rows (b, i, j)
    """
    w = w_ref[...]
    acc = jnp.dot(w, p_ref[0], preferred_element_type=jnp.float32)
    for d in range(1, 4):                      # static unroll over pool members
        acc = jnp.maximum(acc, jnp.dot(w, p_ref[d],
                                       preferred_element_type=jnp.float32))
    # relu(max_d(x_d) + b) == max_d relu(x_d + b): single f32 epilogue.
    o_ref[...] = jnp.maximum(acc + b_ref[...], 0.0).astype(o_ref.dtype)


def conv2_fc_kernel(p_ref, w2_ref, b2_ref, w3_ref, b3_ref, w4_ref, b4_ref,
                    w5_ref, b5_ref, o_ref):
    """Fused conv2(5x5) + ReLU + maxpool(2,2) + flatten + 3x Linear.

    p_ref : (4, TB, K2P) bf16  rows = batch, cols = (spatial s, patch k), zero-padded
    w2_ref: (K2P, F)  bf16     block-diagonal conv2 weight (kron(I_25, w2)), F = 512
    b2_ref: (1, F)    f32      conv2 bias tiled over the 25 spatial positions
    w3/4/5: bf16 FC weights, inputs/outputs zero-padded to lane-aligned sizes
    b3/4/5: (1, 128)  f32
    o_ref : (TB, 128) f32      padded logits (first n_class columns are real)
    """
    w2 = w2_ref[...]
    acc = jnp.dot(p_ref[0], w2, preferred_element_type=jnp.float32)
    for d in range(1, 4):
        acc = jnp.maximum(acc, jnp.dot(p_ref[d], w2,
                                       preferred_element_type=jnp.float32))
    flat = jnp.maximum(acc + b2_ref[...], 0.0)          # (TB, F) f32, (s, c) order
    h = jnp.dot(flat.astype(jnp.bfloat16), w3_ref[...],
                preferred_element_type=jnp.float32) + b3_ref[...]
    h = jnp.dot(h.astype(jnp.bfloat16), w4_ref[...],
                preferred_element_type=jnp.float32) + b4_ref[...]
    o_ref[...] = jnp.dot(h.astype(jnp.bfloat16), w5_ref[...],
                         preferred_element_type=jnp.float32) + b5_ref[...]


# ------------------------------ pallas_call wrappers ------------------------

def conv_relu_pool_call(p1, w1t, b1c, tn):
    _, K, Np = p1.shape
    c_out = w1t.shape[0]
    return pl.pallas_call(
        conv_relu_pool_kernel,
        out_shape=jax.ShapeDtypeStruct((c_out, Np), jnp.bfloat16),
        grid_spec=pltpu.PrefetchScalarGridSpec(
            num_scalar_prefetch=0,
            grid=(Np // tn,),
            in_specs=[
                pl.BlockSpec((4, K, tn), lambda n: (0, 0, n)),
                pl.BlockSpec((c_out, K), lambda n: (0, 0)),
                pl.BlockSpec((c_out, 1), lambda n: (0, 0)),
            ],
            out_specs=pl.BlockSpec((c_out, tn), lambda n: (0, n)),
        ),
        compiler_params=pltpu.CompilerParams(dimension_semantics=("parallel",)),
    )(p1, w1t, b1c)


def conv2_fc_call(p2, w2blk, b2t, w3p, b3p, w4p, b4p, w5p, b5p, tb):
    _, Bp, K2P = p2.shape
    F = w2blk.shape[1]
    return pl.pallas_call(
        conv2_fc_kernel,
        out_shape=jax.ShapeDtypeStruct((Bp, 128), jnp.float32),
        grid_spec=pltpu.PrefetchScalarGridSpec(
            num_scalar_prefetch=0,
            grid=(Bp // tb,),
            in_specs=[
                pl.BlockSpec((4, tb, K2P), lambda i: (0, i, 0)),
                pl.BlockSpec((K2P, F), lambda i: (0, 0)),
                pl.BlockSpec((1, F), lambda i: (0, 0)),
                pl.BlockSpec((F, 128), lambda i: (0, 0)),
                pl.BlockSpec((1, 128), lambda i: (0, 0)),
                pl.BlockSpec((128, 128), lambda i: (0, 0)),
                pl.BlockSpec((1, 128), lambda i: (0, 0)),
                pl.BlockSpec((128, 128), lambda i: (0, 0)),
                pl.BlockSpec((1, 128), lambda i: (0, 0)),
            ],
            out_specs=pl.BlockSpec((tb, 128), lambda i: (i, 0)),
        ),
        compiler_params=pltpu.CompilerParams(dimension_semantics=("parallel",)),
    )(p2, w2blk, b2t, w3p, b3p, w4p, b4p, w5p, b5p)


# ------------------------- offline weight re-layout -------------------------

def prepare_params(params, in_dim, n_class):
    (w1, b1, w2, b2, w3, b3, w4, b4, w5, b5) = params
    K1 = 9 * in_dim
    # conv1 -> (C_out, K) with k order (kh, kw, ci) matching the im2col columns.
    w1t = jnp.transpose(w1, (0, 2, 3, 1)).reshape(6, K1).astype(jnp.bfloat16)
    b1c = b1.reshape(6, 1).astype(jnp.float32)

    # conv2 -> (150, 16) with k order (kh, kw, ci); block-diag over the 25 post-pool
    # spatial positions so kernel 2's matmul emits the flatten in (s, c) order.
    w2_k = jnp.transpose(w2, (2, 3, 1, 0)).reshape(150, 16)
    w2blk = jnp.kron(jnp.eye(25, dtype=jnp.float32), w2_k)          # (3750, 400)
    K2P = _round_up(25 * 150, 128)                                  # 3840
    F = _round_up(400, 128)                                         # 512
    w2blk = jnp.pad(w2blk, ((0, K2P - 3750), (0, F - 400))).astype(jnp.bfloat16)
    b2t = jnp.pad(jnp.tile(b2, 25), (0, F - 400)).reshape(1, F).astype(jnp.float32)

    # fc1: permute input features from PyTorch (c, h, w) order to kernel (s=(h,w), c)
    # order, transpose to (in, out), zero-pad in -> F and out 120 -> 128.
    w3p = jnp.transpose(w3.reshape(120, 16, 25), (0, 2, 1)).reshape(120, 400).T
    w3p = jnp.pad(w3p, ((0, F - 400), (0, 128 - 120))).astype(jnp.bfloat16)
    b3p = jnp.pad(b3, (0, 128 - 120)).reshape(1, 128).astype(jnp.float32)
    w4p = jnp.pad(w4.T, ((0, 128 - 120), (0, 128 - 84))).astype(jnp.bfloat16)
    b4p = jnp.pad(b4, (0, 128 - 84)).reshape(1, 128).astype(jnp.float32)
    w5p = jnp.pad(w5.T, ((0, 128 - 84), (0, 128 - n_class))).astype(jnp.bfloat16)
    b5p = jnp.pad(b5, (0, 128 - n_class)).reshape(1, 128).astype(jnp.float32)
    return (w1t, b1c, w2blk, b2t, w3p, b3p, w4p, b4p, w5p, b5p)


# ------------------------------- glue (JAX) ---------------------------------

def _im2col(x_nhwc, kh, kw):
    """(B,H,W,C) -> (B,Ho,Wo,kh*kw*C) valid windows, column order (kh, kw, c)."""
    B, H, W, C = x_nhwc.shape
    Ho, Wo = H - kh + 1, W - kw + 1
    cols = []
    for i in range(kh):
        for j in range(kw):
            cols.append(x_nhwc[:, i:i + Ho, j:j + Wo, :])
    p = jnp.stack(cols, axis=3)                     # (B, Ho, Wo, kh*kw, C)
    return p.reshape(B, Ho, Wo, kh * kw * C)


def lenet_forward(x_nchw, prepped, n_class):
    (w1t, b1c, w2blk, b2t, w3p, b3p, w4p, b4p, w5p, b5p) = prepped
    B, cin, H, W = x_nchw.shape                     # expects 28x28 (Linear(400,.))
    K1 = 9 * cin

    # ---------------- conv1 (3x3, pad 1) + ReLU + maxpool 2x2 ----------------
    x = jnp.transpose(x_nchw, (0, 2, 3, 1)).astype(jnp.float32)     # NHWC
    xpad = jnp.pad(x, ((0, 0), (1, 1), (1, 1), (0, 0)))             # zero padding=1
    p = _im2col(xpad, 3, 3)                                         # (B,28,28,K1)
    t = p.reshape(B, 14, 2, 14, 2, K1)
    t = jnp.transpose(t, (2, 4, 5, 0, 1, 3))                        # (di,dj,K1,B,14,14)
    N1 = B * 14 * 14
    p1 = t.reshape(4, K1, N1).astype(jnp.bfloat16)                  # (4, K1, N) lane-dense
    tn = min(1024, _round_up(N1, 128))
    N1p = _round_up(N1, tn)
    p1 = jnp.pad(p1, ((0, 0), (0, 0), (0, N1p - N1)))
    a1 = conv_relu_pool_call(p1, w1t, b1c, tn)                      # (6, N1p) bf16
    a1 = jnp.transpose(a1[:, :N1].reshape(6, B, 14, 14), (1, 2, 3, 0))  # (B,14,14,6)

    # -------- conv2 (5x5) + ReLU + maxpool + flatten + fc (single fused call) -----
    p = _im2col(a1, 5, 5)                                           # (B,10,10,150)
    t = p.reshape(B, 5, 2, 5, 2, 150)
    t = jnp.transpose(t, (2, 4, 0, 1, 3, 5))                        # (di,dj,B,5,5,150)
    p2 = t.reshape(4, B, 25 * 150)                                  # (4, B, 3750), (s,k) order
    K2P = w2blk.shape[0]
    tb = min(64, _round_up(B, 8))
    Bp = _round_up(B, tb)
    p2 = jnp.pad(p2, ((0, 0), (0, Bp - B), (0, K2P - 25 * 150))).astype(jnp.bfloat16)
    out = conv2_fc_call(p2, w2blk, b2t, w3p, b3p, w4p, b4p, w5p, b5p, tb)
    return out[:B, :n_class]


# --------------------------- pure-JAX reference -----------------------------

def reference_forward(x_nchw, params):
    (w1, b1, w2, b2, w3, b3, w4, b4, w5, b5) = params
    dn = ('NCHW', 'OIHW', 'NCHW')
    hp = lax.Precision.HIGHEST
    y = lax.conv_general_dilated(x_nchw, w1, (1, 1), ((1, 1), (1, 1)),
                                 dimension_numbers=dn, precision=hp)
    y = jnp.maximum(y + b1[None, :, None, None], 0.0)
    y = lax.reduce_window(y, -jnp.inf, lax.max, (1, 1, 2, 2), (1, 1, 2, 2), 'VALID')
    y = lax.conv_general_dilated(y, w2, (1, 1), 'VALID',
                                 dimension_numbers=dn, precision=hp)
    y = jnp.maximum(y + b2[None, :, None, None], 0.0)
    y = lax.reduce_window(y, -jnp.inf, lax.max, (1, 1, 2, 2), (1, 1, 2, 2), 'VALID')
    flat = y.reshape(y.shape[0], -1)
    z = jnp.matmul(flat, w3.T, precision=hp) + b3
    z = jnp.matmul(z, w4.T, precision=hp) + b4
    z = jnp.matmul(z, w5.T, precision=hp) + b5
    return z


# --------------------------------- main --------------------------------------

if __name__ == "__main__":
    B, in_dim, n_class = 2, 1, 10

    key = jax.random.PRNGKey(0)
    ks = jax.random.split(key, 11)
    # Deterministic synthetic parameters, PyTorch conventions:
    #   conv weight (O, I, KH, KW), linear weight (out, in), biases 1-D.
    w1 = 0.2 * jax.random.normal(ks[0], (6, in_dim, 3, 3), jnp.float32)
    b1 = 0.1 * jax.random.normal(ks[1], (6,), jnp.float32)
    w2 = 0.1 * jax.random.normal(ks[2], (16, 6, 5, 5), jnp.float32)
    b2 = 0.1 * jax.random.normal(ks[3], (16,), jnp.float32)
    w3 = 0.1 * jax.random.normal(ks[4], (120, 400), jnp.float32)
    b3 = 0.1 * jax.random.normal(ks[5], (120,), jnp.float32)
    w4 = 0.1 * jax.random.normal(ks[6], (84, 120), jnp.float32)
    b4 = 0.1 * jax.random.normal(ks[7], (84,), jnp.float32)
    w5 = 0.1 * jax.random.normal(ks[8], (n_class, 84), jnp.float32)
    b5 = 0.1 * jax.random.normal(ks[9], (n_class,), jnp.float32)
    params = (w1, b1, w2, b2, w3, b3, w4, b4, w5, b5)

    x = jax.random.normal(ks[10], (B, in_dim, 28, 28), jnp.float32)   # NCHW, like PyTorch

    prepped = prepare_params(params, in_dim, n_class)   # offline weight re-layout (once)
    fwd = jax.jit(lambda inp: lenet_forward(inp, prepped, n_class))
    out = jax.block_until_ready(fwd(x))

    ref = jax.block_until_ready(reference_forward(x, params))
    assert out.shape == (B, n_class) and out.dtype == jnp.float32
    np.testing.assert_allclose(np.asarray(out), np.asarray(ref), rtol=2e-2, atol=2e-2)

    print("KERNEL_OK")
</pallas_src>

<mosaic_0001>
module attributes {stable_mosaic.version = 11 : i64} {
  func.func @conv_relu_pool_kernel(%arg0: i32, %arg1: memref<4x9x512xbf16, #tpu.memory_space<vmem>>, %arg2: memref<6x9xbf16, #tpu.memory_space<vmem>>, %arg3: memref<6x1xf32, #tpu.memory_space<vmem>>, %arg4: memref<6x512xbf16, #tpu.memory_space<vmem>>) attributes {dimension_semantics = [#tpu.dimension_semantics<parallel>], iteration_bounds = array<i64: 1>, scalar_prefetch = 0 : i64, scratch_operands = 0 : i64, tpu.core_type = #tpu.core_type<tc>, window_params = [{transform_indices = @transform_0, window_bounds = array<i64: 4, 9, 512>}, {pipeline_mode = #tpu.pipeline_mode<synchronous>, transform_indices = @transform_1, window_bounds = array<i64: 6, 9>}, {pipeline_mode = #tpu.pipeline_mode<synchronous>, transform_indices = @transform_2, window_bounds = array<i64: 6, 1>}, {transform_indices = @transform_3, window_bounds = array<i64: 6, 512>}]} {
    %c0 = arith.constant 0 : index
    %c0_0 = arith.constant 0 : index
    %0 = vector.load %arg2[%c0, %c0_0] : memref<6x9xbf16, #tpu.memory_space<vmem>>, vector<6x9xbf16>
    %c0_1 = arith.constant 0 : index
    %c0_2 = arith.constant 0 : index
    %c0_3 = arith.constant 0 : index
    %1 = vector.load %arg1[%c0_1, %c0_2, %c0_3] : memref<4x9x512xbf16, #tpu.memory_space<vmem>>, vector<1x9x512xbf16>
    %2 = vector.shape_cast %1 : vector<1x9x512xbf16> to vector<9x512xbf16>
    %cst = arith.constant dense<0.000000e+00> : vector<6x512xf32>
    %3 = tpu.matmul %0, %2, %cst {dimension_numbers = #tpu.dot_dimension_numbers<[1], [0], [0], [1], [0, 0, 1, 1], [], []>} : vector<6x9xbf16>, vector<9x512xbf16>, vector<6x512xf32> -> vector<6x512xf32>
    %c1 = arith.constant 1 : index
    %c0_4 = arith.constant 0 : index
    %c0_5 = arith.constant 0 : index
    %4 = vector.load %arg1[%c1, %c0_4, %c0_5] : memref<4x9x512xbf16, #tpu.memory_space<vmem>>, vector<1x9x512xbf16>
    %5 = vector.shape_cast %4 : vector<1x9x512xbf16> to vector<9x512xbf16>
    %cst_6 = arith.constant dense<0.000000e+00> : vector<6x512xf32>
    %6 = tpu.matmul %0, %5, %cst_6 {dimension_numbers = #tpu.dot_dimension_numbers<[1], [0], [0], [1], [0, 0, 1, 1], [], []>} : vector<6x9xbf16>, vector<9x512xbf16>, vector<6x512xf32> -> vector<6x512xf32>
    %7 = arith.maximumf %3, %6 : vector<6x512xf32>
    %c2 = arith.constant 2 : index
    %c0_7 = arith.constant 0 : index
    %c0_8 = arith.constant 0 : index
    %8 = vector.load %arg1[%c2, %c0_7, %c0_8] : memref<4x9x512xbf16, #tpu.memory_space<vmem>>, vector<1x9x512xbf16>
    %9 = vector.shape_cast %8 : vector<1x9x512xbf16> to vector<9x512xbf16>
    %cst_9 = arith.constant dense<0.000000e+00> : vector<6x512xf32>
    %10 = tpu.matmul %0, %9, %cst_9 {dimension_numbers = #tpu.dot_dimension_numbers<[1], [0], [0], [1], [0, 0, 1, 1], [], []>} : vector<6x9xbf16>, vector<9x512xbf16>, vector<6x512xf32> -> vector<6x512xf32>
    %11 = arith.maximumf %7, %10 : vector<6x512xf32>
    %c3 = arith.constant 3 : index
    %c0_10 = arith.constant 0 : index
    %c0_11 = arith.constant 0 : index
    %12 = vector.load %arg1[%c3, %c0_10, %c0_11] : memref<4x9x512xbf16, #tpu.memory_space<vmem>>, vector<1x9x512xbf16>
    %13 = vector.shape_cast %12 : vector<1x9x512xbf16> to vector<9x512xbf16>
    %cst_12 = arith.constant dense<0.000000e+00> : vector<6x512xf32>
    %14 = tpu.matmul %0, %13, %cst_12 {dimension_numbers = #tpu.dot_dimension_numbers<[1], [0], [0], [1], [0, 0, 1, 1], [], []>} : vector<6x9xbf16>, vector<9x512xbf16>, vector<6x512xf32> -> vector<6x512xf32>
    %15 = arith.maximumf %11, %14 : vector<6x512xf32>
    %c0_13 = arith.constant 0 : index
    %c0_14 = arith.constant 0 : index
    %16 = vector.load %arg3[%c0_13, %c0_14] : memref<6x1xf32, #tpu.memory_space<vmem>>, vector<6x1xf32>
    %17 = vector.broadcast %16 : vector<6x1xf32> to vector<6x512xf32>
    %18 = arith.addf %15, %17 : vector<6x512xf32>
    %cst_15 = arith.constant 0.000000e+00 : f32
    %19 = vector.broadcast %cst_15 : f32 to vector<6x512xf32>
    %20 = arith.maximumf %18, %19 : vector<6x512xf32>
    %21 = arith.truncf %20 : vector<6x512xf32> to vector<6x512xbf16>
    %c0_16 = arith.constant 0 : index
    %c0_17 = arith.constant 0 : index
    %22 = vector.load %arg4[%c0_16, %c0_17] : memref<6x512xbf16, #tpu.memory_space<vmem>>, vector<6x512xbf16>
    tpu.vector_store %arg4[%c0_16, %c0_17], %21 {strides = array<i32>} : memref<6x512xbf16, #tpu.memory_space<vmem>>, vector<6x512xbf16>,
    return
  }
  func.func @transform_0(%arg0: i32) -> (i32, i32, i32) {
    %c0_i32 = arith.constant 0 : i32
    %c0_i32_0 = arith.constant 0 : i32
    %c0_i32_1 = arith.constant 0 : i32
    return %c0_i32, %c0_i32_0, %arg0 : i32, i32, i32
  }
  func.func @transform_1(%arg0: i32) -> (i32, i32) {
    %c0_i32 = arith.constant 0 : i32
    %c0_i32_0 = arith.constant 0 : i32
    %c0_i32_1 = arith.constant 0 : i32
    return %c0_i32, %c0_i32_0 : i32, i32
  }
  func.func @transform_2(%arg0: i32) -> (i32, i32) {
    %c0_i32 = arith.constant 0 : i32
    %c0_i32_0 = arith.constant 0 : i32
    %c0_i32_1 = arith.constant 0 : i32
    return %c0_i32, %c0_i32_0 : i32, i32
  }
  func.func @transform_3(%arg0: i32) -> (i32, i32) {
    %c0_i32 = arith.constant 0 : i32
    %c0_i32_0 = arith.constant 0 : i32
    return %c0_i32, %arg0 : i32, i32
  }
}

module attributes {stable_mosaic.version = 11 : i64} {
  func.func @conv2_fc_kernel(%arg0: i32, %arg1: memref<4x8x3840xbf16, #tpu.memory_space<vmem>>, %arg2: memref<3840x512xbf16, #tpu.memory_space<vmem>>, %arg3: memref<1x512xf32, #tpu.memory_space<vmem>>, %arg4: memref<512x128xbf16, #tpu.memory_space<vmem>>, %arg5: memref<1x128xf32, #tpu.memory_space<vmem>>, %arg6: memref<128x128xbf16, #tpu.memory_space<vmem>>, %arg7: memref<1x128xf32, #tpu.memory_space<vmem>>, %arg8: memref<128x128xbf16, #tpu.memory_space<vmem>>, %arg9: memref<1x128xf32, #tpu.memory_space<vmem>>, %arg10: memref<8x128xf32, #tpu.memory_space<vmem>>) attributes {dimension_semantics = [#tpu.dimension_semantics<parallel>], iteration_bounds = array<i64: 1>, scalar_prefetch = 0 : i64, scratch_operands = 0 : i64, tpu.core_type = #tpu.core_type<tc>, window_params = [{transform_indices = @transform_0, window_bounds = array<i64: 4, 8, 3840>}, {pipeline_mode = #tpu.pipeline_mode<synchronous>, transform_indices = @transform_1, window_bounds = array<i64: 3840, 512>}, {pipeline_mode = #tpu.pipeline_mode<synchronous>, transform_indices = @transform_2, window_bounds = array<i64: 1, 512>}, {pipeline_mode = #tpu.pipeline_mode<synchronous>, transform_indices = @transform_3, window_bounds = array<i64: 512, 128>}, {pipeline_mode = #tpu.pipeline_mode<synchronous>, transform_indices = @transform_4, window_bounds = array<i64: 1, 128>}, {pipeline_mode = #tpu.pipeline_mode<synchronous>, transform_indices = @transform_5, window_bounds = array<i64: 128, 128>}, {pipeline_mode = #tpu.pipeline_mode<synchronous>, transform_indices = @transform_6, window_bounds = array<i64: 1, 128>}, {pipeline_mode = #tpu.pipeline_mode<synchronous>, transform_indices = @transform_7, window_bounds = array<i64: 128, 128>}, {pipeline_mode = #tpu.pipeline_mode<synchronous>, transform_indices = @transform_8, window_bounds = array<i64: 1, 128>}, {transform_indices = @transform_9, window_bounds = array<i64: 8, 128>}]} {
    %c0 = arith.constant 0 : index
    %c0_0 = arith.constant 0 : index
    %0 = vector.load %arg2[%c0, %c0_0] : memref<3840x512xbf16, #tpu.memory_space<vmem>>, vector<3840x512xbf16>
    %c0_1 = arith.constant 0 : index
    %c0_2 = arith.constant 0 : index
    %c0_3 = arith.constant 0 : index
    %1 = vector.load %arg1[%c0_1, %c0_2, %c0_3] : memref<4x8x3840xbf16, #tpu.memory_space<vmem>>, vector<1x8x3840xbf16>
    %2 = vector.shape_cast %1 : vector<1x8x3840xbf16> to vector<8x3840xbf16>
    %cst = arith.constant dense<0.000000e+00> : vector<8x512xf32>
    %3 = tpu.matmul %2, %0, %cst {dimension_numbers = #tpu.dot_dimension_numbers<[1], [0], [0], [1], [0, 0, 1, 1], [], []>} : vector<8x3840xbf16>, vector<3840x512xbf16>, vector<8x512xf32> -> vector<8x512xf32>
    %c1 = arith.constant 1 : index
    %c0_4 = arith.constant 0 : index
    %c0_5 = arith.constant 0 : index
    %4 = vector.load %arg1[%c1, %c0_4, %c0_5] : memref<4x8x3840xbf16, #tpu.memory_space<vmem>>, vector<1x8x3840xbf16>
    %5 = vector.shape_cast %4 : vector<1x8x3840xbf16> to vector<8x3840xbf16>
    %cst_6 = arith.constant dense<0.000000e+00> : vector<8x512xf32>
    %6 = tpu.matmul %5, %0, %cst_6 {dimension_numbers = #tpu.dot_dimension_numbers<[1], [0], [0], [1], [0, 0, 1, 1], [], []>} : vector<8x3840xbf16>, vector<3840x512xbf16>, vector<8x512xf32> -> vector<8x512xf32>
    %7 = arith.maximumf %3, %6 : vector<8x512xf32>
    %c2 = arith.constant 2 : index
    %c0_7 = arith.constant 0 : index
    %c0_8 = arith.constant 0 : index
    %8 = vector.load %arg1[%c2, %c0_7, %c0_8] : memref<4x8x3840xbf16, #tpu.memory_space<vmem>>, vector<1x8x3840xbf16>
    %9 = vector.shape_cast %8 : vector<1x8x3840xbf16> to vector<8x3840xbf16>
    %cst_9 = arith.constant dense<0.000000e+00> : vector<8x512xf32>
    %10 = tpu.matmul %9, %0, %cst_9 {dimension_numbers = #tpu.dot_dimension_numbers<[1], [0], [0], [1], [0, 0, 1, 1], [], []>} : vector<8x3840xbf16>, vector<3840x512xbf16>, vector<8x512xf32> -> vector<8x512xf32>
    %11 = arith.maximumf %7, %10 : vector<8x512xf32>
    %c3 = arith.constant 3 : index
    %c0_10 = arith.constant 0 : index
    %c0_11 = arith.constant 0 : index
    %12 = vector.load %arg1[%c3, %c0_10, %c0_11] : memref<4x8x3840xbf16, #tpu.memory_space<vmem>>, vector<1x8x3840xbf16>
    %13 = vector.shape_cast %12 : vector<1x8x3840xbf16> to vector<8x3840xbf16>
    %cst_12 = arith.constant dense<0.000000e+00> : vector<8x512xf32>
    %14 = tpu.matmul %13, %0, %cst_12 {dimension_numbers = #tpu.dot_dimension_numbers<[1], [0], [0], [1], [0, 0, 1, 1], [], []>} : vector<8x3840xbf16>, vector<3840x512xbf16>, vector<8x512xf32> -> vector<8x512xf32>
    %15 = arith.maximumf %11, %14 : vector<8x512xf32>
    %c0_13 = arith.constant 0 : index
    %c0_14 = arith.constant 0 : index
    %16 = vector.load %arg3[%c0_13, %c0_14] : memref<1x512xf32, #tpu.memory_space<vmem>>, vector<1x512xf32>
    %17 = vector.broadcast %16 : vector<1x512xf32> to vector<8x512xf32>
    %18 = arith.addf %15, %17 : vector<8x512xf32>
    %cst_15 = arith.constant 0.000000e+00 : f32
    %19 = vector.broadcast %cst_15 : f32 to vector<8x512xf32>
    %20 = arith.maximumf %18, %19 : vector<8x512xf32>
    %21 = arith.truncf %20 : vector<8x512xf32> to vector<8x512xbf16>
    %c0_16 = arith.constant 0 : index
    %c0_17 = arith.constant 0 : index
    %22 = vector.load %arg4[%c0_16, %c0_17] : memref<512x128xbf16, #tpu.memory_space<vmem>>, vector<512x128xbf16>
    %cst_18 = arith.constant dense<0.000000e+00> : vector<8x128xf32>
    %23 = tpu.matmul %21, %22, %cst_18 {dimension_numbers = #tpu.dot_dimension_numbers<[1], [0], [0], [1], [0, 0, 1, 1], [], []>} : vector<8x512xbf16>, vector<512x128xbf16>, vector<8x128xf32> -> vector<8x128xf32>
    %c0_19 = arith.constant 0 : index
    %c0_20 = arith.constant 0 : index
    %24 = vector.load %arg5[%c0_19, %c0_20] : memref<1x128xf32, #tpu.memory_space<vmem>>, vector<1x128xf32>
    %25 = vector.broadcast %24 : vector<1x128xf32> to vector<8x128xf32>
    %26 = arith.addf %23, %25 : vector<8x128xf32>
    %27 = arith.truncf %26 : vector<8x128xf32> to vector<8x128xbf16>
    %c0_21 = arith.constant 0 : index
    %c0_22 = arith.constant 0 : index
    %28 = vector.load %arg6[%c0_21, %c0_22] : memref<128x128xbf16, #tpu.memory_space<vmem>>, vector<128x128xbf16>
    %cst_23 = arith.constant dense<0.000000e+00> : vector<8x128xf32>
    %29 = tpu.matmul %27, %28, %cst_23 {dimension_numbers = #tpu.dot_dimension_numbers<[1], [0], [0], [1], [0, 0, 1, 1], [], []>} : vector<8x128xbf16>, vector<128x128xbf16>, vector<8x128xf32> -> vector<8x128xf32>
    %c0_24 = arith.constant 0 : index
    %c0_25 = arith.constant 0 : index
    %30 = vector.load %arg7[%c0_24, %c0_25] : memref<1x128xf32, #tpu.memory_space<vmem>>, vector<1x128xf32>
    %31 = vector.broadcast %30 : vector<1x128xf32> to vector<8x128xf32>
    %32 = arith.addf %29, %31 : vector<8x128xf32>
    %33 = arith.truncf %32 : vector<8x128xf32> to vector<8x128xbf16>
    %c0_26 = arith.constant 0 : index
    %c0_27 = arith.constant 0 : index
    %34 = vector.load %arg8[%c0_26, %c0_27] : memref<128x128xbf16, #tpu.memory_space<vmem>>, vector<128x128xbf16>
    %cst_28 = arith.constant dense<0.000000e+00> : vector<8x128xf32>
    %35 = tpu.matmul %33, %34, %cst_28 {dimension_numbers = #tpu.dot_dimension_numbers<[1], [0], [0], [1], [0, 0, 1, 1], [], []>} : vector<8x128xbf16>, vector<128x128xbf16>, vector<8x128xf32> -> vector<8x128xf32>
    %c0_29 = arith.constant 0 : index
    %c0_30 = arith.constant 0 : index
    %36 = vector.load %arg9[%c0_29, %c0_30] : memref<1x128xf32, #tpu.memory_space<vmem>>, vector<1x128xf32>
    %37 = vector.broadcast %36 : vector<1x128xf32> to vector<8x128xf32>
    %38 = arith.addf %35, %37 : vector<8x128xf32>
    %c0_31 = arith.constant 0 : index
    %c0_32 = arith.constant 0 : index
    %39 = vector.load %arg10[%c0_31, %c0_32] : memref<8x128xf32, #tpu.memory_space<vmem>>, vector<8x128xf32>
    tpu.vector_store %arg10[%c0_31, %c0_32], %38 {strides = array<i32>} : memref<8x128xf32, #tpu.memory_space<vmem>>, vector<8x128xf32>,
    return
  }
  func.func @transform_0(%arg0: i32) -> (i32, i32, i32) {
    %c0_i32 = arith.constant 0 : i32
    %c0_i32_0 = arith.constant 0 : i32
    %c0_i32_1 = arith.constant 0 : i32
    return %c0_i32, %arg0, %c0_i32_0 : i32, i32, i32
  }
  func.func @transform_1(%arg0: i32) -> (i32, i32) {
    %c0_i32 = arith.constant 0 : i32
    %c0_i32_0 = arith.constant 0 : i32
    %c0_i32_1 = arith.constant 0 : i32
    return %c0_i32, %c0_i32_0 : i32, i32
  }
  func.func @transform_2(%arg0: i32) -> (i32, i32) {
    %c0_i32 = arith.constant 0 : i32
    %c0_i32_0 = arith.constant 0 : i32
    %c0_i32_1 = arith.constant 0 : i32
    return %c0_i32, %c0_i32_0 : i32, i32
  }
  func.func @transform_3(%arg0: i32) -> (i32, i32) {
    %c0_i32 = arith.constant 0 : i32
    %c0_i32_0 = arith.constant 0 : i32
    %c0_i32_1 = arith.constant 0 : i32
    return %c0_i32, %c0_i32_0 : i32, i32
  }
  func.func @transform_4(%arg0: i32) -> (i32, i32) {
    %c0_i32 = arith.constant 0 : i32
    %c0_i32_0 = arith.constant 0 : i32
    %c0_i32_1 = arith.constant 0 : i32
    return %c0_i32, %c0_i32_0 : i32, i32
  }
  func.func @transform_5(%arg0: i32) -> (i32, i32) {
    %c0_i32 = arith.constant 0 : i32
    %c0_i32_0 = arith.constant 0 : i32
    %c0_i32_1 = arith.constant 0 : i32
    return %c0_i32, %c0_i32_0 : i32, i32
  }
  func.func @transform_6(%arg0: i32) -> (i32, i32) {
    %c0_i32 = arith.constant 0 : i32
    %c0_i32_0 = arith.constant 0 : i32
    %c0_i32_1 = arith.constant 0 : i32
    return %c0_i32, %c0_i32_0 : i32, i32
  }
  func.func @transform_7(%arg0: i32) -> (i32, i32) {
    %c0_i32 = arith.constant 0 : i32
    %c0_i32_0 = arith.constant 0 : i32
    %c0_i32_1 = arith.constant 0 : i32
    return %c0_i32, %c0_i32_0 : i32, i32
  }
  func.func @transform_8(%arg0: i32) -> (i32, i32) {
    %c0_i32 = arith.constant 0 : i32
    %c0_i32_0 = arith.constant 0 : i32
    %c0_i32_1 = arith.constant 0 : i32
    return %c0_i32, %c0_i32_0 : i32, i32
  }
  func.func @transform_9(%arg0: i32) -> (i32, i32) {
    %c0_i32 = arith.constant 0 : i32
    %c0_i32_0 = arith.constant 0 : i32
    return %arg0, %c0_i32 : i32, i32
  }
}

</mosaic_0001>

<llo_original>
// kernel: _lambda_.2
$region0: #{_lambda_.2}
  #allocation0 [shape = 'u32[]', space=smem, size = 0x4, offset = 0x4, fixed_abs, tag = 'smem constant byte address 0x4 - core index']
  #allocation1 [shape = 'u32[72,128]{1,0:T(1,128)}', space=vmem, size = 0x9000, scoped, tag = 'internal scratch']
  %s0 = inlined_call_operand.vmem [shape: bf16[4,9,512], index: 0, kind: input, shape index: {}]
  %s1 = inlined_call_operand.vmem [shape: bf16[6,9], index: 1, kind: input, shape index: {}]
  %s2 = inlined_call_operand.vmem [shape: f32[6,1], index: 2, kind: input, shape index: {}]
  %s3 = inlined_call_operand.vmem [shape: bf16[6,512], index: 3, kind: output, shape index: {}]
  %s4 = sld [smem:[#allocation0]]
  $region22: #{_lambda_.2} parent=0
    _
  %s6 = ssub.s32 1, %s4
  %s7 = scalar_select 0, %s6, %s4
  // Predicated region
  $region2: #{_lambda_.2} parent=0 // pred_check
    _
  $region3: #{_lambda_.2} parent=0 // pred_check_branch
    %9 = sbr.rel (0) target = $region5
  $region4: #{_lambda_.2} parent=0 // pred_region
    _
  $region5: #{_lambda_.2} parent=0 // pred_fallthru
    _
  // Predicated region
  $region6: #{_lambda_.2} parent=0 // pred_check
    _
  $region7: #{_lambda_.2} parent=0 // pred_check_branch
    %11 = sbr.rel (0) target = $region9
  $region8: #{_lambda_.2} parent=0 // pred_region
    _
  $region9: #{_lambda_.2} parent=0 // pred_fallthru
    _
  // Predicated region
  $region10: #{_lambda_.2} parent=0 // pred_check
    _
  $region11: #{_lambda_.2} parent=0 // pred_check_branch
    %13 = sbr.rel (0) target = $region13
  $region12: #{_lambda_.2} parent=0 // pred_region
    _
  $region13: #{_lambda_.2} parent=0 // pred_fallthru
    _
  %v15 = vld [vmem:[%s1] sm:$0x7]
  %v16 = vld [vmem:[%s0] sm:$0xff]
  %v17 = vld [vmem:[%s0 + $0x8] sm:$0xff]
  %v18 = vld [vmem:[%s0 + $0x10] sm:$0x11]
  %v19 = vld [vmem:[%s0 + $0x18] sm:$0x11]
  %v24 = vunpack.c.l.b16 %v16
  %v25 = vunpack.c.h.b16 %v16
  %v26 = vunpack.c.l.b16 %v17
  %v27 = vunpack.c.h.b16 %v17
  %v28 = vunpack.c.l.b16 %v18
  %v29 = vunpack.c.h.b16 %v18
  %v30 = vunpack.c.l.b16 %v19
  %v31 = vunpack.c.h.b16 %v19
  %v32 = vpack.c.b16 %v28, %v24
  %v33 = vpack.c.b16 %v29, %v25
  %v34 = vpack.c.b16 %v30, %v26
  %v35 = vpack.c.b16 %v31, %v27
  %vm36 = vcmask 72704
  %v38 = vsel %vm36, %v15, 0
  %vm40 = vcmask 1043456
  %vm41 = vcmask 1044480
  %v42 = vsel %vm40, 4294967295, 65535
  %v43 = vsel %vm41, %v42, 0
  %v45 = vand.u32 %v32, %v43
  %v48 = vand.u32 %v33, %v43
  %v51 = vand.u32 %v34, %v43
  %v54 = vand.u32 %v35, %v43
  %56 = vmatpush.bf16.msra.mxu0 0
  %57 = vmatpush.bf16.msra.mxu0 0
  %58 = vmatpush.bf16.msra.mxu0 0
  %59 = vmatpush.bf16.msra.mxu0 0
  %60 = vmatpush.bf16.msra.mxu0 0
  %61 = vmatpush.bf16.msra.mxu0 0
  %62 = vmatpush.bf16.msra.mxu0 0
  %63 = vmatpush.bf16.msra.mxu0 %v45
  %64 = vmatmul.bf16.gmra.mxu0 %v38
  %v65 = vpop.f32.mrf.mxu0
  %v66 = vadd.f32 0.0, %v65
  %v67 = vpop.f32.mrf.mxu0
  %68 = vdwg.mxu0
  %69 = vmatpush.bf16.msra.mxu0 0
  %70 = vmatpush.bf16.msra.mxu0 0
  %71 = vmatpush.bf16.msra.mxu0 0
  %72 = vmatpush.bf16.msra.mxu0 0
  %73 = vmatpush.bf16.msra.mxu0 0
  %74 = vmatpush.bf16.msra.mxu0 0
  %75 = vmatpush.bf16.msra.mxu0 0
  %76 = vmatpush.bf16.msra.mxu0 %v48
  %77 = vmatmul.bf16.gmra.mxu0 %v38
  %v78 = vpop.f32.mrf.mxu0
  %v79 = vadd.f32 0.0, %v78
  %v80 = vpop.f32.mrf.mxu0
  %81 = vdwg.mxu0
  %82 = vmatpush.bf16.msra.mxu0 0
  %83 = vmatpush.bf16.msra.mxu0 0
  %84 = vmatpush.bf16.msra.mxu0 0
  %85 = vmatpush.bf16.msra.mxu0 0
  %86 = vmatpush.bf16.msra.mxu0 0
  %87 = vmatpush.bf16.msra.mxu0 0
  %88 = vmatpush.bf16.msra.mxu0 0
  %89 = vmatpush.bf16.msra.mxu0 %v51
  %90 = vmatmul.bf16.gmra.mxu0 %v38
  %v91 = vpop.f32.mrf.mxu0
  %v92 = vadd.f32 0.0, %v91
  %v93 = vpop.f32.mrf.mxu0
  %94 = vdwg.mxu0
  %95 = vmatpush.bf16.msra.mxu0 0
  %96 = vmatpush.bf16.msra.mxu0 0
  %97 = vmatpush.bf16.msra.mxu0 0
  %98 = vmatpush.bf16.msra.mxu0 0
  %99 = vmatpush.bf16.msra.mxu0 0
  %100 = vmatpush.bf16.msra.mxu0 0
  %101 = vmatpush.bf16.msra.mxu0 0
  %102 = vmatpush.bf16.msra.mxu0 %v54
  %103 = vmatmul.bf16.gmra.mxu0 %v38
  %v104 = vpop.f32.mrf.mxu0
  %v105 = vadd.f32 0.0, %v104
  %v106 = vpop.f32.mrf.mxu0
  %107 = vdwg.mxu0
  %s108 = scalar_lea.vmem %s0, 32
  %v109 = vld [vmem:[%s108] sm:$0xff]
  %v110 = vld [vmem:[%s108 + $0x8] sm:$0xff]
  %v111 = vld [vmem:[%s108 + $0x10] sm:$0x11]
  %v112 = vld [vmem:[%s108 + $0x18] sm:$0x11]
  %v117 = vunpack.c.l.b16 %v109
  %v118 = vunpack.c.h.b16 %v109
  %v119 = vunpack.c.l.b16 %v110
  %v120 = vunpack.c.h.b16 %v110
  %v121 = vunpack.c.l.b16 %v111
  %v122 = vunpack.c.h.b16 %v111
  %v123 = vunpack.c.l.b16 %v112
  %v124 = vunpack.c.h.b16 %v112
  %v125 = vpack.c.b16 %v121, %v117
  %v126 = vpack.c.b16 %v122, %v118
  %v127 = vpack.c.b16 %v123, %v119
  %v128 = vpack.c.b16 %v124, %v120
  %v130 = vand.u32 %v125, %v43
  %v133 = vand.u32 %v126, %v43
  %v136 = vand.u32 %v127, %v43
  %v139 = vand.u32 %v128, %v43
  %141 = vmatpush.bf16.msra.mxu0 0
  %142 = vmatpush.bf16.msra.mxu0 0
  %143 = vmatpush.bf16.msra.mxu0 0
  %144 = vmatpush.bf16.msra.mxu0 0
  %145 = vmatpush.bf16.msra.mxu0 0
  %146 = vmatpush.bf16.msra.mxu0 0
  %147 = vmatpush.bf16.msra.mxu0 0
  %148 = vmatpush.bf16.msra.mxu0 %v130
  %149 = vmatmul.bf16.gmra.mxu0 %v38
  %v150 = vpop.f32.mrf.mxu0
  %v151 = vadd.f32 0.0, %v150
  %v152 = vpop.f32.mrf.mxu0
  %153 = vdwg.mxu0
  %154 = vmatpush.bf16.msra.mxu0 0
  %155 = vmatpush.bf16.msra.mxu0 0
  %156 = vmatpush.bf16.msra.mxu0 0
  %157 = vmatpush.bf16.msra.mxu0 0
  %158 = vmatpush.bf16.msra.mxu0 0
  %159 = vmatpush.bf16.msra.mxu0 0
  %160 = vmatpush.bf16.msra.mxu0 0
  %161 = vmatpush.bf16.msra.mxu0 %v133
  %162 = vmatmul.bf16.gmra.mxu0 %v38
  %v163 = vpop.f32.mrf.mxu0
  %v164 = vadd.f32 0.0, %v163
  %v165 = vpop.f32.mrf.mxu0
  %166 = vdwg.mxu0
  %167 = vmatpush.bf16.msra.mxu0 0
  %168 = vmatpush.bf16.msra.mxu0 0
  %169 = vmatpush.bf16.msra.mxu0 0
  %170 = vmatpush.bf16.msra.mxu0 0
  %171 = vmatpush.bf16.msra.mxu0 0
  %172 = vmatpush.bf16.msra.mxu0 0
  %173 = vmatpush.bf16.msra.mxu0 0
  %174 = vmatpush.bf16.msra.mxu0 %v136
  %175 = vmatmul.bf16.gmra.mxu0 %v38
  %v176 = vpop.f32.mrf.mxu0
  %v177 = vadd.f32 0.0, %v176
  %v178 = vpop.f32.mrf.mxu0
  %179 = vdwg.mxu0
  %180 = vmatpush.bf16.msra.mxu0 0
  %181 = vmatpush.bf16.msra.mxu0 0
  %182 = vmatpush.bf16.msra.mxu0 0
  %183 = vmatpush.bf16.msra.mxu0 0
  %184 = vmatpush.bf16.msra.mxu0 0
  %185 = vmatpush.bf16.msra.mxu0 0
  %186 = vmatpush.bf16.msra.mxu0 0
  %187 = vmatpush.bf16.msra.mxu0 %v139
  %188 = vmatmul.bf16.gmra.mxu0 %v38
  %v189 = vpop.f32.mrf.mxu0
  %v190 = vadd.f32 0.0, %v189
  %v191 = vpop.f32.mrf.mxu0
  %192 = vdwg.mxu0
  %v193 = vmax.f32 %v66, %v151
  %v194 = vmax.f32 %v79, %v164
  %v195 = vmax.f32 %v92, %v177
  %v196 = vmax.f32 %v105, %v190
  %s197 = scalar_lea.vmem %s0, 64
  %v198 = vld [vmem:[%s197] sm:$0xff]
  %v199 = vld [vmem:[%s197 + $0x8] sm:$0xff]
  %v200 = vld [vmem:[%s197 + $0x10] sm:$0x11]
  %v201 = vld [vmem:[%s197 + $0x18] sm:$0x11]
  %v206 = vunpack.c.l.b16 %v198
  %v207 = vunpack.c.h.b16 %v198
  %v208 = vunpack.c.l.b16 %v199
  %v209 = vunpack.c.h.b16 %v199
  %v210 = vunpack.c.l.b16 %v200
  %v211 = vunpack.c.h.b16 %v200
  %v212 = vunpack.c.l.b16 %v201
  %v213 = vunpack.c.h.b16 %v201
  %v214 = vpack.c.b16 %v210, %v206
  %v215 = vpack.c.b16 %v211, %v207
  %v216 = vpack.c.b16 %v212, %v208
  %v217 = vpack.c.b16 %v213, %v209
  %v219 = vand.u32 %v214, %v43
  %v222 = vand.u32 %v215, %v43
  %v225 = vand.u32 %v216, %v43
  %v228 = vand.u32 %v217, %v43
  %230 = vmatpush.bf16.msra.mxu0 0
  %231 = vmatpush.bf16.msra.mxu0 0
  %232 = vmatpush.bf16.msra.mxu0 0
  %233 = vmatpush.bf16.msra.mxu0 0
  %234 = vmatpush.bf16.msra.mxu0 0
  %235 = vmatpush.bf16.msra.mxu0 0
  %236 = vmatpush.bf16.msra.mxu0 0
  %237 = vmatpush.bf16.msra.mxu0 %v219
  %238 = vmatmul.bf16.gmra.mxu0 %v38
  %v239 = vpop.f32.mrf.mxu0
  %v240 = vadd.f32 0.0, %v239
  %v241 = vpop.f32.mrf.mxu0
  %242 = vdwg.mxu0
  %243 = vmatpush.bf16.msra.mxu0 0
  %244 = vmatpush.bf16.msra.mxu0 0
  %245 = vmatpush.bf16.msra.mxu0 0
  %246 = vmatpush.bf16.msra.mxu0 0
  %247 = vmatpush.bf16.msra.mxu0 0
  %248 = vmatpush.bf16.msra.mxu0 0
  %249 = vmatpush.bf16.msra.mxu0 0
  %250 = vmatpush.bf16.msra.mxu0 %v222
  %251 = vmatmul.bf16.gmra.mxu0 %v38
  %v252 = vpop.f32.mrf.mxu0
  %v253 = vadd.f32 0.0, %v252
  %v254 = vpop.f32.mrf.mxu0
  %255 = vdwg.mxu0
  %256 = vmatpush.bf16.msra.mxu0 0
  %257 = vmatpush.bf16.msra.mxu0 0
  %258 = vmatpush.bf16.msra.mxu0 0
  %259 = vmatpush.bf16.msra.mxu0 0
  %260 = vmatpush.bf16.msra.mxu0 0
  %261 = vmatpush.bf16.msra.mxu0 0
  %262 = vmatpush.bf16.msra.mxu0 0
  %263 = vmatpush.bf16.msra.mxu0 %v225
  %264 = vmatmul.bf16.gmra.mxu0 %v38
  %v265 = vpop.f32.mrf.mxu0
  %v266 = vadd.f32 0.0, %v265
  %v267 = vpop.f32.mrf.mxu0
  %268 = vdwg.mxu0
  %269 = vmatpush.bf16.msra.mxu0 0
  %270 = vmatpush.bf16.msra.mxu0 0
  %271 = vmatpush.bf16.msra.mxu0 0
  %272 = vmatpush.bf16.msra.mxu0 0
  %273 = vmatpush.bf16.msra.mxu0 0
  %274 = vmatpush.bf16.msra.mxu0 0
  %275 = vmatpush.bf16.msra.mxu0 0
  %276 = vmatpush.bf16.msra.mxu0 %v228
  %277 = vmatmul.bf16.gmra.mxu0 %v38
  %v278 = vpop.f32.mrf.mxu0
  %v279 = vadd.f32 0.0, %v278
  %v280 = vpop.f32.mrf.mxu0
  %281 = vdwg.mxu0
  %v282 = vmax.f32 %v193, %v240
  %v283 = vmax.f32 %v194, %v253
  %v284 = vmax.f32 %v195, %v266
  %v285 = vmax.f32 %v196, %v279
  %s286 = scalar_lea.vmem %s0, 96
  %v287 = vld [vmem:[%s286] sm:$0xff]
  %v288 = vld [vmem:[%s286 + $0x8] sm:$0xff]
  %v289 = vld [vmem:[%s286 + $0x10] sm:$0x11]
  %v290 = vld [vmem:[%s286 + $0x18] sm:$0x11]
  %v295 = vunpack.c.l.b16 %v287
  %v296 = vunpack.c.h.b16 %v287
  %v297 = vunpack.c.l.b16 %v288
  %v298 = vunpack.c.h.b16 %v288
  %v299 = vunpack.c.l.b16 %v289
  %v300 = vunpack.c.h.b16 %v289
  %v301 = vunpack.c.l.b16 %v290
  %v302 = vunpack.c.h.b16 %v290
  %v303 = vpack.c.b16 %v299, %v295
  %v304 = vpack.c.b16 %v300, %v296
  %v305 = vpack.c.b16 %v301, %v297
  %v306 = vpack.c.b16 %v302, %v298
  %v308 = vand.u32 %v303, %v43
  %v311 = vand.u32 %v304, %v43
  %v314 = vand.u32 %v305, %v43
  %v317 = vand.u32 %v306, %v43
  %319 = vmatpush.bf16.msra.mxu0 0
  %320 = vmatpush.bf16.msra.mxu0 0
  %321 = vmatpush.bf16.msra.mxu0 0
  %322 = vmatpush.bf16.msra.mxu0 0
  %323 = vmatpush.bf16.msra.mxu0 0
  %324 = vmatpush.bf16.msra.mxu0 0
  %325 = vmatpush.bf16.msra.mxu0 0
  %326 = vmatpush.bf16.msra.mxu0 %v308
  %327 = vmatmul.bf16.gmra.mxu0 %v38
  %v328 = vpop.f32.mrf.mxu0
  %v329 = vadd.f32 0.0, %v328
  %v330 = vpop.f32.mrf.mxu0
  %331 = vdwg.mxu0
  %332 = vmatpush.bf16.msra.mxu0 0
  %333 = vmatpush.bf16.msra.mxu0 0
  %334 = vmatpush.bf16.msra.mxu0 0
  %335 = vmatpush.bf16.msra.mxu0 0
  %336 = vmatpush.bf16.msra.mxu0 0
  %337 = vmatpush.bf16.msra.mxu0 0
  %338 = vmatpush.bf16.msra.mxu0 0
  %339 = vmatpush.bf16.msra.mxu0 %v311
  %340 = vmatmul.bf16.gmra.mxu0 %v38
  %v341 = vpop.f32.mrf.mxu0
  %v342 = vadd.f32 0.0, %v341
  %v343 = vpop.f32.mrf.mxu0
  %344 = vdwg.mxu0
  %345 = vmatpush.bf16.msra.mxu0 0
  %346 = vmatpush.bf16.msra.mxu0 0
  %347 = vmatpush.bf16.msra.mxu0 0
  %348 = vmatpush.bf16.msra.mxu0 0
  %349 = vmatpush.bf16.msra.mxu0 0
  %350 = vmatpush.bf16.msra.mxu0 0
  %351 = vmatpush.bf16.msra.mxu0 0
  %352 = vmatpush.bf16.msra.mxu0 %v314
  %353 = vmatmul.bf16.gmra.mxu0 %v38
  %v354 = vpop.f32.mrf.mxu0
  %v355 = vadd.f32 0.0, %v354
  %v356 = vpop.f32.mrf.mxu0
  %357 = vdwg.mxu0
  %358 = vmatpush.bf16.msra.mxu0 0
  %359 = vmatpush.bf16.msra.mxu0 0
  %360 = vmatpush.bf16.msra.mxu0 0
  %361 = vmatpush.bf16.msra.mxu0 0
  %362 = vmatpush.bf16.msra.mxu0 0
  %363 = vmatpush.bf16.msra.mxu0 0
  %364 = vmatpush.bf16.msra.mxu0 0
  %365 = vmatpush.bf16.msra.mxu0 %v317
  %366 = vmatmul.bf16.gmra.mxu0 %v38
  %v367 = vpop.f32.mrf.mxu0
  %v368 = vadd.f32 0.0, %v367
  %v369 = vpop.f32.mrf.mxu0
  %370 = vdwg.mxu0
  %v371 = vmax.f32 %v282, %v329
  %v372 = vmax.f32 %v283, %v342
  %v373 = vmax.f32 %v284, %v355
  %v374 = vmax.f32 %v285, %v368
  %v375 = vld [vmem:[%s2] sm:$0x3f]
  %377 = vset.pattern.permute.xlu0 0
  %378 = vperm.xlu0 %377, %v375
  %v379 = vpop.permute.xlu0 %378
  %v381 = vadd.f32 %v371, %v379
  %v382 = vadd.f32 %v372, %v379
  %v383 = vadd.f32 %v373, %v379
  %v384 = vadd.f32 %v374, %v379
  %v385 = vmax.f32 %v381, 0.0
  %v386 = vmax.f32 %v382, 0.0
  %v387 = vmax.f32 %v383, 0.0
  %v388 = vmax.f32 %v384, 0.0
  %v389 = vpack.c.bf16 %v386, %v385
  %v390 = vpack.c.bf16 %v388, %v387
  %391 = vst [vmem:[%s3] sm:$0x77] %v389
  %392 = vst [vmem:[%s3 + $0x8] sm:$0x77] %v390
  // Predicated region
  $region14: #{_lambda_.2} parent=0 // pred_check
    _
  $region15: #{_lambda_.2} parent=0 // pred_check_branch
    %394 = sbr.rel (0) target = $region17
  $region16: #{_lambda_.2} parent=0 // pred_region
    _
  $region17: #{_lambda_.2} parent=0 // pred_fallthru
    _
  // Predicated region
  $region18: #{_lambda_.2} parent=0 // pred_check
    _
  $region19: #{_lambda_.2} parent=0 // pred_check_branch
    %396 = sbr.rel (0) target = $region21
  $region20: #{_lambda_.2} parent=0 // pred_region
    _
  $region21: #{_lambda_.2} parent=0 // pred_fallthru
    _

// kernel: _lambda_.3
$region0: #{_lambda_.3}
  #allocation0 [shape = 'u32[]', space=smem, size = 0x4, offset = 0x4, fixed_abs, tag = 'smem constant byte address 0x4 - core index']
  #allocation1 [shape = 'u32[72,128]{1,0:T(1,128)}', space=vmem, size = 0x9000, scoped, tag = 'internal scratch']
  %s0 = inlined_call_operand.vmem [shape: bf16[4,8,3840], index: 0, kind: input, shape index: {}]
  %s1 = inlined_call_operand.vmem [shape: bf16[3840,512], index: 1, kind: input, shape index: {}]
  %s2 = inlined_call_operand.vmem [shape: f32[1,512], index: 2, kind: input, shape index: {}]
  %s3 = inlined_call_operand.vmem [shape: bf16[512,128], index: 3, kind: input, shape index: {}]
  %s4 = inlined_call_operand.vmem [shape: f32[1,128], index: 4, kind: input, shape index: {}]
  %s5 = inlined_call_operand.vmem [shape: bf16[128,128], index: 5, kind: input, shape index: {}]
  %s6 = inlined_call_operand.vmem [shape: f32[1,128], index: 6, kind: input, shape index: {}]
  %s7 = inlined_call_operand.vmem [shape: bf16[128,128], index: 7, kind: input, shape index: {}]
  %s8 = inlined_call_operand.vmem [shape: f32[1,128], index: 8, kind: input, shape index: {}]
  %s9 = inlined_call_operand.vmem [shape: f32[8,128], index: 9, kind: output, shape index: {}]
  %s10 = sld [smem:[#allocation0]]
  $region46: #{_lambda_.3} parent=0
    _
  %s12 = ssub.s32 1, %s10
  %s13 = scalar_select 0, %s12, %s10
  // Predicated region
  $region2: #{_lambda_.3} parent=0 // pred_check
    _
  $region3: #{_lambda_.3} parent=0 // pred_check_branch
    %15 = sbr.rel (0) target = $region5
  $region4: #{_lambda_.3} parent=0 // pred_region
    _
  $region5: #{_lambda_.3} parent=0 // pred_fallthru
    _
  // Predicated region
  $region6: #{_lambda_.3} parent=0 // pred_check
    _
  $region7: #{_lambda_.3} parent=0 // pred_check_branch
    %17 = sbr.rel (0) target = $region9
  $region8: #{_lambda_.3} parent=0 // pred_region
    _
  $region9: #{_lambda_.3} parent=0 // pred_fallthru
    _
  // Predicated region
  $region10: #{_lambda_.3} parent=0 // pred_check
    _
  $region11: #{_lambda_.3} parent=0 // pred_check_branch
    %19 = sbr.rel (0) target = $region13
  $region12: #{_lambda_.3} parent=0 // pred_region
    _
  $region13: #{_lambda_.3} parent=0 // pred_fallthru
    _
  // Predicated region
  $region14: #{_lambda_.3} parent=0 // pred_check
    _
  $region15: #{_lambda_.3} parent=0 // pred_check_branch
    %21 = sbr.rel (0) target = $region17
  $region16: #{_lambda_.3} parent=0 // pred_region
    _
  $region17: #{_lambda_.3} parent=0 // pred_fallthru
    _
  // Predicated region
  $region18: #{_lambda_.3} parent=0 // pred_check
    _
  $region19: #{_lambda_.3} parent=0 // pred_check_branch
    %23 = sbr.rel (0) target = $region21
  $region20: #{_lambda_.3} parent=0 // pred_region
    _
  $region21: #{_lambda_.3} parent=0 // pred_fallthru
    _
  // Predicated region
  $region22: #{_lambda_.3} parent=0 // pred_check
    _
  $region23: #{_lambda_.3} parent=0 // pred_check_branch
    %25 = sbr.rel (0) target = $region25
  $region24: #{_lambda_.3} parent=0 // pred_region
    _
  $region25: #{_lambda_.3} parent=0 // pred_fallthru
    _
  // Predicated region
  $region26: #{_lambda_.3} parent=0 // pred_check
    _
  $region27: #{_lambda_.3} parent=0 // pred_check_branch
    %27 = sbr.rel (0) target = $region29
  $region28: #{_lambda_.3} parent=0 // pred_region
    _
  $region29: #{_lambda_.3} parent=0 // pred_fallthru
    _
  // Predicated region
  $region30: #{_lambda_.3} parent=0 // pred_check
    _
  $region31: #{_lambda_.3} parent=0 // pred_check_branch
    %29 = sbr.rel (0) target = $region33
  $region32: #{_lambda_.3} parent=0 // pred_region
    _
  $region33: #{_lambda_.3} parent=0 // pred_fallthru
    _
  // Predicated region
  $region34: #{_lambda_.3} parent=0 // pred_check
    _
  $region35: #{_lambda_.3} parent=0 // pred_check_branch
    %31 = sbr.rel (0) target = $region37
  $region36: #{_lambda_.3} parent=0 // pred_region
    _
  $region37: #{_lambda_.3} parent=0 // pred_fallthru
    _
  %v32 = vld [vmem:[%s1] sm:$0xff]
  %v33 = vld [vmem:[%s1 + $0x8] sm:$0xff]
  %v34 = vld [vmem:[%s1 + $0x10] sm:$0xff]
  %v35 = vld [vmem:[%s1 + $0x18] sm:$0xff]
  %v36 = vld [vmem:[%s1 + $0x20] sm:$0xff]
  %v37 = vld [vmem:[%s1 + $0x28] sm:$0xff]
  %v38 = vld [vmem:[%s1 + $0x30] sm:$0xff]
  %v39 = vld [vmem:[%s1 + $0x38] sm:$0xff]
  %v40 = vld [vmem:[%s1 + $0x40] sm:$0xff]
  %v41 = vld [vmem:[%s1 + $0x48] sm:$0xff]
  %v42 = vld [vmem:[%s1 + $0x50] sm:$0xff]
  %v43 = vld [vmem:[%s1 + $0x58] sm:$0xff]
  %v44 = vld [vmem:[%s1 + $0x60] sm:$0xff]
  %v45 = vld [vmem:[%s1 + $0x68] sm:$0xff]
  %v46 = vld [vmem:[%s1 + $0x70] sm:$0xff]
  %v47 = vld [vmem:[%s1 + $0x78] sm:$0xff]
  %v48 = vld [vmem:[%s1 + $0x80] sm:$0xff]
  %v49 = vld [vmem:[%s1 + $0x88] sm:$0xff]
  %v50 = vld [vmem:[%s1 + $0x90] sm:$0xff]
  %v51 = vld [vmem:[%s1 + $0x98] sm:$0xff]
  %v52 = vld [vmem:[%s1 + $0xa0] sm:$0xff]
  %v53 = vld [vmem:[%s1 + $0xa8] sm:$0xff]
  %v54 = vld [vmem:[%s1 + $0xb0] sm:$0xff]
  %v55 = vld [vmem:[%s1 + $0xb8] sm:$0xff]
  %v56 = vld [vmem:[%s1 + $0xc0] sm:$0xff]
  %v57 = vld [vmem:[%s1 + $0xc8] sm:$0xff]
  %v58 = vld [vmem:[%s1 + $0xd0] sm:$0xff]
  %v59 = vld [vmem:[%s1 + $0xd8] sm:$0xff]
  %v60 = vld [vmem:[%s1 + $0xe0] sm:$0xff]
  %v61 = vld [vmem:[%s1 + $0xe8] sm:$0xff]
  %v62 = vld [vmem:[%s1 + $0xf0] sm:$0xff]
  %v63 = vld [vmem:[%s1 + $0xf8] sm:$0xff]
  %v64 = vld [vmem:[%s1 + $0x100] sm:$0xff]
  %v65 = vld [vmem:[%s1 + $0x108] sm:$0xff]
  %v66 = vld [vmem:[%s1 + $0x110] sm:$0xff]
  %v67 = vld [vmem:[%s1 + $0x118] sm:$0xff]
  %v68 = vld [vmem:[%s1 + $0x120] sm:$0xff]
  %v69 = vld [vmem:[%s1 + $0x128] sm:$0xff]
  %v70 = vld [vmem:[%s1 + $0x130] sm:$0xff]
  %v71 = vld [vmem:[%s1 + $0x138] sm:$0xff]
  %v72 = vld [vmem:[%s1 + $0x140] sm:$0xff]
  %v73 = vld [vmem:[%s1 + $0x148] sm:$0xff]
  %v74 = vld [vmem:[%s1 + $0x150] sm:$0xff]
  %v75 = vld [vmem:[%s1 + $0x158] sm:$0xff]
  %v76 = vld [vmem:[%s1 + $0x160] sm:$0xff]
  %v77 = vld [vmem:[%s1 + $0x168] sm:$0xff]
  %v78 = vld [vmem:[%s1 + $0x170] sm:$0xff]
  %v79 = vld [vmem:[%s1 + $0x178] sm:$0xff]
  %v80 = vld [vmem:[%s1 + $0x180] sm:$0xff]
  %v81 = vld [vmem:[%s1 + $0x188] sm:$0xff]
  %v82 = vld [vmem:[%s1 + $0x190] sm:$0xff]
  %v83 = vld [vmem:[%s1 + $0x198] sm:$0xff]
  %v84 = vld [vmem:[%s1 + $0x1a0] sm:$0xff]
  %v85 = vld [vmem:[%s1 + $0x1a8] sm:$0xff]
  %v86 = vld [vmem:[%s1 + $0x1b0] sm:$0xff]
  %v87 = vld [vmem:[%s1 + $0x1b8] sm:$0xff]
  %v88 = vld [vmem:[%s1 + $0x1c0] sm:$0xff]
  %v89 = vld [vmem:[%s1 + $0x1c8] sm:$0xff]
  %v90 = vld [vmem:[%s1 + $0x1d0] sm:$0xff]
  %v91 = vld [vmem:[%s1 + $0x1d8] sm:$0xff]
  %v92 = vld [vmem:[%s1 + $0x1e0] sm:$0xff]
  %v93 = vld [vmem:[%s1 + $0x1e8] sm:$0xff]
  %v94 = vld [vmem:[%s1 + $0x1f0] sm:$0xff]
  %v95 = vld [vmem:[%s1 + $0x1f8] sm:$0xff]
  %v96 = vld [vmem:[%s1 + $0x200] sm:$0xff]
  %v97 = vld [vmem:[%s1 + $0x208] sm:$0xff]
  %v98 = vld [vmem:[%s1 + $0x210] sm:$0xff]
  %v99 = vld [vmem:[%s1 + $0x218] sm:$0xff]
  %v100 = vld [vmem:[%s1 + $0x220] sm:$0xff]
  %v101 = vld [vmem:[%s1 + $0x228] sm:$0xff]
  %v102 = vld [vmem:[%s1 + $0x230] sm:$0xff]
  %v103 = vld [vmem:[%s1 + $0x238] sm:$0xff]
  %v104 = vld [vmem:[%s1 + $0x240] sm:$0xff]
  %v105 = vld [vmem:[%s1 + $0x248] sm:$0xff]
  %v106 = vld [vmem:[%s1 + $0x250] sm:$0xff]
  %v107 = vld [vmem:[%s1 + $0x258] sm:$0xff]
  %v108 = vld [vmem:[%s1 + $0x260] sm:$0xff]
  %v109 = vld [vmem:[%s1 + $0x268] sm:$0xff]
  %v110 = vld [vmem:[%s1 + $0x270] sm:$0xff]
  %v111 = vld [vmem:[%s1 + $0x278] sm:$0xff]
  %v112 = vld [vmem:[%s1 + $0x280] sm:$0xff]
  %v113 = vld [vmem:[%s1 + $0x288] sm:$0xff]
  %v114 = vld [vmem:[%s1 + $0x290] sm:$0xff]
  %v115 = vld [vmem:[%s1 + $0x298] sm:$0xff]
  %v116 = vld [vmem:[%s1 + $0x2a0] sm:$0xff]
  %v117 = vld [vmem:[%s1 + $0x2a8] sm:$0xff]
  %v118 = vld [vmem:[%s1 + $0x2b0] sm:$0xff]
  %v119 = vld [vmem:[%s1 + $0x2b8] sm:$0xff]
  %v120 = vld [vmem:[%s1 + $0x2c0] sm:$0xff]
  %v121 = vld [vmem:[%s1 + $0x2c8] sm:$0xff]
  %v122 = vld [vmem:[%s1 + $0x2d0] sm:$0xff]
  %v123 = vld [vmem:[%s1 + $0x2d8] sm:$0xff]
  %v124 = vld [vmem:[%s1 + $0x2e0] sm:$0xff]
  %v125 = vld [vmem:[%s1 + $0x2e8] sm:$0xff]
  %v126 = vld [vmem:[%s1 + $0x2f0] sm:$0xff]
  %v127 = vld [vmem:[%s1 + $0x2f8] sm:$0xff]
  %v128 = vld [vmem:[%s1 + $0x300] sm:$0xff]
  %v129 = vld [vmem:[%s1 + $0x308] sm:$0xff]
  %v130 = vld [vmem:[%s1 + $0x310] sm:$0xff]
  %v131 = vld [vmem:[%s1 + $0x318] sm:$0xff]
  %v132 = vld [vmem:[%s1 + $0x320] sm:$0xff]
  %v133 = vld [vmem:[%s1 + $0x328] sm:$0xff]
  %v134 = vld [vmem:[%s1 + $0x330] sm:$0xff]
  %v135 = vld [vmem:[%s1 + $0x338] sm:$0xff]
  %v136 = vld [vmem:[%s1 + $0x340] sm:$0xff]
  %v137 = vld [vmem:[%s1 + $0x348] sm:$0xff]
  %v138 = vld [vmem:[%s1 + $0x350] sm:$0xff]
  %v139 = vld [vmem:[%s1 + $0x358] sm:$0xff]
  %v140 = vld [vmem:[%s1 + $0x360] sm:$0xff]
  %v141 = vld [vmem:[%s1 + $0x368] sm:$0xff]
  %v142 = vld [vmem:[%s1 + $0x370] sm:$0xff]
  %v143 = vld [vmem:[%s1 + $0x378] sm:$0xff]
  %v144 = vld [vmem:[%s1 + $0x380] sm:$0xff]
  %v145 = vld [vmem:[%s1 + $0x388] sm:$0xff]
  %v146 = vld [vmem:[%s1 + $0x390] sm:$0xff]
  %v147 = vld [vmem:[%s1 + $0x398] sm:$0xff]
  %v148 = vld [vmem:[%s1 + $0x3a0] sm:$0xff]
  %v149 = vld [vmem:[%s1 + $0x3a8] sm:$0xff]
  %v150 = vld [vmem:[%s1 + $0x3b0] sm:$0xff]
  %v151 = vld [vmem:[%s1 + $0x3b8] sm:$0xff]
  %v152 = vld [vmem:[%s1 + $0x3c0] sm:$0xff]
  %v153 = vld [vmem:[%s1 + $0x3c8] sm:$0xff]
  %v154 = vld [vmem:[%s1 + $0x3d0] sm:$0xff]
  %v155 = vld [vmem:[%s1 + $0x3d8] sm:$0xff]
  %v156 = vld [vmem:[%s1 + $0x3e0] sm:$0xff]
  %v157 = vld [vmem:[%s1 + $0x3e8] sm:$0xff]
  %v158 = vld [vmem:[%s1 + $0x3f0] sm:$0xff]
  %v159 = vld [vmem:[%s1 + $0x3f8] sm:$0xff]
  %v160 = vld [vmem:[%s1 + $0x400] sm:$0xff]
  %v161 = vld [vmem:[%s1 + $0x408] sm:$0xff]
  %v162 = vld [vmem:[%s1 + $0x410] sm:$0xff]
  %v163 = vld [vmem:[%s1 + $0x418] sm:$0xff]
  %v164 = vld [vmem:[%s1 + $0x420] sm:$0xff]
  %v165 = vld [vmem:[%s1 + $0x428] sm:$0xff]
  %v166 = vld [vmem:[%s1 + $0x430] sm:$0xff]
  %v167 = vld [vmem:[%s1 + $0x438] sm:$0xff]
  %v168 = vld [vmem:[%s1 + $0x440] sm:$0xff]
  %v169 = vld [vmem:[%s1 + $0x448] sm:$0xff]
  %v170 = vld [vmem:[%s1 + $0x450] sm:$0xff]
  %v171 = vld [vmem:[%s1 + $0x458] sm:$0xff]
  %v172 = vld [vmem:[%s1 + $0x460] sm:$0xff]
  %v173 = vld [vmem:[%s1 + $0x468] sm:$0xff]
  %v174 = vld [vmem:[%s1 + $0x470] sm:$0xff]
  %v175 = vld [vmem:[%s1 + $0x478] sm:$0xff]
  %v176 = vld [vmem:[%s1 + $0x480] sm:$0xff]
  %v177 = vld [vmem:[%s1 + $0x488] sm:$0xff]
  %v178 = vld [vmem:[%s1 + $0x490] sm:$0xff]
  %v179 = vld [vmem:[%s1 + $0x498] sm:$0xff]
  %v180 = vld [vmem:[%s1 + $0x4a0] sm:$0xff]
  %v181 = vld [vmem:[%s1 + $0x4a8] sm:$0xff]
  %v182 = vld [vmem:[%s1 + $0x4b0] sm:$0xff]
  %v183 = vld [vmem:[%s1 + $0x4b8] sm:$0xff]
  %v184 = vld [vmem:[%s1 + $0x4c0] sm:$0xff]
  %v185 = vld [vmem:[%s1 + $0x4c8] sm:$0xff]
  %v186 = vld [vmem:[%s1 + $0x4d0] sm:$0xff]
  %v187 = vld [vmem:[%s1 + $0x4d8] sm:$0xff]
  %v188 = vld [vmem:[%s1 + $0x4e0] sm:$0xff]
  %v189 = vld [vmem:[%s1 + $0x4e8] sm:$0xff]
  %v190 = vld [vmem:[%s1 + $0x4f0] sm:$0xff]
  %v191 = vld [vmem:[%s1 + $0x4f8] sm:$0xff]
  %v192 = vld [vmem:[%s1 + $0x500] sm:$0xff]
  %v193 = vld [vmem:[%s1 + $0x508] sm:$0xff]
  %v194 = vld [vmem:[%s1 + $0x510] sm:$0xff]
  %v195 = vld [vmem:[%s1 + $0x518] sm:$0xff]
  %v196 = vld [vmem:[%s1 + $0x520] sm:$0xff]
  %v197 = vld [vmem:[%s1 + $0x528] sm:$0xff]
  %v198 = vld [vmem:[%s1 + $0x530] sm:$0xff]
  %v199 = vld [vmem:[%s1 + $0x538] sm:$0xff]
  %v200 = vld [vmem:[%s1 + $0x540] sm:$0xff]
  %v201 = vld [vmem:[%s1 + $0x548] sm:$0xff]
  %v202 = vld [vmem:[%s1 + $0x550] sm:$0xff]
  %v203 = vld [vmem:[%s1 + $0x558] sm:$0xff]
  %v204 = vld [vmem:[%s1 + $0x560] sm:$0xff]
  %v205 = vld [vmem:[%s1 + $0x568] sm:$0xff]
  %v206 = vld [vmem:[%s1 + $0x570] sm:$0xff]
  %v207 = vld [vmem:[%s1 + $0x578] sm:$0xff]
  %v208 = vld [vmem:[%s1 + $0x580] sm:$0xff]
  %v209 = vld [vmem:[%s1 + $0x588] sm:$0xff]
  %v210 = vld [vmem:[%s1 + $0x590] sm:$0xff]
  %v211 = vld [vmem:[%s1 + $0x598] sm:$0xff]
  %v212 = vld [vmem:[%s1 + $0x5a0] sm:$0xff]
  %v213 = vld [vmem:[%s1 + $0x5a8] sm:$0xff]
  %v214 = vld [vmem:[%s1 + $0x5b0] sm:$0xff]
  %v215 = vld [vmem:[%s1 + $0x5b8] sm:$0xff]
  %v216 = vld [vmem:[%s1 + $0x5c0] sm:$0xff]
  %v217 = vld [vmem:[%s1 + $0x5c8] sm:$0xff]
  %v218 = vld [vmem:[%s1 + $0x5d0] sm:$0xff]
  %v219 = vld [vmem:[%s1 + $0x5d8] sm:$0xff]
  %v220 = vld [vmem:[%s1 + $0x5e0] sm:$0xff]
  %v221 = vld [vmem:[%s1 + $0x5e8] sm:$0xff]
  %v222 = vld [vmem:[%s1 + $0x5f0] sm:$0xff]
  %v223 = vld [vmem:[%s1 + $0x5f8] sm:$0xff]
  %v224 = vld [vmem:[%s1 + $0x600] sm:$0xff]
  %v225 = vld [vmem:[%s1 + $0x608] sm:$0xff]
  %v226 = vld [vmem:[%s1 + $0x610] sm:$0xff]
  %v227 = vld [vmem:[%s1 + $0x618] sm:$0xff]
  %v228 = vld [vmem:[%s1 + $0x620] sm:$0xff]
  %v229 = vld [vmem:[%s1 + $0x628] sm:$0xff]
  %v230 = vld [vmem:[%s1 + $0x630] sm:$0xff]
  %v231 = vld [vmem:[%s1 + $0x638] sm:$0xff]
  %v232 = vld [vmem:[%s1 + $0x640] sm:$0xff]
  %v233 = vld [vmem:[%s1 + $0x648] sm:$0xff]
  %v234 = vld [vmem:[%s1 + $0x650] sm:$0xff]
  %v235 = vld [vmem:[%s1 + $0x658] sm:$0xff]
  %v236 = vld [vmem:[%s1 + $0x660] sm:$0xff]
  %v237 = vld [vmem:[%s1 + $0x668] sm:$0xff]
  %v238 = vld [vmem:[%s1 + $0x670] sm:$0xff]
  %v239 = vld [vmem:[%s1 + $0x678] sm:$0xff]
  %v240 = vld [vmem:[%s1 + $0x680] sm:$0xff]
  %v241 = vld [vmem:[%s1 + $0x688] sm:$0xff]
  %v242 = vld [vmem:[%s1 + $0x690] sm:$0xff]
  %v243 = vld [vmem:[%s1 + $0x698] sm:$0xff]
  %v244 = vld [vmem:[%s1 + $0x6a0] sm:$0xff]
  %v245 = vld [vmem:[%s1 + $0x6a8] sm:$0xff]
  %v246 = vld [vmem:[%s1 + $0x6b0] sm:$0xff]
  %v247 = vld [vmem:[%s1 + $0x6b8] sm:$0xff]
  %v248 = vld [vmem:[%s1 + $0x6c0] sm:$0xff]
  %v249 = vld [vmem:[%s1 + $0x6c8] sm:$0xff]
  %v250 = vld [vmem:[%s1 + $0x6d0] sm:$0xff]
  %v251 = vld [vmem:[%s1 + $0x6d8] sm:$0xff]
  %v252 = vld [vmem:[%s1 + $0x6e0] sm:$0xff]
  %v253 = vld [vmem:[%s1 + $0x6e8] sm:$0xff]
  %v254 = vld [vmem:[%s1 + $0x6f0] sm:$0xff]
  %v255 = vld [vmem:[%s1 + $0x6f8] sm:$0xff]
  %v256 = vld [vmem:[%s1 + $0x700] sm:$0xff]
  %v257 = vld [vmem:[%s1 + $0x708] sm:$0xff]
  %v258 = vld [vmem:[%s1 + $0x710] sm:$0xff]
  %v259 = vld [vmem:[%s1 + $0x718] sm:$0xff]
  %v260 = vld [vmem:[%s1 + $0x720] sm:$0xff]
  %v261 = vld [vmem:[%s1 + $0x728] sm:$0xff]
  %v262 = vld [vmem:[%s1 + $0x730] sm:$0xff]
  %v263 = vld [vmem:[%s1 + $0x738] sm:$0xff]
  %v264 = vld [vmem:[%s1 + $0x740] sm:$0xff]
  %v265 = vld [vmem:[%s1 + $0x748] sm:$0xff]
  %v266 = vld [vmem:[%s1 + $0x750] sm:$0xff]
  %v267 = vld [vmem:[%s1 + $0x758] sm:$0xff]
  %v268 = vld [vmem:[%s1 + $0x760] sm:$0xff]
  %v269 = vld [vmem:[%s1 + $0x768] sm:$0xff]
  %v270 = vld [vmem:[%s1 + $0x770] sm:$0xff]
  %v271 = vld [vmem:[%s1 + $0x778] sm:$0xff]
  %v272 = vld [vmem:[%s1 + $0x780] sm:$0xff]
  %v273 = vld [vmem:[%s1 + $0x788] sm:$0xff]
  %v274 = vld [vmem:[%s1 + $0x790] sm:$0xff]
  %v275 = vld [vmem:[%s1 + $0x798] sm:$0xff]
  %v276 = vld [vmem:[%s1 + $0x7a0] sm:$0xff]
  %v277 = vld [vmem:[%s1 + $0x7a8] sm:$0xff]
  %v278 = vld [vmem:[%s1 + $0x7b0] sm:$0xff]
  %v279 = vld [vmem:[%s1 + $0x7b8] sm:$0xff]
  %v280 = vld [vmem:[%s1 + $0x7c0] sm:$0xff]
  %v281 = vld [vmem:[%s1 + $0x7c8] sm:$0xff]
  %v282 = vld [vmem:[%s1 + $0x7d0] sm:$0xff]
  %v283 = vld [vmem:[%s1 + $0x7d8] sm:$0xff]
  %v284 = vld [vmem:[%s1 + $0x7e0] sm:$0xff]
  %v285 = vld [vmem:[%s1 + $0x7e8] sm:$0xff]
  %v286 = vld [vmem:[%s1 + $0x7f0] sm:$0xff]
  %v287 = vld [vmem:[%s1 + $0x7f8] sm:$0xff]
  %v288 = vld [vmem:[%s1 + $0x800] sm:$0xff]
  %v289 = vld [vmem:[%s1 + $0x808] sm:$0xff]
  %v290 = vld [vmem:[%s1 + $0x810] sm:$0xff]
  %v291 = vld [vmem:[%s1 + $0x818] sm:$0xff]
  %v292 = vld [vmem:[%s1 + $0x820] sm:$0xff]
  %v293 = vld [vmem:[%s1 + $0x828] sm:$0xff]
  %v294 = vld [vmem:[%s1 + $0x830] sm:$0xff]
  %v295 = vld [vmem:[%s1 + $0x838] sm:$0xff]
  %v296 = vld [vmem:[%s1 + $0x840] sm:$0xff]
  %v297 = vld [vmem:[%s1 + $0x848] sm:$0xff]
  %v298 = vld [vmem:[%s1 + $0x850] sm:$0xff]
  %v299 = vld [vmem:[%s1 + $0x858] sm:$0xff]
  %v300 = vld [vmem:[%s1 + $0x860] sm:$0xff]
  %v301 = vld [vmem:[%s1 + $0x868] sm:$0xff]
  %v302 = vld [vmem:[%s1 + $0x870] sm:$0xff]
  %v303 = vld [vmem:[%s1 + $0x878] sm:$0xff]
  %v304 = vld [vmem:[%s1 + $0x880] sm:$0xff]
  %v305 = vld [vmem:[%s1 + $0x888] sm:$0xff]
  %v306 = vld [vmem:[%s1 + $0x890] sm:$0xff]
  %v307 = vld [vmem:[%s1 + $0x898] sm:$0xff]
  %v308 = vld [vmem:[%s1 + $0x8a0] sm:$0xff]
  %v309 = vld [vmem:[%s1 + $0x8a8] sm:$0xff]
  %v310 = vld [vmem:[%s1 + $0x8b0] sm:$0xff]
  %v311 = vld [vmem:[%s1 + $0x8b8] sm:$0xff]
  %v312 = vld [vmem:[%s1 + $0x8c0] sm:$0xff]
  %v313 = vld [vmem:[%s1 + $0x8c8] sm:$0xff]
  %v314 = vld [vmem:[%s1 + $0x8d0] sm:$0xff]
  %v315 = vld [vmem:[%s1 + $0x8d8] sm:$0xff]
  %v316 = vld [vmem:[%s1 + $0x8e0] sm:$0xff]
  %v317 = vld [vmem:[%s1 + $0x8e8] sm:$0xff]
  %v318 = vld [vmem:[%s1 + $0x8f0] sm:$0xff]
  %v319 = vld [vmem:[%s1 + $0x8f8] sm:$0xff]
  %v320 = vld [vmem:[%s1 + $0x900] sm:$0xff]
  %v321 = vld [vmem:[%s1 + $0x908] sm:$0xff]
  %v322 = vld [vmem:[%s1 + $0x910] sm:$0xff]
  %v323 = vld [vmem:[%s1 + $0x918] sm:$0xff]
  %v324 = vld [vmem:[%s1 + $0x920] sm:$0xff]
  %v325 = vld [vmem:[%s1 + $0x928] sm:$0xff]
  %v326 = vld [vmem:[%s1 + $0x930] sm:$0xff]
  %v327 = vld [vmem:[%s1 + $0x938] sm:$0xff]
  %v328 = vld [vmem:[%s1 + $0x940] sm:$0xff]
  %v329 = vld [vmem:[%s1 + $0x948] sm:$0xff]
  %v330 = vld [vmem:[%s1 + $0x950] sm:$0xff]
  %v331 = vld [vmem:[%s1 + $0x958] sm:$0xff]
  %v332 = vld [vmem:[%s1 + $0x960] sm:$0xff]
  %v333 = vld [vmem:[%s1 + $0x968] sm:$0xff]
  %v334 = vld [vmem:[%s1 + $0x970] sm:$0xff]
  %v335 = vld [vmem:[%s1 + $0x978] sm:$0xff]
  %v336 = vld [vmem:[%s1 + $0x980] sm:$0xff]
  %v337 = vld [vmem:[%s1 + $0x988] sm:$0xff]
  %v338 = vld [vmem:[%s1 + $0x990] sm:$0xff]
  %v339 = vld [vmem:[%s1 + $0x998] sm:$0xff]
  %v340 = vld [vmem:[%s1 + $0x9a0] sm:$0xff]
  %v341 = vld [vmem:[%s1 + $0x9a8] sm:$0xff]
  %v342 = vld [vmem:[%s1 + $0x9b0] sm:$0xff]
  %v343 = vld [vmem:[%s1 + $0x9b8] sm:$0xff]
  %v344 = vld [vmem:[%s1 + $0x9c0] sm:$0xff]
  %v345 = vld [vmem:[%s1 + $0x9c8] sm:$0xff]
  %v346 = vld [vmem:[%s1 + $0x9d0] sm:$0xff]
  %v347 = vld [vmem:[%s1 + $0x9d8] sm:$0xff]
  %v348 = vld [vmem:[%s1 + $0x9e0] sm:$0xff]
  %v349 = vld [vmem:[%s1 + $0x9e8] sm:$0xff]
  %v350 = vld [vmem:[%s1 + $0x9f0] sm:$0xff]
  %v351 = vld [vmem:[%s1 + $0x9f8] sm:$0xff]
  %v352 = vld [vmem:[%s1 + $0xa00] sm:$0xff]
  %v353 = vld [vmem:[%s1 + $0xa08] sm:$0xff]
  %v354 = vld [vmem:[%s1 + $0xa10] sm:$0xff]
  %v355 = vld [vmem:[%s1 + $0xa18] sm:$0xff]
  %v356 = vld [vmem:[%s1 + $0xa20] sm:$0xff]
  %v357 = vld [vmem:[%s1 + $0xa28] sm:$0xff]
  %v358 = vld [vmem:[%s1 + $0xa30] sm:$0xff]
  %v359 = vld [vmem:[%s1 + $0xa38] sm:$0xff]
  %v360 = vld [vmem:[%s1 + $0xa40] sm:$0xff]
  %v361 = vld [vmem:[%s1 + $0xa48] sm:$0xff]
  %v362 = vld [vmem:[%s1 + $0xa50] sm:$0xff]
  %v363 = vld [vmem:[%s1 + $0xa58] sm:$0xff]
  %v364 = vld [vmem:[%s1 + $0xa60] sm:$0xff]
  %v365 = vld [vmem:[%s1 + $0xa68] sm:$0xff]
  %v366 = vld [vmem:[%s1 + $0xa70] sm:$0xff]
  %v367 = vld [vmem:[%s1 + $0xa78] sm:$0xff]
  %v368 = vld [vmem:[%s1 + $0xa80] sm:$0xff]
  %v369 = vld [vmem:[%s1 + $0xa88] sm:$0xff]
  %v370 = vld [vmem:[%s1 + $0xa90] sm:$0xff]
  %v371 = vld [vmem:[%s1 + $0xa98] sm:$0xff]
  %v372 = vld [vmem:[%s1 + $0xaa0] sm:$0xff]
  %v373 = vld [vmem:[%s1 + $0xaa8] sm:$0xff]
  %v374 = vld [vmem:[%s1 + $0xab0] sm:$0xff]
  %v375 = vld [vmem:[%s1 + $0xab8] sm:$0xff]
  %v376 = vld [vmem:[%s1 + $0xac0] sm:$0xff]
  %v377 = vld [vmem:[%s1 + $0xac8] sm:$0xff]
  %v378 = vld [vmem:[%s1 + $0xad0] sm:$0xff]
  %v379 = vld [vmem:[%s1 + $0xad8] sm:$0xff]
  %v380 = vld [vmem:[%s1 + $0xae0] sm:$0xff]
  %v381 = vld [vmem:[%s1 + $0xae8] sm:$0xff]
  %v382 = vld [vmem:[%s1 + $0xaf0] sm:$0xff]
  %v383 = vld [vmem:[%s1 + $0xaf8] sm:$0xff]
  %v384 = vld [vmem:[%s1 + $0xb00] sm:$0xff]
  %v385 = vld [vmem:[%s1 + $0xb08] sm:$0xff]
  %v386 = vld [vmem:[%s1 + $0xb10] sm:$0xff]
  %v387 = vld [vmem:[%s1 + $0xb18] sm:$0xff]
  %v388 = vld [vmem:[%s1 + $0xb20] sm:$0xff]
  %v389 = vld [vmem:[%s1 + $0xb28] sm:$0xff]
  %v390 = vld [vmem:[%s1 + $0xb30] sm:$0xff]
  %v391 = vld [vmem:[%s1 + $0xb38] sm:$0xff]
  %v392 = vld [vmem:[%s1 + $0xb40] sm:$0xff]
  %v393 = vld [vmem:[%s1 + $0xb48] sm:$0xff]
  %v394 = vld [vmem:[%s1 + $0xb50] sm:$0xff]
  %v395 = vld [vmem:[%s1 + $0xb58] sm:$0xff]
  %v396 = vld [vmem:[%s1 + $0xb60] sm:$0xff]
  %v397 = vld [vmem:[%s1 + $0xb68] sm:$0xff]
  %v398 = vld [vmem:[%s1 + $0xb70] sm:$0xff]
  %v399 = vld [vmem:[%s1 + $0xb78] sm:$0xff]
  %v400 = vld [vmem:[%s1 + $0xb80] sm:$0xff]
  %v401 = vld [vmem:[%s1 + $0xb88] sm:$0xff]
  %v402 = vld [vmem:[%s1 + $0xb90] sm:$0xff]
  %v403 = vld [vmem:[%s1 + $0xb98] sm:$0xff]
  %v404 = vld [vmem:[%s1 + $0xba0] sm:$0xff]
  %v405 = vld [vmem:[%s1 + $0xba8] sm:$0xff]
  %v406 = vld [vmem:[%s1 + $0xbb0] sm:$0xff]
  %v407 = vld [vmem:[%s1 + $0xbb8] sm:$0xff]
  %v408 = vld [vmem:[%s1 + $0xbc0] sm:$0xff]
  %v409 = vld [vmem:[%s1 + $0xbc8] sm:$0xff]
  %v410 = vld [vmem:[%s1 + $0xbd0] sm:$0xff]
  %v411 = vld [vmem:[%s1 + $0xbd8] sm:$0xff]
  %v412 = vld [vmem:[%s1 + $0xbe0] sm:$0xff]
  %v413 = vld [vmem:[%s1 + $0xbe8] sm:$0xff]
  %v414 = vld [vmem:[%s1 + $0xbf0] sm:$0xff]
  %v415 = vld [vmem:[%s1 + $0xbf8] sm:$0xff]
  %v416 = vld [vmem:[%s1 + $0xc00] sm:$0xff]
  %v417 = vld [vmem:[%s1 + $0xc08] sm:$0xff]
  %v418 = vld [vmem:[%s1 + $0xc10] sm:$0xff]
  %v419 = vld [vmem:[%s1 + $0xc18] sm:$0xff]
  %v420 = vld [vmem:[%s1 + $0xc20] sm:$0xff]
  %v421 = vld [vmem:[%s1 + $0xc28] sm:$0xff]
  %v422 = vld [vmem:[%s1 + $0xc30] sm:$0xff]
  %v423 = vld [vmem:[%s1 + $0xc38] sm:$0xff]
  %v424 = vld [vmem:[%s1 + $0xc40] sm:$0xff]
  %v425 = vld [vmem:[%s1 + $0xc48] sm:$0xff]
  %v426 = vld [vmem:[%s1 + $0xc50] sm:$0xff]
  %v427 = vld [vmem:[%s1 + $0xc58] sm:$0xff]
  %v428 = vld [vmem:[%s1 + $0xc60] sm:$0xff]
  %v429 = vld [vmem:[%s1 + $0xc68] sm:$0xff]
  %v430 = vld [vmem:[%s1 + $0xc70] sm:$0xff]
  %v431 = vld [vmem:[%s1 + $0xc78] sm:$0xff]
  %v432 = vld [vmem:[%s1 + $0xc80] sm:$0xff]
  %v433 = vld [vmem:[%s1 + $0xc88] sm:$0xff]
  %v434 = vld [vmem:[%s1 + $0xc90] sm:$0xff]
  %v435 = vld [vmem:[%s1 + $0xc98] sm:$0xff]
  %v436 = vld [vmem:[%s1 + $0xca0] sm:$0xff]
  %v437 = vld [vmem:[%s1 + $0xca8] sm:$0xff]
  %v438 = vld [vmem:[%s1 + $0xcb0] sm:$0xff]
  %v439 = vld [vmem:[%s1 + $0xcb8] sm:$0xff]
  %v440 = vld [vmem:[%s1 + $0xcc0] sm:$0xff]
  %v441 = vld [vmem:[%s1 + $0xcc8] sm:$0xff]
  %v442 = vld [vmem:[%s1 + $0xcd0] sm:$0xff]
  %v443 = vld [vmem:[%s1 + $0xcd8] sm:$0xff]
  %v444 = vld [vmem:[%s1 + $0xce0] sm:$0xff]
  %v445 = vld [vmem:[%s1 + $0xce8] sm:$0xff]
  %v446 = vld [vmem:[%s1 + $0xcf0] sm:$0xff]
  %v447 = vld [vmem:[%s1 + $0xcf8] sm:$0xff]
  %v448 = vld [vmem:[%s1 + $0xd00] sm:$0xff]
  %v449 = vld [vmem:[%s1 + $0xd08] sm:$0xff]
  %v450 = vld [vmem:[%s1 + $0xd10] sm:$0xff]
  %v451 = vld [vmem:[%s1 + $0xd18] sm:$0xff]
  %v452 = vld [vmem:[%s1 + $0xd20] sm:$0xff]
  %v453 = vld [vmem:[%s1 + $0xd28] sm:$0xff]
  %v454 = vld [vmem:[%s1 + $0xd30] sm:$0xff]
  %v455 = vld [vmem:[%s1 + $0xd38] sm:$0xff]
  %v456 = vld [vmem:[%s1 + $0xd40] sm:$0xff]
  %v457 = vld [vmem:[%s1 + $0xd48] sm:$0xff]
  %v458 = vld [vmem:[%s1 + $0xd50] sm:$0xff]
  %v459 = vld [vmem:[%s1 + $0xd58] sm:$0xff]
  %v460 = vld [vmem:[%s1 + $0xd60] sm:$0xff]
  %v461 = vld [vmem:[%s1 + $0xd68] sm:$0xff]
  %v462 = vld [vmem:[%s1 + $0xd70] sm:$0xff]
  %v463 = vld [vmem:[%s1 + $0xd78] sm:$0xff]
  %v464 = vld [vmem:[%s1 + $0xd80] sm:$0xff]
  %v465 = vld [vmem:[%s1 + $0xd88] sm:$0xff]
  %v466 = vld [vmem:[%s1 + $0xd90] sm:$0xff]
  %v467 = vld [vmem:[%s1 + $0xd98] sm:$0xff]
  %v468 = vld [vmem:[%s1 + $0xda0] sm:$0xff]
  %v469 = vld [vmem:[%s1 + $0xda8] sm:$0xff]
  %v470 = vld [vmem:[%s1 + $0xdb0] sm:$0xff]
  %v471 = vld [vmem:[%s1 + $0xdb8] sm:$0xff]
  %v472 = vld [vmem:[%s1 + $0xdc0] sm:$0xff]
  %v473 = vld [vmem:[%s1 + $0xdc8] sm:$0xff]
  %v474 = vld [vmem:[%s1 + $0xdd0] sm:$0xff]
  %v475 = vld [vmem:[%s1 + $0xdd8] sm:$0xff]
  %v476 = vld [vmem:[%s1 + $0xde0] sm:$0xff]
  %v477 = vld [vmem:[%s1 + $0xde8] sm:$0xff]
  %v478 = vld [vmem:[%s1 + $0xdf0] sm:$0xff]
  %v479 = vld [vmem:[%s1 + $0xdf8] sm:$0xff]
  %v480 = vld [vmem:[%s1 + $0xe00] sm:$0xff]
  %v481 = vld [vmem:[%s1 + $0xe08] sm:$0xff]
  %v482 = vld [vmem:[%s1 + $0xe10] sm:$0xff]
  %v483 = vld [vmem:[%s1 + $0xe18] sm:$0xff]
  %v484 = vld [vmem:[%s1 + $0xe20] sm:$0xff]
  %v485 = vld [vmem:[%s1 + $0xe28] sm:$0xff]
  %v486 = vld [vmem:[%s1 + $0xe30] sm:$0xff]
  %v487 = vld [vmem:[%s1 + $0xe38] sm:$0xff]
  %v488 = vld [vmem:[%s1 + $0xe40] sm:$0xff]
  %v489 = vld [vmem:[%s1 + $0xe48] sm:$0xff]
  %v490 = vld [vmem:[%s1 + $0xe50] sm:$0xff]
  %v491 = vld [vmem:[%s1 + $0xe58] sm:$0xff]
  %v492 = vld [vmem:[%s1 + $0xe60] sm:$0xff]
  %v493 = vld [vmem:[%s1 + $0xe68] sm:$0xff]
  %v494 = vld [vmem:[%s1 + $0xe70] sm:$0xff]
  %v495 = vld [vmem:[%s1 + $0xe78] sm:$0xff]
  %v496 = vld [vmem:[%s1 + $0xe80] sm:$0xff]
  %v497 = vld [vmem:[%s1 + $0xe88] sm:$0xff]
  %v498 = vld [vmem:[%s1 + $0xe90] sm:$0xff]
  %v499 = vld [vmem:[%s1 + $0xe98] sm:$0xff]
  %v500 = vld [vmem:[%s1 + $0xea0] sm:$0xff]
  %v501 = vld [vmem:[%s1 + $0xea8] sm:$0xff]
  %v502 = vld [vmem:[%s1 + $0xeb0] sm:$0xff]
  %v503 = vld [vmem:[%s1 + $0xeb8] sm:$0xff]
  %v504 = vld [vmem:[%s1 + $0xec0] sm:$0xff]
  %v505 = vld [vmem:[%s1 + $0xec8] sm:$0xff]
  %v506 = vld [vmem:[%s1 + $0xed0] sm:$0xff]
  %v507 = vld [vmem:[%s1 + $0xed8] sm:$0xff]
  %v508 = vld [vmem:[%s1 + $0xee0] sm:$0xff]
  %v509 = vld [vmem:[%s1 + $0xee8] sm:$0xff]
  %v510 = vld [vmem:[%s1 + $0xef0] sm:$0xff]
  %v511 = vld [vmem:[%s1 + $0xef8] sm:$0xff]
  %v512 = vld [vmem:[%s1 + $0xf00] sm:$0xff]
  %v513 = vld [vmem:[%s1 + $0xf08] sm:$0xff]
  %v514 = vld [vmem:[%s1 + $0xf10] sm:$0xff]
  %v515 = vld [vmem:[%s1 + $0xf18] sm:$0xff]
  %v516 = vld [vmem:[%s1 + $0xf20] sm:$0xff]
  %v517 = vld [vmem:[%s1 + $0xf28] sm:$0xff]
  %v518 = vld [vmem:[%s1 + $0xf30] sm:$0xff]
  %v519 = vld [vmem:[%s1 + $0xf38] sm:$0xff]
  %v520 = vld [vmem:[%s1 + $0xf40] sm:$0xff]
  %v521 = vld [vmem:[%s1 + $0xf48] sm:$0xff]
  %v522 = vld [vmem:[%s1 + $0xf50] sm:$0xff]
  %v523 = vld [vmem:[%s1 + $0xf58] sm:$0xff]
  %v524 = vld [vmem:[%s1 + $0xf60] sm:$0xff]
  %v525 = vld [vmem:[%s1 + $0xf68] sm:$0xff]
  %v526 = vld [vmem:[%s1 + $0xf70] sm:$0xff]
  %v527 = vld [vmem:[%s1 + $0xf78] sm:$0xff]
  %v528 = vld [vmem:[%s1 + $0xf80] sm:$0xff]
  %v529 = vld [vmem:[%s1 + $0xf88] sm:$0xff]
  %v530 = vld [vmem:[%s1 + $0xf90] sm:$0xff]
  %v531 = vld [vmem:[%s1 + $0xf98] sm:$0xff]
  %v532 = vld [vmem:[%s1 + $0xfa0] sm:$0xff]
  %v533 = vld [vmem:[%s1 + $0xfa8] sm:$0xff]
  %v534 = vld [vmem:[%s1 + $0xfb0] sm:$0xff]
  %v535 = vld [vmem:[%s1 + $0xfb8] sm:$0xff]
  %v536 = vld [vmem:[%s1 + $0xfc0] sm:$0xff]
  %v537 = vld [vmem:[%s1 + $0xfc8] sm:$0xff]
  %v538 = vld [vmem:[%s1 + $0xfd0] sm:$0xff]
  %v539 = vld [vmem:[%s1 + $0xfd8] sm:$0xff]
  %v540 = vld [vmem:[%s1 + $0xfe0] sm:$0xff]
  %v541 = vld [vmem:[%s1 + $0xfe8] sm:$0xff]
  %v542 = vld [vmem:[%s1 + $0xff0] sm:$0xff]
  %v543 = vld [vmem:[%s1 + $0xff8] sm:$0xff]
  %v544 = vld [vmem:[%s1 + $0x1000] sm:$0xff]
  %v545 = vld [vmem:[%s1 + $0x1008] sm:$0xff]
  %v546 = vld [vmem:[%s1 + $0x1010] sm:$0xff]
  %v547 = vld [vmem:[%s1 + $0x1018] sm:$0xff]
  %v548 = vld [vmem:[%s1 + $0x1020] sm:$0xff]
  %v549 = vld [vmem:[%s1 + $0x1028] sm:$0xff]
  %v550 = vld [vmem:[%s1 + $0x1030] sm:$0xff]
  %v551 = vld [vmem:[%s1 + $0x1038] sm:$0xff]
  %v552 = vld [vmem:[%s1 + $0x1040] sm:$0xff]
  %v553 = vld [vmem:[%s1 + $0x1048] sm:$0xff]
  %v554 = vld [vmem:[%s1 + $0x1050] sm:$0xff]
  %v555 = vld [vmem:[%s1 + $0x1058] sm:$0xff]
  %v556 = vld [vmem:[%s1 + $0x1060] sm:$0xff]
  %v557 = vld [vmem:[%s1 + $0x1068] sm:$0xff]
  %v558 = vld [vmem:[%s1 + $0x1070] sm:$0xff]
  %v559 = vld [vmem:[%s1 + $0x1078] sm:$0xff]
  %v560 = vld [vmem:[%s1 + $0x1080] sm:$0xff]
  %v561 = vld [vmem:[%s1 + $0x1088] sm:$0xff]
  %v562 = vld [vmem:[%s1 + $0x1090] sm:$0xff]
  %v563 = vld [vmem:[%s1 + $0x1098] sm:$0xff]
  %v564 = vld [vmem:[%s1 + $0x10a0] sm:$0xff]
  %v565 = vld [vmem:[%s1 + $0x10a8] sm:$0xff]
  %v566 = vld [vmem:[%s1 + $0x10b0] sm:$0xff]
  %v567 = vld [vmem:[%s1 + $0x10b8] sm:$0xff]
  %v568 = vld [vmem:[%s1 + $0x10c0] sm:$0xff]
  %v569 = vld [vmem:[%s1 + $0x10c8] sm:$0xff]
  %v570 = vld [vmem:[%s1 + $0x10d0] sm:$0xff]
  %v571 = vld [vmem:[%s1 + $0x10d8] sm:$0xff]
  %v572 = vld [vmem:[%s1 + $0x10e0] sm:$0xff]
  %v573 = vld [vmem:[%s1 + $0x10e8] sm:$0xff]
  %v574 = vld [vmem:[%s1 + $0x10f0] sm:$0xff]
  %v575 = vld [vmem:[%s1 + $0x10f8] sm:$0xff]
  %v576 = vld [vmem:[%s1 + $0x1100] sm:$0xff]
  %v577 = vld [vmem:[%s1 + $0x1108] sm:$0xff]
  %v578 = vld [vmem:[%s1 + $0x1110] sm:$0xff]
  %v579 = vld [vmem:[%s1 + $0x1118] sm:$0xff]
  %v580 = vld [vmem:[%s1 + $0x1120] sm:$0xff]
  %v581 = vld [vmem:[%s1 + $0x1128] sm:$0xff]
  %v582 = vld [vmem:[%s1 + $0x1130] sm:$0xff]
  %v583 = vld [vmem:[%s1 + $0x1138] sm:$0xff]
  %v584 = vld [vmem:[%s1 + $0x1140] sm:$0xff]
  %v585 = vld [vmem:[%s1 + $0x1148] sm:$0xff]
  %v586 = vld [vmem:[%s1 + $0x1150] sm:$0xff]
  %v587 = vld [vmem:[%s1 + $0x1158] sm:$0xff]
  %v588 = vld [vmem:[%s1 + $0x1160] sm:$0xff]
  %v589 = vld [vmem:[%s1 + $0x1168] sm:$0xff]
  %v590 = vld [vmem:[%s1 + $0x1170] sm:$0xff]
  %v591 = vld [vmem:[%s1 + $0x1178] sm:$0xff]
  %v592 = vld [vmem:[%s1 + $0x1180] sm:$0xff]
  %v593 = vld [vmem:[%s1 + $0x1188] sm:$0xff]
  %v594 = vld [vmem:[%s1 + $0x1190] sm:$0xff]
  %v595 = vld [vmem:[%s1 + $0x1198] sm:$0xff]
  %v596 = vld [vmem:[%s1 + $0x11a0] sm:$0xff]
  %v597 = vld [vmem:[%s1 + $0x11a8] sm:$0xff]
  %v598 = vld [vmem:[%s1 + $0x11b0] sm:$0xff]
  %v599 = vld [vmem:[%s1 + $0x11b8] sm:$0xff]
  %v600 = vld [vmem:[%s1 + $0x11c0] sm:$0xff]
  %v601 = vld [vmem:[%s1 + $0x11c8] sm:$0xff]
  %v602 = vld [vmem:[%s1 + $0x11d0] sm:$0xff]
  %v603 = vld [vmem:[%s1 + $0x11d8] sm:$0xff]
  %v604 = vld [vmem:[%s1 + $0x11e0] sm:$0xff]
  %v605 = vld [vmem:[%s1 + $0x11e8] sm:$0xff]
  %v606 = vld [vmem:[%s1 + $0x11f0] sm:$0xff]
  %v607 = vld [vmem:[%s1 + $0x11f8] sm:$0xff]
  %v608 = vld [vmem:[%s1 + $0x1200] sm:$0xff]
  %v609 = vld [vmem:[%s1 + $0x1208] sm:$0xff]
  %v610 = vld [vmem:[%s1 + $0x1210] sm:$0xff]
  %v611 = vld [vmem:[%s1 + $0x1218] sm:$0xff]
  %v612 = vld [vmem:[%s1 + $0x1220] sm:$0xff]
  %v613 = vld [vmem:[%s1 + $0x1228] sm:$0xff]
  %v614 = vld [vmem:[%s1 + $0x1230] sm:$0xff]
  %v615 = vld [vmem:[%s1 + $0x1238] sm:$0xff]
  %v616 = vld [vmem:[%s1 + $0x1240] sm:$0xff]
  %v617 = vld [vmem:[%s1 + $0x1248] sm:$0xff]
  %v618 = vld [vmem:[%s1 + $0x1250] sm:$0xff]
  %v619 = vld [vmem:[%s1 + $0x1258] sm:$0xff]
  %v620 = vld [vmem:[%s1 + $0x1260] sm:$0xff]
  %v621 = vld [vmem:[%s1 + $0x1268] sm:$0xff]
  %v622 = vld [vmem:[%s1 + $0x1270] sm:$0xff]
  %v623 = vld [vmem:[%s1 + $0x1278] sm:$0xff]
  %v624 = vld [vmem:[%s1 + $0x1280] sm:$0xff]
  %v625 = vld [vmem:[%s1 + $0x1288] sm:$0xff]
  %v626 = vld [vmem:[%s1 + $0x1290] sm:$0xff]
  %v627 = vld [vmem:[%s1 + $0x1298] sm:$0xff]
  %v628 = vld [vmem:[%s1 + $0x12a0] sm:$0xff]
  %v629 = vld [vmem:[%s1 + $0x12a8] sm:$0xff]
  %v630 = vld [vmem:[%s1 + $0x12b0] sm:$0xff]
  %v631 = vld [vmem:[%s1 + $0x12b8] sm:$0xff]
  %v632 = vld [vmem:[%s1 + $0x12c0] sm:$0xff]
  %v633 = vld [vmem:[%s1 + $0x12c8] sm:$0xff]
  %v634 = vld [vmem:[%s1 + $0x12d0] sm:$0xff]
  %v635 = vld [vmem:[%s1 + $0x12d8] sm:$0xff]
  %v636 = vld [vmem:[%s1 + $0x12e0] sm:$0xff]
  %v637 = vld [vmem:[%s1 + $0x12e8] sm:$0xff]
  %v638 = vld [vmem:[%s1 + $0x12f0] sm:$0xff]
  %v639 = vld [vmem:[%s1 + $0x12f8] sm:$0xff]
  %v640 = vld [vmem:[%s1 + $0x1300] sm:$0xff]
  %v641 = vld [vmem:[%s1 + $0x1308] sm:$0xff]
  %v642 = vld [vmem:[%s1 + $0x1310] sm:$0xff]
  %v643 = vld [vmem:[%s1 + $0x1318] sm:$0xff]
  %v644 = vld [vmem:[%s1 + $0x1320] sm:$0xff]
  %v645 = vld [vmem:[%s1 + $0x1328] sm:$0xff]
  %v646 = vld [vmem:[%s1 + $0x1330] sm:$0xff]
  %v647 = vld [vmem:[%s1 + $0x1338] sm:$0xff]
  %v648 = vld [vmem:[%s1 + $0x1340] sm:$0xff]
  %v649 = vld [vmem:[%s1 + $0x1348] sm:$0xff]
  %v650 = vld [vmem:[%s1 + $0x1350] sm:$0xff]
  %v651 = vld [vmem:[%s1 + $0x1358] sm:$0xff]
  %v652 = vld [vmem:[%s1 + $0x1360] sm:$0xff]
  %v653 = vld [vmem:[%s1 + $0x1368] sm:$0xff]
  %v654 = vld [vmem:[%s1 + $0x1370] sm:$0xff]
  %v655 = vld [vmem:[%s1 + $0x1378] sm:$0xff]
  %v656 = vld [vmem:[%s1 + $0x1380] sm:$0xff]
  %v657 = vld [vmem:[%s1 + $0x1388] sm:$0xff]
  %v658 = vld [vmem:[%s1 + $0x1390] sm:$0xff]
  %v659 = vld [vmem:[%s1 + $0x1398] sm:$0xff]
  %v660 = vld [vmem:[%s1 + $0x13a0] sm:$0xff]
  %v661 = vld [vmem:[%s1 + $0x13a8] sm:$0xff]
  %v662 = vld [vmem:[%s1 + $0x13b0] sm:$0xff]
  %v663 = vld [vmem:[%s1 + $0x13b8] sm:$0xff]
  %v664 = vld [vmem:[%s1 + $0x13c0] sm:$0xff]
  %v665 = vld [vmem:[%s1 + $0x13c8] sm:$0xff]
  %v666 = vld [vmem:[%s1 + $0x13d0] sm:$0xff]
  %v667 = vld [vmem:[%s1 + $0x13d8] sm:$0xff]
  %v668 = vld [vmem:[%s1 + $0x13e0] sm:$0xff]
  %v669 = vld [vmem:[%s1 + $0x13e8] sm:$0xff]
  %v670 = vld [vmem:[%s1 + $0x13f0] sm:$0xff]
  %v671 = vld [vmem:[%s1 + $0x13f8] sm:$0xff]
  %v672 = vld [vmem:[%s1 + $0x1400] sm:$0xff]
  %v673 = vld [vmem:[%s1 + $0x1408] sm:$0xff]
  %v674 = vld [vmem:[%s1 + $0x1410] sm:$0xff]
  %v675 = vld [vmem:[%s1 + $0x1418] sm:$0xff]
  %v676 = vld [vmem:[%s1 + $0x1420] sm:$0xff]
  %v677 = vld [vmem:[%s1 + $0x1428] sm:$0xff]
  %v678 = vld [vmem:[%s1 + $0x1430] sm:$0xff]
  %v679 = vld [vmem:[%s1 + $0x1438] sm:$0xff]
  %v680 = vld [vmem:[%s1 + $0x1440] sm:$0xff]
  %v681 = vld [vmem:[%s1 + $0x1448] sm:$0xff]
  %v682 = vld [vmem:[%s1 + $0x1450] sm:$0xff]
  %v683 = vld [vmem:[%s1 + $0x1458] sm:$0xff]
  %v684 = vld [vmem:[%s1 + $0x1460] sm:$0xff]
  %v685 = vld [vmem:[%s1 + $0x1468] sm:$0xff]
  %v686 = vld [vmem:[%s1 + $0x1470] sm:$0xff]
  %v687 = vld [vmem:[%s1 + $0x1478] sm:$0xff]
  %v688 = vld [vmem:[%s1 + $0x1480] sm:$0xff]
  %v689 = vld [vmem:[%s1 + $0x1488] sm:$0xff]
  %v690 = vld [vmem:[%s1 + $0x1490] sm:$0xff]
  %v691 = vld [vmem:[%s1 + $0x1498] sm:$0xff]
  %v692 = vld [vmem:[%s1 + $0x14a0] sm:$0xff]
  %v693 = vld [vmem:[%s1 + $0x14a8] sm:$0xff]
  %v694 = vld [vmem:[%s1 + $0x14b0] sm:$0xff]
  %v695 = vld [vmem:[%s1 + $0x14b8] sm:$0xff]
  %v696 = vld [vmem:[%s1 + $0x14c0] sm:$0xff]
  %v697 = vld [vmem:[%s1 + $0x14c8] sm:$0xff]
  %v698 = vld [vmem:[%s1 + $0x14d0] sm:$0xff]
  %v699 = vld [vmem:[%s1 + $0x14d8] sm:$0xff]
  %v700 = vld [vmem:[%s1 + $0x14e0] sm:$0xff]
  %v701 = vld [vmem:[%s1 + $0x14e8] sm:$0xff]
  %v702 = vld [vmem:[%s1 + $0x14f0] sm:$0xff]
  %v703 = vld [vmem:[%s1 + $0x14f8] sm:$0xff]
  %v704 = vld [vmem:[%s1 + $0x1500] sm:$0xff]
  %v705 = vld [vmem:[%s1 + $0x1508] sm:$0xff]
  %v706 = vld [vmem:[%s1 + $0x1510] sm:$0xff]
  %v707 = vld [vmem:[%s1 + $0x1518] sm:$0xff]
  %v708 = vld [vmem:[%s1 + $0x1520] sm:$0xff]
  %v709 = vld [vmem:[%s1 + $0x1528] sm:$0xff]
  %v710 = vld [vmem:[%s1 + $0x1530] sm:$0xff]
  %v711 = vld [vmem:[%s1 + $0x1538] sm:$0xff]
  %v712 = vld [vmem:[%s1 + $0x1540] sm:$0xff]
  %v713 = vld [vmem:[%s1 + $0x1548] sm:$0xff]
  %v714 = vld [vmem:[%s1 + $0x1550] sm:$0xff]
  %v715 = vld [vmem:[%s1 + $0x1558] sm:$0xff]
  %v716 = vld [vmem:[%s1 + $0x1560] sm:$0xff]
  %v717 = vld [vmem:[%s1 + $0x1568] sm:$0xff]
  %v718 = vld [vmem:[%s1 + $0x1570] sm:$0xff]
  %v719 = vld [vmem:[%s1 + $0x1578] sm:$0xff]
  %v720 = vld [vmem:[%s1 + $0x1580] sm:$0xff]
  %v721 = vld [vmem:[%s1 + $0x1588] sm:$0xff]
  %v722 = vld [vmem:[%s1 + $0x1590] sm:$0xff]
  %v723 = vld [vmem:[%s1 + $0x1598] sm:$0xff]
  %v724 = vld [vmem:[%s1 + $0x15a0] sm:$0xff]
  %v725 = vld [vmem:[%s1 + $0x15a8] sm:$0xff]
  %v726 = vld [vmem:[%s1 + $0x15b0] sm:$0xff]
  %v727 = vld [vmem:[%s1 + $0x15b8] sm:$0xff]
  %v728 = vld [vmem:[%s1 + $0x15c0] sm:$0xff]
  %v729 = vld [vmem:[%s1 + $0x15c8] sm:$0xff]
  %v730 = vld [vmem:[%s1 + $0x15d0] sm:$0xff]
  %v731 = vld [vmem:[%s1 + $0x15d8] sm:$0xff]
  %v732 = vld [vmem:[%s1 + $0x15e0] sm:$0xff]
  %v733 = vld [vmem:[%s1 + $0x15e8] sm:$0xff]
  %v734 = vld [vmem:[%s1 + $0x15f0] sm:$0xff]
  %v735 = vld [vmem:[%s1 + $0x15f8] sm:$0xff]
  %v736 = vld [vmem:[%s1 + $0x1600] sm:$0xff]
  %v737 = vld [vmem:[%s1 + $0x1608] sm:$0xff]
  %v738 = vld [vmem:[%s1 + $0x1610] sm:$0xff]
  %v739 = vld [vmem:[%s1 + $0x1618] sm:$0xff]
  %v740 = vld [vmem:[%s1 + $0x1620] sm:$0xff]
  %v741 = vld [vmem:[%s1 + $0x1628] sm:$0xff]
  %v742 = vld [vmem:[%s1 + $0x1630] sm:$0xff]
  %v743 = vld [vmem:[%s1 + $0x1638] sm:$0xff]
  %v744 = vld [vmem:[%s1 + $0x1640] sm:$0xff]
  %v745 = vld [vmem:[%s1 + $0x1648] sm:$0xff]
  %v746 = vld [vmem:[%s1 + $0x1650] sm:$0xff]
  %v747 = vld [vmem:[%s1 + $0x1658] sm:$0xff]
  %v748 = vld [vmem:[%s1 + $0x1660] sm:$0xff]
  %v749 = vld [vmem:[%s1 + $0x1668] sm:$0xff]
  %v750 = vld [vmem:[%s1 + $0x1670] sm:$0xff]
  %v751 = vld [vmem:[%s1 + $0x1678] sm:$0xff]
  %v752 = vld [vmem:[%s1 + $0x1680] sm:$0xff]
  %v753 = vld [vmem:[%s1 + $0x1688] sm:$0xff]
  %v754 = vld [vmem:[%s1 + $0x1690] sm:$0xff]
  %v755 = vld [vmem:[%s1 + $0x1698] sm:$0xff]
  %v756 = vld [vmem:[%s1 + $0x16a0] sm:$0xff]
  %v757 = vld [vmem:[%s1 + $0x16a8] sm:$0xff]
  %v758 = vld [vmem:[%s1 + $0x16b0] sm:$0xff]
  %v759 = vld [vmem:[%s1 + $0x16b8] sm:$0xff]
  %v760 = vld [vmem:[%s1 + $0x16c0] sm:$0xff]
  %v761 = vld [vmem:[%s1 + $0x16c8] sm:$0xff]
  %v762 = vld [vmem:[%s1 + $0x16d0] sm:$0xff]
  %v763 = vld [vmem:[%s1 + $0x16d8] sm:$0xff]
  %v764 = vld [vmem:[%s1 + $0x16e0] sm:$0xff]
  %v765 = vld [vmem:[%s1 + $0x16e8] sm:$0xff]
  %v766 = vld [vmem:[%s1 + $0x16f0] sm:$0xff]
  %v767 = vld [vmem:[%s1 + $0x16f8] sm:$0xff]
  %v768 = vld [vmem:[%s1 + $0x1700] sm:$0xff]
  %v769 = vld [vmem:[%s1 + $0x1708] sm:$0xff]
  %v770 = vld [vmem:[%s1 + $0x1710] sm:$0xff]
  %v771 = vld [vmem:[%s1 + $0x1718] sm:$0xff]
  %v772 = vld [vmem:[%s1 + $0x1720] sm:$0xff]
  %v773 = vld [vmem:[%s1 + $0x1728] sm:$0xff]
  %v774 = vld [vmem:[%s1 + $0x1730] sm:$0xff]
  %v775 = vld [vmem:[%s1 + $0x1738] sm:$0xff]
  %v776 = vld [vmem:[%s1 + $0x1740] sm:$0xff]
  %v777 = vld [vmem:[%s1 + $0x1748] sm:$0xff]
  %v778 = vld [vmem:[%s1 + $0x1750] sm:$0xff]
  %v779 = vld [vmem:[%s1 + $0x1758] sm:$0xff]
  %v780 = vld [vmem:[%s1 + $0x1760] sm:$0xff]
  %v781 = vld [vmem:[%s1 + $0x1768] sm:$0xff]
  %v782 = vld [vmem:[%s1 + $0x1770] sm:$0xff]
  %v783 = vld [vmem:[%s1 + $0x1778] sm:$0xff]
  %v784 = vld [vmem:[%s1 + $0x1780] sm:$0xff]
  %v785 = vld [vmem:[%s1 + $0x1788] sm:$0xff]
  %v786 = vld [vmem:[%s1 + $0x1790] sm:$0xff]
  %v787 = vld [vmem:[%s1 + $0x1798] sm:$0xff]
  %v788 = vld [vmem:[%s1 + $0x17a0] sm:$0xff]
  %v789 = vld [vmem:[%s1 + $0x17a8] sm:$0xff]
  %v790 = vld [vmem:[%s1 + $0x17b0] sm:$0xff]
  %v791 = vld [vmem:[%s1 + $0x17b8] sm:$0xff]
  %v792 = vld [vmem:[%s1 + $0x17c0] sm:$0xff]
  %v793 = vld [vmem:[%s1 + $0x17c8] sm:$0xff]
  %v794 = vld [vmem:[%s1 + $0x17d0] sm:$0xff]
  %v795 = vld [vmem:[%s1 + $0x17d8] sm:$0xff]
  %v796 = vld [vmem:[%s1 + $0x17e0] sm:$0xff]
  %v797 = vld [vmem:[%s1 + $0x17e8] sm:$0xff]
  %v798 = vld [vmem:[%s1 + $0x17f0] sm:$0xff]
  %v799 = vld [vmem:[%s1 + $0x17f8] sm:$0xff]
  %v800 = vld [vmem:[%s1 + $0x1800] sm:$0xff]
  %v801 = vld [vmem:[%s1 + $0x1808] sm:$0xff]
  %v802 = vld [vmem:[%s1 + $0x1810] sm:$0xff]
  %v803 = vld [vmem:[%s1 + $0x1818] sm:$0xff]
  %v804 = vld [vmem:[%s1 + $0x1820] sm:$0xff]
  %v805 = vld [vmem:[%s1 + $0x1828] sm:$0xff]
  %v806 = vld [vmem:[%s1 + $0x1830] sm:$0xff]
  %v807 = vld [vmem:[%s1 + $0x1838] sm:$0xff]
  %v808 = vld [vmem:[%s1 + $0x1840] sm:$0xff]
  %v809 = vld [vmem:[%s1 + $0x1848] sm:$0xff]
  %v810 = vld [vmem:[%s1 + $0x1850] sm:$0xff]
  %v811 = vld [vmem:[%s1 + $0x1858] sm:$0xff]
  %v812 = vld [vmem:[%s1 + $0x1860] sm:$0xff]
  %v813 = vld [vmem:[%s1 + $0x1868] sm:$0xff]
  %v814 = vld [vmem:[%s1 + $0x1870] sm:$0xff]
  %v815 = vld [vmem:[%s1 + $0x1878] sm:$0xff]
  %v816 = vld [vmem:[%s1 + $0x1880] sm:$0xff]
  %v817 = vld [vmem:[%s1 + $0x1888] sm:$0xff]
  %v818 = vld [vmem:[%s1 + $0x1890] sm:$0xff]
  %v819 = vld [vmem:[%s1 + $0x1898] sm:$0xff]
  %v820 = vld [vmem:[%s1 + $0x18a0] sm:$0xff]
  %v821 = vld [vmem:[%s1 + $0x18a8] sm:$0xff]
  %v822 = vld [vmem:[%s1 + $0x18b0] sm:$0xff]
  %v823 = vld [vmem:[%s1 + $0x18b8] sm:$0xff]
  %v824 = vld [vmem:[%s1 + $0x18c0] sm:$0xff]
  %v825 = vld [vmem:[%s1 + $0x18c8] sm:$0xff]
  %v826 = vld [vmem:[%s1 + $0x18d0] sm:$0xff]
  %v827 = vld [vmem:[%s1 + $0x18d8] sm:$0xff]
  %v828 = vld [vmem:[%s1 + $0x18e0] sm:$0xff]
  %v829 = vld [vmem:[%s1 + $0x18e8] sm:$0xff]
  %v830 = vld [vmem:[%s1 + $0x18f0] sm:$0xff]
  %v831 = vld [vmem:[%s1 + $0x18f8] sm:$0xff]
  %v832 = vld [vmem:[%s1 + $0x1900] sm:$0xff]
  %v833 = vld [vmem:[%s1 + $0x1908] sm:$0xff]
  %v834 = vld [vmem:[%s1 + $0x1910] sm:$0xff]
  %v835 = vld [vmem:[%s1 + $0x1918] sm:$0xff]
  %v836 = vld [vmem:[%s1 + $0x1920] sm:$0xff]
  %v837 = vld [vmem:[%s1 + $0x1928] sm:$0xff]
  %v838 = vld [vmem:[%s1 + $0x1930] sm:$0xff]
  %v839 = vld [vmem:[%s1 + $0x1938] sm:$0xff]
  %v840 = vld [vmem:[%s1 + $0x1940] sm:$0xff]
  %v841 = vld [vmem:[%s1 + $0x1948] sm:$0xff]
  %v842 = vld [vmem:[%s1 + $0x1950] sm:$0xff]
  %v843 = vld [vmem:[%s1 + $0x1958] sm:$0xff]
  %v844 = vld [vmem:[%s1 + $0x1960] sm:$0xff]
  %v845 = vld [vmem:[%s1 + $0x1968] sm:$0xff]
  %v846 = vld [vmem:[%s1 + $0x1970] sm:$0xff]
  %v847 = vld [vmem:[%s1 + $0x1978] sm:$0xff]
  %v848 = vld [vmem:[%s1 + $0x1980] sm:$0xff]
  %v849 = vld [vmem:[%s1 + $0x1988] sm:$0xff]
  %v850 = vld [vmem:[%s1 + $0x1990] sm:$0xff]
  %v851 = vld [vmem:[%s1 + $0x1998] sm:$0xff]
  %v852 = vld [vmem:[%s1 + $0x19a0] sm:$0xff]
  %v853 = vld [vmem:[%s1 + $0x19a8] sm:$0xff]
  %v854 = vld [vmem:[%s1 + $0x19b0] sm:$0xff]
  %v855 = vld [vmem:[%s1 + $0x19b8] sm:$0xff]
  %v856 = vld [vmem:[%s1 + $0x19c0] sm:$0xff]
  %v857 = vld [vmem:[%s1 + $0x19c8] sm:$0xff]
  %v858 = vld [vmem:[%s1 + $0x19d0] sm:$0xff]
  %v859 = vld [vmem:[%s1 + $0x19d8] sm:$0xff]
  %v860 = vld [vmem:[%s1 + $0x19e0] sm:$0xff]
  %v861 = vld [vmem:[%s1 + $0x19e8] sm:$0xff]
  %v862 = vld [vmem:[%s1 + $0x19f0] sm:$0xff]
  %v863 = vld [vmem:[%s1 + $0x19f8] sm:$0xff]
  %v864 = vld [vmem:[%s1 + $0x1a00] sm:$0xff]
  %v865 = vld [vmem:[%s1 + $0x1a08] sm:$0xff]
  %v866 = vld [vmem:[%s1 + $0x1a10] sm:$0xff]
  %v867 = vld [vmem:[%s1 + $0x1a18] sm:$0xff]
  %v868 = vld [vmem:[%s1 + $0x1a20] sm:$0xff]
  %v869 = vld [vmem:[%s1 + $0x1a28] sm:$0xff]
  %v870 = vld [vmem:[%s1 + $0x1a30] sm:$0xff]
  %v871 = vld [vmem:[%s1 + $0x1a38] sm:$0xff]
  %v872 = vld [vmem:[%s1 + $0x1a40] sm:$0xff]
  %v873 = vld [vmem:[%s1 + $0x1a48] sm:$0xff]
  %v874 = vld [vmem:[%s1 + $0x1a50] sm:$0xff]
  %v875 = vld [vmem:[%s1 + $0x1a58] sm:$0xff]
  %v876 = vld [vmem:[%s1 + $0x1a60] sm:$0xff]
  %v877 = vld [vmem:[%s1 + $0x1a68] sm:$0xff]
  %v878 = vld [vmem:[%s1 + $0x1a70] sm:$0xff]
  %v879 = vld [vmem:[%s1 + $0x1a78] sm:$0xff]
  %v880 = vld [vmem:[%s1 + $0x1a80] sm:$0xff]
  %v881 = vld [vmem:[%s1 + $0x1a88] sm:$0xff]
  %v882 = vld [vmem:[%s1 + $0x1a90] sm:$0xff]
  %v883 = vld [vmem:[%s1 + $0x1a98] sm:$0xff]
  %v884 = vld [vmem:[%s1 + $0x1aa0] sm:$0xff]
  %v885 = vld [vmem:[%s1 + $0x1aa8] sm:$0xff]
  %v886 = vld [vmem:[%s1 + $0x1ab0] sm:$0xff]
  %v887 = vld [vmem:[%s1 + $0x1ab8] sm:$0xff]
  %v888 = vld [vmem:[%s1 + $0x1ac0] sm:$0xff]
  %v889 = vld [vmem:[%s1 + $0x1ac8] sm:$0xff]
  %v890 = vld [vmem:[%s1 + $0x1ad0] sm:$0xff]
  %v891 = vld [vmem:[%s1 + $0x1ad8] sm:$0xff]
  %v892 = vld [vmem:[%s1 + $0x1ae0] sm:$0xff]
  %v893 = vld [vmem:[%s1 + $0x1ae8] sm:$0xff]
  %v894 = vld [vmem:[%s1 + $0x1af0] sm:$0xff]
  %v895 = vld [vmem:[%s1 + $0x1af8] sm:$0xff]
  %v896 = vld [vmem:[%s1 + $0x1b00] sm:$0xff]
  %v897 = vld [vmem:[%s1 + $0x1b08] sm:$0xff]
  %v898 = vld [vmem:[%s1 + $0x1b10] sm:$0xff]
  %v899 = vld [vmem:[%s1 + $0x1b18] sm:$0xff]
  %v900 = vld [vmem:[%s1 + $0x1b20] sm:$0xff]
  %v901 = vld [vmem:[%s1 + $0x1b28] sm:$0xff]
  %v902 = vld [vmem:[%s1 + $0x1b30] sm:$0xff]
  %v903 = vld [vmem:[%s1 + $0x1b38] sm:$0xff]
  %v904 = vld [vmem:[%s1 + $0x1b40] sm:$0xff]
  %v905 = vld [vmem:[%s1 + $0x1b48] sm:$0xff]
  %v906 = vld [vmem:[%s1 + $0x1b50] sm:$0xff]
  %v907 = vld [vmem:[%s1 + $0x1b58] sm:$0xff]
  %v908 = vld [vmem:[%s1 + $0x1b60] sm:$0xff]
  %v909 = vld [vmem:[%s1 + $0x1b68] sm:$0xff]
  %v910 = vld [vmem:[%s1 + $0x1b70] sm:$0xff]
  %v911 = vld [vmem:[%s1 + $0x1b78] sm:$0xff]
  %v912 = vld [vmem:[%s1 + $0x1b80] sm:$0xff]
  %v913 = vld [vmem:[%s1 + $0x1b88] sm:$0xff]
  %v914 = vld [vmem:[%s1 + $0x1b90] sm:$0xff]
  %v915 = vld [vmem:[%s1 + $0x1b98] sm:$0xff]
  %v916 = vld [vmem:[%s1 + $0x1ba0] sm:$0xff]
  %v917 = vld [vmem:[%s1 + $0x1ba8] sm:$0xff]
  %v918 = vld [vmem:[%s1 + $0x1bb0] sm:$0xff]
  %v919 = vld [vmem:[%s1 + $0x1bb8] sm:$0xff]
  %v920 = vld [vmem:[%s1 + $0x1bc0] sm:$0xff]
  %v921 = vld [vmem:[%s1 + $0x1bc8] sm:$0xff]
  %v922 = vld [vmem:[%s1 + $0x1bd0] sm:$0xff]
  %v923 = vld [vmem:[%s1 + $0x1bd8] sm:$0xff]
  %v924 = vld [vmem:[%s1 + $0x1be0] sm:$0xff]
  %v925 = vld [vmem:[%s1 + $0x1be8] sm:$0xff]
  %v926 = vld [vmem:[%s1 + $0x1bf0] sm:$0xff]
  %v927 = vld [vmem:[%s1 + $0x1bf8] sm:$0xff]
  %v928 = vld [vmem:[%s1 + $0x1c00] sm:$0xff]
  %v929 = vld [vmem:[%s1 + $0x1c08] sm:$0xff]
  %v930 = vld [vmem:[%s1 + $0x1c10] sm:$0xff]
  %v931 = vld [vmem:[%s1 + $0x1c18] sm:$0xff]
  %v932 = vld [vmem:[%s1 + $0x1c20] sm:$0xff]
  %v933 = vld [vmem:[%s1 + $0x1c28] sm:$0xff]
  %v934 = vld [vmem:[%s1 + $0x1c30] sm:$0xff]
  %v935 = vld [vmem:[%s1 + $0x1c38] sm:$0xff]
  %v936 = vld [vmem:[%s1 + $0x1c40] sm:$0xff]
  %v937 = vld [vmem:[%s1 + $0x1c48] sm:$0xff]
  %v938 = vld [vmem:[%s1 + $0x1c50] sm:$0xff]
  %v939 = vld [vmem:[%s1 + $0x1c58] sm:$0xff]
  %v940 = vld [vmem:[%s1 + $0x1c60] sm:$0xff]
  %v941 = vld [vmem:[%s1 + $0x1c68] sm:$0xff]
  %v942 = vld [vmem:[%s1 + $0x1c70] sm:$0xff]
  %v943 = vld [vmem:[%s1 + $0x1c78] sm:$0xff]
  %v944 = vld [vmem:[%s1 + $0x1c80] sm:$0xff]
  %v945 = vld [vmem:[%s1 + $0x1c88] sm:$0xff]
  %v946 = vld [vmem:[%s1 + $0x1c90] sm:$0xff]
  %v947 = vld [vmem:[%s1 + $0x1c98] sm:$0xff]
  %v948 = vld [vmem:[%s1 + $0x1ca0] sm:$0xff]
  %v949 = vld [vmem:[%s1 + $0x1ca8] sm:$0xff]
  %v950 = vld [vmem:[%s1 + $0x1cb0] sm:$0xff]
  %v951 = vld [vmem:[%s1 + $0x1cb8] sm:$0xff]
  %v952 = vld [vmem:[%s1 + $0x1cc0] sm:$0xff]
  %v953 = vld [vmem:[%s1 + $0x1cc8] sm:$0xff]
  %v954 = vld [vmem:[%s1 + $0x1cd0] sm:$0xff]
  %v955 = vld [vmem:[%s1 + $0x1cd8] sm:$0xff]
  %v956 = vld [vmem:[%s1 + $0x1ce0] sm:$0xff]
  %v957 = vld [vmem:[%s1 + $0x1ce8] sm:$0xff]
  %v958 = vld [vmem:[%s1 + $0x1cf0] sm:$0xff]
  %v959 = vld [vmem:[%s1 + $0x1cf8] sm:$0xff]
  %v960 = vld [vmem:[%s1 + $0x1d00] sm:$0xff]
  %v961 = vld [vmem:[%s1 + $0x1d08] sm:$0xff]
  %v962 = vld [vmem:[%s1 + $0x1d10] sm:$0xff]
  %v963 = vld [vmem:[%s1 + $0x1d18] sm:$0xff]
  %v964 = vld [vmem:[%s1 + $0x1d20] sm:$0xff]
  %v965 = vld [vmem:[%s1 + $0x1d28] sm:$0xff]
  %v966 = vld [vmem:[%s1 + $0x1d30] sm:$0xff]
  %v967 = vld [vmem:[%s1 + $0x1d38] sm:$0xff]
  %v968 = vld [vmem:[%s1 + $0x1d40] sm:$0xff]
  %v969 = vld [vmem:[%s1 + $0x1d48] sm:$0xff]
  %v970 = vld [vmem:[%s1 + $0x1d50] sm:$0xff]
  %v971 = vld [vmem:[%s1 + $0x1d58] sm:$0xff]
  %v972 = vld [vmem:[%s1 + $0x1d60] sm:$0xff]
  %v973 = vld [vmem:[%s1 + $0x1d68] sm:$0xff]
  %v974 = vld [vmem:[%s1 + $0x1d70] sm:$0xff]
  %v975 = vld [vmem:[%s1 + $0x1d78] sm:$0xff]
  %v976 = vld [vmem:[%s1 + $0x1d80] sm:$0xff]
  %v977 = vld [vmem:[%s1 + $0x1d88] sm:$0xff]
  %v978 = vld [vmem:[%s1 + $0x1d90] sm:$0xff]
  %v979 = vld [vmem:[%s1 + $0x1d98] sm:$0xff]
  %v980 = vld [vmem:[%s1 + $0x1da0] sm:$0xff]
  %v981 = vld [vmem:[%s1 + $0x1da8] sm:$0xff]
  %v982 = vld [vmem:[%s1 + $0x1db0] sm:$0xff]
  %v983 = vld [vmem:[%s1 + $0x1db8] sm:$0xff]
  %v984 = vld [vmem:[%s1 + $0x1dc0] sm:$0xff]
  %v985 = vld [vmem:[%s1 + $0x1dc8] sm:$0xff]
  %v986 = vld [vmem:[%s1 + $0x1dd0] sm:$0xff]
  %v987 = vld [vmem:[%s1 + $0x1dd8] sm:$0xff]
  %v988 = vld [vmem:[%s1 + $0x1de0] sm:$0xff]
  %v989 = vld [vmem:[%s1 + $0x1de8] sm:$0xff]
  %v990 = vld [vmem:[%s1 + $0x1df0] sm:$0xff]
  %v991 = vld [vmem:[%s1 + $0x1df8] sm:$0xff]
  %v992 = vld [vmem:[%s0] sm:$0xff]
  %v993 = vld [vmem:[%s0 + $0x8] sm:$0xff]
  %v994 = vld [vmem:[%s0 + $0x10] sm:$0xff]
  %v995 = vld [vmem:[%s0 + $0x18] sm:$0xff]
  %v996 = vld [vmem:[%s0 + $0x20] sm:$0xff]
  %v997 = vld [vmem:[%s0 + $0x28] sm:$0xff]
  %v998 = vld [vmem:[%s0 + $0x30] sm:$0xff]
  %v999 = vld [vmem:[%s0 + $0x38] sm:$0xff]
  %v1000 = vld [vmem:[%s0 + $0x40] sm:$0xff]
  %v1001 = vld [vmem:[%s0 + $0x48] sm:$0xff]
  %v1002 = vld [vmem:[%s0 + $0x50] sm:$0xff]
  %v1003 = vld [vmem:[%s0 + $0x58] sm:$0xff]
  %v1004 = vld [vmem:[%s0 + $0x60] sm:$0xff]
  %v1005 = vld [vmem:[%s0 + $0x68] sm:$0xff]
  %v1006 = vld [vmem:[%s0 + $0x70] sm:$0xff]
  %v1022 = vunpack.c.l.b16 %v992
  %v1023 = vunpack.c.h.b16 %v992
  %v1024 = vunpack.c.l.b16 %v993
  %v1025 = vunpack.c.h.b16 %v993
  %v1026 = vunpack.c.l.b16 %v994
  %v1027 = vunpack.c.h.b16 %v994
  %v1028 = vunpack.c.l.b16 %v995
  %v1029 = vunpack.c.h.b16 %v995
  %v1030 = vunpack.c.l.b16 %v996
  %v1031 = vunpack.c.h.b16 %v996
  %v1032 = vunpack.c.l.b16 %v997
  %v1033 = vunpack.c.h.b16 %v997
  %v1034 = vunpack.c.l.b16 %v998
  %v1035 = vunpack.c.h.b16 %v998
  %v1036 = vunpack.c.l.b16 %v999
  %v1037 = vunpack.c.h.b16 %v999
  %v1038 = vunpack.c.l.b16 %v1000
  %v1039 = vunpack.c.h.b16 %v1000
  %v1040 = vunpack.c.l.b16 %v1001
  %v1041 = vunpack.c.h.b16 %v1001
  %v1042 = vunpack.c.l.b16 %v1002
  %v1043 = vunpack.c.h.b16 %v1002
  %v1044 = vunpack.c.l.b16 %v1003
  %v1045 = vunpack.c.h.b16 %v1003
  %v1046 = vunpack.c.l.b16 %v1004
  %v1047 = vunpack.c.h.b16 %v1004
  %v1048 = vunpack.c.l.b16 %v1005
  %v1049 = vunpack.c.h.b16 %v1005
  %v1050 = vunpack.c.l.b16 %v1006
  %v1051 = vunpack.c.h.b16 %v1006
  %v1052 = vpack.c.b16 %v1022, %v1022
  %v1053 = vpack.c.b16 %v1023, %v1023
  %v1054 = vpack.c.b16 %v1024, %v1024
  %v1055 = vpack.c.b16 %v1025, %v1025
  %v1056 = vpack.c.b16 %v1026, %v1026
  %v1057 = vpack.c.b16 %v1027, %v1027
  %v1058 = vpack.c.b16 %v1028, %v1028
  %v1059 = vpack.c.b16 %v1029, %v1029
  %v1060 = vpack.c.b16 %v1030, %v1030
  %v1061 = vpack.c.b16 %v1031, %v1031
  %v1062 = vpack.c.b16 %v1032, %v1032
  %v1063 = vpack.c.b16 %v1033, %v1033
  %v1064 = vpack.c.b16 %v1034, %v1034
  %v1065 = vpack.c.b16 %v1035, %v1035
  %v1066 = vpack.c.b16 %v1036, %v1036
  %v1067 = vpack.c.b16 %v1037, %v1037
  %v1068 = vpack.c.b16 %v1038, %v1038
  %v1069 = vpack.c.b16 %v1039, %v1039
  %v1070 = vpack.c.b16 %v1040, %v1040
  %v1071 = vpack.c.b16 %v1041, %v1041
  %v1072 = vpack.c.b16 %v1042, %v1042
  %v1073 = vpack.c.b16 %v1043, %v1043
  %v1074 = vpack.c.b16 %v1044, %v1044
  %v1075 = vpack.c.b16 %v1045, %v1045
  %v1076 = vpack.c.b16 %v1046, %v1046
  %v1077 = vpack.c.b16 %v1047, %v1047
  %v1078 = vpack.c.b16 %v1048, %v1048
  %v1079 = vpack.c.b16 %v1049, %v1049
  %v1080 = vpack.c.b16 %v1050, %v1050
  %v1081 = vpack.c.b16 %v1051, %v1051
  %v2072 = vunpack.c.l.b16 %v32
  %v2073 = vunpack.c.h.b16 %v32
  %v2074 = vunpack.c.l.b16 %v33
  %v2075 = vunpack.c.h.b16 %v33
  %v2076 = vunpack.c.l.b16 %v34
  %v2077 = vunpack.c.h.b16 %v34
  %v2078 = vunpack.c.l.b16 %v35
  %v2079 = vunpack.c.h.b16 %v35
  %v2080 = vunpack.c.l.b16 %v36
  %v2081 = vunpack.c.h.b16 %v36
  %v2082 = vunpack.c.l.b16 %v37
  %v2083 = vunpack.c.h.b16 %v37
  %v2084 = vunpack.c.l.b16 %v38
  %v2085 = vunpack.c.h.b16 %v38
  %v2086 = vunpack.c.l.b16 %v39
  %v2087 = vunpack.c.h.b16 %v39
  %v2088 = vunpack.c.l.b16 %v40
  %v2089 = vunpack.c.h.b16 %v40
  %v2090 = vunpack.c.l.b16 %v41
  %v2091 = vunpack.c.h.b16 %v41
  %v2092 = vunpack.c.l.b16 %v42
  %v2093 = vunpack.c.h.b16 %v42
  %v2094 = vunpack.c.l.b16 %v43
  %v2095 = vunpack.c.h.b16 %v43
  %v2096 = vunpack.c.l.b16 %v44
  %v2097 = vunpack.c.h.b16 %v44
  %v2098 = vunpack.c.l.b16 %v45
  %v2099 = vunpack.c.h.b16 %v45
  %v2100 = vunpack.c.l.b16 %v46
  %v2101 = vunpack.c.h.b16 %v46
  %v2102 = vunpack.c.l.b16 %v47
  %v2103 = vunpack.c.h.b16 %v47
  %v2104 = vunpack.c.l.b16 %v48
  %v2105 = vunpack.c.h.b16 %v48
  %v2106 = vunpack.c.l.b16 %v49
  %v2107 = vunpack.c.h.b16 %v49
  %v2108 = vunpack.c.l.b16 %v50
  %v2109 = vunpack.c.h.b16 %v50
  %v2110 = vunpack.c.l.b16 %v51
  %v2111 = vunpack.c.h.b16 %v51
  %v2112 = vunpack.c.l.b16 %v52
  %v2113 = vunpack.c.h.b16 %v52
  %v2114 = vunpack.c.l.b16 %v53
  %v2115 = vunpack.c.h.b16 %v53
  %v2116 = vunpack.c.l.b16 %v54
  %v2117 = vunpack.c.h.b16 %v54
  %v2118 = vunpack.c.l.b16 %v55
  %v2119 = vunpack.c.h.b16 %v55
  %v2120 = vunpack.c.l.b16 %v56
  %v2121 = vunpack.c.h.b16 %v56
  %v2122 = vunpack.c.l.b16 %v57
  %v2123 = vunpack.c.h.b16 %v57
  %v2124 = vunpack.c.l.b16 %v58
  %v2125 = vunpack.c.h.b16 %v58
  %v2126 = vunpack.c.l.b16 %v59
  %v2127 = vunpack.c.h.b16 %v59
  %v2128 = vunpack.c.l.b16 %v60
  %v2129 = vunpack.c.h.b16 %v60
  %v2130 = vunpack.c.l.b16 %v61
  %v2131 = vunpack.c.h.b16 %v61
  %v2132 = vunpack.c.l.b16 %v62
  %v2133 = vunpack.c.h.b16 %v62
  %v2134 = vunpack.c.l.b16 %v63
  %v2135 = vunpack.c.h.b16 %v63
  %v2136 = vunpack.c.l.b16 %v64
  %v2137 = vunpack.c.h.b16 %v64
  %v2138 = vunpack.c.l.b16 %v65
  %v2139 = vunpack.c.h.b16 %v65
  %v2140 = vunpack.c.l.b16 %v66
  %v2141 = vunpack.c.h.b16 %v66
  %v2142 = vunpack.c.l.b16 %v67
  %v2143 = vunpack.c.h.b16 %v67
  %v2144 = vunpack.c.l.b16 %v68
  %v2145 = vunpack.c.h.b16 %v68
  %v2146 = vunpack.c.l.b16 %v69
  %v2147 = vunpack.c.h.b16 %v69
  %v2148 = vunpack.c.l.b16 %v70
  %v2149 = vunpack.c.h.b16 %v70
  %v2150 = vunpack.c.l.b16 %v71
  %v2151 = vunpack.c.h.b16 %v71
  %v2152 = vunpack.c.l.b16 %v72
  %v2153 = vunpack.c.h.b16 %v72
  %v2154 = vunpack.c.l.b16 %v73
  %v2155 = vunpack.c.h.b16 %v73
  %v2156 = vunpack.c.l.b16 %v74
  %v2157 = vunpack.c.h.b16 %v74
  %v2158 = vunpack.c.l.b16 %v75
  %v2159 = vunpack.c.h.b16 %v75
  %v2160 = vunpack.c.l.b16 %v76
  %v2161 = vunpack.c.h.b16 %v76
  %v2162 = vunpack.c.l.b16 %v77
  %v2163 = vunpack.c.h.b16 %v77
  %v2164 = vunpack.c.l.b16 %v78
  %v2165 = vunpack.c.h.b16 %v78
  %v2166 = vunpack.c.l.b16 %v79
  %v2167 = vunpack.c.h.b16 %v79
  %v2168 = vunpack.c.l.b16 %v80
  %v2169 = vunpack.c.h.b16 %v80
  %v2170 = vunpack.c.l.b16 %v81
  %v2171 = vunpack.c.h.b16 %v81
  %v2172 = vunpack.c.l.b16 %v82
  %v2173 = vunpack.c.h.b16 %v82
  %v2174 = vunpack.c.l.b16 %v83
  %v2175 = vunpack.c.h.b16 %v83
  %v2176 = vunpack.c.l.b16 %v84
  %v2177 = vunpack.c.h.b16 %v84
  %v2178 = vunpack.c.l.b16 %v85
  %v2179 = vunpack.c.h.b16 %v85
  %v2180 = vunpack.c.l.b16 %v86
  %v2181 = vunpack.c.h.b16 %v86
  %v2182 = vunpack.c.l.b16 %v87
  %v2183 = vunpack.c.h.b16 %v87
  %v2184 = vunpack.c.l.b16 %v88
  %v2185 = vunpack.c.h.b16 %v88
  %v2186 = vunpack.c.l.b16 %v89
  %v2187 = vunpack.c.h.b16 %v89
  %v2188 = vunpack.c.l.b16 %v90
  %v2189 = vunpack.c.h.b16 %v90
  %v2190 = vunpack.c.l.b16 %v91
  %v2191 = vunpack.c.h.b16 %v91
  %v2192 = vunpack.c.l.b16 %v92
  %v2193 = vunpack.c.h.b16 %v92
  %v2194 = vunpack.c.l.b16 %v93
  %v2195 = vunpack.c.h.b16 %v93
  %v2196 = vunpack.c.l.b16 %v94
  %v2197 = vunpack.c.h.b16 %v94
  %v2198 = vunpack.c.l.b16 %v95
  %v2199 = vunpack.c.h.b16 %v95
  %v2200 = vunpack.c.l.b16 %v96
  %v2201 = vunpack.c.h.b16 %v96
  %v2202 = vunpack.c.l.b16 %v97
  %v2203 = vunpack.c.h.b16 %v97
  %v2204 = vunpack.c.l.b16 %v98
  %v2205 = vunpack.c.h.b16 %v98
  %v2206 = vunpack.c.l.b16 %v99
  %v2207 = vunpack.c.h.b16 %v99
  %v2208 = vunpack.c.l.b16 %v100
  %v2209 = vunpack.c.h.b16 %v100
  %v2210 = vunpack.c.l.b16 %v101
  %v2211 = vunpack.c.h.b16 %v101
  %v2212 = vunpack.c.l.b16 %v102
  %v2213 = vunpack.c.h.b16 %v102
  %v2214 = vunpack.c.l.b16 %v103
  %v2215 = vunpack.c.h.b16 %v103
  %v2216 = vunpack.c.l.b16 %v104
  %v2217 = vunpack.c.h.b16 %v104
  %v2218 = vunpack.c.l.b16 %v105
  %v2219 = vunpack.c.h.b16 %v105
  %v2220 = vunpack.c.l.b16 %v106
  %v2221 = vunpack.c.h.b16 %v106
  %v2222 = vunpack.c.l.b16 %v107
  %v2223 = vunpack.c.h.b16 %v107
  %v2224 = vunpack.c.l.b16 %v108
  %v2225 = vunpack.c.h.b16 %v108
  %v2226 = vunpack.c.l.b16 %v109
  %v2227 = vunpack.c.h.b16 %v109
  %v2228 = vunpack.c.l.b16 %v110
  %v2229 = vunpack.c.h.b16 %v110
  %v2230 = vunpack.c.l.b16 %v111
  %v2231 = vunpack.c.h.b16 %v111
  %v2232 = vunpack.c.l.b16 %v112
  %v2233 = vunpack.c.h.b16 %v112
  %v2234 = vunpack.c.l.b16 %v113
  %v2235 = vunpack.c.h.b16 %v113
  %v2236 = vunpack.c.l.b16 %v114
  %v2237 = vunpack.c.h.b16 %v114
  %v2238 = vunpack.c.l.b16 %v115
  %v2239 = vunpack.c.h.b16 %v115
  %v2240 = vunpack.c.l.b16 %v116
  %v2241 = vunpack.c.h.b16 %v116
  %v2242 = vunpack.c.l.b16 %v117
  %v2243 = vunpack.c.h.b16 %v117
  %v2244 = vunpack.c.l.b16 %v118
  %v2245 = vunpack.c.h.b16 %v118
  %v2246 = vunpack.c.l.b16 %v119
  %v2247 = vunpack.c.h.b16 %v119
  %v2248 = vunpack.c.l.b16 %v120
  %v2249 = vunpack.c.h.b16 %v120
  %v2250 = vunpack.c.l.b16 %v121
  %v2251 = vunpack.c.h.b16 %v121
  %v2252 = vunpack.c.l.b16 %v122
  %v2253 = vunpack.c.h.b16 %v122
  %v2254 = vunpack.c.l.b16 %v123
  %v2255 = vunpack.c.h.b16 %v123
  %v2256 = vunpack.c.l.b16 %v124
  %v2257 = vunpack.c.h.b16 %v124
  %v2258 = vunpack.c.l.b16 %v125
  %v2259 = vunpack.c.h.b16 %v125
  %v2260 = vunpack.c.l.b16 %v126
  %v2261 = vunpack.c.h.b16 %v126
  %v2262 = vunpack.c.l.b16 %v127
  %v2263 = vunpack.c.h.b16 %v127
  %v2264 = vunpack.c.l.b16 %v128
  %v2265 = vunpack.c.h.b16 %v128
  %v2266 = vunpack.c.l.b16 %v129
  %v2267 = vunpack.c.h.b16 %v129
  %v2268 = vunpack.c.l.b16 %v130
  %v2269 = vunpack.c.h.b16 %v130
  %v2270 = vunpack.c.l.b16 %v131
  %v2271 = vunpack.c.h.b16 %v131
  %v2272 = vunpack.c.l.b16 %v132
  %v2273 = vunpack.c.h.b16 %v132
  %v2274 = vunpack.c.l.b16 %v133
  %v2275 = vunpack.c.h.b16 %v133
  %v2276 = vunpack.c.l.b16 %v134
  %v2277 = vunpack.c.h.b16 %v134
  %v2278 = vunpack.c.l.b16 %v135
  %v2279 = vunpack.c.h.b16 %v135
  %v2280 = vunpack.c.l.b16 %v136
  %v2281 = vunpack.c.h.b16 %v136
  %v2282 = vunpack.c.l.b16 %v137
  %v2283 = vunpack.c.h.b16 %v137
  %v2284 = vunpack.c.l.b16 %v138
  %v2285 = vunpack.c.h.b16 %v138
  %v2286 = vunpack.c.l.b16 %v139
  %v2287 = vunpack.c.h.b16 %v139
  %v2288 = vunpack.c.l.b16 %v140
  %v2289 = vunpack.c.h.b16 %v140
  %v2290 = vunpack.c.l.b16 %v141
  %v2291 = vunpack.c.h.b16 %v141
  %v2292 = vunpack.c.l.b16 %v142
  %v2293 = vunpack.c.h.b16 %v142
  %v2294 = vunpack.c.l.b16 %v143
  %v2295 = vunpack.c.h.b16 %v143
  %v2296 = vunpack.c.l.b16 %v144
  %v2297 = vunpack.c.h.b16 %v144
  %v2298 = vunpack.c.l.b16 %v145
  %v2299 = vunpack.c.h.b16 %v145
  %v2300 = vunpack.c.l.b16 %v146
  %v2301 = vunpack.c.h.b16 %v146
  %v2302 = vunpack.c.l.b16 %v147
  %v2303 = vunpack.c.h.b16 %v147
  %v2304 = vunpack.c.l.b16 %v148
  %v2305 = vunpack.c.h.b16 %v148
  %v2306 = vunpack.c.l.b16 %v149
  %v2307 = vunpack.c.h.b16 %v149
  %v2308 = vunpack.c.l.b16 %v150
  %v2309 = vunpack.c.h.b16 %v150
  %v2310 = vunpack.c.l.b16 %v151
  %v2311 = vunpack.c.h.b16 %v151
  %v2312 = vunpack.c.l.b16 %v152
  %v2313 = vunpack.c.h.b16 %v152
  %v2314 = vunpack.c.l.b16 %v153
  %v2315 = vunpack.c.h.b16 %v153
  %v2316 = vunpack.c.l.b16 %v154
  %v2317 = vunpack.c.h.b16 %v154
  %v2318 = vunpack.c.l.b16 %v155
  %v2319 = vunpack.c.h.b16 %v155
  %v2320 = vunpack.c.l.b16 %v156
  %v2321 = vunpack.c.h.b16 %v156
  %v2322 = vunpack.c.l.b16 %v157
  %v2323 = vunpack.c.h.b16 %v157
  %v2324 = vunpack.c.l.b16 %v158
  %v2325 = vunpack.c.h.b16 %v158
  %v2326 = vunpack.c.l.b16 %v159
  %v2327 = vunpack.c.h.b16 %v159
  %v2328 = vunpack.c.l.b16 %v160
  %v2329 = vunpack.c.h.b16 %v160
  %v2330 = vunpack.c.l.b16 %v161
  %v2331 = vunpack.c.h.b16 %v161
  %v2332 = vunpack.c.l.b16 %v162
  %v2333 = vunpack.c.h.b16 %v162
  %v2334 = vunpack.c.l.b16 %v163
  %v2335 = vunpack.c.h.b16 %v163
  %v2336 = vunpack.c.l.b16 %v164
  %v2337 = vunpack.c.h.b16 %v164
  %v2338 = vunpack.c.l.b16 %v165
  %v2339 = vunpack.c.h.b16 %v165
  %v2340 = vunpack.c.l.b16 %v166
  %v2341 = vunpack.c.h.b16 %v166
  %v2342 = vunpack.c.l.b16 %v167
  %v2343 = vunpack.c.h.b16 %v167
  %v2344 = vunpack.c.l.b16 %v168
  %v2345 = vunpack.c.h.b16 %v168
  %v2346 = vunpack.c.l.b16 %v169
  %v2347 = vunpack.c.h.b16 %v169
  %v2348 = vunpack.c.l.b16 %v170
  %v2349 = vunpack.c.h.b16 %v170
  %v2350 = vunpack.c.l.b16 %v171
  %v2351 = vunpack.c.h.b16 %v171
  %v2352 = vunpack.c.l.b16 %v172
  %v2353 = vunpack.c.h.b16 %v172
  %v2354 = vunpack.c.l.b16 %v173
  %v2355 = vunpack.c.h.b16 %v173
  %v2356 = vunpack.c.l.b16 %v174
  %v2357 = vunpack.c.h.b16 %v174
  %v2358 = vunpack.c.l.b16 %v175
  %v2359 = vunpack.c.h.b16 %v175
  %v2360 = vunpack.c.l.b16 %v176
  %v2361 = vunpack.c.h.b16 %v176
  %v2362 = vunpack.c.l.b16 %v177
  %v2363 = vunpack.c.h.b16 %v177
  %v2364 = vunpack.c.l.b16 %v178
  %v2365 = vunpack.c.h.b16 %v178
  %v2366 = vunpack.c.l.b16 %v179
  %v2367 = vunpack.c.h.b16 %v179
  %v2368 = vunpack.c.l.b16 %v180
  %v2369 = vunpack.c.h.b16 %v180
  %v2370 = vunpack.c.l.b16 %v181
  %v2371 = vunpack.c.h.b16 %v181
  %v2372 = vunpack.c.l.b16 %v182
  %v2373 = vunpack.c.h.b16 %v182
  %v2374 = vunpack.c.l.b16 %v183
  %v2375 = vunpack.c.h.b16 %v183
  %v2376 = vunpack.c.l.b16 %v184
  %v2377 = vunpack.c.h.b16 %v184
  %v2378 = vunpack.c.l.b16 %v185
  %v2379 = vunpack.c.h.b16 %v185
  %v2380 = vunpack.c.l.b16 %v186
  %v2381 = vunpack.c.h.b16 %v186
  %v2382 = vunpack.c.l.b16 %v187
  %v2383 = vunpack.c.h.b16 %v187
  %v2384 = vunpack.c.l.b16 %v188
  %v2385 = vunpack.c.h.b16 %v188
  %v2386 = vunpack.c.l.b16 %v189
  %v2387 = vunpack.c.h.b16 %v189
  %v2388 = vunpack.c.l.b16 %v190
  %v2389 = vunpack.c.h.b16 %v190
  %v2390 = vunpack.c.l.b16 %v191
  %v2391 = vunpack.c.h.b16 %v191
  %v2392 = vunpack.c.l.b16 %v192
  %v2393 = vunpack.c.h.b16 %v192
  %v2394 = vunpack.c.l.b16 %v193
  %v2395 = vunpack.c.h.b16 %v193
  %v2396 = vunpack.c.l.b16 %v194
  %v2397 = vunpack.c.h.b16 %v194
  %v2398 = vunpack.c.l.b16 %v195
  %v2399 = vunpack.c.h.b16 %v195
  %v2400 = vunpack.c.l.b16 %v196
  %v2401 = vunpack.c.h.b16 %v196
  %v2402 = vunpack.c.l.b16 %v197
  %v2403 = vunpack.c.h.b16 %v197
  %v2404 = vunpack.c.l.b16 %v198
  %v2405 = vunpack.c.h.b16 %v198
  %v2406 = vunpack.c.l.b16 %v199
  %v2407 = vunpack.c.h.b16 %v199
  %v2408 = vunpack.c.l.b16 %v200
  %v2409 = vunpack.c.h.b16 %v200
  %v2410 = vunpack.c.l.b16 %v201
  %v2411 = vunpack.c.h.b16 %v201
  %v2412 = vunpack.c.l.b16 %v202
  %v2413 = vunpack.c.h.b16 %v202
  %v2414 = vunpack.c.l.b16 %v203
  %v2415 = vunpack.c.h.b16 %v203
  %v2416 = vunpack.c.l.b16 %v204
  %v2417 = vunpack.c.h.b16 %v204
  %v2418 = vunpack.c.l.b16 %v205
  %v2419 = vunpack.c.h.b16 %v205
  %v2420 = vunpack.c.l.b16 %v206
  %v2421 = vunpack.c.h.b16 %v206
  %v2422 = vunpack.c.l.b16 %v207
  %v2423 = vunpack.c.h.b16 %v207
  %v2424 = vunpack.c.l.b16 %v208
  %v2425 = vunpack.c.h.b16 %v208
  %v2426 = vunpack.c.l.b16 %v209
  %v2427 = vunpack.c.h.b16 %v209
  %v2428 = vunpack.c.l.b16 %v210
  %v2429 = vunpack.c.h.b16 %v210
  %v2430 = vunpack.c.l.b16 %v211
  %v2431 = vunpack.c.h.b16 %v211
  %v2432 = vunpack.c.l.b16 %v212
  %v2433 = vunpack.c.h.b16 %v212
  %v2434 = vunpack.c.l.b16 %v213
  %v2435 = vunpack.c.h.b16 %v213
  %v2436 = vunpack.c.l.b16 %v214
  %v2437 = vunpack.c.h.b16 %v214
  %v2438 = vunpack.c.l.b16 %v215
  %v2439 = vunpack.c.h.b16 %v215
  %v2440 = vunpack.c.l.b16 %v216
  %v2441 = vunpack.c.h.b16 %v216
  %v2442 = vunpack.c.l.b16 %v217
  %v2443 = vunpack.c.h.b16 %v217
  %v2444 = vunpack.c.l.b16 %v218
  %v2445 = vunpack.c.h.b16 %v218
  %v2446 = vunpack.c.l.b16 %v219
  %v2447 = vunpack.c.h.b16 %v219
  %v2448 = vunpack.c.l.b16 %v220
  %v2449 = vunpack.c.h.b16 %v220
  %v2450 = vunpack.c.l.b16 %v221
  %v2451 = vunpack.c.h.b16 %v221
  %v2452 = vunpack.c.l.b16 %v222
  %v2453 = vunpack.c.h.b16 %v222
  %v2454 = vunpack.c.l.b16 %v223
  %v2455 = vunpack.c.h.b16 %v223
  %v2456 = vunpack.c.l.b16 %v224
  %v2457 = vunpack.c.h.b16 %v224
  %v2458 = vunpack.c.l.b16 %v225
  %v2459 = vunpack.c.h.b16 %v225
  %v2460 = vunpack.c.l.b16 %v226
  %v2461 = vunpack.c.h.b16 %v226
  %v2462 = vunpack.c.l.b16 %v227
  %v2463 = vunpack.c.h.b16 %v227
  %v2464 = vunpack.c.l.b16 %v228
  %v2465 = vunpack.c.h.b16 %v228
  %v2466 = vunpack.c.l.b16 %v229
  %v2467 = vunpack.c.h.b16 %v229
  %v2468 = vunpack.c.l.b16 %v230
  %v2469 = vunpack.c.h.b16 %v230
  %v2470 = vunpack.c.l.b16 %v231
  %v2471 = vunpack.c.h.b16 %v231
  %v2472 = vunpack.c.l.b16 %v232
  %v2473 = vunpack.c.h.b16 %v232
  %v2474 = vunpack.c.l.b16 %v233
  %v2475 = vunpack.c.h.b16 %v233
  %v2476 = vunpack.c.l.b16 %v234
  %v2477 = vunpack.c.h.b16 %v234
  %v2478 = vunpack.c.l.b16 %v235
  %v2479 = vunpack.c.h.b16 %v235
  %v2480 = vunpack.c.l.b16 %v236
  %v2481 = vunpack.c.h.b16 %v236
  %v2482 = vunpack.c.l.b16 %v237
  %v2483 = vunpack.c.h.b16 %v237
  %v2484 = vunpack.c.l.b16 %v238
  %v2485 = vunpack.c.h.b16 %v238
  %v2486 = vunpack.c.l.b16 %v239
  %v2487 = vunpack.c.h.b16 %v239
  %v2488 = vunpack.c.l.b16 %v240
  %v2489 = vunpack.c.h.b16 %v240
  %v2490 = vunpack.c.l.b16 %v241
  %v2491 = vunpack.c.h.b16 %v241
  %v2492 = vunpack.c.l.b16 %v242
  %v2493 = vunpack.c.h.b16 %v242
  %v2494 = vunpack.c.l.b16 %v243
  %v2495 = vunpack.c.h.b16 %v243
  %v2496 = vunpack.c.l.b16 %v244
  %v2497 = vunpack.c.h.b16 %v244
  %v2498 = vunpack.c.l.b16 %v245
  %v2499 = vunpack.c.h.b16 %v245
  %v2500 = vunpack.c.l.b16 %v246
  %v2501 = vunpack.c.h.b16 %v246
  %v2502 = vunpack.c.l.b16 %v247
  %v2503 = vunpack.c.h.b16 %v247
  %v2504 = vunpack.c.l.b16 %v248
  %v2505 = vunpack.c.h.b16 %v248
  %v2506 = vunpack.c.l.b16 %v249
  %v2507 = vunpack.c.h.b16 %v249
  %v2508 = vunpack.c.l.b16 %v250
  %v2509 = vunpack.c.h.b16 %v250
  %v2510 = vunpack.c.l.b16 %v251
  %v2511 = vunpack.c.h.b16 %v251
  %v2512 = vunpack.c.l.b16 %v252
  %v2513 = vunpack.c.h.b16 %v252
  %v2514 = vunpack.c.l.b16 %v253
  %v2515 = vunpack.c.h.b16 %v253
  %v2516 = vunpack.c.l.b16 %v254
  %v2517 = vunpack.c.h.b16 %v254
  %v2518 = vunpack.c.l.b16 %v255
  %v2519 = vunpack.c.h.b16 %v255
  %v2520 = vunpack.c.l.b16 %v256
  %v2521 = vunpack.c.h.b16 %v256
  %v2522 = vunpack.c.l.b16 %v257
  %v2523 = vunpack.c.h.b16 %v257
  %v2524 = vunpack.c.l.b16 %v258
  %v2525 = vunpack.c.h.b16 %v258
  %v2526 = vunpack.c.l.b16 %v259
  %v2527 = vunpack.c.h.b16 %v259
  %v2528 = vunpack.c.l.b16 %v260
  %v2529 = vunpack.c.h.b16 %v260
  %v2530 = vunpack.c.l.b16 %v261
  %v2531 = vunpack.c.h.b16 %v261
  %v2532 = vunpack.c.l.b16 %v262
  %v2533 = vunpack.c.h.b16 %v262
  %v2534 = vunpack.c.l.b16 %v263
  %v2535 = vunpack.c.h.b16 %v263
  %v2536 = vunpack.c.l.b16 %v264
  %v2537 = vunpack.c.h.b16 %v264
  %v2538 = vunpack.c.l.b16 %v265
  %v2539 = vunpack.c.h.b16 %v265
  %v2540 = vunpack.c.l.b16 %v266
  %v2541 = vunpack.c.h.b16 %v266
  %v2542 = vunpack.c.l.b16 %v267
  %v2543 = vunpack.c.h.b16 %v267
  %v2544 = vunpack.c.l.b16 %v268
  %v2545 = vunpack.c.h.b16 %v268
  %v2546 = vunpack.c.l.b16 %v269
  %v2547 = vunpack.c.h.b16 %v269
  %v2548 = vunpack.c.l.b16 %v270
  %v2549 = vunpack.c.h.b16 %v270
  %v2550 = vunpack.c.l.b16 %v271
  %v2551 = vunpack.c.h.b16 %v271
  %v2552 = vunpack.c.l.b16 %v272
  %v2553 = vunpack.c.h.b16 %v272
  %v2554 = vunpack.c.l.b16 %v273
  %v2555 = vunpack.c.h.b16 %v273
  %v2556 = vunpack.c.l.b16 %v274
  %v2557 = vunpack.c.h.b16 %v274
  %v2558 = vunpack.c.l.b16 %v275
  %v2559 = vunpack.c.h.b16 %v275
  %v2560 = vunpack.c.l.b16 %v276
  %v2561 = vunpack.c.h.b16 %v276
  %v2562 = vunpack.c.l.b16 %v277
  %v2563 = vunpack.c.h.b16 %v277
  %v2564 = vunpack.c.l.b16 %v278
  %v2565 = vunpack.c.h.b16 %v278
  %v2566 = vunpack.c.l.b16 %v279
  %v2567 = vunpack.c.h.b16 %v279
  %v2568 = vunpack.c.l.b16 %v280
  %v2569 = vunpack.c.h.b16 %v280
  %v2570 = vunpack.c.l.b16 %v281
  %v2571 = vunpack.c.h.b16 %v281
  %v2572 = vunpack.c.l.b16 %v282
  %v2573 = vunpack.c.h.b16 %v282
  %v2574 = vunpack.c.l.b16 %v283
  %v2575 = vunpack.c.h.b16 %v283
  %v2576 = vunpack.c.l.b16 %v284
  %v2577 = vunpack.c.h.b16 %v284
  %v2578 = vunpack.c.l.b16 %v285
  %v2579 = vunpack.c.h.b16 %v285
  %v2580 = vunpack.c.l.b16 %v286
  %v2581 = vunpack.c.h.b16 %v286
  %v2582 = vunpack.c.l.b16 %v287
  %v2583 = vunpack.c.h.b16 %v287
  %v2584 = vunpack.c.l.b16 %v288
  %v2585 = vunpack.c.h.b16 %v288
  %v2586 = vunpack.c.l.b16 %v289
  %v2587 = vunpack.c.h.b16 %v289
  %v2588 = vunpack.c.l.b16 %v290
  %v2589 = vunpack.c.h.b16 %v290
  %v2590 = vunpack.c.l.b16 %v291
  %v2591 = vunpack.c.h.b16 %v291
  %v2592 = vunpack.c.l.b16 %v292
  %v2593 = vunpack.c.h.b16 %v292
  %v2594 = vunpack.c.l.b16 %v293
  %v2595 = vunpack.c.h.b16 %v293
  %v2596 = vunpack.c.l.b16 %v294
  %v2597 = vunpack.c.h.b16 %v294
  %v2598 = vunpack.c.l.b16 %v295
  %v2599 = vunpack.c.h.b16 %v295
  %v2600 = vunpack.c.l.b16 %v296
  %v2601 = vunpack.c.h.b16 %v296
  %v2602 = vunpack.c.l.b16 %v297
  %v2603 = vunpack.c.h.b16 %v297
  %v2604 = vunpack.c.l.b16 %v298
  %v2605 = vunpack.c.h.b16 %v298
  %v2606 = vunpack.c.l.b16 %v299
  %v2607 = vunpack.c.h.b16 %v299
  %v2608 = vunpack.c.l.b16 %v300
  %v2609 = vunpack.c.h.b16 %v300
  %v2610 = vunpack.c.l.b16 %v301
  %v2611 = vunpack.c.h.b16 %v301
  %v2612 = vunpack.c.l.b16 %v302
  %v2613 = vunpack.c.h.b16 %v302
  %v2614 = vunpack.c.l.b16 %v303
  %v2615 = vunpack.c.h.b16 %v303
  %v2616 = vunpack.c.l.b16 %v304
  %v2617 = vunpack.c.h.b16 %v304
  %v2618 = vunpack.c.l.b16 %v305
  %v2619 = vunpack.c.h.b16 %v305
  %v2620 = vunpack.c.l.b16 %v306
  %v2621 = vunpack.c.h.b16 %v306
  %v2622 = vunpack.c.l.b16 %v307
  %v2623 = vunpack.c.h.b16 %v307
  %v2624 = vunpack.c.l.b16 %v308
  %v2625 = vunpack.c.h.b16 %v308
  %v2626 = vunpack.c.l.b16 %v309
  %v2627 = vunpack.c.h.b16 %v309
  %v2628 = vunpack.c.l.b16 %v310
  %v2629 = vunpack.c.h.b16 %v310
  %v2630 = vunpack.c.l.b16 %v311
  %v2631 = vunpack.c.h.b16 %v311
  %v2632 = vunpack.c.l.b16 %v312
  %v2633 = vunpack.c.h.b16 %v312
  %v2634 = vunpack.c.l.b16 %v313
  %v2635 = vunpack.c.h.b16 %v313
  %v2636 = vunpack.c.l.b16 %v314
  %v2637 = vunpack.c.h.b16 %v314
  %v2638 = vunpack.c.l.b16 %v315
  %v2639 = vunpack.c.h.b16 %v315
  %v2640 = vunpack.c.l.b16 %v316
  %v2641 = vunpack.c.h.b16 %v316
  %v2642 = vunpack.c.l.b16 %v317
  %v2643 = vunpack.c.h.b16 %v317
  %v2644 = vunpack.c.l.b16 %v318
  %v2645 = vunpack.c.h.b16 %v318
  %v2646 = vunpack.c.l.b16 %v319
  %v2647 = vunpack.c.h.b16 %v319
  %v2648 = vunpack.c.l.b16 %v320
  %v2649 = vunpack.c.h.b16 %v320
  %v2650 = vunpack.c.l.b16 %v321
  %v2651 = vunpack.c.h.b16 %v321
  %v2652 = vunpack.c.l.b16 %v322
  %v2653 = vunpack.c.h.b16 %v322
  %v2654 = vunpack.c.l.b16 %v323
  %v2655 = vunpack.c.h.b16 %v323
  %v2656 = vunpack.c.l.b16 %v324
  %v2657 = vunpack.c.h.b16 %v324
  %v2658 = vunpack.c.l.b16 %v325
  %v2659 = vunpack.c.h.b16 %v325
  %v2660 = vunpack.c.l.b16 %v326
  %v2661 = vunpack.c.h.b16 %v326
  %v2662 = vunpack.c.l.b16 %v327
  %v2663 = vunpack.c.h.b16 %v327
  %v2664 = vunpack.c.l.b16 %v328
  %v2665 = vunpack.c.h.b16 %v328
  %v2666 = vunpack.c.l.b16 %v329
  %v2667 = vunpack.c.h.b16 %v329
  %v2668 = vunpack.c.l.b16 %v330
  %v2669 = vunpack.c.h.b16 %v330
  %v2670 = vunpack.c.l.b16 %v331
  %v2671 = vunpack.c.h.b16 %v331
  %v2672 = vunpack.c.l.b16 %v332
  %v2673 = vunpack.c.h.b16 %v332
  %v2674 = vunpack.c.l.b16 %v333
  %v2675 = vunpack.c.h.b16 %v333
  %v2676 = vunpack.c.l.b16 %v334
  %v2677 = vunpack.c.h.b16 %v334
  %v2678 = vunpack.c.l.b16 %v335
  %v2679 = vunpack.c.h.b16 %v335
  %v2680 = vunpack.c.l.b16 %v336
  %v2681 = vunpack.c.h.b16 %v336
  %v2682 = vunpack.c.l.b16 %v337
  %v2683 = vunpack.c.h.b16 %v337
  %v2684 = vunpack.c.l.b16 %v338
  %v2685 = vunpack.c.h.b16 %v338
  %v2686 = vunpack.c.l.b16 %v339
  %v2687 = vunpack.c.h.b16 %v339
  %v2688 = vunpack.c.l.b16 %v340
  %v2689 = vunpack.c.h.b16 %v340
  %v2690 = vunpack.c.l.b16 %v341
  %v2691 = vunpack.c.h.b16 %v341
  %v2692 = vunpack.c.l.b16 %v342
  %v2693 = vunpack.c.h.b16 %v342
  %v2694 = vunpack.c.l.b16 %v343
  %v2695 = vunpack.c.h.b16 %v343
  %v2696 = vunpack.c.l.b16 %v344
  %v2697 = vunpack.c.h.b16 %v344
  %v2698 = vunpack.c.l.b16 %v345
  %v2699 = vunpack.c.h.b16 %v345
  %v2700 = vunpack.c.l.b16 %v346
  %v2701 = vunpack.c.h.b16 %v346
  %v2702 = vunpack.c.l.b16 %v347
  %v2703 = vunpack.c.h.b16 %v347
  %v2704 = vunpack.c.l.b16 %v348
  %v2705 = vunpack.c.h.b16 %v348
  %v2706 = vunpack.c.l.b16 %v349
  %v2707 = vunpack.c.h.b16 %v349
  %v2708 = vunpack.c.l.b16 %v350
  %v2709 = vunpack.c.h.b16 %v350
  %v2710 = vunpack.c.l.b16 %v351
  %v2711 = vunpack.c.h.b16 %v351
  %v2712 = vunpack.c.l.b16 %v352
  %v2713 = vunpack.c.h.b16 %v352
  %v2714 = vunpack.c.l.b16 %v353
  %v2715 = vunpack.c.h.b16 %v353
  %v2716 = vunpack.c.l.b16 %v354
  %v2717 = vunpack.c.h.b16 %v354
  %v2718 = vunpack.c.l.b16 %v355
  %v2719 = vunpack.c.h.b16 %v355
  %v2720 = vunpack.c.l.b16 %v356
  %v2721 = vunpack.c.h.b16 %v356
  %v2722 = vunpack.c.l.b16 %v357
  %v2723 = vunpack.c.h.b16 %v357
  %v2724 = vunpack.c.l.b16 %v358
  %v2725 = vunpack.c.h.b16 %v358
  %v2726 = vunpack.c.l.b16 %v359
  %v2727 = vunpack.c.h.b16 %v359
  %v2728 = vunpack.c.l.b16 %v360
  %v2729 = vunpack.c.h.b16 %v360
  %v2730 = vunpack.c.l.b16 %v361
  %v2731 = vunpack.c.h.b16 %v361
  %v2732 = vunpack.c.l.b16 %v362
  %v2733 = vunpack.c.h.b16 %v362
  %v2734 = vunpack.c.l.b16 %v363
  %v2735 = vunpack.c.h.b16 %v363
  %v2736 = vunpack.c.l.b16 %v364
  %v2737 = vunpack.c.h.b16 %v364
  %v2738 = vunpack.c.l.b16 %v365
  %v2739 = vunpack.c.h.b16 %v365
  %v2740 = vunpack.c.l.b16 %v366
  %v2741 = vunpack.c.h.b16 %v366
  %v2742 = vunpack.c.l.b16 %v367
  %v2743 = vunpack.c.h.b16 %v367
  %v2744 = vunpack.c.l.b16 %v368
  %v2745 = vunpack.c.h.b16 %v368
  %v2746 = vunpack.c.l.b16 %v369
  %v2747 = vunpack.c.h.b16 %v369
  %v2748 = vunpack.c.l.b16 %v370
  %v2749 = vunpack.c.h.b16 %v370
  %v2750 = vunpack.c.l.b16 %v371
  %v2751 = vunpack.c.h.b16 %v371
  %v2752 = vunpack.c.l.b16 %v372
  %v2753 = vunpack.c.h.b16 %v372
  %v2754 = vunpack.c.l.b16 %v373
  %v2755 = vunpack.c.h.b16 %v373
  %v2756 = vunpack.c.l.b16 %v374
  %v2757 = vunpack.c.h.b16 %v374
  %v2758 = vunpack.c.l.b16 %v375
  %v2759 = vunpack.c.h.b16 %v375
  %v2760 = vunpack.c.l.b16 %v376
  %v2761 = vunpack.c.h.b16 %v376
  %v2762 = vunpack.c.l.b16 %v377
  %v2763 = vunpack.c.h.b16 %v377
  %v2764 = vunpack.c.l.b16 %v378
  %v2765 = vunpack.c.h.b16 %v378
  %v2766 = vunpack.c.l.b16 %v379
  %v2767 = vunpack.c.h.b16 %v379
  %v2768 = vunpack.c.l.b16 %v380
  %v2769 = vunpack.c.h.b16 %v380
  %v2770 = vunpack.c.l.b16 %v381
  %v2771 = vunpack.c.h.b16 %v381
  %v2772 = vunpack.c.l.b16 %v382
  %v2773 = vunpack.c.h.b16 %v382
  %v2774 = vunpack.c.l.b16 %v383
  %v2775 = vunpack.c.h.b16 %v383
  %v2776 = vunpack.c.l.b16 %v384
  %v2777 = vunpack.c.h.b16 %v384
  %v2778 = vunpack.c.l.b16 %v385
  %v2779 = vunpack.c.h.b16 %v385
  %v2780 = vunpack.c.l.b16 %v386
  %v2781 = vunpack.c.h.b16 %v386
  %v2782 = vunpack.c.l.b16 %v387
  %v2783 = vunpack.c.h.b16 %v387
  %v2784 = vunpack.c.l.b16 %v388
  %v2785 = vunpack.c.h.b16 %v388
  %v2786 = vunpack.c.l.b16 %v389
  %v2787 = vunpack.c.h.b16 %v389
  %v2788 = vunpack.c.l.b16 %v390
  %v2789 = vunpack.c.h.b16 %v390
  %v2790 = vunpack.c.l.b16 %v391
  %v2791 = vunpack.c.h.b16 %v391
  %v2792 = vunpack.c.l.b16 %v392
  %v2793 = vunpack.c.h.b16 %v392
  %v2794 = vunpack.c.l.b16 %v393
  %v2795 = vunpack.c.h.b16 %v393
  %v2796 = vunpack.c.l.b16 %v394
  %v2797 = vunpack.c.h.b16 %v394
  %v2798 = vunpack.c.l.b16 %v395
  %v2799 = vunpack.c.h.b16 %v395
  %v2800 = vunpack.c.l.b16 %v396
  %v2801 = vunpack.c.h.b16 %v396
  %v2802 = vunpack.c.l.b16 %v397
  %v2803 = vunpack.c.h.b16 %v397
  %v2804 = vunpack.c.l.b16 %v398
  %v2805 = vunpack.c.h.b16 %v398
  %v2806 = vunpack.c.l.b16 %v399
  %v2807 = vunpack.c.h.b16 %v399
  %v2808 = vunpack.c.l.b16 %v400
  %v2809 = vunpack.c.h.b16 %v400
  %v2810 = vunpack.c.l.b16 %v401
  %v2811 = vunpack.c.h.b16 %v401
  %v2812 = vunpack.c.l.b16 %v402
  %v2813 = vunpack.c.h.b16 %v402
  %v2814 = vunpack.c.l.b16 %v403
  %v2815 = vunpack.c.h.b16 %v403
  %v2816 = vunpack.c.l.b16 %v404
  %v2817 = vunpack.c.h.b16 %v404
  %v2818 = vunpack.c.l.b16 %v405
  %v2819 = vunpack.c.h.b16 %v405
  %v2820 = vunpack.c.l.b16 %v406
  %v2821 = vunpack.c.h.b16 %v406
  %v2822 = vunpack.c.l.b16 %v407
  %v2823 = vunpack.c.h.b16 %v407
  %v2824 = vunpack.c.l.b16 %v408
  %v2825 = vunpack.c.h.b16 %v408
  %v2826 = vunpack.c.l.b16 %v409
  %v2827 = vunpack.c.h.b16 %v409
  %v2828 = vunpack.c.l.b16 %v410
  %v2829 = vunpack.c.h.b16 %v410
  %v2830 = vunpack.c.l.b16 %v411
  %v2831 = vunpack.c.h.b16 %v411
  %v2832 = vunpack.c.l.b16 %v412
  %v2833 = vunpack.c.h.b16 %v412
  %v2834 = vunpack.c.l.b16 %v413
  %v2835 = vunpack.c.h.b16 %v413
  %v2836 = vunpack.c.l.b16 %v414
  %v2837 = vunpack.c.h.b16 %v414
  %v2838 = vunpack.c.l.b16 %v415
  %v2839 = vunpack.c.h.b16 %v415
  %v2840 = vunpack.c.l.b16 %v416
  %v2841 = vunpack.c.h.b16 %v416
  %v2842 = vunpack.c.l.b16 %v417
  %v2843 = vunpack.c.h.b16 %v417
  %v2844 = vunpack.c.l.b16 %v418
  %v2845 = vunpack.c.h.b16 %v418
  %v2846 = vunpack.c.l.b16 %v419
  %v2847 = vunpack.c.h.b16 %v419
  %v2848 = vunpack.c.l.b16 %v420
  %v2849 = vunpack.c.h.b16 %v420
  %v2850 = vunpack.c.l.b16 %v421
  %v2851 = vunpack.c.h.b16 %v421
  %v2852 = vunpack.c.l.b16 %v422
  %v2853 = vunpack.c.h.b16 %v422
  %v2854 = vunpack.c.l.b16 %v423
  %v2855 = vunpack.c.h.b16 %v423
  %v2856 = vunpack.c.l.b16 %v424
  %v2857 = vunpack.c.h.b16 %v424
  %v2858 = vunpack.c.l.b16 %v425
  %v2859 = vunpack.c.h.b16 %v425
  %v2860 = vunpack.c.l.b16 %v426
  %v2861 = vunpack.c.h.b16 %v426
  %v2862 = vunpack.c.l.b16 %v427
  %v2863 = vunpack.c.h.b16 %v427
  %v2864 = vunpack.c.l.b16 %v428
  %v2865 = vunpack.c.h.b16 %v428
  %v2866 = vunpack.c.l.b16 %v429
  %v2867 = vunpack.c.h.b16 %v429
  %v2868 = vunpack.c.l.b16 %v430
  %v2869 = vunpack.c.h.b16 %v430
  %v2870 = vunpack.c.l.b16 %v431
  %v2871 = vunpack.c.h.b16 %v431
  %v2872 = vunpack.c.l.b16 %v432
  %v2873 = vunpack.c.h.b16 %v432
  %v2874 = vunpack.c.l.b16 %v433
  %v2875 = vunpack.c.h.b16 %v433
  %v2876 = vunpack.c.l.b16 %v434
  %v2877 = vunpack.c.h.b16 %v434
  %v2878 = vunpack.c.l.b16 %v435
  %v2879 = vunpack.c.h.b16 %v435
  %v2880 = vunpack.c.l.b16 %v436
  %v2881 = vunpack.c.h.b16 %v436
  %v2882 = vunpack.c.l.b16 %v437
  %v2883 = vunpack.c.h.b16 %v437
  %v2884 = vunpack.c.l.b16 %v438
  %v2885 = vunpack.c.h.b16 %v438
  %v2886 = vunpack.c.l.b16 %v439
  %v2887 = vunpack.c.h.b16 %v439
  %v2888 = vunpack.c.l.b16 %v440
  %v2889 = vunpack.c.h.b16 %v440
  %v2890 = vunpack.c.l.b16 %v441
  %v2891 = vunpack.c.h.b16 %v441
  %v2892 = vunpack.c.l.b16 %v442
  %v2893 = vunpack.c.h.b16 %v442
  %v2894 = vunpack.c.l.b16 %v443
  %v2895 = vunpack.c.h.b16 %v443
  %v2896 = vunpack.c.l.b16 %v444
  %v2897 = vunpack.c.h.b16 %v444
  %v2898 = vunpack.c.l.b16 %v445
  %v2899 = vunpack.c.h.b16 %v445
  %v2900 = vunpack.c.l.b16 %v446
  %v2901 = vunpack.c.h.b16 %v446
  %v2902 = vunpack.c.l.b16 %v447
  %v2903 = vunpack.c.h.b16 %v447
  %v2904 = vunpack.c.l.b16 %v448
  %v2905 = vunpack.c.h.b16 %v448
  %v2906 = vunpack.c.l.b16 %v449
  %v2907 = vunpack.c.h.b16 %v449
  %v2908 = vunpack.c.l.b16 %v450
  %v2909 = vunpack.c.h.b16 %v450
  %v2910 = vunpack.c.l.b16 %v451
  %v2911 = vunpack.c.h.b16 %v451
  %v2912 = vunpack.c.l.b16 %v452
  %v2913 = vunpack.c.h.b16 %v452
  %v2914 = vunpack.c.l.b16 %v453
  %v2915 = vunpack.c.h.b16 %v453
  %v2916 = vunpack.c.l.b16 %v454
  %v2917 = vunpack.c.h.b16 %v454
  %v2918 = vunpack.c.l.b16 %v455
  %v2919 = vunpack.c.h.b16 %v455
  %v2920 = vunpack.c.l.b16 %v456
  %v2921 = vunpack.c.h.b16 %v456
  %v2922 = vunpack.c.l.b16 %v457
  %v2923 = vunpack.c.h.b16 %v457
  %v2924 = vunpack.c.l.b16 %v458
  %v2925 = vunpack.c.h.b16 %v458
  %v2926 = vunpack.c.l.b16 %v459
  %v2927 = vunpack.c.h.b16 %v459
  %v2928 = vunpack.c.l.b16 %v460
  %v2929 = vunpack.c.h.b16 %v460
  %v2930 = vunpack.c.l.b16 %v461
  %v2931 = vunpack.c.h.b16 %v461
  %v2932 = vunpack.c.l.b16 %v462
  %v2933 = vunpack.c.h.b16 %v462
  %v2934 = vunpack.c.l.b16 %v463
  %v2935 = vunpack.c.h.b16 %v463
  %v2936 = vunpack.c.l.b16 %v464
  %v2937 = vunpack.c.h.b16 %v464
  %v2938 = vunpack.c.l.b16 %v465
  %v2939 = vunpack.c.h.b16 %v465
  %v2940 = vunpack.c.l.b16 %v466
  %v2941 = vunpack.c.h.b16 %v466
  %v2942 = vunpack.c.l.b16 %v467
  %v2943 = vunpack.c.h.b16 %v467
  %v2944 = vunpack.c.l.b16 %v468
  %v2945 = vunpack.c.h.b16 %v468
  %v2946 = vunpack.c.l.b16 %v469
  %v2947 = vunpack.c.h.b16 %v469
  %v2948 = vunpack.c.l.b16 %v470
  %v2949 = vunpack.c.h.b16 %v470
  %v2950 = vunpack.c.l.b16 %v471
  %v2951 = vunpack.c.h.b16 %v471
  %v2952 = vunpack.c.l.b16 %v472
  %v2953 = vunpack.c.h.b16 %v472
  %v2954 = vunpack.c.l.b16 %v473
  %v2955 = vunpack.c.h.b16 %v473
  %v2956 = vunpack.c.l.b16 %v474
  %v2957 = vunpack.c.h.b16 %v474
  %v2958 = vunpack.c.l.b16 %v475
  %v2959 = vunpack.c.h.b16 %v475
  %v2960 = vunpack.c.l.b16 %v476
  %v2961 = vunpack.c.h.b16 %v476
  %v2962 = vunpack.c.l.b16 %v477
  %v2963 = vunpack.c.h.b16 %v477
  %v2964 = vunpack.c.l.b16 %v478
  %v2965 = vunpack.c.h.b16 %v478
  %v2966 = vunpack.c.l.b16 %v479
  %v2967 = vunpack.c.h.b16 %v479
  %v2968 = vunpack.c.l.b16 %v480
  %v2969 = vunpack.c.h.b16 %v480
  %v2970 = vunpack.c.l.b16 %v481
  %v2971 = vunpack.c.h.b16 %v481
  %v2972 = vunpack.c.l.b16 %v482
  %v2973 = vunpack.c.h.b16 %v482
  %v2974 = vunpack.c.l.b16 %v483
  %v2975 = vunpack.c.h.b16 %v483
  %v2976 = vunpack.c.l.b16 %v484
  %v2977 = vunpack.c.h.b16 %v484
  %v2978 = vunpack.c.l.b16 %v485
  %v2979 = vunpack.c.h.b16 %v485
  %v2980 = vunpack.c.l.b16 %v486
  %v2981 = vunpack.c.h.b16 %v486
  %v2982 = vunpack.c.l.b16 %v487
  %v2983 = vunpack.c.h.b16 %v487
  %v2984 = vunpack.c.l.b16 %v488
  %v2985 = vunpack.c.h.b16 %v488
  %v2986 = vunpack.c.l.b16 %v489
  %v2987 = vunpack.c.h.b16 %v489
  %v2988 = vunpack.c.l.b16 %v490
  %v2989 = vunpack.c.h.b16 %v490
  %v2990 = vunpack.c.l.b16 %v491
  %v2991 = vunpack.c.h.b16 %v491
  %v2992 = vunpack.c.l.b16 %v492
  %v2993 = vunpack.c.h.b16 %v492
  %v2994 = vunpack.c.l.b16 %v493
  %v2995 = vunpack.c.h.b16 %v493
  %v2996 = vunpack.c.l.b16 %v494
  %v2997 = vunpack.c.h.b16 %v494
  %v2998 = vunpack.c.l.b16 %v495
  %v2999 = vunpack.c.h.b16 %v495
  %v3000 = vunpack.c.l.b16 %v496
  %v3001 = vunpack.c.h.b16 %v496
  %v3002 = vunpack.c.l.b16 %v497
  %v3003 = vunpack.c.h.b16 %v497
  %v3004 = vunpack.c.l.b16 %v498
  %v3005 = vunpack.c.h.b16 %v498
  %v3006 = vunpack.c.l.b16 %v499
  %v3007 = vunpack.c.h.b16 %v499
  %v3008 = vunpack.c.l.b16 %v500
  %v3009 = vunpack.c.h.b16 %v500
  %v3010 = vunpack.c.l.b16 %v501
  %v3011 = vunpack.c.h.b16 %v501
  %v3012 = vunpack.c.l.b16 %v502
  %v3013 = vunpack.c.h.b16 %v502
  %v3014 = vunpack.c.l.b16 %v503
  %v3015 = vunpack.c.h.b16 %v503
  %v3016 = vunpack.c.l.b16 %v504
  %v3017 = vunpack.c.h.b16 %v504
  %v3018 = vunpack.c.l.b16 %v505
  %v3019 = vunpack.c.h.b16 %v505
  %v3020 = vunpack.c.l.b16 %v506
  %v3021 = vunpack.c.h.b16 %v506
  %v3022 = vunpack.c.l.b16 %v507
  %v3023 = vunpack.c.h.b16 %v507
  %v3024 = vunpack.c.l.b16 %v508
  %v3025 = vunpack.c.h.b16 %v508
  %v3026 = vunpack.c.l.b16 %v509
  %v3027 = vunpack.c.h.b16 %v509
  %v3028 = vunpack.c.l.b16 %v510
  %v3029 = vunpack.c.h.b16 %v510
  %v3030 = vunpack.c.l.b16 %v511
  %v3031 = vunpack.c.h.b16 %v511
  %v3032 = vunpack.c.l.b16 %v512
  %v3033 = vunpack.c.h.b16 %v512
  %v3034 = vunpack.c.l.b16 %v513
  %v3035 = vunpack.c.h.b16 %v513
  %v3036 = vunpack.c.l.b16 %v514
  %v3037 = vunpack.c.h.b16 %v514
  %v3038 = vunpack.c.l.b16 %v515
  %v3039 = vunpack.c.h.b16 %v515
  %v3040 = vunpack.c.l.b16 %v516
  %v3041 = vunpack.c.h.b16 %v516
  %v3042 = vunpack.c.l.b16 %v517
  %v3043 = vunpack.c.h.b16 %v517
  %v3044 = vunpack.c.l.b16 %v518
  %v3045 = vunpack.c.h.b16 %v518
  %v3046 = vunpack.c.l.b16 %v519
  %v3047 = vunpack.c.h.b16 %v519
  %v3048 = vunpack.c.l.b16 %v520
  %v3049 = vunpack.c.h.b16 %v520
  %v3050 = vunpack.c.l.b16 %v521
  %v3051 = vunpack.c.h.b16 %v521
  %v3052 = vunpack.c.l.b16 %v522
  %v3053 = vunpack.c.h.b16 %v522
  %v3054 = vunpack.c.l.b16 %v523
  %v3055 = vunpack.c.h.b16 %v523
  %v3056 = vunpack.c.l.b16 %v524
  %v3057 = vunpack.c.h.b16 %v524
  %v3058 = vunpack.c.l.b16 %v525
  %v3059 = vunpack.c.h.b16 %v525
  %v3060 = vunpack.c.l.b16 %v526
  %v3061 = vunpack.c.h.b16 %v526
  %v3062 = vunpack.c.l.b16 %v527
  %v3063 = vunpack.c.h.b16 %v527
  %v3064 = vunpack.c.l.b16 %v528
  %v3065 = vunpack.c.h.b16 %v528
  %v3066 = vunpack.c.l.b16 %v529
  %v3067 = vunpack.c.h.b16 %v529
  %v3068 = vunpack.c.l.b16 %v530
  %v3069 = vunpack.c.h.b16 %v530
  %v3070 = vunpack.c.l.b16 %v531
  %v3071 = vunpack.c.h.b16 %v531
  %v3072 = vunpack.c.l.b16 %v532
  %v3073 = vunpack.c.h.b16 %v532
  %v3074 = vunpack.c.l.b16 %v533
  %v3075 = vunpack.c.h.b16 %v533
  %v3076 = vunpack.c.l.b16 %v534
  %v3077 = vunpack.c.h.b16 %v534
  %v3078 = vunpack.c.l.b16 %v535
  %v3079 = vunpack.c.h.b16 %v535
  %v3080 = vunpack.c.l.b16 %v536
  %v3081 = vunpack.c.h.b16 %v536
  %v3082 = vunpack.c.l.b16 %v537
  %v3083 = vunpack.c.h.b16 %v537
  %v3084 = vunpack.c.l.b16 %v538
  %v3085 = vunpack.c.h.b16 %v538
  %v3086 = vunpack.c.l.b16 %v539
  %v3087 = vunpack.c.h.b16 %v539
  %v3088 = vunpack.c.l.b16 %v540
  %v3089 = vunpack.c.h.b16 %v540
  %v3090 = vunpack.c.l.b16 %v541
  %v3091 = vunpack.c.h.b16 %v541
  %v3092 = vunpack.c.l.b16 %v542
  %v3093 = vunpack.c.h.b16 %v542
  %v3094 = vunpack.c.l.b16 %v543
  %v3095 = vunpack.c.h.b16 %v543
  %v3096 = vunpack.c.l.b16 %v544
  %v3097 = vunpack.c.h.b16 %v544
  %v3098 = vunpack.c.l.b16 %v545
  %v3099 = vunpack.c.h.b16 %v545
  %v3100 = vunpack.c.l.b16 %v546
  %v3101 = vunpack.c.h.b16 %v546
  %v3102 = vunpack.c.l.b16 %v547
  %v3103 = vunpack.c.h.b16 %v547
  %v3104 = vunpack.c.l.b16 %v548
  %v3105 = vunpack.c.h.b16 %v548
  %v3106 = vunpack.c.l.b16 %v549
  %v3107 = vunpack.c.h.b16 %v549
  %v3108 = vunpack.c.l.b16 %v550
  %v3109 = vunpack.c.h.b16 %v550
  %v3110 = vunpack.c.l.b16 %v551
  %v3111 = vunpack.c.h.b16 %v551
  %v3112 = vunpack.c.l.b16 %v552
  %v3113 = vunpack.c.h.b16 %v552
  %v3114 = vunpack.c.l.b16 %v553
  %v3115 = vunpack.c.h.b16 %v553
  %v3116 = vunpack.c.l.b16 %v554
  %v3117 = vunpack.c.h.b16 %v554
  %v3118 = vunpack.c.l.b16 %v555
  %v3119 = vunpack.c.h.b16 %v555
  %v3120 = vunpack.c.l.b16 %v556
  %v3121 = vunpack.c.h.b16 %v556
  %v3122 = vunpack.c.l.b16 %v557
  %v3123 = vunpack.c.h.b16 %v557
  %v3124 = vunpack.c.l.b16 %v558
  %v3125 = vunpack.c.h.b16 %v558
  %v3126 = vunpack.c.l.b16 %v559
  %v3127 = vunpack.c.h.b16 %v559
  %v3128 = vunpack.c.l.b16 %v560
  %v3129 = vunpack.c.h.b16 %v560
  %v3130 = vunpack.c.l.b16 %v561
  %v3131 = vunpack.c.h.b16 %v561
  %v3132 = vunpack.c.l.b16 %v562
  %v3133 = vunpack.c.h.b16 %v562
  %v3134 = vunpack.c.l.b16 %v563
  %v3135 = vunpack.c.h.b16 %v563
  %v3136 = vunpack.c.l.b16 %v564
  %v3137 = vunpack.c.h.b16 %v564
  %v3138 = vunpack.c.l.b16 %v565
  %v3139 = vunpack.c.h.b16 %v565
  %v3140 = vunpack.c.l.b16 %v566
  %v3141 = vunpack.c.h.b16 %v566
  %v3142 = vunpack.c.l.b16 %v567
  %v3143 = vunpack.c.h.b16 %v567
  %v3144 = vunpack.c.l.b16 %v568
  %v3145 = vunpack.c.h.b16 %v568
  %v3146 = vunpack.c.l.b16 %v569
  %v3147 = vunpack.c.h.b16 %v569
  %v3148 = vunpack.c.l.b16 %v570
  %v3149 = vunpack.c.h.b16 %v570
  %v3150 = vunpack.c.l.b16 %v571
  %v3151 = vunpack.c.h.b16 %v571
  %v3152 = vunpack.c.l.b16 %v572
  %v3153 = vunpack.c.h.b16 %v572
  %v3154 = vunpack.c.l.b16 %v573
  %v3155 = vunpack.c.h.b16 %v573
  %v3156 = vunpack.c.l.b16 %v574
  %v3157 = vunpack.c.h.b16 %v574
  %v3158 = vunpack.c.l.b16 %v575
  %v3159 = vunpack.c.h.b16 %v575
  %v3160 = vunpack.c.l.b16 %v576
  %v3161 = vunpack.c.h.b16 %v576
  %v3162 = vunpack.c.l.b16 %v577
  %v3163 = vunpack.c.h.b16 %v577
  %v3164 = vunpack.c.l.b16 %v578
  %v3165 = vunpack.c.h.b16 %v578
  %v3166 = vunpack.c.l.b16 %v579
  %v3167 = vunpack.c.h.b16 %v579
  %v3168 = vunpack.c.l.b16 %v580
  %v3169 = vunpack.c.h.b16 %v580
  %v3170 = vunpack.c.l.b16 %v581
  %v3171 = vunpack.c.h.b16 %v581
  %v3172 = vunpack.c.l.b16 %v582
  %v3173 = vunpack.c.h.b16 %v582
  %v3174 = vunpack.c.l.b16 %v583
  %v3175 = vunpack.c.h.b16 %v583
  %v3176 = vunpack.c.l.b16 %v584
  %v3177 = vunpack.c.h.b16 %v584
  %v3178 = vunpack.c.l.b16 %v585
  %v3179 = vunpack.c.h.b16 %v585
  %v3180 = vunpack.c.l.b16 %v586
  %v3181 = vunpack.c.h.b16 %v586
  %v3182 = vunpack.c.l.b16 %v587
  %v3183 = vunpack.c.h.b16 %v587
  %v3184 = vunpack.c.l.b16 %v588
  %v3185 = vunpack.c.h.b16 %v588
  %v3186 = vunpack.c.l.b16 %v589
  %v3187 = vunpack.c.h.b16 %v589
  %v3188 = vunpack.c.l.b16 %v590
  %v3189 = vunpack.c.h.b16 %v590
  %v3190 = vunpack.c.l.b16 %v591
  %v3191 = vunpack.c.h.b16 %v591
  %v3192 = vunpack.c.l.b16 %v592
  %v3193 = vunpack.c.h.b16 %v592
  %v3194 = vunpack.c.l.b16 %v593
  %v3195 = vunpack.c.h.b16 %v593
  %v3196 = vunpack.c.l.b16 %v594
  %v3197 = vunpack.c.h.b16 %v594
  %v3198 = vunpack.c.l.b16 %v595
  %v3199 = vunpack.c.h.b16 %v595
  %v3200 = vunpack.c.l.b16 %v596
  %v3201 = vunpack.c.h.b16 %v596
  %v3202 = vunpack.c.l.b16 %v597
  %v3203 = vunpack.c.h.b16 %v597
  %v3204 = vunpack.c.l.b16 %v598
  %v3205 = vunpack.c.h.b16 %v598
  %v3206 = vunpack.c.l.b16 %v599
  %v3207 = vunpack.c.h.b16 %v599
  %v3208 = vunpack.c.l.b16 %v600
  %v3209 = vunpack.c.h.b16 %v600
  %v3210 = vunpack.c.l.b16 %v601
  %v3211 = vunpack.c.h.b16 %v601
  %v3212 = vunpack.c.l.b16 %v602
  %v3213 = vunpack.c.h.b16 %v602
  %v3214 = vunpack.c.l.b16 %v603
  %v3215 = vunpack.c.h.b16 %v603
  %v3216 = vunpack.c.l.b16 %v604
  %v3217 = vunpack.c.h.b16 %v604
  %v3218 = vunpack.c.l.b16 %v605
  %v3219 = vunpack.c.h.b16 %v605
  %v3220 = vunpack.c.l.b16 %v606
  %v3221 = vunpack.c.h.b16 %v606
  %v3222 = vunpack.c.l.b16 %v607
  %v3223 = vunpack.c.h.b16 %v607
  %v3224 = vunpack.c.l.b16 %v608
  %v3225 = vunpack.c.h.b16 %v608
  %v3226 = vunpack.c.l.b16 %v609
  %v3227 = vunpack.c.h.b16 %v609
  %v3228 = vunpack.c.l.b16 %v610
  %v3229 = vunpack.c.h.b16 %v610
  %v3230 = vunpack.c.l.b16 %v611
  %v3231 = vunpack.c.h.b16 %v611
  %v3232 = vunpack.c.l.b16 %v612
  %v3233 = vunpack.c.h.b16 %v612
  %v3234 = vunpack.c.l.b16 %v613
  %v3235 = vunpack.c.h.b16 %v613
  %v3236 = vunpack.c.l.b16 %v614
  %v3237 = vunpack.c.h.b16 %v614
  %v3238 = vunpack.c.l.b16 %v615
  %v3239 = vunpack.c.h.b16 %v615
  %v3240 = vunpack.c.l.b16 %v616
  %v3241 = vunpack.c.h.b16 %v616
  %v3242 = vunpack.c.l.b16 %v617
  %v3243 = vunpack.c.h.b16 %v617
  %v3244 = vunpack.c.l.b16 %v618
  %v3245 = vunpack.c.h.b16 %v618
  %v3246 = vunpack.c.l.b16 %v619
  %v3247 = vunpack.c.h.b16 %v619
  %v3248 = vunpack.c.l.b16 %v620
  %v3249 = vunpack.c.h.b16 %v620
  %v3250 = vunpack.c.l.b16 %v621
  %v3251 = vunpack.c.h.b16 %v621
  %v3252 = vunpack.c.l.b16 %v622
  %v3253 = vunpack.c.h.b16 %v622
  %v3254 = vunpack.c.l.b16 %v623
  %v3255 = vunpack.c.h.b16 %v623
  %v3256 = vunpack.c.l.b16 %v624
  %v3257 = vunpack.c.h.b16 %v624
  %v3258 = vunpack.c.l.b16 %v625
  %v3259 = vunpack.c.h.b16 %v625
  %v3260 = vunpack.c.l.b16 %v626
  %v3261 = vunpack.c.h.b16 %v626
  %v3262 = vunpack.c.l.b16 %v627
  %v3263 = vunpack.c.h.b16 %v627
  %v3264 = vunpack.c.l.b16 %v628
  %v3265 = vunpack.c.h.b16 %v628
  %v3266 = vunpack.c.l.b16 %v629
  %v3267 = vunpack.c.h.b16 %v629
  %v3268 = vunpack.c.l.b16 %v630
  %v3269 = vunpack.c.h.b16 %v630
  %v3270 = vunpack.c.l.b16 %v631
  %v3271 = vunpack.c.h.b16 %v631
  %v3272 = vunpack.c.l.b16 %v632
  %v3273 = vunpack.c.h.b16 %v632
  %v3274 = vunpack.c.l.b16 %v633
  %v3275 = vunpack.c.h.b16 %v633
  %v3276 = vunpack.c.l.b16 %v634
  %v3277 = vunpack.c.h.b16 %v634
  %v3278 = vunpack.c.l.b16 %v635
  %v3279 = vunpack.c.h.b16 %v635
  %v3280 = vunpack.c.l.b16 %v636
  %v3281 = vunpack.c.h.b16 %v636
  %v3282 = vunpack.c.l.b16 %v637
  %v3283 = vunpack.c.h.b16 %v637
  %v3284 = vunpack.c.l.b16 %v638
  %v3285 = vunpack.c.h.b16 %v638
  %v3286 = vunpack.c.l.b16 %v639
  %v3287 = vunpack.c.h.b16 %v639
  %v3288 = vunpack.c.l.b16 %v640
  %v3289 = vunpack.c.h.b16 %v640
  %v3290 = vunpack.c.l.b16 %v641
  %v3291 = vunpack.c.h.b16 %v641
  %v3292 = vunpack.c.l.b16 %v642
  %v3293 = vunpack.c.h.b16 %v642
  %v3294 = vunpack.c.l.b16 %v643
  %v3295 = vunpack.c.h.b16 %v643
  %v3296 = vunpack.c.l.b16 %v644
  %v3297 = vunpack.c.h.b16 %v644
  %v3298 = vunpack.c.l.b16 %v645
  %v3299 = vunpack.c.h.b16 %v645
  %v3300 = vunpack.c.l.b16 %v646
  %v3301 = vunpack.c.h.b16 %v646
  %v3302 = vunpack.c.l.b16 %v647
  %v3303 = vunpack.c.h.b16 %v647
  %v3304 = vunpack.c.l.b16 %v648
  %v3305 = vunpack.c.h.b16 %v648
  %v3306 = vunpack.c.l.b16 %v649
  %v3307 = vunpack.c.h.b16 %v649
  %v3308 = vunpack.c.l.b16 %v650
  %v3309 = vunpack.c.h.b16 %v650
  %v3310 = vunpack.c.l.b16 %v651
  %v3311 = vunpack.c.h.b16 %v651
  %v3312 = vunpack.c.l.b16 %v652
  %v3313 = vunpack.c.h.b16 %v652
  %v3314 = vunpack.c.l.b16 %v653
  %v3315 = vunpack.c.h.b16 %v653
  %v3316 = vunpack.c.l.b16 %v654
  %v3317 = vunpack.c.h.b16 %v654
  %v3318 = vunpack.c.l.b16 %v655
  %v3319 = vunpack.c.h.b16 %v655
  %v3320 = vunpack.c.l.b16 %v656
  %v3321 = vunpack.c.h.b16 %v656
  %v3322 = vunpack.c.l.b16 %v657
  %v3323 = vunpack.c.h.b16 %v657
  %v3324 = vunpack.c.l.b16 %v658
  %v3325 = vunpack.c.h.b16 %v658
  %v3326 = vunpack.c.l.b16 %v659
  %v3327 = vunpack.c.h.b16 %v659
  %v3328 = vunpack.c.l.b16 %v660
  %v3329 = vunpack.c.h.b16 %v660
  %v3330 = vunpack.c.l.b16 %v661
  %v3331 = vunpack.c.h.b16 %v661
  %v3332 = vunpack.c.l.b16 %v662
  %v3333 = vunpack.c.h.b16 %v662
  %v3334 = vunpack.c.l.b16 %v663
  %v3335 = vunpack.c.h.b16 %v663
  %v3336 = vunpack.c.l.b16 %v664
  %v3337 = vunpack.c.h.b16 %v664
  %v3338 = vunpack.c.l.b16 %v665
  %v3339 = vunpack.c.h.b16 %v665
  %v3340 = vunpack.c.l.b16 %v666
  %v3341 = vunpack.c.h.b16 %v666
  %v3342 = vunpack.c.l.b16 %v667
  %v3343 = vunpack.c.h.b16 %v667
  %v3344 = vunpack.c.l.b16 %v668
  %v3345 = vunpack.c.h.b16 %v668
  %v3346 = vunpack.c.l.b16 %v669
  %v3347 = vunpack.c.h.b16 %v669
  %v3348 = vunpack.c.l.b16 %v670
  %v3349 = vunpack.c.h.b16 %v670
  %v3350 = vunpack.c.l.b16 %v671
  %v3351 = vunpack.c.h.b16 %v671
  %v3352 = vunpack.c.l.b16 %v672
  %v3353 = vunpack.c.h.b16 %v672
  %v3354 = vunpack.c.l.b16 %v673
  %v3355 = vunpack.c.h.b16 %v673
  %v3356 = vunpack.c.l.b16 %v674
  %v3357 = vunpack.c.h.b16 %v674
  %v3358 = vunpack.c.l.b16 %v675
  %v3359 = vunpack.c.h.b16 %v675
  %v3360 = vunpack.c.l.b16 %v676
  %v3361 = vunpack.c.h.b16 %v676
  %v3362 = vunpack.c.l.b16 %v677
  %v3363 = vunpack.c.h.b16 %v677
  %v3364 = vunpack.c.l.b16 %v678
  %v3365 = vunpack.c.h.b16 %v678
  %v3366 = vunpack.c.l.b16 %v679
  %v3367 = vunpack.c.h.b16 %v679
  %v3368 = vunpack.c.l.b16 %v680
  %v3369 = vunpack.c.h.b16 %v680
  %v3370 = vunpack.c.l.b16 %v681
  %v3371 = vunpack.c.h.b16 %v681
  %v3372 = vunpack.c.l.b16 %v682
  %v3373 = vunpack.c.h.b16 %v682
  %v3374 = vunpack.c.l.b16 %v683
  %v3375 = vunpack.c.h.b16 %v683
  %v3376 = vunpack.c.l.b16 %v684
  %v3377 = vunpack.c.h.b16 %v684
  %v3378 = vunpack.c.l.b16 %v685
  %v3379 = vunpack.c.h.b16 %v685
  %v3380 = vunpack.c.l.b16 %v686
  %v3381 = vunpack.c.h.b16 %v686
  %v3382 = vunpack.c.l.b16 %v687
  %v3383 = vunpack.c.h.b16 %v687
  %v3384 = vunpack.c.l.b16 %v688
  %v3385 = vunpack.c.h.b16 %v688
  %v3386 = vunpack.c.l.b16 %v689
  %v3387 = vunpack.c.h.b16 %v689
  %v3388 = vunpack.c.l.b16 %v690
  %v3389 = vunpack.c.h.b16 %v690
  %v3390 = vunpack.c.l.b16 %v691
  %v3391 = vunpack.c.h.b16 %v691
  %v3392 = vunpack.c.l.b16 %v692
  %v3393 = vunpack.c.h.b16 %v692
  %v3394 = vunpack.c.l.b16 %v693
  %v3395 = vunpack.c.h.b16 %v693
  %v3396 = vunpack.c.l.b16 %v694
  %v3397 = vunpack.c.h.b16 %v694
  %v3398 = vunpack.c.l.b16 %v695
  %v3399 = vunpack.c.h.b16 %v695
  %v3400 = vunpack.c.l.b16 %v696
  %v3401 = vunpack.c.h.b16 %v696
  %v3402 = vunpack.c.l.b16 %v697
  %v3403 = vunpack.c.h.b16 %v697
  %v3404 = vunpack.c.l.b16 %v698
  %v3405 = vunpack.c.h.b16 %v698
  %v3406 = vunpack.c.l.b16 %v699
  %v3407 = vunpack.c.h.b16 %v699
  %v3408 = vunpack.c.l.b16 %v700
  %v3409 = vunpack.c.h.b16 %v700
  %v3410 = vunpack.c.l.b16 %v701
  %v3411 = vunpack.c.h.b16 %v701
  %v3412 = vunpack.c.l.b16 %v702
  %v3413 = vunpack.c.h.b16 %v702
  %v3414 = vunpack.c.l.b16 %v703
  %v3415 = vunpack.c.h.b16 %v703
  %v3416 = vunpack.c.l.b16 %v704
  %v3417 = vunpack.c.h.b16 %v704
  %v3418 = vunpack.c.l.b16 %v705
  %v3419 = vunpack.c.h.b16 %v705
  %v3420 = vunpack.c.l.b16 %v706
  %v3421 = vunpack.c.h.b16 %v706
  %v3422 = vunpack.c.l.b16 %v707
  %v3423 = vunpack.c.h.b16 %v707
  %v3424 = vunpack.c.l.b16 %v708
  %v3425 = vunpack.c.h.b16 %v708
  %v3426 = vunpack.c.l.b16 %v709
  %v3427 = vunpack.c.h.b16 %v709
  %v3428 = vunpack.c.l.b16 %v710
  %v3429 = vunpack.c.h.b16 %v710
  %v3430 = vunpack.c.l.b16 %v711
  %v3431 = vunpack.c.h.b16 %v711
  %v3432 = vunpack.c.l.b16 %v712
  %v3433 = vunpack.c.h.b16 %v712
  %v3434 = vunpack.c.l.b16 %v713
  %v3435 = vunpack.c.h.b16 %v713
  %v3436 = vunpack.c.l.b16 %v714
  %v3437 = vunpack.c.h.b16 %v714
  %v3438 = vunpack.c.l.b16 %v715
  %v3439 = vunpack.c.h.b16 %v715
  %v3440 = vunpack.c.l.b16 %v716
  %v3441 = vunpack.c.h.b16 %v716
  %v3442 = vunpack.c.l.b16 %v717
  %v3443 = vunpack.c.h.b16 %v717
  %v3444 = vunpack.c.l.b16 %v718
  %v3445 = vunpack.c.h.b16 %v718
  %v3446 = vunpack.c.l.b16 %v719
  %v3447 = vunpack.c.h.b16 %v719
  %v3448 = vunpack.c.l.b16 %v720
  %v3449 = vunpack.c.h.b16 %v720
  %v3450 = vunpack.c.l.b16 %v721
  %v3451 = vunpack.c.h.b16 %v721
  %v3452 = vunpack.c.l.b16 %v722
  %v3453 = vunpack.c.h.b16 %v722
  %v3454 = vunpack.c.l.b16 %v723
  %v3455 = vunpack.c.h.b16 %v723
  %v3456 = vunpack.c.l.b16 %v724
  %v3457 = vunpack.c.h.b16 %v724
  %v3458 = vunpack.c.l.b16 %v725
  %v3459 = vunpack.c.h.b16 %v725
  %v3460 = vunpack.c.l.b16 %v726
  %v3461 = vunpack.c.h.b16 %v726
  %v3462 = vunpack.c.l.b16 %v727
  %v3463 = vunpack.c.h.b16 %v727
  %v3464 = vunpack.c.l.b16 %v728
  %v3465 = vunpack.c.h.b16 %v728
  %v3466 = vunpack.c.l.b16 %v729
  %v3467 = vunpack.c.h.b16 %v729
  %v3468 = vunpack.c.l.b16 %v730
  %v3469 = vunpack.c.h.b16 %v730
  %v3470 = vunpack.c.l.b16 %v731
  %v3471 = vunpack.c.h.b16 %v731
  %v3472 = vunpack.c.l.b16 %v732
  %v3473 = vunpack.c.h.b16 %v732
  %v3474 = vunpack.c.l.b16 %v733
  %v3475 = vunpack.c.h.b16 %v733
  %v3476 = vunpack.c.l.b16 %v734
  %v3477 = vunpack.c.h.b16 %v734
  %v3478 = vunpack.c.l.b16 %v735
  %v3479 = vunpack.c.h.b16 %v735
  %v3480 = vunpack.c.l.b16 %v736
  %v3481 = vunpack.c.h.b16 %v736
  %v3482 = vunpack.c.l.b16 %v737
  %v3483 = vunpack.c.h.b16 %v737
  %v3484 = vunpack.c.l.b16 %v738
  %v3485 = vunpack.c.h.b16 %v738
  %v3486 = vunpack.c.l.b16 %v739
  %v3487 = vunpack.c.h.b16 %v739
  %v3488 = vunpack.c.l.b16 %v740
  %v3489 = vunpack.c.h.b16 %v740
  %v3490 = vunpack.c.l.b16 %v741
  %v3491 = vunpack.c.h.b16 %v741
  %v3492 = vunpack.c.l.b16 %v742
  %v3493 = vunpack.c.h.b16 %v742
  %v3494 = vunpack.c.l.b16 %v743
  %v3495 = vunpack.c.h.b16 %v743
  %v3496 = vunpack.c.l.b16 %v744
  %v3497 = vunpack.c.h.b16 %v744
  %v3498 = vunpack.c.l.b16 %v745
  %v3499 = vunpack.c.h.b16 %v745
  %v3500 = vunpack.c.l.b16 %v746
  %v3501 = vunpack.c.h.b16 %v746
  %v3502 = vunpack.c.l.b16 %v747
  %v3503 = vunpack.c.h.b16 %v747
  %v3504 = vunpack.c.l.b16 %v748
  %v3505 = vunpack.c.h.b16 %v748
  %v3506 = vunpack.c.l.b16 %v749
  %v3507 = vunpack.c.h.b16 %v749
  %v3508 = vunpack.c.l.b16 %v750
  %v3509 = vunpack.c.h.b16 %v750
  %v3510 = vunpack.c.l.b16 %v751
  %v3511 = vunpack.c.h.b16 %v751
  %v3512 = vunpack.c.l.b16 %v752
  %v3513 = vunpack.c.h.b16 %v752
  %v3514 = vunpack.c.l.b16 %v753
  %v3515 = vunpack.c.h.b16 %v753
  %v3516 = vunpack.c.l.b16 %v754
  %v3517 = vunpack.c.h.b16 %v754
  %v3518 = vunpack.c.l.b16 %v755
  %v3519 = vunpack.c.h.b16 %v755
  %v3520 = vunpack.c.l.b16 %v756
  %v3521 = vunpack.c.h.b16 %v756
  %v3522 = vunpack.c.l.b16 %v757
  %v3523 = vunpack.c.h.b16 %v757
  %v3524 = vunpack.c.l.b16 %v758
  %v3525 = vunpack.c.h.b16 %v758
  %v3526 = vunpack.c.l.b16 %v759
  %v3527 = vunpack.c.h.b16 %v759
  %v3528 = vunpack.c.l.b16 %v760
  %v3529 = vunpack.c.h.b16 %v760
  %v3530 = vunpack.c.l.b16 %v761
  %v3531 = vunpack.c.h.b16 %v761
  %v3532 = vunpack.c.l.b16 %v762
  %v3533 = vunpack.c.h.b16 %v762
  %v3534 = vunpack.c.l.b16 %v763
  %v3535 = vunpack.c.h.b16 %v763
  %v3536 = vunpack.c.l.b16 %v764
  %v3537 = vunpack.c.h.b16 %v764
  %v3538 = vunpack.c.l.b16 %v765
  %v3539 = vunpack.c.h.b16 %v765
  %v3540 = vunpack.c.l.b16 %v766
  %v3541 = vunpack.c.h.b16 %v766
  %v3542 = vunpack.c.l.b16 %v767
  %v3543 = vunpack.c.h.b16 %v767
  %v3544 = vunpack.c.l.b16 %v768
  %v3545 = vunpack.c.h.b16 %v768
  %v3546 = vunpack.c.l.b16 %v769
  %v3547 = vunpack.c.h.b16 %v769
  %v3548 = vunpack.c.l.b16 %v770
  %v3549 = vunpack.c.h.b16 %v770
  %v3550 = vunpack.c.l.b16 %v771
  %v3551 = vunpack.c.h.b16 %v771
  %v3552 = vunpack.c.l.b16 %v772
  %v3553 = vunpack.c.h.b16 %v772
  %v3554 = vunpack.c.l.b16 %v773
  %v3555 = vunpack.c.h.b16 %v773
  %v3556 = vunpack.c.l.b16 %v774
  %v3557 = vunpack.c.h.b16 %v774
  %v3558 = vunpack.c.l.b16 %v775
  %v3559 = vunpack.c.h.b16 %v775
  %v3560 = vunpack.c.l.b16 %v776
  %v3561 = vunpack.c.h.b16 %v776
  %v3562 = vunpack.c.l.b16 %v777
  %v3563 = vunpack.c.h.b16 %v777
  %v3564 = vunpack.c.l.b16 %v778
  %v3565 = vunpack.c.h.b16 %v778
  %v3566 = vunpack.c.l.b16 %v779
  %v3567 = vunpack.c.h.b16 %v779
  %v3568 = vunpack.c.l.b16 %v780
  %v3569 = vunpack.c.h.b16 %v780
  %v3570 = vunpack.c.l.b16 %v781
  %v3571 = vunpack.c.h.b16 %v781
  %v3572 = vunpack.c.l.b16 %v782
  %v3573 = vunpack.c.h.b16 %v782
  %v3574 = vunpack.c.l.b16 %v783
  %v3575 = vunpack.c.h.b16 %v783
  %v3576 = vunpack.c.l.b16 %v784
  %v3577 = vunpack.c.h.b16 %v784
  %v3578 = vunpack.c.l.b16 %v785
  %v3579 = vunpack.c.h.b16 %v785
  %v3580 = vunpack.c.l.b16 %v786
  %v3581 = vunpack.c.h.b16 %v786
  %v3582 = vunpack.c.l.b16 %v787
  %v3583 = vunpack.c.h.b16 %v787
  %v3584 = vunpack.c.l.b16 %v788
  %v3585 = vunpack.c.h.b16 %v788
  %v3586 = vunpack.c.l.b16 %v789
  %v3587 = vunpack.c.h.b16 %v789
  %v3588 = vunpack.c.l.b16 %v790
  %v3589 = vunpack.c.h.b16 %v790
  %v3590 = vunpack.c.l.b16 %v791
  %v3591 = vunpack.c.h.b16 %v791
  %v3592 = vunpack.c.l.b16 %v792
  %v3593 = vunpack.c.h.b16 %v792
  %v3594 = vunpack.c.l.b16 %v793
  %v3595 = vunpack.c.h.b16 %v793
  %v3596 = vunpack.c.l.b16 %v794
  %v3597 = vunpack.c.h.b16 %v794
  %v3598 = vunpack.c.l.b16 %v795
  %v3599 = vunpack.c.h.b16 %v795
  %v3600 = vunpack.c.l.b16 %v796
  %v3601 = vunpack.c.h.b16 %v796
  %v3602 = vunpack.c.l.b16 %v797
  %v3603 = vunpack.c.h.b16 %v797
  %v3604 = vunpack.c.l.b16 %v798
  %v3605 = vunpack.c.h.b16 %v798
  %v3606 = vunpack.c.l.b16 %v799
  %v3607 = vunpack.c.h.b16 %v799
  %v3608 = vunpack.c.l.b16 %v800
  %v3609 = vunpack.c.h.b16 %v800
  %v3610 = vunpack.c.l.b16 %v801
  %v3611 = vunpack.c.h.b16 %v801
  %v3612 = vunpack.c.l.b16 %v802
  %v3613 = vunpack.c.h.b16 %v802
  %v3614 = vunpack.c.l.b16 %v803
  %v3615 = vunpack.c.h.b16 %v803
  %v3616 = vunpack.c.l.b16 %v804
  %v3617 = vunpack.c.h.b16 %v804
  %v3618 = vunpack.c.l.b16 %v805
  %v3619 = vunpack.c.h.b16 %v805
  %v3620 = vunpack.c.l.b16 %v806
  %v3621 = vunpack.c.h.b16 %v806
  %v3622 = vunpack.c.l.b16 %v807
  %v3623 = vunpack.c.h.b16 %v807
  %v3624 = vunpack.c.l.b16 %v808
  %v3625 = vunpack.c.h.b16 %v808
  %v3626 = vunpack.c.l.b16 %v809
  %v3627 = vunpack.c.h.b16 %v809
  %v3628 = vunpack.c.l.b16 %v810
  %v3629 = vunpack.c.h.b16 %v810
  %v3630 = vunpack.c.l.b16 %v811
  %v3631 = vunpack.c.h.b16 %v811
  %v3632 = vunpack.c.l.b16 %v812
  %v3633 = vunpack.c.h.b16 %v812
  %v3634 = vunpack.c.l.b16 %v813
  %v3635 = vunpack.c.h.b16 %v813
  %v3636 = vunpack.c.l.b16 %v814
  %v3637 = vunpack.c.h.b16 %v814
  %v3638 = vunpack.c.l.b16 %v815
  %v3639 = vunpack.c.h.b16 %v815
  %v3640 = vunpack.c.l.b16 %v816
  %v3641 = vunpack.c.h.b16 %v816
  %v3642 = vunpack.c.l.b16 %v817
  %v3643 = vunpack.c.h.b16 %v817
  %v3644 = vunpack.c.l.b16 %v818
  %v3645 = vunpack.c.h.b16 %v818
  %v3646 = vunpack.c.l.b16 %v819
  %v3647 = vunpack.c.h.b16 %v819
  %v3648 = vunpack.c.l.b16 %v820
  %v3649 = vunpack.c.h.b16 %v820
  %v3650 = vunpack.c.l.b16 %v821
  %v3651 = vunpack.c.h.b16 %v821
  %v3652 = vunpack.c.l.b16 %v822
  %v3653 = vunpack.c.h.b16 %v822
  %v3654 = vunpack.c.l.b16 %v823
  %v3655 = vunpack.c.h.b16 %v823
  %v3656 = vunpack.c.l.b16 %v824
  %v3657 = vunpack.c.h.b16 %v824
  %v3658 = vunpack.c.l.b16 %v825
  %v3659 = vunpack.c.h.b16 %v825
  %v3660 = vunpack.c.l.b16 %v826
  %v3661 = vunpack.c.h.b16 %v826
  %v3662 = vunpack.c.l.b16 %v827
  %v3663 = vunpack.c.h.b16 %v827
  %v3664 = vunpack.c.l.b16 %v828
  %v3665 = vunpack.c.h.b16 %v828
  %v3666 = vunpack.c.l.b16 %v829
  %v3667 = vunpack.c.h.b16 %v829
  %v3668 = vunpack.c.l.b16 %v830
  %v3669 = vunpack.c.h.b16 %v830
  %v3670 = vunpack.c.l.b16 %v831
  %v3671 = vunpack.c.h.b16 %v831
  %v3672 = vunpack.c.l.b16 %v832
  %v3673 = vunpack.c.h.b16 %v832
  %v3674 = vunpack.c.l.b16 %v833
  %v3675 = vunpack.c.h.b16 %v833
  %v3676 = vunpack.c.l.b16 %v834
  %v3677 = vunpack.c.h.b16 %v834
  %v3678 = vunpack.c.l.b16 %v835
  %v3679 = vunpack.c.h.b16 %v835
  %v3680 = vunpack.c.l.b16 %v836
  %v3681 = vunpack.c.h.b16 %v836
  %v3682 = vunpack.c.l.b16 %v837
  %v3683 = vunpack.c.h.b16 %v837
  %v3684 = vunpack.c.l.b16 %v838
  %v3685 = vunpack.c.h.b16 %v838
  %v3686 = vunpack.c.l.b16 %v839
  %v3687 = vunpack.c.h.b16 %v839
  %v3688 = vunpack.c.l.b16 %v840
  %v3689 = vunpack.c.h.b16 %v840
  %v3690 = vunpack.c.l.b16 %v841
  %v3691 = vunpack.c.h.b16 %v841
  %v3692 = vunpack.c.l.b16 %v842
  %v3693 = vunpack.c.h.b16 %v842
  %v3694 = vunpack.c.l.b16 %v843
  %v3695 = vunpack.c.h.b16 %v843
  %v3696 = vunpack.c.l.b16 %v844
  %v3697 = vunpack.c.h.b16 %v844
  %v3698 = vunpack.c.l.b16 %v845
  %v3699 = vunpack.c.h.b16 %v845
  %v3700 = vunpack.c.l.b16 %v846
  %v3701 = vunpack.c.h.b16 %v846
  %v3702 = vunpack.c.l.b16 %v847
  %v3703 = vunpack.c.h.b16 %v847
  %v3704 = vunpack.c.l.b16 %v848
  %v3705 = vunpack.c.h.b16 %v848
  %v3706 = vunpack.c.l.b16 %v849
  %v3707 = vunpack.c.h.b16 %v849
  %v3708 = vunpack.c.l.b16 %v850
  %v3709 = vunpack.c.h.b16 %v850
  %v3710 = vunpack.c.l.b16 %v851
  %v3711 = vunpack.c.h.b16 %v851
  %v3712 = vunpack.c.l.b16 %v852
  %v3713 = vunpack.c.h.b16 %v852
  %v3714 = vunpack.c.l.b16 %v853
  %v3715 = vunpack.c.h.b16 %v853
  %v3716 = vunpack.c.l.b16 %v854
  %v3717 = vunpack.c.h.b16 %v854
  %v3718 = vunpack.c.l.b16 %v855
  %v3719 = vunpack.c.h.b16 %v855
  %v3720 = vunpack.c.l.b16 %v856
  %v3721 = vunpack.c.h.b16 %v856
  %v3722 = vunpack.c.l.b16 %v857
  %v3723 = vunpack.c.h.b16 %v857
  %v3724 = vunpack.c.l.b16 %v858
  %v3725 = vunpack.c.h.b16 %v858
  %v3726 = vunpack.c.l.b16 %v859
  %v3727 = vunpack.c.h.b16 %v859
  %v3728 = vunpack.c.l.b16 %v860
  %v3729 = vunpack.c.h.b16 %v860
  %v3730 = vunpack.c.l.b16 %v861
  %v3731 = vunpack.c.h.b16 %v861
  %v3732 = vunpack.c.l.b16 %v862
  %v3733 = vunpack.c.h.b16 %v862
  %v3734 = vunpack.c.l.b16 %v863
  %v3735 = vunpack.c.h.b16 %v863
  %v3736 = vunpack.c.l.b16 %v864
  %v3737 = vunpack.c.h.b16 %v864
  %v3738 = vunpack.c.l.b16 %v865
  %v3739 = vunpack.c.h.b16 %v865
  %v3740 = vunpack.c.l.b16 %v866
  %v3741 = vunpack.c.h.b16 %v866
  %v3742 = vunpack.c.l.b16 %v867
  %v3743 = vunpack.c.h.b16 %v867
  %v3744 = vunpack.c.l.b16 %v868
  %v3745 = vunpack.c.h.b16 %v868
  %v3746 = vunpack.c.l.b16 %v869
  %v3747 = vunpack.c.h.b16 %v869
  %v3748 = vunpack.c.l.b16 %v870
  %v3749 = vunpack.c.h.b16 %v870
  %v3750 = vunpack.c.l.b16 %v871
  %v3751 = vunpack.c.h.b16 %v871
  %v3752 = vunpack.c.l.b16 %v872
  %v3753 = vunpack.c.h.b16 %v872
  %v3754 = vunpack.c.l.b16 %v873
  %v3755 = vunpack.c.h.b16 %v873
  %v3756 = vunpack.c.l.b16 %v874
  %v3757 = vunpack.c.h.b16 %v874
  %v3758 = vunpack.c.l.b16 %v875
  %v3759 = vunpack.c.h.b16 %v875
  %v3760 = vunpack.c.l.b16 %v876
  %v3761 = vunpack.c.h.b16 %v876
  %v3762 = vunpack.c.l.b16 %v877
  %v3763 = vunpack.c.h.b16 %v877
  %v3764 = vunpack.c.l.b16 %v878
  %v3765 = vunpack.c.h.b16 %v878
  %v3766 = vunpack.c.l.b16 %v879
  %v3767 = vunpack.c.h.b16 %v879
  %v3768 = vunpack.c.l.b16 %v880
  %v3769 = vunpack.c.h.b16 %v880
  %v3770 = vunpack.c.l.b16 %v881
  %v3771 = vunpack.c.h.b16 %v881
  %v3772 = vunpack.c.l.b16 %v882
  %v3773 = vunpack.c.h.b16 %v882
  %v3774 = vunpack.c.l.b16 %v883
  %v3775 = vunpack.c.h.b16 %v883
  %v3776 = vunpack.c.l.b16 %v884
  %v3777 = vunpack.c.h.b16 %v884
  %v3778 = vunpack.c.l.b16 %v885
  %v3779 = vunpack.c.h.b16 %v885
  %v3780 = vunpack.c.l.b16 %v886
  %v3781 = vunpack.c.h.b16 %v886
  %v3782 = vunpack.c.l.b16 %v887
  %v3783 = vunpack.c.h.b16 %v887
  %v3784 = vunpack.c.l.b16 %v888
  %v3785 = vunpack.c.h.b16 %v888
  %v3786 = vunpack.c.l.b16 %v889
  %v3787 = vunpack.c.h.b16 %v889
  %v3788 = vunpack.c.l.b16 %v890
  %v3789 = vunpack.c.h.b16 %v890
  %v3790 = vunpack.c.l.b16 %v891
  %v3791 = vunpack.c.h.b16 %v891
  %v3792 = vunpack.c.l.b16 %v892
  %v3793 = vunpack.c.h.b16 %v892
  %v3794 = vunpack.c.l.b16 %v893
  %v3795 = vunpack.c.h.b16 %v893
  %v3796 = vunpack.c.l.b16 %v894
  %v3797 = vunpack.c.h.b16 %v894
  %v3798 = vunpack.c.l.b16 %v895
  %v3799 = vunpack.c.h.b16 %v895
  %v3800 = vunpack.c.l.b16 %v896
  %v3801 = vunpack.c.h.b16 %v896
  %v3802 = vunpack.c.l.b16 %v897
  %v3803 = vunpack.c.h.b16 %v897
  %v3804 = vunpack.c.l.b16 %v898
  %v3805 = vunpack.c.h.b16 %v898
  %v3806 = vunpack.c.l.b16 %v899
  %v3807 = vunpack.c.h.b16 %v899
  %v3808 = vunpack.c.l.b16 %v900
  %v3809 = vunpack.c.h.b16 %v900
  %v3810 = vunpack.c.l.b16 %v901
  %v3811 = vunpack.c.h.b16 %v901
  %v3812 = vunpack.c.l.b16 %v902
  %v3813 = vunpack.c.h.b16 %v902
  %v3814 = vunpack.c.l.b16 %v903
  %v3815 = vunpack.c.h.b16 %v903
  %v3816 = vunpack.c.l.b16 %v904
  %v3817 = vunpack.c.h.b16 %v904
  %v3818 = vunpack.c.l.b16 %v905
  %v3819 = vunpack.c.h.b16 %v905
  %v3820 = vunpack.c.l.b16 %v906
  %v3821 = vunpack.c.h.b16 %v906
  %v3822 = vunpack.c.l.b16 %v907
  %v3823 = vunpack.c.h.b16 %v907
  %v3824 = vunpack.c.l.b16 %v908
  %v3825 = vunpack.c.h.b16 %v908
  %v3826 = vunpack.c.l.b16 %v909
  %v3827 = vunpack.c.h.b16 %v909
  %v3828 = vunpack.c.l.b16 %v910
  %v3829 = vunpack.c.h.b16 %v910
  %v3830 = vunpack.c.l.b16 %v911
  %v3831 = vunpack.c.h.b16 %v911
  %v3832 = vunpack.c.l.b16 %v912
  %v3833 = vunpack.c.h.b16 %v912
  %v3834 = vunpack.c.l.b16 %v913
  %v3835 = vunpack.c.h.b16 %v913
  %v3836 = vunpack.c.l.b16 %v914
  %v3837 = vunpack.c.h.b16 %v914
  %v3838 = vunpack.c.l.b16 %v915
  %v3839 = vunpack.c.h.b16 %v915
  %v3840 = vunpack.c.l.b16 %v916
  %v3841 = vunpack.c.h.b16 %v916
  %v3842 = vunpack.c.l.b16 %v917
  %v3843 = vunpack.c.h.b16 %v917
  %v3844 = vunpack.c.l.b16 %v918
  %v3845 = vunpack.c.h.b16 %v918
  %v3846 = vunpack.c.l.b16 %v919
  %v3847 = vunpack.c.h.b16 %v919
  %v3848 = vunpack.c.l.b16 %v920
  %v3849 = vunpack.c.h.b16 %v920
  %v3850 = vunpack.c.l.b16 %v921
  %v3851 = vunpack.c.h.b16 %v921
  %v3852 = vunpack.c.l.b16 %v922
  %v3853 = vunpack.c.h.b16 %v922
  %v3854 = vunpack.c.l.b16 %v923
  %v3855 = vunpack.c.h.b16 %v923
  %v3856 = vunpack.c.l.b16 %v924
  %v3857 = vunpack.c.h.b16 %v924
  %v3858 = vunpack.c.l.b16 %v925
  %v3859 = vunpack.c.h.b16 %v925
  %v3860 = vunpack.c.l.b16 %v926
  %v3861 = vunpack.c.h.b16 %v926
  %v3862 = vunpack.c.l.b16 %v927
  %v3863 = vunpack.c.h.b16 %v927
  %v3864 = vunpack.c.l.b16 %v928
  %v3865 = vunpack.c.h.b16 %v928
  %v3866 = vunpack.c.l.b16 %v929
  %v3867 = vunpack.c.h.b16 %v929
  %v3868 = vunpack.c.l.b16 %v930
  %v3869 = vunpack.c.h.b16 %v930
  %v3870 = vunpack.c.l.b16 %v931
  %v3871 = vunpack.c.h.b16 %v931
  %v3872 = vunpack.c.l.b16 %v932
  %v3873 = vunpack.c.h.b16 %v932
  %v3874 = vunpack.c.l.b16 %v933
  %v3875 = vunpack.c.h.b16 %v933
  %v3876 = vunpack.c.l.b16 %v934
  %v3877 = vunpack.c.h.b16 %v934
  %v3878 = vunpack.c.l.b16 %v935
  %v3879 = vunpack.c.h.b16 %v935
  %v3880 = vunpack.c.l.b16 %v936
  %v3881 = vunpack.c.h.b16 %v936
  %v3882 = vunpack.c.l.b16 %v937
  %v3883 = vunpack.c.h.b16 %v937
  %v3884 = vunpack.c.l.b16 %v938
  %v3885 = vunpack.c.h.b16 %v938
  %v3886 = vunpack.c.l.b16 %v939
  %v3887 = vunpack.c.h.b16 %v939
  %v3888 = vunpack.c.l.b16 %v940
  %v3889 = vunpack.c.h.b16 %v940
  %v3890 = vunpack.c.l.b16 %v941
  %v3891 = vunpack.c.h.b16 %v941
  %v3892 = vunpack.c.l.b16 %v942
  %v3893 = vunpack.c.h.b16 %v942
  %v3894 = vunpack.c.l.b16 %v943
  %v3895 = vunpack.c.h.b16 %v943
  %v3896 = vunpack.c.l.b16 %v944
  %v3897 = vunpack.c.h.b16 %v944
  %v3898 = vunpack.c.l.b16 %v945
  %v3899 = vunpack.c.h.b16 %v945
  %v3900 = vunpack.c.l.b16 %v946
  %v3901 = vunpack.c.h.b16 %v946
  %v3902 = vunpack.c.l.b16 %v947
  %v3903 = vunpack.c.h.b16 %v947
  %v3904 = vunpack.c.l.b16 %v948
  %v3905 = vunpack.c.h.b16 %v948
  %v3906 = vunpack.c.l.b16 %v949
  %v3907 = vunpack.c.h.b16 %v949
  %v3908 = vunpack.c.l.b16 %v950
  %v3909 = vunpack.c.h.b16 %v950
  %v3910 = vunpack.c.l.b16 %v951
  %v3911 = vunpack.c.h.b16 %v951
  %v3912 = vunpack.c.l.b16 %v952
  %v3913 = vunpack.c.h.b16 %v952
  %v3914 = vunpack.c.l.b16 %v953
  %v3915 = vunpack.c.h.b16 %v953
  %v3916 = vunpack.c.l.b16 %v954
  %v3917 = vunpack.c.h.b16 %v954
  %v3918 = vunpack.c.l.b16 %v955
  %v3919 = vunpack.c.h.b16 %v955
  %v3920 = vunpack.c.l.b16 %v956
  %v3921 = vunpack.c.h.b16 %v956
  %v3922 = vunpack.c.l.b16 %v957
  %v3923 = vunpack.c.h.b16 %v957
  %v3924 = vunpack.c.l.b16 %v958
  %v3925 = vunpack.c.h.b16 %v958
  %v3926 = vunpack.c.l.b16 %v959
  %v3927 = vunpack.c.h.b16 %v959
  %v3928 = vunpack.c.l.b16 %v960
  %v3929 = vunpack.c.h.b16 %v960
  %v3930 = vunpack.c.l.b16 %v961
  %v3931 = vunpack.c.h.b16 %v961
  %v3932 = vunpack.c.l.b16 %v962
  %v3933 = vunpack.c.h.b16 %v962
  %v3934 = vunpack.c.l.b16 %v963
  %v3935 = vunpack.c.h.b16 %v963
  %v3936 = vunpack.c.l.b16 %v964
  %v3937 = vunpack.c.h.b16 %v964
  %v3938 = vunpack.c.l.b16 %v965
  %v3939 = vunpack.c.h.b16 %v965
  %v3940 = vunpack.c.l.b16 %v966
  %v3941 = vunpack.c.h.b16 %v966
  %v3942 = vunpack.c.l.b16 %v967
  %v3943 = vunpack.c.h.b16 %v967
  %v3944 = vunpack.c.l.b16 %v968
  %v3945 = vunpack.c.h.b16 %v968
  %v3946 = vunpack.c.l.b16 %v969
  %v3947 = vunpack.c.h.b16 %v969
  %v3948 = vunpack.c.l.b16 %v970
  %v3949 = vunpack.c.h.b16 %v970
  %v3950 = vunpack.c.l.b16 %v971
  %v3951 = vunpack.c.h.b16 %v971
  %v3952 = vunpack.c.l.b16 %v972
  %v3953 = vunpack.c.h.b16 %v972
  %v3954 = vunpack.c.l.b16 %v973
  %v3955 = vunpack.c.h.b16 %v973
  %v3956 = vunpack.c.l.b16 %v974
  %v3957 = vunpack.c.h.b16 %v974
  %v3958 = vunpack.c.l.b16 %v975
  %v3959 = vunpack.c.h.b16 %v975
  %v3960 = vunpack.c.l.b16 %v976
  %v3961 = vunpack.c.h.b16 %v976
  %v3962 = vunpack.c.l.b16 %v977
  %v3963 = vunpack.c.h.b16 %v977
  %v3964 = vunpack.c.l.b16 %v978
  %v3965 = vunpack.c.h.b16 %v978
  %v3966 = vunpack.c.l.b16 %v979
  %v3967 = vunpack.c.h.b16 %v979
  %v3968 = vunpack.c.l.b16 %v980
  %v3969 = vunpack.c.h.b16 %v980
  %v3970 = vunpack.c.l.b16 %v981
  %v3971 = vunpack.c.h.b16 %v981
  %v3972 = vunpack.c.l.b16 %v982
  %v3973 = vunpack.c.h.b16 %v982
  %v3974 = vunpack.c.l.b16 %v983
  %v3975 = vunpack.c.h.b16 %v983
  %v3976 = vunpack.c.l.b16 %v984
  %v3977 = vunpack.c.h.b16 %v984
  %v3978 = vunpack.c.l.b16 %v985
  %v3979 = vunpack.c.h.b16 %v985
  %v3980 = vunpack.c.l.b16 %v986
  %v3981 = vunpack.c.h.b16 %v986
  %v3982 = vunpack.c.l.b16 %v987
  %v3983 = vunpack.c.h.b16 %v987
  %v3984 = vunpack.c.l.b16 %v988
  %v3985 = vunpack.c.h.b16 %v988
  %v3986 = vunpack.c.l.b16 %v989
  %v3987 = vunpack.c.h.b16 %v989
  %v3988 = vunpack.c.l.b16 %v990
  %v3989 = vunpack.c.h.b16 %v990
  %v3990 = vunpack.c.l.b16 %v991
  %v3991 = vunpack.c.h.b16 %v991
  %v3992 = vpack.c.b16 %v2076, %v2072
  %v3993 = vpack.c.b16 %v2077, %v2073
  %v3994 = vpack.c.b16 %v2078, %v2074
  %v3995 = vpack.c.b16 %v2079, %v2075
  %v3996 = vpack.c.b16 %v2084, %v2080
  %v3997 = vpack.c.b16 %v2085, %v2081
  %v3998 = vpack.c.b16 %v2086, %v2082
  %v3999 = vpack.c.b16 %v2087, %v2083
  %v4000 = vpack.c.b16 %v2092, %v2088
  %v4001 = vpack.c.b16 %v2093, %v2089
  %v4002 = vpack.c.b16 %v2094, %v2090
  %v4003 = vpack.c.b16 %v2095, %v2091
  %v4004 = vpack.c.b16 %v2100, %v2096
  %v4005 = vpack.c.b16 %v2101, %v2097
  %v4006 = vpack.c.b16 %v2102, %v2098
  %v4007 = vpack.c.b16 %v2103, %v2099
  %v4008 = vpack.c.b16 %v2108, %v2104
  %v4009 = vpack.c.b16 %v2109, %v2105
  %v4010 = vpack.c.b16 %v2110, %v2106
  %v4011 = vpack.c.b16 %v2111, %v2107
  %v4012 = vpack.c.b16 %v2116, %v2112
  %v4013 = vpack.c.b16 %v2117, %v2113
  %v4014 = vpack.c.b16 %v2118, %v2114
  %v4015 = vpack.c.b16 %v2119, %v2115
  %v4016 = vpack.c.b16 %v2124, %v2120
  %v4017 = vpack.c.b16 %v2125, %v2121
  %v4018 = vpack.c.b16 %v2126, %v2122
  %v4019 = vpack.c.b16 %v2127, %v2123
  %v4020 = vpack.c.b16 %v2132, %v2128
  %v4021 = vpack.c.b16 %v2133, %v2129
  %v4022 = vpack.c.b16 %v2134, %v2130
  %v4023 = vpack.c.b16 %v2135, %v2131
  %v4024 = vpack.c.b16 %v2140, %v2136
  %v4025 = vpack.c.b16 %v2141, %v2137
  %v4026 = vpack.c.b16 %v2142, %v2138
  %v4027 = vpack.c.b16 %v2143, %v2139
  %v4028 = vpack.c.b16 %v2148, %v2144
  %v4029 = vpack.c.b16 %v2149, %v2145
  %v4030 = vpack.c.b16 %v2150, %v2146
  %v4031 = vpack.c.b16 %v2151, %v2147
  %v4032 = vpack.c.b16 %v2156, %v2152
  %v4033 = vpack.c.b16 %v2157, %v2153
  %v4034 = vpack.c.b16 %v2158, %v2154
  %v4035 = vpack.c.b16 %v2159, %v2155
  %v4036 = vpack.c.b16 %v2164, %v2160
  %v4037 = vpack.c.b16 %v2165, %v2161
  %v4038 = vpack.c.b16 %v2166, %v2162
  %v4039 = vpack.c.b16 %v2167, %v2163
  %v4040 = vpack.c.b16 %v2172, %v2168
  %v4041 = vpack.c.b16 %v2173, %v2169
  %v4042 = vpack.c.b16 %v2174, %v2170
  %v4043 = vpack.c.b16 %v2175, %v2171
  %v4044 = vpack.c.b16 %v2180, %v2176
  %v4045 = vpack.c.b16 %v2181, %v2177
  %v4046 = vpack.c.b16 %v2182, %v2178
  %v4047 = vpack.c.b16 %v2183, %v2179
  %v4048 = vpack.c.b16 %v2188, %v2184
  %v4049 = vpack.c.b16 %v2189, %v2185
  %v4050 = vpack.c.b16 %v2190, %v2186
  %v4051 = vpack.c.b16 %v2191, %v2187
  %v4052 = vpack.c.b16 %v2196, %v2192
  %v4053 = vpack.c.b16 %v2197, %v2193
  %v4054 = vpack.c.b16 %v2198, %v2194
  %v4055 = vpack.c.b16 %v2199, %v2195
  %v4056 = vpack.c.b16 %v2204, %v2200
  %v4057 = vpack.c.b16 %v2205, %v2201
  %v4058 = vpack.c.b16 %v2206, %v2202
  %v4059 = vpack.c.b16 %v2207, %v2203
  %v4060 = vpack.c.b16 %v2212, %v2208
  %v4061 = vpack.c.b16 %v2213, %v2209
  %v4062 = vpack.c.b16 %v2214, %v2210
  %v4063 = vpack.c.b16 %v2215, %v2211
  %v4064 = vpack.c.b16 %v2220, %v2216
  %v4065 = vpack.c.b16 %v2221, %v2217
  %v4066 = vpack.c.b16 %v2222, %v2218
  %v4067 = vpack.c.b16 %v2223, %v2219
  %v4068 = vpack.c.b16 %v2228, %v2224
  %v4069 = vpack.c.b16 %v2229, %v2225
  %v4070 = vpack.c.b16 %v2230, %v2226
  %v4071 = vpack.c.b16 %v2231, %v2227
  %v4072 = vpack.c.b16 %v2236, %v2232
  %v4073 = vpack.c.b16 %v2237, %v2233
  %v4074 = vpack.c.b16 %v2238, %v2234
  %v4075 = vpack.c.b16 %v2239, %v2235
  %v4076 = vpack.c.b16 %v2244, %v2240
  %v4077 = vpack.c.b16 %v2245, %v2241
  %v4078 = vpack.c.b16 %v2246, %v2242
  %v4079 = vpack.c.b16 %v2247, %v2243
  %v4080 = vpack.c.b16 %v2252, %v2248
  %v4081 = vpack.c.b16 %v2253, %v2249
  %v4082 = vpack.c.b16 %v2254, %v2250
  %v4083 = vpack.c.b16 %v2255, %v2251
  %v4084 = vpack.c.b16 %v2260, %v2256
  %v4085 = vpack.c.b16 %v2261, %v2257
  %v4086 = vpack.c.b16 %v2262, %v2258
  %v4087 = vpack.c.b16 %v2263, %v2259
  %v4088 = vpack.c.b16 %v2268, %v2264
  %v4089 = vpack.c.b16 %v2269, %v2265
  %v4090 = vpack.c.b16 %v2270, %v2266
  %v4091 = vpack.c.b16 %v2271, %v2267
  %v4092 = vpack.c.b16 %v2276, %v2272
  %v4093 = vpack.c.b16 %v2277, %v2273
  %v4094 = vpack.c.b16 %v2278, %v2274
  %v4095 = vpack.c.b16 %v2279, %v2275
  %v4096 = vpack.c.b16 %v2284, %v2280
  %v4097 = vpack.c.b16 %v2285, %v2281
  %v4098 = vpack.c.b16 %v2286, %v2282
  %v4099 = vpack.c.b16 %v2287, %v2283
  %v4100 = vpack.c.b16 %v2292, %v2288
  %v4101 = vpack.c.b16 %v2293, %v2289
  %v4102 = vpack.c.b16 %v2294, %v2290
  %v4103 = vpack.c.b16 %v2295, %v2291
  %v4104 = vpack.c.b16 %v2300, %v2296
  %v4105 = vpack.c.b16 %v2301, %v2297
  %v4106 = vpack.c.b16 %v2302, %v2298
  %v4107 = vpack.c.b16 %v2303, %v2299
  %v4108 = vpack.c.b16 %v2308, %v2304
  %v4109 = vpack.c.b16 %v2309, %v2305
  %v4110 = vpack.c.b16 %v2310, %v2306
  %v4111 = vpack.c.b16 %v2311, %v2307
  %v4112 = vpack.c.b16 %v2316, %v2312
  %v4113 = vpack.c.b16 %v2317, %v2313
  %v4114 = vpack.c.b16 %v2318, %v2314
  %v4115 = vpack.c.b16 %v2319, %v2315
  %v4116 = vpack.c.b16 %v2324, %v2320
  %v4117 = vpack.c.b16 %v2325, %v2321
  %v4118 = vpack.c.b16 %v2326, %v2322
  %v4119 = vpack.c.b16 %v2327, %v2323
  %v4120 = vpack.c.b16 %v2332, %v2328
  %v4121 = vpack.c.b16 %v2333, %v2329
  %v4122 = vpack.c.b16 %v2334, %v2330
  %v4123 = vpack.c.b16 %v2335, %v2331
  %v4124 = vpack.c.b16 %v2340, %v2336
  %v4125 = vpack.c.b16 %v2341, %v2337
  %v4126 = vpack.c.b16 %v2342, %v2338
  %v4127 = vpack.c.b16 %v2343, %v2339
  %v4128 = vpack.c.b16 %v2348, %v2344
  %v4129 = vpack.c.b16 %v2349, %v2345
  %v4130 = vpack.c.b16 %v2350, %v2346
  %v4131 = vpack.c.b16 %v2351, %v2347
  %v4132 = vpack.c.b16 %v2356, %v2352
  %v4133 = vpack.c.b16 %v2357, %v2353
  %v4134 = vpack.c.b16 %v2358, %v2354
  %v4135 = vpack.c.b16 %v2359, %v2355
  %v4136 = vpack.c.b16 %v2364, %v2360
  %v4137 = vpack.c.b16 %v2365, %v2361
  %v4138 = vpack.c.b16 %v2366, %v2362
  %v4139 = vpack.c.b16 %v2367, %v2363
  %v4140 = vpack.c.b16 %v2372, %v2368
  %v4141 = vpack.c.b16 %v2373, %v2369
  %v4142 = vpack.c.b16 %v2374, %v2370
  %v4143 = vpack.c.b16 %v2375, %v2371
  %v4144 = vpack.c.b16 %v2380, %v2376
  %v4145 = vpack.c.b16 %v2381, %v2377
  %v4146 = vpack.c.b16 %v2382, %v2378
  %v4147 = vpack.c.b16 %v2383, %v2379
  %v4148 = vpack.c.b16 %v2388, %v2384
  %v4149 = vpack.c.b16 %v2389, %v2385
  %v4150 = vpack.c.b16 %v2390, %v2386
  %v4151 = vpack.c.b16 %v2391, %v2387
  %v4152 = vpack.c.b16 %v2396, %v2392
  %v4153 = vpack.c.b16 %v2397, %v2393
  %v4154 = vpack.c.b16 %v2398, %v2394
  %v4155 = vpack.c.b16 %v2399, %v2395
  %v4156 = vpack.c.b16 %v2404, %v2400
  %v4157 = vpack.c.b16 %v2405, %v2401
  %v4158 = vpack.c.b16 %v2406, %v2402
  %v4159 = vpack.c.b16 %v2407, %v2403
  %v4160 = vpack.c.b16 %v2412, %v2408
  %v4161 = vpack.c.b16 %v2413, %v2409
  %v4162 = vpack.c.b16 %v2414, %v2410
  %v4163 = vpack.c.b16 %v2415, %v2411
  %v4164 = vpack.c.b16 %v2420, %v2416
  %v4165 = vpack.c.b16 %v2421, %v2417
  %v4166 = vpack.c.b16 %v2422, %v2418
  %v4167 = vpack.c.b16 %v2423, %v2419
  %v4168 = vpack.c.b16 %v2428, %v2424
  %v4169 = vpack.c.b16 %v2429, %v2425
  %v4170 = vpack.c.b16 %v2430, %v2426
  %v4171 = vpack.c.b16 %v2431, %v2427
  %v4172 = vpack.c.b16 %v2436, %v2432
  %v4173 = vpack.c.b16 %v2437, %v2433
  %v4174 = vpack.c.b16 %v2438, %v2434
  %v4175 = vpack.c.b16 %v2439, %v2435
  %v4176 = vpack.c.b16 %v2444, %v2440
  %v4177 = vpack.c.b16 %v2445, %v2441
  %v4178 = vpack.c.b16 %v2446, %v2442
  %v4179 = vpack.c.b16 %v2447, %v2443
  %v4180 = vpack.c.b16 %v2452, %v2448
  %v4181 = vpack.c.b16 %v2453, %v2449
  %v4182 = vpack.c.b16 %v2454, %v2450
  %v4183 = vpack.c.b16 %v2455, %v2451
  %v4184 = vpack.c.b16 %v2460, %v2456
  %v4185 = vpack.c.b16 %v2461, %v2457
  %v4186 = vpack.c.b16 %v2462, %v2458
  %v4187 = vpack.c.b16 %v2463, %v2459
  %v4188 = vpack.c.b16 %v2468, %v2464
  %v4189 = vpack.c.b16 %v2469, %v2465
  %v4190 = vpack.c.b16 %v2470, %v2466
  %v4191 = vpack.c.b16 %v2471, %v2467
  %v4192 = vpack.c.b16 %v2476, %v2472
  %v4193 = vpack.c.b16 %v2477, %v2473
  %v4194 = vpack.c.b16 %v2478, %v2474
  %v4195 = vpack.c.b16 %v2479, %v2475
  %v4196 = vpack.c.b16 %v2484, %v2480
  %v4197 = vpack.c.b16 %v2485, %v2481
  %v4198 = vpack.c.b16 %v2486, %v2482
  %v4199 = vpack.c.b16 %v2487, %v2483
  %v4200 = vpack.c.b16 %v2492, %v2488
  %v4201 = vpack.c.b16 %v2493, %v2489
  %v4202 = vpack.c.b16 %v2494, %v2490
  %v4203 = vpack.c.b16 %v2495, %v2491
  %v4204 = vpack.c.b16 %v2500, %v2496
  %v4205 = vpack.c.b16 %v2501, %v2497
  %v4206 = vpack.c.b16 %v2502, %v2498
  %v4207 = vpack.c.b16 %v2503, %v2499
  %v4208 = vpack.c.b16 %v2508, %v2504
  %v4209 = vpack.c.b16 %v2509, %v2505
  %v4210 = vpack.c.b16 %v2510, %v2506
  %v4211 = vpack.c.b16 %v2511, %v2507
  %v4212 = vpack.c.b16 %v2516, %v2512
  %v4213 = vpack.c.b16 %v2517, %v2513
  %v4214 = vpack.c.b16 %v2518, %v2514
  %v4215 = vpack.c.b16 %v2519, %v2515
  %v4216 = vpack.c.b16 %v2524, %v2520
  %v4217 = vpack.c.b16 %v2525, %v2521
  %v4218 = vpack.c.b16 %v2526, %v2522
  %v4219 = vpack.c.b16 %v2527, %v2523
  %v4220 = vpack.c.b16 %v2532, %v2528
  %v4221 = vpack.c.b16 %v2533, %v2529
  %v4222 = vpack.c.b16 %v2534, %v2530
  %v4223 = vpack.c.b16 %v2535, %v2531
  %v4224 = vpack.c.b16 %v2540, %v2536
  %v4225 = vpack.c.b16 %v2541, %v2537
  %v4226 = vpack.c.b16 %v2542, %v2538
  %v4227 = vpack.c.b16 %v2543, %v2539
  %v4228 = vpack.c.b16 %v2548, %v2544
  %v4229 = vpack.c.b16 %v2549, %v2545
  %v4230 = vpack.c.b16 %v2550, %v2546
  %v4231 = vpack.c.b16 %v2551, %v2547
  %v4232 = vpack.c.b16 %v2556, %v2552
  %v4233 = vpack.c.b16 %v2557, %v2553
  %v4234 = vpack.c.b16 %v2558, %v2554
  %v4235 = vpack.c.b16 %v2559, %v2555
  %v4236 = vpack.c.b16 %v2564, %v2560
  %v4237 = vpack.c.b16 %v2565, %v2561
  %v4238 = vpack.c.b16 %v2566, %v2562
  %v4239 = vpack.c.b16 %v2567, %v2563
  %v4240 = vpack.c.b16 %v2572, %v2568
  %v4241 = vpack.c.b16 %v2573, %v2569
  %v4242 = vpack.c.b16 %v2574, %v2570
  %v4243 = vpack.c.b16 %v2575, %v2571
  %v4244 = vpack.c.b16 %v2580, %v2576
  %v4245 = vpack.c.b16 %v2581, %v2577
  %v4246 = vpack.c.b16 %v2582, %v2578
  %v4247 = vpack.c.b16 %v2583, %v2579
  %v4248 = vpack.c.b16 %v2588, %v2584
  %v4249 = vpack.c.b16 %v2589, %v2585
  %v4250 = vpack.c.b16 %v2590, %v2586
  %v4251 = vpack.c.b16 %v2591, %v2587
  %v4252 = vpack.c.b16 %v2596, %v2592
  %v4253 = vpack.c.b16 %v2597, %v2593
  %v4254 = vpack.c.b16 %v2598, %v2594
  %v4255 = vpack.c.b16 %v2599, %v2595
  %v4256 = vpack.c.b16 %v2604, %v2600
  %v4257 = vpack.c.b16 %v2605, %v2601
  %v4258 = vpack.c.b16 %v2606, %v2602
  %v4259 = vpack.c.b16 %v2607, %v2603
  %v4260 = vpack.c.b16 %v2612, %v2608
  %v4261 = vpack.c.b16 %v2613, %v2609
  %v4262 = vpack.c.b16 %v2614, %v2610
  %v4263 = vpack.c.b16 %v2615, %v2611
  %v4264 = vpack.c.b16 %v2620, %v2616
  %v4265 = vpack.c.b16 %v2621, %v2617
  %v4266 = vpack.c.b16 %v2622, %v2618
  %v4267 = vpack.c.b16 %v2623, %v2619
  %v4268 = vpack.c.b16 %v2628, %v2624
  %v4269 = vpack.c.b16 %v2629, %v2625
  %v4270 = vpack.c.b16 %v2630, %v2626
  %v4271 = vpack.c.b16 %v2631, %v2627
  %v4272 = vpack.c.b16 %v2636, %v2632
  %v4273 = vpack.c.b16 %v2637, %v2633
  %v4274 = vpack.c.b16 %v2638, %v2634
  %v4275 = vpack.c.b16 %v2639, %v2635
  %v4276 = vpack.c.b16 %v2644, %v2640
  %v4277 = vpack.c.b16 %v2645, %v2641
  %v4278 = vpack.c.b16 %v2646, %v2642
  %v4279 = vpack.c.b16 %v2647, %v2643
  %v4280 = vpack.c.b16 %v2652, %v2648
  %v4281 = vpack.c.b16 %v2653, %v2649
  %v4282 = vpack.c.b16 %v2654, %v2650
  %v4283 = vpack.c.b16 %v2655, %v2651
  %v4284 = vpack.c.b16 %v2660, %v2656
  %v4285 = vpack.c.b16 %v2661, %v2657
  %v4286 = vpack.c.b16 %v2662, %v2658
  %v4287 = vpack.c.b16 %v2663, %v2659
  %v4288 = vpack.c.b16 %v2668, %v2664
  %v4289 = vpack.c.b16 %v2669, %v2665
  %v4290 = vpack.c.b16 %v2670, %v2666
  %v4291 = vpack.c.b16 %v2671, %v2667
  %v4292 = vpack.c.b16 %v2676, %v2672
  %v4293 = vpack.c.b16 %v2677, %v2673
  %v4294 = vpack.c.b16 %v2678, %v2674
  %v4295 = vpack.c.b16 %v2679, %v2675
  %v4296 = vpack.c.b16 %v2684, %v2680
  %v4297 = vpack.c.b16 %v2685, %v2681
  %v4298 = vpack.c.b16 %v2686, %v2682
  %v4299 = vpack.c.b16 %v2687, %v2683
  %v4300 = vpack.c.b16 %v2692, %v2688
  %v4301 = vpack.c.b16 %v2693, %v2689
  %v4302 = vpack.c.b16 %v2694, %v2690
  %v4303 = vpack.c.b16 %v2695, %v2691
  %v4304 = vpack.c.b16 %v2700, %v2696
  %v4305 = vpack.c.b16 %v2701, %v2697
  %v4306 = vpack.c.b16 %v2702, %v2698
  %v4307 = vpack.c.b16 %v2703, %v2699
  %v4308 = vpack.c.b16 %v2708, %v2704
  %v4309 = vpack.c.b16 %v2709, %v2705
  %v4310 = vpack.c.b16 %v2710, %v2706
  %v4311 = vpack.c.b16 %v2711, %v2707
  %v4312 = vpack.c.b16 %v2716, %v2712
  %v4313 = vpack.c.b16 %v2717, %v2713
  %v4314 = vpack.c.b16 %v2718, %v2714
  %v4315 = vpack.c.b16 %v2719, %v2715
  %v4316 = vpack.c.b16 %v2724, %v2720
  %v4317 = vpack.c.b16 %v2725, %v2721
  %v4318 = vpack.c.b16 %v2726, %v2722
  %v4319 = vpack.c.b16 %v2727, %v2723
  %v4320 = vpack.c.b16 %v2732, %v2728
  %v4321 = vpack.c.b16 %v2733, %v2729
  %v4322 = vpack.c.b16 %v2734, %v2730
  %v4323 = vpack.c.b16 %v2735, %v2731
  %v4324 = vpack.c.b16 %v2740, %v2736
  %v4325 = vpack.c.b16 %v2741, %v2737
  %v4326 = vpack.c.b16 %v2742, %v2738
  %v4327 = vpack.c.b16 %v2743, %v2739
  %v4328 = vpack.c.b16 %v2748, %v2744
  %v4329 = vpack.c.b16 %v2749, %v2745
  %v4330 = vpack.c.b16 %v2750, %v2746
  %v4331 = vpack.c.b16 %v2751, %v2747
  %v4332 = vpack.c.b16 %v2756, %v2752
  %v4333 = vpack.c.b16 %v2757, %v2753
  %v4334 = vpack.c.b16 %v2758, %v2754
  %v4335 = vpack.c.b16 %v2759, %v2755
  %v4336 = vpack.c.b16 %v2764, %v2760
  %v4337 = vpack.c.b16 %v2765, %v2761
  %v4338 = vpack.c.b16 %v2766, %v2762
  %v4339 = vpack.c.b16 %v2767, %v2763
  %v4340 = vpack.c.b16 %v2772, %v2768
  %v4341 = vpack.c.b16 %v2773, %v2769
  %v4342 = vpack.c.b16 %v2774, %v2770
  %v4343 = vpack.c.b16 %v2775, %v2771
  %v4344 = vpack.c.b16 %v2780, %v2776
  %v4345 = vpack.c.b16 %v2781, %v2777
  %v4346 = vpack.c.b16 %v2782, %v2778
  %v4347 = vpack.c.b16 %v2783, %v2779
  %v4348 = vpack.c.b16 %v2788, %v2784
  %v4349 = vpack.c.b16 %v2789, %v2785
  %v4350 = vpack.c.b16 %v2790, %v2786
  %v4351 = vpack.c.b16 %v2791, %v2787
  %v4352 = vpack.c.b16 %v2796, %v2792
  %v4353 = vpack.c.b16 %v2797, %v2793
  %v4354 = vpack.c.b16 %v2798, %v2794
  %v4355 = vpack.c.b16 %v2799, %v2795
  %v4356 = vpack.c.b16 %v2804, %v2800
  %v4357 = vpack.c.b16 %v2805, %v2801
  %v4358 = vpack.c.b16 %v2806, %v2802
  %v4359 = vpack.c.b16 %v2807, %v2803
  %v4360 = vpack.c.b16 %v2812, %v2808
  %v4361 = vpack.c.b16 %v2813, %v2809
  %v4362 = vpack.c.b16 %v2814, %v2810
  %v4363 = vpack.c.b16 %v2815, %v2811
  %v4364 = vpack.c.b16 %v2820, %v2816
  %v4365 = vpack.c.b16 %v2821, %v2817
  %v4366 = vpack.c.b16 %v2822, %v2818
  %v4367 = vpack.c.b16 %v2823, %v2819
  %v4368 = vpack.c.b16 %v2828, %v2824
  %v4369 = vpack.c.b16 %v2829, %v2825
  %v4370 = vpack.c.b16 %v2830, %v2826
  %v4371 = vpack.c.b16 %v2831, %v2827
  %v4372 = vpack.c.b16 %v2836, %v2832
  %v4373 = vpack.c.b16 %v2837, %v2833
  %v4374 = vpack.c.b16 %v2838, %v2834
  %v4375 = vpack.c.b16 %v2839, %v2835
  %v4376 = vpack.c.b16 %v2844, %v2840
  %v4377 = vpack.c.b16 %v2845, %v2841
  %v4378 = vpack.c.b16 %v2846, %v2842
  %v4379 = vpack.c.b16 %v2847, %v2843
  %v4380 = vpack.c.b16 %v2852, %v2848
  %v4381 = vpack.c.b16 %v2853, %v2849
  %v4382 = vpack.c.b16 %v2854, %v2850
  %v4383 = vpack.c.b16 %v2855, %v2851
  %v4384 = vpack.c.b16 %v2860, %v2856
  %v4385 = vpack.c.b16 %v2861, %v2857
  %v4386 = vpack.c.b16 %v2862, %v2858
  %v4387 = vpack.c.b16 %v2863, %v2859
  %v4388 = vpack.c.b16 %v2868, %v2864
  %v4389 = vpack.c.b16 %v2869, %v2865
  %v4390 = vpack.c.b16 %v2870, %v2866
  %v4391 = vpack.c.b16 %v2871, %v2867
  %v4392 = vpack.c.b16 %v2876, %v2872
  %v4393 = vpack.c.b16 %v2877, %v2873
  %v4394 = vpack.c.b16 %v2878, %v2874
  %v4395 = vpack.c.b16 %v2879, %v2875
  %v4396 = vpack.c.b16 %v2884, %v2880
  %v4397 = vpack.c.b16 %v2885, %v2881
  %v4398 = vpack.c.b16 %v2886, %v2882
  %v4399 = vpack.c.b16 %v2887, %v2883
  %v4400 = vpack.c.b16 %v2892, %v2888
  %v4401 = vpack.c.b16 %v2893, %v2889
  %v4402 = vpack.c.b16 %v2894, %v2890
  %v4403 = vpack.c.b16 %v2895, %v2891
  %v4404 = vpack.c.b16 %v2900, %v2896
  %v4405 = vpack.c.b16 %v2901, %v2897
  %v4406 = vpack.c.b16 %v2902, %v2898
  %v4407 = vpack.c.b16 %v2903, %v2899
  %v4408 = vpack.c.b16 %v2908, %v2904
  %v4409 = vpack.c.b16 %v2909, %v2905
  %v4410 = vpack.c.b16 %v2910, %v2906
  %v4411 = vpack.c.b16 %v2911, %v2907
  %v4412 = vpack.c.b16 %v2916, %v2912
  %v4413 = vpack.c.b16 %v2917, %v2913
  %v4414 = vpack.c.b16 %v2918, %v2914
  %v4415 = vpack.c.b16 %v2919, %v2915
  %v4416 = vpack.c.b16 %v2924, %v2920
  %v4417 = vpack.c.b16 %v2925, %v2921
  %v4418 = vpack.c.b16 %v2926, %v2922
  %v4419 = vpack.c.b16 %v2927, %v2923
  %v4420 = vpack.c.b16 %v2932, %v2928
  %v4421 = vpack.c.b16 %v2933, %v2929
  %v4422 = vpack.c.b16 %v2934, %v2930
  %v4423 = vpack.c.b16 %v2935, %v2931
  %v4424 = vpack.c.b16 %v2940, %v2936
  %v4425 = vpack.c.b16 %v2941, %v2937
  %v4426 = vpack.c.b16 %v2942, %v2938
  %v4427 = vpack.c.b16 %v2943, %v2939
  %v4428 = vpack.c.b16 %v2948, %v2944
  %v4429 = vpack.c.b16 %v2949, %v2945
  %v4430 = vpack.c.b16 %v2950, %v2946
  %v4431 = vpack.c.b16 %v2951, %v2947
  %v4432 = vpack.c.b16 %v2956, %v2952
  %v4433 = vpack.c.b16 %v2957, %v2953
  %v4434 = vpack.c.b16 %v2958, %v2954
  %v4435 = vpack.c.b16 %v2959, %v2955
  %v4436 = vpack.c.b16 %v2964, %v2960
  %v4437 = vpack.c.b16 %v2965, %v2961
  %v4438 = vpack.c.b16 %v2966, %v2962
  %v4439 = vpack.c.b16 %v2967, %v2963
  %v4440 = vpack.c.b16 %v2972, %v2968
  %v4441 = vpack.c.b16 %v2973, %v2969
  %v4442 = vpack.c.b16 %v2974, %v2970
  %v4443 = vpack.c.b16 %v2975, %v2971
  %v4444 = vpack.c.b16 %v2980, %v2976
  %v4445 = vpack.c.b16 %v2981, %v2977
  %v4446 = vpack.c.b16 %v2982, %v2978
  %v4447 = vpack.c.b16 %v2983, %v2979
  %v4448 = vpack.c.b16 %v2988, %v2984
  %v4449 = vpack.c.b16 %v2989, %v2985
  %v4450 = vpack.c.b16 %v2990, %v2986
  %v4451 = vpack.c.b16 %v2991, %v2987
  %v4452 = vpack.c.b16 %v2996, %v2992
  %v4453 = vpack.c.b16 %v2997, %v2993
  %v4454 = vpack.c.b16 %v2998, %v2994
  %v4455 = vpack.c.b16 %v2999, %v2995
  %v4456 = vpack.c.b16 %v3004, %v3000
  %v4457 = vpack.c.b16 %v3005, %v3001
  %v4458 = vpack.c.b16 %v3006, %v3002
  %v4459 = vpack.c.b16 %v3007, %v3003
  %v4460 = vpack.c.b16 %v3012, %v3008
  %v4461 = vpack.c.b16 %v3013, %v3009
  %v4462 = vpack.c.b16 %v3014, %v3010
  %v4463 = vpack.c.b16 %v3015, %v3011
  %v4464 = vpack.c.b16 %v3020, %v3016
  %v4465 = vpack.c.b16 %v3021, %v3017
  %v4466 = vpack.c.b16 %v3022, %v3018
  %v4467 = vpack.c.b16 %v3023, %v3019
  %v4468 = vpack.c.b16 %v3028, %v3024
  %v4469 = vpack.c.b16 %v3029, %v3025
  %v4470 = vpack.c.b16 %v3030, %v3026
  %v4471 = vpack.c.b16 %v3031, %v3027
  %v4472 = vpack.c.b16 %v3036, %v3032
  %v4473 = vpack.c.b16 %v3037, %v3033
  %v4474 = vpack.c.b16 %v3038, %v3034
  %v4475 = vpack.c.b16 %v3039, %v3035
  %v4476 = vpack.c.b16 %v3044, %v3040
  %v4477 = vpack.c.b16 %v3045, %v3041
  %v4478 = vpack.c.b16 %v3046, %v3042
  %v4479 = vpack.c.b16 %v3047, %v3043
  %v4480 = vpack.c.b16 %v3052, %v3048
  %v4481 = vpack.c.b16 %v3053, %v3049
  %v4482 = vpack.c.b16 %v3054, %v3050
  %v4483 = vpack.c.b16 %v3055, %v3051
  %v4484 = vpack.c.b16 %v3060, %v3056
  %v4485 = vpack.c.b16 %v3061, %v3057
  %v4486 = vpack.c.b16 %v3062, %v3058
  %v4487 = vpack.c.b16 %v3063, %v3059
  %v4488 = vpack.c.b16 %v3068, %v3064
  %v4489 = vpack.c.b16 %v3069, %v3065
  %v4490 = vpack.c.b16 %v3070, %v3066
  %v4491 = vpack.c.b16 %v3071, %v3067
  %v4492 = vpack.c.b16 %v3076, %v3072
  %v4493 = vpack.c.b16 %v3077, %v3073
  %v4494 = vpack.c.b16 %v3078, %v3074
  %v4495 = vpack.c.b16 %v3079, %v3075
  %v4496 = vpack.c.b16 %v3084, %v3080
  %v4497 = vpack.c.b16 %v3085, %v3081
  %v4498 = vpack.c.b16 %v3086, %v3082
  %v4499 = vpack.c.b16 %v3087, %v3083
  %v4500 = vpack.c.b16 %v3092, %v3088
  %v4501 = vpack.c.b16 %v3093, %v3089
  %v4502 = vpack.c.b16 %v3094, %v3090
  %v4503 = vpack.c.b16 %v3095, %v3091
  %v4504 = vpack.c.b16 %v3100, %v3096
  %v4505 = vpack.c.b16 %v3101, %v3097
  %v4506 = vpack.c.b16 %v3102, %v3098
  %v4507 = vpack.c.b16 %v3103, %v3099
  %v4508 = vpack.c.b16 %v3108, %v3104
  %v4509 = vpack.c.b16 %v3109, %v3105
  %v4510 = vpack.c.b16 %v3110, %v3106
  %v4511 = vpack.c.b16 %v3111, %v3107
  %v4512 = vpack.c.b16 %v3116, %v3112
  %v4513 = vpack.c.b16 %v3117, %v3113
  %v4514 = vpack.c.b16 %v3118, %v3114
  %v4515 = vpack.c.b16 %v3119, %v3115
  %v4516 = vpack.c.b16 %v3124, %v3120
  %v4517 = vpack.c.b16 %v3125, %v3121
  %v4518 = vpack.c.b16 %v3126, %v3122
  %v4519 = vpack.c.b16 %v3127, %v3123
  %v4520 = vpack.c.b16 %v3132, %v3128
  %v4521 = vpack.c.b16 %v3133, %v3129
  %v4522 = vpack.c.b16 %v3134, %v3130
  %v4523 = vpack.c.b16 %v3135, %v3131
  %v4524 = vpack.c.b16 %v3140, %v3136
  %v4525 = vpack.c.b16 %v3141, %v3137
  %v4526 = vpack.c.b16 %v3142, %v3138
  %v4527 = vpack.c.b16 %v3143, %v3139
  %v4528 = vpack.c.b16 %v3148, %v3144
  %v4529 = vpack.c.b16 %v3149, %v3145
  %v4530 = vpack.c.b16 %v3150, %v3146
  %v4531 = vpack.c.b16 %v3151, %v3147
  %v4532 = vpack.c.b16 %v3156, %v3152
  %v4533 = vpack.c.b16 %v3157, %v3153
  %v4534 = vpack.c.b16 %v3158, %v3154
  %v4535 = vpack.c.b16 %v3159, %v3155
  %v4536 = vpack.c.b16 %v3164, %v3160
  %v4537 = vpack.c.b16 %v3165, %v3161
  %v4538 = vpack.c.b16 %v3166, %v3162
  %v4539 = vpack.c.b16 %v3167, %v3163
  %v4540 = vpack.c.b16 %v3172, %v3168
  %v4541 = vpack.c.b16 %v3173, %v3169
  %v4542 = vpack.c.b16 %v3174, %v3170
  %v4543 = vpack.c.b16 %v3175, %v3171
  %v4544 = vpack.c.b16 %v3180, %v3176
  %v4545 = vpack.c.b16 %v3181, %v3177
  %v4546 = vpack.c.b16 %v3182, %v3178
  %v4547 = vpack.c.b16 %v3183, %v3179
  %v4548 = vpack.c.b16 %v3188, %v3184
  %v4549 = vpack.c.b16 %v3189, %v3185
  %v4550 = vpack.c.b16 %v3190, %v3186
  %v4551 = vpack.c.b16 %v3191, %v3187
  %v4552 = vpack.c.b16 %v3196, %v3192
  %v4553 = vpack.c.b16 %v3197, %v3193
  %v4554 = vpack.c.b16 %v3198, %v3194
  %v4555 = vpack.c.b16 %v3199, %v3195
  %v4556 = vpack.c.b16 %v3204, %v3200
  %v4557 = vpack.c.b16 %v3205, %v3201
  %v4558 = vpack.c.b16 %v3206, %v3202
  %v4559 = vpack.c.b16 %v3207, %v3203
  %v4560 = vpack.c.b16 %v3212, %v3208
  %v4561 = vpack.c.b16 %v3213, %v3209
  %v4562 = vpack.c.b16 %v3214, %v3210
  %v4563 = vpack.c.b16 %v3215, %v3211
  %v4564 = vpack.c.b16 %v3220, %v3216
  %v4565 = vpack.c.b16 %v3221, %v3217
  %v4566 = vpack.c.b16 %v3222, %v3218
  %v4567 = vpack.c.b16 %v3223, %v3219
  %v4568 = vpack.c.b16 %v3228, %v3224
  %v4569 = vpack.c.b16 %v3229, %v3225
  %v4570 = vpack.c.b16 %v3230, %v3226
  %v4571 = vpack.c.b16 %v3231, %v3227
  %v4572 = vpack.c.b16 %v3236, %v3232
  %v4573 = vpack.c.b16 %v3237, %v3233
  %v4574 = vpack.c.b16 %v3238, %v3234
  %v4575 = vpack.c.b16 %v3239, %v3235
  %v4576 = vpack.c.b16 %v3244, %v3240
  %v4577 = vpack.c.b16 %v3245, %v3241
  %v4578 = vpack.c.b16 %v3246, %v3242
  %v4579 = vpack.c.b16 %v3247, %v3243
  %v4580 = vpack.c.b16 %v3252, %v3248
  %v4581 = vpack.c.b16 %v3253, %v3249
  %v4582 = vpack.c.b16 %v3254, %v3250
  %v4583 = vpack.c.b16 %v3255, %v3251
  %v4584 = vpack.c.b16 %v3260, %v3256
  %v4585 = vpack.c.b16 %v3261, %v3257
  %v4586 = vpack.c.b16 %v3262, %v3258
  %v4587 = vpack.c.b16 %v3263, %v3259
  %v4588 = vpack.c.b16 %v3268, %v3264
  %v4589 = vpack.c.b16 %v3269, %v3265
  %v4590 = vpack.c.b16 %v3270, %v3266
  %v4591 = vpack.c.b16 %v3271, %v3267
  %v4592 = vpack.c.b16 %v3276, %v3272
  %v4593 = vpack.c.b16 %v3277, %v3273
  %v4594 = vpack.c.b16 %v3278, %v3274
  %v4595 = vpack.c.b16 %v3279, %v3275
  %v4596 = vpack.c.b16 %v3284, %v3280
  %v4597 = vpack.c.b16 %v3285, %v3281
  %v4598 = vpack.c.b16 %v3286, %v3282
  %v4599 = vpack.c.b16 %v3287, %v3283
  %v4600 = vpack.c.b16 %v3292, %v3288
  %v4601 = vpack.c.b16 %v3293, %v3289
  %v4602 = vpack.c.b16 %v3294, %v3290
  %v4603 = vpack.c.b16 %v3295, %v3291
  %v4604 = vpack.c.b16 %v3300, %v3296
  %v4605 = vpack.c.b16 %v3301, %v3297
  %v4606 = vpack.c.b16 %v3302, %v3298
  %v4607 = vpack.c.b16 %v3303, %v3299
  %v4608 = vpack.c.b16 %v3308, %v3304
  %v4609 = vpack.c.b16 %v3309, %v3305
  %v4610 = vpack.c.b16 %v3310, %v3306
  %v4611 = vpack.c.b16 %v3311, %v3307
  %v4612 = vpack.c.b16 %v3316, %v3312
  %v4613 = vpack.c.b16 %v3317, %v3313
  %v4614 = vpack.c.b16 %v3318, %v3314
  %v4615 = vpack.c.b16 %v3319, %v3315
  %v4616 = vpack.c.b16 %v3324, %v3320
  %v4617 = vpack.c.b16 %v3325, %v3321
  %v4618 = vpack.c.b16 %v3326, %v3322
  %v4619 = vpack.c.b16 %v3327, %v3323
  %v4620 = vpack.c.b16 %v3332, %v3328
  %v4621 = vpack.c.b16 %v3333, %v3329
  %v4622 = vpack.c.b16 %v3334, %v3330
  %v4623 = vpack.c.b16 %v3335, %v3331
  %v4624 = vpack.c.b16 %v3340, %v3336
  %v4625 = vpack.c.b16 %v3341, %v3337
  %v4626 = vpack.c.b16 %v3342, %v3338
  %v4627 = vpack.c.b16 %v3343, %v3339
  %v4628 = vpack.c.b16 %v3348, %v3344
  %v4629 = vpack.c.b16 %v3349, %v3345
  %v4630 = vpack.c.b16 %v3350, %v3346
  %v4631 = vpack.c.b16 %v3351, %v3347
  %v4632 = vpack.c.b16 %v3356, %v3352
  %v4633 = vpack.c.b16 %v3357, %v3353
  %v4634 = vpack.c.b16 %v3358, %v3354
  %v4635 = vpack.c.b16 %v3359, %v3355
  %v4636 = vpack.c.b16 %v3364, %v3360
  %v4637 = vpack.c.b16 %v3365, %v3361
  %v4638 = vpack.c.b16 %v3366, %v3362
  %v4639 = vpack.c.b16 %v3367, %v3363
  %v4640 = vpack.c.b16 %v3372, %v3368
  %v4641 = vpack.c.b16 %v3373, %v3369
  %v4642 = vpack.c.b16 %v3374, %v3370
  %v4643 = vpack.c.b16 %v3375, %v3371
  %v4644 = vpack.c.b16 %v3380, %v3376
  %v4645 = vpack.c.b16 %v3381, %v3377
  %v4646 = vpack.c.b16 %v3382, %v3378
  %v4647 = vpack.c.b16 %v3383, %v3379
  %v4648 = vpack.c.b16 %v3388, %v3384
  %v4649 = vpack.c.b16 %v3389, %v3385
  %v4650 = vpack.c.b16 %v3390, %v3386
  %v4651 = vpack.c.b16 %v3391, %v3387
  %v4652 = vpack.c.b16 %v3396, %v3392
  %v4653 = vpack.c.b16 %v3397, %v3393
  %v4654 = vpack.c.b16 %v3398, %v3394
  %v4655 = vpack.c.b16 %v3399, %v3395
  %v4656 = vpack.c.b16 %v3404, %v3400
  %v4657 = vpack.c.b16 %v3405, %v3401
  %v4658 = vpack.c.b16 %v3406, %v3402
  %v4659 = vpack.c.b16 %v3407, %v3403
  %v4660 = vpack.c.b16 %v3412, %v3408
  %v4661 = vpack.c.b16 %v3413, %v3409
  %v4662 = vpack.c.b16 %v3414, %v3410
  %v4663 = vpack.c.b16 %v3415, %v3411
  %v4664 = vpack.c.b16 %v3420, %v3416
  %v4665 = vpack.c.b16 %v3421, %v3417
  %v4666 = vpack.c.b16 %v3422, %v3418
  %v4667 = vpack.c.b16 %v3423, %v3419
  %v4668 = vpack.c.b16 %v3428, %v3424
  %v4669 = vpack.c.b16 %v3429, %v3425
  %v4670 = vpack.c.b16 %v3430, %v3426
  %v4671 = vpack.c.b16 %v3431, %v3427
  %v4672 = vpack.c.b16 %v3436, %v3432
  %v4673 = vpack.c.b16 %v3437, %v3433
  %v4674 = vpack.c.b16 %v3438, %v3434
  %v4675 = vpack.c.b16 %v3439, %v3435
  %v4676 = vpack.c.b16 %v3444, %v3440
  %v4677 = vpack.c.b16 %v3445, %v3441
  %v4678 = vpack.c.b16 %v3446, %v3442
  %v4679 = vpack.c.b16 %v3447, %v3443
  %v4680 = vpack.c.b16 %v3452, %v3448
  %v4681 = vpack.c.b16 %v3453, %v3449
  %v4682 = vpack.c.b16 %v3454, %v3450
  %v4683 = vpack.c.b16 %v3455, %v3451
  %v4684 = vpack.c.b16 %v3460, %v3456
  %v4685 = vpack.c.b16 %v3461, %v3457
  %v4686 = vpack.c.b16 %v3462, %v3458
  %v4687 = vpack.c.b16 %v3463, %v3459
  %v4688 = vpack.c.b16 %v3468, %v3464
  %v4689 = vpack.c.b16 %v3469, %v3465
  %v4690 = vpack.c.b16 %v3470, %v3466
  %v4691 = vpack.c.b16 %v3471, %v3467
  %v4692 = vpack.c.b16 %v3476, %v3472
  %v4693 = vpack.c.b16 %v3477, %v3473
  %v4694 = vpack.c.b16 %v3478, %v3474
  %v4695 = vpack.c.b16 %v3479, %v3475
  %v4696 = vpack.c.b16 %v3484, %v3480
  %v4697 = vpack.c.b16 %v3485, %v3481
  %v4698 = vpack.c.b16 %v3486, %v3482
  %v4699 = vpack.c.b16 %v3487, %v3483
  %v4700 = vpack.c.b16 %v3492, %v3488
  %v4701 = vpack.c.b16 %v3493, %v3489
  %v4702 = vpack.c.b16 %v3494, %v3490
  %v4703 = vpack.c.b16 %v3495, %v3491
  %v4704 = vpack.c.b16 %v3500, %v3496
  %v4705 = vpack.c.b16 %v3501, %v3497
  %v4706 = vpack.c.b16 %v3502, %v3498
  %v4707 = vpack.c.b16 %v3503, %v3499
  %v4708 = vpack.c.b16 %v3508, %v3504
  %v4709 = vpack.c.b16 %v3509, %v3505
  %v4710 = vpack.c.b16 %v3510, %v3506
  %v4711 = vpack.c.b16 %v3511, %v3507
  %v4712 = vpack.c.b16 %v3516, %v3512
  %v4713 = vpack.c.b16 %v3517, %v3513
  %v4714 = vpack.c.b16 %v3518, %v3514
  %v4715 = vpack.c.b16 %v3519, %v3515
  %v4716 = vpack.c.b16 %v3524, %v3520
  %v4717 = vpack.c.b16 %v3525, %v3521
  %v4718 = vpack.c.b16 %v3526, %v3522
  %v4719 = vpack.c.b16 %v3527, %v3523
  %v4720 = vpack.c.b16 %v3532, %v3528
  %v4721 = vpack.c.b16 %v3533, %v3529
  %v4722 = vpack.c.b16 %v3534, %v3530
  %v4723 = vpack.c.b16 %v3535, %v3531
  %v4724 = vpack.c.b16 %v3540, %v3536
  %v4725 = vpack.c.b16 %v3541, %v3537
  %v4726 = vpack.c.b16 %v3542, %v3538
  %v4727 = vpack.c.b16 %v3543, %v3539
  %v4728 = vpack.c.b16 %v3548, %v3544
  %v4729 = vpack.c.b16 %v3549, %v3545
  %v4730 = vpack.c.b16 %v3550, %v3546
  %v4731 = vpack.c.b16 %v3551, %v3547
  %v4732 = vpack.c.b16 %v3556, %v3552
  %v4733 = vpack.c.b16 %v3557, %v3553
  %v4734 = vpack.c.b16 %v3558, %v3554
  %v4735 = vpack.c.b16 %v3559, %v3555
  %v4736 = vpack.c.b16 %v3564, %v3560
  %v4737 = vpack.c.b16 %v3565, %v3561
  %v4738 = vpack.c.b16 %v3566, %v3562
  %v4739 = vpack.c.b16 %v3567, %v3563
  %v4740 = vpack.c.b16 %v3572, %v3568
  %v4741 = vpack.c.b16 %v3573, %v3569
  %v4742 = vpack.c.b16 %v3574, %v3570
  %v4743 = vpack.c.b16 %v3575, %v3571
  %v4744 = vpack.c.b16 %v3580, %v3576
  %v4745 = vpack.c.b16 %v3581, %v3577
  %v4746 = vpack.c.b16 %v3582, %v3578
  %v4747 = vpack.c.b16 %v3583, %v3579
  %v4748 = vpack.c.b16 %v3588, %v3584
  %v4749 = vpack.c.b16 %v3589, %v3585
  %v4750 = vpack.c.b16 %v3590, %v3586
  %v4751 = vpack.c.b16 %v3591, %v3587
  %v4752 = vpack.c.b16 %v3596, %v3592
  %v4753 = vpack.c.b16 %v3597, %v3593
  %v4754 = vpack.c.b16 %v3598, %v3594
  %v4755 = vpack.c.b16 %v3599, %v3595
  %v4756 = vpack.c.b16 %v3604, %v3600
  %v4757 = vpack.c.b16 %v3605, %v3601
  %v4758 = vpack.c.b16 %v3606, %v3602
  %v4759 = vpack.c.b16 %v3607, %v3603
  %v4760 = vpack.c.b16 %v3612, %v3608
  %v4761 = vpack.c.b16 %v3613, %v3609
  %v4762 = vpack.c.b16 %v3614, %v3610
  %v4763 = vpack.c.b16 %v3615, %v3611
  %v4764 = vpack.c.b16 %v3620, %v3616
  %v4765 = vpack.c.b16 %v3621, %v3617
  %v4766 = vpack.c.b16 %v3622, %v3618
  %v4767 = vpack.c.b16 %v3623, %v3619
  %v4768 = vpack.c.b16 %v3628, %v3624
  %v4769 = vpack.c.b16 %v3629, %v3625
  %v4770 = vpack.c.b16 %v3630, %v3626
  %v4771 = vpack.c.b16 %v3631, %v3627
  %v4772 = vpack.c.b16 %v3636, %v3632
  %v4773 = vpack.c.b16 %v3637, %v3633
  %v4774 = vpack.c.b16 %v3638, %v3634
  %v4775 = vpack.c.b16 %v3639, %v3635
  %v4776 = vpack.c.b16 %v3644, %v3640
  %v4777 = vpack.c.b16 %v3645, %v3641
  %v4778 = vpack.c.b16 %v3646, %v3642
  %v4779 = vpack.c.b16 %v3647, %v3643
  %v4780 = vpack.c.b16 %v3652, %v3648
  %v4781 = vpack.c.b16 %v3653, %v3649
  %v4782 = vpack.c.b16 %v3654, %v3650
  %v4783 = vpack.c.b16 %v3655, %v3651
  %v4784 = vpack.c.b16 %v3660, %v3656
  %v4785 = vpack.c.b16 %v3661, %v3657
  %v4786 = vpack.c.b16 %v3662, %v3658
  %v4787 = vpack.c.b16 %v3663, %v3659
  %v4788 = vpack.c.b16 %v3668, %v3664
  %v4789 = vpack.c.b16 %v3669, %v3665
  %v4790 = vpack.c.b16 %v3670, %v3666
  %v4791 = vpack.c.b16 %v3671, %v3667
  %v4792 = vpack.c.b16 %v3676, %v3672
  %v4793 = vpack.c.b16 %v3677, %v3673
  %v4794 = vpack.c.b16 %v3678, %v3674
  %v4795 = vpack.c.b16 %v3679, %v3675
  %v4796 = vpack.c.b16 %v3684, %v3680
  %v4797 = vpack.c.b16 %v3685, %v3681
  %v4798 = vpack.c.b16 %v3686, %v3682
  %v4799 = vpack.c.b16 %v3687, %v3683
  %v4800 = vpack.c.b16 %v3692, %v3688
  %v4801 = vpack.c.b16 %v3693, %v3689
  %v4802 = vpack.c.b16 %v3694, %v3690
  %v4803 = vpack.c.b16 %v3695, %v3691
  %v4804 = vpack.c.b16 %v3700, %v3696
  %v4805 = vpack.c.b16 %v3701, %v3697
  %v4806 = vpack.c.b16 %v3702, %v3698
  %v4807 = vpack.c.b16 %v3703, %v3699
  %v4808 = vpack.c.b16 %v3708, %v3704
  %v4809 = vpack.c.b16 %v3709, %v3705
  %v4810 = vpack.c.b16 %v3710, %v3706
  %v4811 = vpack.c.b16 %v3711, %v3707
  %v4812 = vpack.c.b16 %v3716, %v3712
  %v4813 = vpack.c.b16 %v3717, %v3713
  %v4814 = vpack.c.b16 %v3718, %v3714
  %v4815 = vpack.c.b16 %v3719, %v3715
  %v4816 = vpack.c.b16 %v3724, %v3720
  %v4817 = vpack.c.b16 %v3725, %v3721
  %v4818 = vpack.c.b16 %v3726, %v3722
  %v4819 = vpack.c.b16 %v3727, %v3723
  %v4820 = vpack.c.b16 %v3732, %v3728
  %v4821 = vpack.c.b16 %v3733, %v3729
  %v4822 = vpack.c.b16 %v3734, %v3730
  %v4823 = vpack.c.b16 %v3735, %v3731
  %v4824 = vpack.c.b16 %v3740, %v3736
  %v4825 = vpack.c.b16 %v3741, %v3737
  %v4826 = vpack.c.b16 %v3742, %v3738
  %v4827 = vpack.c.b16 %v3743, %v3739
  %v4828 = vpack.c.b16 %v3748, %v3744
  %v4829 = vpack.c.b16 %v3749, %v3745
  %v4830 = vpack.c.b16 %v3750, %v3746
  %v4831 = vpack.c.b16 %v3751, %v3747
  %v4832 = vpack.c.b16 %v3756, %v3752
  %v4833 = vpack.c.b16 %v3757, %v3753
  %v4834 = vpack.c.b16 %v3758, %v3754
  %v4835 = vpack.c.b16 %v3759, %v3755
  %v4836 = vpack.c.b16 %v3764, %v3760
  %v4837 = vpack.c.b16 %v3765, %v3761
  %v4838 = vpack.c.b16 %v3766, %v3762
  %v4839 = vpack.c.b16 %v3767, %v3763
  %v4840 = vpack.c.b16 %v3772, %v3768
  %v4841 = vpack.c.b16 %v3773, %v3769
  %v4842 = vpack.c.b16 %v3774, %v3770
  %v4843 = vpack.c.b16 %v3775, %v3771
  %v4844 = vpack.c.b16 %v3780, %v3776
  %v4845 = vpack.c.b16 %v3781, %v3777
  %v4846 = vpack.c.b16 %v3782, %v3778
  %v4847 = vpack.c.b16 %v3783, %v3779
  %v4848 = vpack.c.b16 %v3788, %v3784
  %v4849 = vpack.c.b16 %v3789, %v3785
  %v4850 = vpack.c.b16 %v3790, %v3786
  %v4851 = vpack.c.b16 %v3791, %v3787
  %v4852 = vpack.c.b16 %v3796, %v3792
  %v4853 = vpack.c.b16 %v3797, %v3793
  %v4854 = vpack.c.b16 %v3798, %v3794
  %v4855 = vpack.c.b16 %v3799, %v3795
  %v4856 = vpack.c.b16 %v3804, %v3800
  %v4857 = vpack.c.b16 %v3805, %v3801
  %v4858 = vpack.c.b16 %v3806, %v3802
  %v4859 = vpack.c.b16 %v3807, %v3803
  %v4860 = vpack.c.b16 %v3812, %v3808
  %v4861 = vpack.c.b16 %v3813, %v3809
  %v4862 = vpack.c.b16 %v3814, %v3810
  %v4863 = vpack.c.b16 %v3815, %v3811
  %v4864 = vpack.c.b16 %v3820, %v3816
  %v4865 = vpack.c.b16 %v3821, %v3817
  %v4866 = vpack.c.b16 %v3822, %v3818
  %v4867 = vpack.c.b16 %v3823, %v3819
  %v4868 = vpack.c.b16 %v3828, %v3824
  %v4869 = vpack.c.b16 %v3829, %v3825
  %v4870 = vpack.c.b16 %v3830, %v3826
  %v4871 = vpack.c.b16 %v3831, %v3827
  %v4872 = vpack.c.b16 %v3836, %v3832
  %v4873 = vpack.c.b16 %v3837, %v3833
  %v4874 = vpack.c.b16 %v3838, %v3834
  %v4875 = vpack.c.b16 %v3839, %v3835
  %v4876 = vpack.c.b16 %v3844, %v3840
  %v4877 = vpack.c.b16 %v3845, %v3841
  %v4878 = vpack.c.b16 %v3846, %v3842
  %v4879 = vpack.c.b16 %v3847, %v3843
  %v4880 = vpack.c.b16 %v3852, %v3848
  %v4881 = vpack.c.b16 %v3853, %v3849
  %v4882 = vpack.c.b16 %v3854, %v3850
  %v4883 = vpack.c.b16 %v3855, %v3851
  %v4884 = vpack.c.b16 %v3860, %v3856
  %v4885 = vpack.c.b16 %v3861, %v3857
  %v4886 = vpack.c.b16 %v3862, %v3858
  %v4887 = vpack.c.b16 %v3863, %v3859
  %v4888 = vpack.c.b16 %v3868, %v3864
  %v4889 = vpack.c.b16 %v3869, %v3865
  %v4890 = vpack.c.b16 %v3870, %v3866
  %v4891 = vpack.c.b16 %v3871, %v3867
  %v4892 = vpack.c.b16 %v3876, %v3872
  %v4893 = vpack.c.b16 %v3877, %v3873
  %v4894 = vpack.c.b16 %v3878, %v3874
  %v4895 = vpack.c.b16 %v3879, %v3875
  %v4896 = vpack.c.b16 %v3884, %v3880
  %v4897 = vpack.c.b16 %v3885, %v3881
  %v4898 = vpack.c.b16 %v3886, %v3882
  %v4899 = vpack.c.b16 %v3887, %v3883
  %v4900 = vpack.c.b16 %v3892, %v3888
  %v4901 = vpack.c.b16 %v3893, %v3889
  %v4902 = vpack.c.b16 %v3894, %v3890
  %v4903 = vpack.c.b16 %v3895, %v3891
  %v4904 = vpack.c.b16 %v3900, %v3896
  %v4905 = vpack.c.b16 %v3901, %v3897
  %v4906 = vpack.c.b16 %v3902, %v3898
  %v4907 = vpack.c.b16 %v3903, %v3899
  %v4908 = vpack.c.b16 %v3908, %v3904
  %v4909 = vpack.c.b16 %v3909, %v3905
  %v4910 = vpack.c.b16 %v3910, %v3906
  %v4911 = vpack.c.b16 %v3911, %v3907
  %v4912 = vpack.c.b16 %v3916, %v3912
  %v4913 = vpack.c.b16 %v3917, %v3913
  %v4914 = vpack.c.b16 %v3918, %v3914
  %v4915 = vpack.c.b16 %v3919, %v3915
  %v4916 = vpack.c.b16 %v3924, %v3920
  %v4917 = vpack.c.b16 %v3925, %v3921
  %v4918 = vpack.c.b16 %v3926, %v3922
  %v4919 = vpack.c.b16 %v3927, %v3923
  %v4920 = vpack.c.b16 %v3932, %v3928
  %v4921 = vpack.c.b16 %v3933, %v3929
  %v4922 = vpack.c.b16 %v3934, %v3930
  %v4923 = vpack.c.b16 %v3935, %v3931
  %v4924 = vpack.c.b16 %v3940, %v3936
  %v4925 = vpack.c.b16 %v3941, %v3937
  %v4926 = vpack.c.b16 %v3942, %v3938
  %v4927 = vpack.c.b16 %v3943, %v3939
  %v4928 = vpack.c.b16 %v3948, %v3944
  %v4929 = vpack.c.b16 %v3949, %v3945
  %v4930 = vpack.c.b16 %v3950, %v3946
  %v4931 = vpack.c.b16 %v3951, %v3947
  %v4932 = vpack.c.b16 %v3956, %v3952
  %v4933 = vpack.c.b16 %v3957, %v3953
  %v4934 = vpack.c.b16 %v3958, %v3954
  %v4935 = vpack.c.b16 %v3959, %v3955
  %v4936 = vpack.c.b16 %v3964, %v3960
  %v4937 = vpack.c.b16 %v3965, %v3961
  %v4938 = vpack.c.b16 %v3966, %v3962
  %v4939 = vpack.c.b16 %v3967, %v3963
  %v4940 = vpack.c.b16 %v3972, %v3968
  %v4941 = vpack.c.b16 %v3973, %v3969
  %v4942 = vpack.c.b16 %v3974, %v3970
  %v4943 = vpack.c.b16 %v3975, %v3971
  %v4944 = vpack.c.b16 %v3980, %v3976
  %v4945 = vpack.c.b16 %v3981, %v3977
  %v4946 = vpack.c.b16 %v3982, %v3978
  %v4947 = vpack.c.b16 %v3983, %v3979
  %v4948 = vpack.c.b16 %v3988, %v3984
  %v4949 = vpack.c.b16 %v3989, %v3985
  %v4950 = vpack.c.b16 %v3990, %v3986
  %v4951 = vpack.c.b16 %v3991, %v3987
  %5912 = vmatpush.bf16.msra.mxu0 %v4020
  %5913 = vmatpush.bf16.msra.mxu0 %v4016
  %5914 = vmatpush.bf16.msra.mxu0 %v4012
  %5915 = vmatpush.bf16.msra.mxu0 %v4008
  %5916 = vmatpush.bf16.msra.mxu0 %v4004
  %5917 = vmatpush.bf16.msra.mxu0 %v4000
  %5918 = vmatpush.bf16.msra.mxu0 %v3996
  %5919 = vmatpush.bf16.msra.mxu0 %v3992
  %5920 = vmatmul.bf16.gmra.mxu0 %v1052
  %v5921 = vpop.f32.mrf.mxu0
  %v5922 = vadd.f32 0.0, %v5921
  %v5923 = vpop.f32.mrf.mxu0
  %5924 = vdwg.mxu0
  %5925 = vmatpush.bf16.msra.mxu0 %v4052
  %5926 = vmatpush.bf16.msra.mxu0 %v4048
  %5927 = vmatpush.bf16.msra.mxu0 %v4044
  %5928 = vmatpush.bf16.msra.mxu0 %v4040
  %5929 = vmatpush.bf16.msra.mxu0 %v4036
  %5930 = vmatpush.bf16.msra.mxu0 %v4032
  %5931 = vmatpush.bf16.msra.mxu0 %v4028
  %5932 = vmatpush.bf16.msra.mxu0 %v4024
  %5933 = vmatmul.bf16.gmra.mxu0 %v1053
  %v5934 = vpop.f32.mrf.mxu0
  %v5935 = vadd.f32 %v5922, %v5934
  %v5936 = vpop.f32.mrf.mxu0
  %5937 = vdwg.mxu0
  %5938 = vmatpush.bf16.msra.mxu0 %v4084
  %5939 = vmatpush.bf16.msra.mxu0 %v4080
  %5940 = vmatpush.bf16.msra.mxu0 %v4076
  %5941 = vmatpush.bf16.msra.mxu0 %v4072
  %5942 = vmatpush.bf16.msra.mxu0 %v4068
  %5943 = vmatpush.bf16.msra.mxu0 %v4064
  %5944 = vmatpush.bf16.msra.mxu0 %v4060
  %5945 = vmatpush.bf16.msra.mxu0 %v4056
  %5946 = vmatmul.bf16.gmra.mxu0 %v1054
  %v5947 = vpop.f32.mrf.mxu0
  %v5948 = vadd.f32 %v5935, %v5947
  %v5949 = vpop.f32.mrf.mxu0
  %5950 = vdwg.mxu0
  %5951 = vmatpush.bf16.msra.mxu0 %v4116
  %5952 = vmatpush.bf16.msra.mxu0 %v4112
  %5953 = vmatpush.bf16.msra.mxu0 %v4108
  %5954 = vmatpush.bf16.msra.mxu0 %v4104
  %5955 = vmatpush.bf16.msra.mxu0 %v4100
  %5956 = vmatpush.bf16.msra.mxu0 %v4096
  %5957 = vmatpush.bf16.msra.mxu0 %v4092
  %5958 = vmatpush.bf16.msra.mxu0 %v4088
  %5959 = vmatmul.bf16.gmra.mxu0 %v1055
  %v5960 = vpop.f32.mrf.mxu0
  %v5961 = vadd.f32 %v5948, %v5960
  %v5962 = vpop.f32.mrf.mxu0
  %5963 = vdwg.mxu0
  %5964 = vmatpush.bf16.msra.mxu0 %v4148
  %5965 = vmatpush.bf16.msra.mxu0 %v4144
  %5966 = vmatpush.bf16.msra.mxu0 %v4140
  %5967 = vmatpush.bf16.msra.mxu0 %v4136
  %5968 = vmatpush.bf16.msra.mxu0 %v4132
  %5969 = vmatpush.bf16.msra.mxu0 %v4128
  %5970 = vmatpush.bf16.msra.mxu0 %v4124
  %5971 = vmatpush.bf16.msra.mxu0 %v4120
  %5972 = vmatmul.bf16.gmra.mxu0 %v1056
  %v5973 = vpop.f32.mrf.mxu0
  %v5974 = vadd.f32 %v5961, %v5973
  %v5975 = vpop.f32.mrf.mxu0
  %5976 = vdwg.mxu0
  %5977 = vmatpush.bf16.msra.mxu0 %v4180
  %5978 = vmatpush.bf16.msra.mxu0 %v4176
  %5979 = vmatpush.bf16.msra.mxu0 %v4172
  %5980 = vmatpush.bf16.msra.mxu0 %v4168
  %5981 = vmatpush.bf16.msra.mxu0 %v4164
  %5982 = vmatpush.bf16.msra.mxu0 %v4160
  %5983 = vmatpush.bf16.msra.mxu0 %v4156
  %5984 = vmatpush.bf16.msra.mxu0 %v4152
  %5985 = vmatmul.bf16.gmra.mxu0 %v1057
  %v5986 = vpop.f32.mrf.mxu0
  %v5987 = vadd.f32 %v5974, %v5986
  %v5988 = vpop.f32.mrf.mxu0
  %5989 = vdwg.mxu0
  %5990 = vmatpush.bf16.msra.mxu0 %v4212
  %5991 = vmatpush.bf16.msra.mxu0 %v4208
  %5992 = vmatpush.bf16.msra.mxu0 %v4204
  %5993 = vmatpush.bf16.msra.mxu0 %v4200
  %5994 = vmatpush.bf16.msra.mxu0 %v4196
  %5995 = vmatpush.bf16.msra.mxu0 %v4192
  %5996 = vmatpush.bf16.msra.mxu0 %v4188
  %5997 = vmatpush.bf16.msra.mxu0 %v4184
  %5998 = vmatmul.bf16.gmra.mxu0 %v1058
  %v5999 = vpop.f32.mrf.mxu0
  %v6000 = vadd.f32 %v5987, %v5999
  %v6001 = vpop.f32.mrf.mxu0
  %6002 = vdwg.mxu0
  %6003 = vmatpush.bf16.msra.mxu0 %v4244
  %6004 = vmatpush.bf16.msra.mxu0 %v4240
  %6005 = vmatpush.bf16.msra.mxu0 %v4236
  %6006 = vmatpush.bf16.msra.mxu0 %v4232
  %6007 = vmatpush.bf16.msra.mxu0 %v4228
  %6008 = vmatpush.bf16.msra.mxu0 %v4224
  %6009 = vmatpush.bf16.msra.mxu0 %v4220
  %6010 = vmatpush.bf16.msra.mxu0 %v4216
  %6011 = vmatmul.bf16.gmra.mxu0 %v1059
  %v6012 = vpop.f32.mrf.mxu0
  %v6013 = vadd.f32 %v6000, %v6012
  %v6014 = vpop.f32.mrf.mxu0
  %6015 = vdwg.mxu0
  %6016 = vmatpush.bf16.msra.mxu0 %v4276
  %6017 = vmatpush.bf16.msra.mxu0 %v4272
  %6018 = vmatpush.bf16.msra.mxu0 %v4268
  %6019 = vmatpush.bf16.msra.mxu0 %v4264
  %6020 = vmatpush.bf16.msra.mxu0 %v4260
  %6021 = vmatpush.bf16.msra.mxu0 %v4256
  %6022 = vmatpush.bf16.msra.mxu0 %v4252
  %6023 = vmatpush.bf16.msra.mxu0 %v4248
  %6024 = vmatmul.bf16.gmra.mxu0 %v1060
  %v6025 = vpop.f32.mrf.mxu0
  %v6026 = vadd.f32 %v6013, %v6025
  %v6027 = vpop.f32.mrf.mxu0
  %6028 = vdwg.mxu0
  %6029 = vmatpush.bf16.msra.mxu0 %v4308
  %6030 = vmatpush.bf16.msra.mxu0 %v4304
  %6031 = vmatpush.bf16.msra.mxu0 %v4300
  %6032 = vmatpush.bf16.msra.mxu0 %v4296
  %6033 = vmatpush.bf16.msra.mxu0 %v4292
  %6034 = vmatpush.bf16.msra.mxu0 %v4288
  %6035 = vmatpush.bf16.msra.mxu0 %v4284
  %6036 = vmatpush.bf16.msra.mxu0 %v4280
  %6037 = vmatmul.bf16.gmra.mxu0 %v1061
  %v6038 = vpop.f32.mrf.mxu0
  %v6039 = vadd.f32 %v6026, %v6038
  %v6040 = vpop.f32.mrf.mxu0
  %6041 = vdwg.mxu0
  %6042 = vmatpush.bf16.msra.mxu0 %v4340
  %6043 = vmatpush.bf16.msra.mxu0 %v4336
  %6044 = vmatpush.bf16.msra.mxu0 %v4332
  %6045 = vmatpush.bf16.msra.mxu0 %v4328
  %6046 = vmatpush.bf16.msra.mxu0 %v4324
  %6047 = vmatpush.bf16.msra.mxu0 %v4320
  %6048 = vmatpush.bf16.msra.mxu0 %v4316
  %6049 = vmatpush.bf16.msra.mxu0 %v4312
  %6050 = vmatmul.bf16.gmra.mxu0 %v1062
  %v6051 = vpop.f32.mrf.mxu0
  %v6052 = vadd.f32 %v6039, %v6051
  %v6053 = vpop.f32.mrf.mxu0
  %6054 = vdwg.mxu0
  %6055 = vmatpush.bf16.msra.mxu0 %v4372
  %6056 = vmatpush.bf16.msra.mxu0 %v4368
  %6057 = vmatpush.bf16.msra.mxu0 %v4364
  %6058 = vmatpush.bf16.msra.mxu0 %v4360
  %6059 = vmatpush.bf16.msra.mxu0 %v4356
  %6060 = vmatpush.bf16.msra.mxu0 %v4352
  %6061 = vmatpush.bf16.msra.mxu0 %v4348
  %6062 = vmatpush.bf16.msra.mxu0 %v4344
  %6063 = vmatmul.bf16.gmra.mxu0 %v1063
  %v6064 = vpop.f32.mrf.mxu0
  %v6065 = vadd.f32 %v6052, %v6064
  %v6066 = vpop.f32.mrf.mxu0
  %6067 = vdwg.mxu0
  %6068 = vmatpush.bf16.msra.mxu0 %v4404
  %6069 = vmatpush.bf16.msra.mxu0 %v4400
  %6070 = vmatpush.bf16.msra.mxu0 %v4396
  %6071 = vmatpush.bf16.msra.mxu0 %v4392
  %6072 = vmatpush.bf16.msra.mxu0 %v4388
  %6073 = vmatpush.bf16.msra.mxu0 %v4384
  %6074 = vmatpush.bf16.msra.mxu0 %v4380
  %6075 = vmatpush.bf16.msra.mxu0 %v4376
  %6076 = vmatmul.bf16.gmra.mxu0 %v1064
  %v6077 = vpop.f32.mrf.mxu0
  %v6078 = vadd.f32 %v6065, %v6077
  %v6079 = vpop.f32.mrf.mxu0
  %6080 = vdwg.mxu0
  %6081 = vmatpush.bf16.msra.mxu0 %v4436
  %6082 = vmatpush.bf16.msra.mxu0 %v4432
  %6083 = vmatpush.bf16.msra.mxu0 %v4428
  %6084 = vmatpush.bf16.msra.mxu0 %v4424
  %6085 = vmatpush.bf16.msra.mxu0 %v4420
  %6086 = vmatpush.bf16.msra.mxu0 %v4416
  %6087 = vmatpush.bf16.msra.mxu0 %v4412
  %6088 = vmatpush.bf16.msra.mxu0 %v4408
  %6089 = vmatmul.bf16.gmra.mxu0 %v1065
  %v6090 = vpop.f32.mrf.mxu0
  %v6091 = vadd.f32 %v6078, %v6090
  %v6092 = vpop.f32.mrf.mxu0
  %6093 = vdwg.mxu0
  %6094 = vmatpush.bf16.msra.mxu0 %v4468
  %6095 = vmatpush.bf16.msra.mxu0 %v4464
  %6096 = vmatpush.bf16.msra.mxu0 %v4460
  %6097 = vmatpush.bf16.msra.mxu0 %v4456
  %6098 = vmatpush.bf16.msra.mxu0 %v4452
  %6099 = vmatpush.bf16.msra.mxu0 %v4448
  %6100 = vmatpush.bf16.msra.mxu0 %v4444
  %6101 = vmatpush.bf16.msra.mxu0 %v4440
  %6102 = vmatmul.bf16.gmra.mxu0 %v1066
  %v6103 = vpop.f32.mrf.mxu0
  %v6104 = vadd.f32 %v6091, %v6103
  %v6105 = vpop.f32.mrf.mxu0
  %6106 = vdwg.mxu0
  %6107 = vmatpush.bf16.msra.mxu0 %v4500
  %6108 = vmatpush.bf16.msra.mxu0 %v4496
  %6109 = vmatpush.bf16.msra.mxu0 %v4492
  %6110 = vmatpush.bf16.msra.mxu0 %v4488
  %6111 = vmatpush.bf16.msra.mxu0 %v4484
  %6112 = vmatpush.bf16.msra.mxu0 %v4480
  %6113 = vmatpush.bf16.msra.mxu0 %v4476
  %6114 = vmatpush.bf16.msra.mxu0 %v4472
  %6115 = vmatmul.bf16.gmra.mxu0 %v1067
  %v6116 = vpop.f32.mrf.mxu0
  %v6117 = vadd.f32 %v6104, %v6116
  %v6118 = vpop.f32.mrf.mxu0
  %6119 = vdwg.mxu0
  %6120 = vmatpush.bf16.msra.mxu0 %v4532
  %6121 = vmatpush.bf16.msra.mxu0 %v4528
  %6122 = vmatpush.bf16.msra.mxu0 %v4524
  %6123 = vmatpush.bf16.msra.mxu0 %v4520
  %6124 = vmatpush.bf16.msra.mxu0 %v4516
  %6125 = vmatpush.bf16.msra.mxu0 %v4512
  %6126 = vmatpush.bf16.msra.mxu0 %v4508
  %6127 = vmatpush.bf16.msra.mxu0 %v4504
  %6128 = vmatmul.bf16.gmra.mxu0 %v1068
  %v6129 = vpop.f32.mrf.mxu0
  %v6130 = vadd.f32 %v6117, %v6129
  %v6131 = vpop.f32.mrf.mxu0
  %6132 = vdwg.mxu0
  %6133 = vmatpush.bf16.msra.mxu0 %v4564
  %6134 = vmatpush.bf16.msra.mxu0 %v4560
  %6135 = vmatpush.bf16.msra.mxu0 %v4556
  %6136 = vmatpush.bf16.msra.mxu0 %v4552
  %6137 = vmatpush.bf16.msra.mxu0 %v4548
  %6138 = vmatpush.bf16.msra.mxu0 %v4544
  %6139 = vmatpush.bf16.msra.mxu0 %v4540
  %6140 = vmatpush.bf16.msra.mxu0 %v4536
  %6141 = vmatmul.bf16.gmra.mxu0 %v1069
  %v6142 = vpop.f32.mrf.mxu0
  %v6143 = vadd.f32 %v6130, %v6142
  %v6144 = vpop.f32.mrf.mxu0
  %6145 = vdwg.mxu0
  %6146 = vmatpush.bf16.msra.mxu0 %v4596
  %6147 = vmatpush.bf16.msra.mxu0 %v4592
  %6148 = vmatpush.bf16.msra.mxu0 %v4588
  %6149 = vmatpush.bf16.msra.mxu0 %v4584
  %6150 = vmatpush.bf16.msra.mxu0 %v4580
  %6151 = vmatpush.bf16.msra.mxu0 %v4576
  %6152 = vmatpush.bf16.msra.mxu0 %v4572
  %6153 = vmatpush.bf16.msra.mxu0 %v4568
  %6154 = vmatmul.bf16.gmra.mxu0 %v1070
  %v6155 = vpop.f32.mrf.mxu0
  %v6156 = vadd.f32 %v6143, %v6155
  %v6157 = vpop.f32.mrf.mxu0
  %6158 = vdwg.mxu0
  %6159 = vmatpush.bf16.msra.mxu0 %v4628
  %6160 = vmatpush.bf16.msra.mxu0 %v4624
  %6161 = vmatpush.bf16.msra.mxu0 %v4620
  %6162 = vmatpush.bf16.msra.mxu0 %v4616
  %6163 = vmatpush.bf16.msra.mxu0 %v4612
  %6164 = vmatpush.bf16.msra.mxu0 %v4608
  %6165 = vmatpush.bf16.msra.mxu0 %v4604
  %6166 = vmatpush.bf16.msra.mxu0 %v4600
  %6167 = vmatmul.bf16.gmra.mxu0 %v1071
  %v6168 = vpop.f32.mrf.mxu0
  %v6169 = vadd.f32 %v6156, %v6168
  %v6170 = vpop.f32.mrf.mxu0
  %6171 = vdwg.mxu0
  %6172 = vmatpush.bf16.msra.mxu0 %v4660
  %6173 = vmatpush.bf16.msra.mxu0 %v4656
  %6174 = vmatpush.bf16.msra.mxu0 %v4652
  %6175 = vmatpush.bf16.msra.mxu0 %v4648
  %6176 = vmatpush.bf16.msra.mxu0 %v4644
  %6177 = vmatpush.bf16.msra.mxu0 %v4640
  %6178 = vmatpush.bf16.msra.mxu0 %v4636
  %6179 = vmatpush.bf16.msra.mxu0 %v4632
  %6180 = vmatmul.bf16.gmra.mxu0 %v1072
  %v6181 = vpop.f32.mrf.mxu0
  %v6182 = vadd.f32 %v6169, %v6181
  %v6183 = vpop.f32.mrf.mxu0
  %6184 = vdwg.mxu0
  %6185 = vmatpush.bf16.msra.mxu0 %v4692
  %6186 = vmatpush.bf16.msra.mxu0 %v4688
  %6187 = vmatpush.bf16.msra.mxu0 %v4684
  %6188 = vmatpush.bf16.msra.mxu0 %v4680
  %6189 = vmatpush.bf16.msra.mxu0 %v4676
  %6190 = vmatpush.bf16.msra.mxu0 %v4672
  %6191 = vmatpush.bf16.msra.mxu0 %v4668
  %6192 = vmatpush.bf16.msra.mxu0 %v4664
  %6193 = vmatmul.bf16.gmra.mxu0 %v1073
  %v6194 = vpop.f32.mrf.mxu0
  %v6195 = vadd.f32 %v6182, %v6194
  %v6196 = vpop.f32.mrf.mxu0
  %6197 = vdwg.mxu0
  %6198 = vmatpush.bf16.msra.mxu0 %v4724
  %6199 = vmatpush.bf16.msra.mxu0 %v4720
  %6200 = vmatpush.bf16.msra.mxu0 %v4716
  %6201 = vmatpush.bf16.msra.mxu0 %v4712
  %6202 = vmatpush.bf16.msra.mxu0 %v4708
  %6203 = vmatpush.bf16.msra.mxu0 %v4704
  %6204 = vmatpush.bf16.msra.mxu0 %v4700
  %6205 = vmatpush.bf16.msra.mxu0 %v4696
  %6206 = vmatmul.bf16.gmra.mxu0 %v1074
  %v6207 = vpop.f32.mrf.mxu0
  %v6208 = vadd.f32 %v6195, %v6207
  %v6209 = vpop.f32.mrf.mxu0
  %6210 = vdwg.mxu0
  %6211 = vmatpush.bf16.msra.mxu0 %v4756
  %6212 = vmatpush.bf16.msra.mxu0 %v4752
  %6213 = vmatpush.bf16.msra.mxu0 %v4748
  %6214 = vmatpush.bf16.msra.mxu0 %v4744
  %6215 = vmatpush.bf16.msra.mxu0 %v4740
  %6216 = vmatpush.bf16.msra.mxu0 %v4736
  %6217 = vmatpush.bf16.msra.mxu0 %v4732
  %6218 = vmatpush.bf16.msra.mxu0 %v4728
  %6219 = vmatmul.bf16.gmra.mxu0 %v1075
  %v6220 = vpop.f32.mrf.mxu0
  %v6221 = vadd.f32 %v6208, %v6220
  %v6222 = vpop.f32.mrf.mxu0
  %6223 = vdwg.mxu0
  %6224 = vmatpush.bf16.msra.mxu0 %v4788
  %6225 = vmatpush.bf16.msra.mxu0 %v4784
  %6226 = vmatpush.bf16.msra.mxu0 %v4780
  %6227 = vmatpush.bf16.msra.mxu0 %v4776
  %6228 = vmatpush.bf16.msra.mxu0 %v4772
  %6229 = vmatpush.bf16.msra.mxu0 %v4768
  %6230 = vmatpush.bf16.msra.mxu0 %v4764
  %6231 = vmatpush.bf16.msra.mxu0 %v4760
  %6232 = vmatmul.bf16.gmra.mxu0 %v1076
  %v6233 = vpop.f32.mrf.mxu0
  %v6234 = vadd.f32 %v6221, %v6233
  %v6235 = vpop.f32.mrf.mxu0
  %6236 = vdwg.mxu0
  %6237 = vmatpush.bf16.msra.mxu0 %v4820
  %6238 = vmatpush.bf16.msra.mxu0 %v4816
  %6239 = vmatpush.bf16.msra.mxu0 %v4812
  %6240 = vmatpush.bf16.msra.mxu0 %v4808
  %6241 = vmatpush.bf16.msra.mxu0 %v4804
  %6242 = vmatpush.bf16.msra.mxu0 %v4800
  %6243 = vmatpush.bf16.msra.mxu0 %v4796
  %6244 = vmatpush.bf16.msra.mxu0 %v4792
  %6245 = vmatmul.bf16.gmra.mxu0 %v1077
  %v6246 = vpop.f32.mrf.mxu0
  %v6247 = vadd.f32 %v6234, %v6246
  %v6248 = vpop.f32.mrf.mxu0
  %6249 = vdwg.mxu0
  %6250 = vmatpush.bf16.msra.mxu0 %v4852
  %6251 = vmatpush.bf16.msra.mxu0 %v4848
  %6252 = vmatpush.bf16.msra.mxu0 %v4844
  %6253 = vmatpush.bf16.msra.mxu0 %v4840
  %6254 = vmatpush.bf16.msra.mxu0 %v4836
  %6255 = vmatpush.bf16.msra.mxu0 %v4832
  %6256 = vmatpush.bf16.msra.mxu0 %v4828
  %6257 = vmatpush.bf16.msra.mxu0 %v4824
  %6258 = vmatmul.bf16.gmra.mxu0 %v1078
  %v6259 = vpop.f32.mrf.mxu0
  %v6260 = vadd.f32 %v6247, %v6259
  %v6261 = vpop.f32.mrf.mxu0
  %6262 = vdwg.mxu0
  %6263 = vmatpush.bf16.msra.mxu0 %v4884
  %6264 = vmatpush.bf16.msra.mxu0 %v4880
  %6265 = vmatpush.bf16.msra.mxu0 %v4876
  %6266 = vmatpush.bf16.msra.mxu0 %v4872
  %6267 = vmatpush.bf16.msra.mxu0 %v4868
  %6268 = vmatpush.bf16.msra.mxu0 %v4864
  %6269 = vmatpush.bf16.msra.mxu0 %v4860
  %6270 = vmatpush.bf16.msra.mxu0 %v4856
  %6271 = vmatmul.bf16.gmra.mxu0 %v1079
  %v6272 = vpop.f32.mrf.mxu0
  %v6273 = vadd.f32 %v6260, %v6272
  %v6274 = vpop.f32.mrf.mxu0
  %6275 = vdwg.mxu0
  %6276 = vmatpush.bf16.msra.mxu0 %v4916
  %6277 = vmatpush.bf16.msra.mxu0 %v4912
  %6278 = vmatpush.bf16.msra.mxu0 %v4908
  %6279 = vmatpush.bf16.msra.mxu0 %v4904
  %6280 = vmatpush.bf16.msra.mxu0 %v4900
  %6281 = vmatpush.bf16.msra.mxu0 %v4896
  %6282 = vmatpush.bf16.msra.mxu0 %v4892
  %6283 = vmatpush.bf16.msra.mxu0 %v4888
  %6284 = vmatmul.bf16.gmra.mxu0 %v1080
  %v6285 = vpop.f32.mrf.mxu0
  %v6286 = vadd.f32 %v6273, %v6285
  %v6287 = vpop.f32.mrf.mxu0
  %6288 = vdwg.mxu0
  %6289 = vmatpush.bf16.msra.mxu0 %v4948
  %6290 = vmatpush.bf16.msra.mxu0 %v4944
  %6291 = vmatpush.bf16.msra.mxu0 %v4940
  %6292 = vmatpush.bf16.msra.mxu0 %v4936
  %6293 = vmatpush.bf16.msra.mxu0 %v4932
  %6294 = vmatpush.bf16.msra.mxu0 %v4928
  %6295 = vmatpush.bf16.msra.mxu0 %v4924
  %6296 = vmatpush.bf16.msra.mxu0 %v4920
  %6297 = vmatmul.bf16.gmra.mxu0 %v1081
  %v6298 = vpop.f32.mrf.mxu0
  %v6299 = vadd.f32 %v6286, %v6298
  %v6300 = vpop.f32.mrf.mxu0
  %6301 = vdwg.mxu0
  %6302 = vmatpush.bf16.msra.mxu0 %v4021
  %6303 = vmatpush.bf16.msra.mxu0 %v4017
  %6304 = vmatpush.bf16.msra.mxu0 %v4013
  %6305 = vmatpush.bf16.msra.mxu0 %v4009
  %6306 = vmatpush.bf16.msra.mxu0 %v4005
  %6307 = vmatpush.bf16.msra.mxu0 %v4001
  %6308 = vmatpush.bf16.msra.mxu0 %v3997
  %6309 = vmatpush.bf16.msra.mxu0 %v3993
  %6310 = vmatmul.bf16.gmra.mxu0 %v1052
  %v6311 = vpop.f32.mrf.mxu0
  %v6312 = vadd.f32 0.0, %v6311
  %v6313 = vpop.f32.mrf.mxu0
  %6314 = vdwg.mxu0
  %6315 = vmatpush.bf16.msra.mxu0 %v4053
  %6316 = vmatpush.bf16.msra.mxu0 %v4049
  %6317 = vmatpush.bf16.msra.mxu0 %v4045
  %6318 = vmatpush.bf16.msra.mxu0 %v4041
  %6319 = vmatpush.bf16.msra.mxu0 %v4037
  %6320 = vmatpush.bf16.msra.mxu0 %v4033
  %6321 = vmatpush.bf16.msra.mxu0 %v4029
  %6322 = vmatpush.bf16.msra.mxu0 %v4025
  %6323 = vmatmul.bf16.gmra.mxu0 %v1053
  %v6324 = vpop.f32.mrf.mxu0
  %v6325 = vadd.f32 %v6312, %v6324
  %v6326 = vpop.f32.mrf.mxu0
  %6327 = vdwg.mxu0
  %6328 = vmatpush.bf16.msra.mxu0 %v4085
  %6329 = vmatpush.bf16.msra.mxu0 %v4081
  %6330 = vmatpush.bf16.msra.mxu0 %v4077
  %6331 = vmatpush.bf16.msra.mxu0 %v4073
  %6332 = vmatpush.bf16.msra.mxu0 %v4069
  %6333 = vmatpush.bf16.msra.mxu0 %v4065
  %6334 = vmatpush.bf16.msra.mxu0 %v4061
  %6335 = vmatpush.bf16.msra.mxu0 %v4057
  %6336 = vmatmul.bf16.gmra.mxu0 %v1054
  %v6337 = vpop.f32.mrf.mxu0
  %v6338 = vadd.f32 %v6325, %v6337
  %v6339 = vpop.f32.mrf.mxu0
  %6340 = vdwg.mxu0
  %6341 = vmatpush.bf16.msra.mxu0 %v4117
  %6342 = vmatpush.bf16.msra.mxu0 %v4113
  %6343 = vmatpush.bf16.msra.mxu0 %v4109
  %6344 = vmatpush.bf16.msra.mxu0 %v4105
  %6345 = vmatpush.bf16.msra.mxu0 %v4101
  %6346 = vmatpush.bf16.msra.mxu0 %v4097
  %6347 = vmatpush.bf16.msra.mxu0 %v4093
  %6348 = vmatpush.bf16.msra.mxu0 %v4089
  %6349 = vmatmul.bf16.gmra.mxu0 %v1055
  %v6350 = vpop.f32.mrf.mxu0
  %v6351 = vadd.f32 %v6338, %v6350
  %v6352 = vpop.f32.mrf.mxu0
  %6353 = vdwg.mxu0
  %6354 = vmatpush.bf16.msra.mxu0 %v4149
  %6355 = vmatpush.bf16.msra.mxu0 %v4145
  %6356 = vmatpush.bf16.msra.mxu0 %v4141
  %6357 = vmatpush.bf16.msra.mxu0 %v4137
  %6358 = vmatpush.bf16.msra.mxu0 %v4133
  %6359 = vmatpush.bf16.msra.mxu0 %v4129
  %6360 = vmatpush.bf16.msra.mxu0 %v4125
  %6361 = vmatpush.bf16.msra.mxu0 %v4121
  %6362 = vmatmul.bf16.gmra.mxu0 %v1056
  %v6363 = vpop.f32.mrf.mxu0
  %v6364 = vadd.f32 %v6351, %v6363
  %v6365 = vpop.f32.mrf.mxu0
  %6366 = vdwg.mxu0
  %6367 = vmatpush.bf16.msra.mxu0 %v4181
  %6368 = vmatpush.bf16.msra.mxu0 %v4177
  %6369 = vmatpush.bf16.msra.mxu0 %v4173
  %6370 = vmatpush.bf16.msra.mxu0 %v4169
  %6371 = vmatpush.bf16.msra.mxu0 %v4165
  %6372 = vmatpush.bf16.msra.mxu0 %v4161
  %6373 = vmatpush.bf16.msra.mxu0 %v4157
  %6374 = vmatpush.bf16.msra.mxu0 %v4153
  %6375 = vmatmul.bf16.gmra.mxu0 %v1057
  %v6376 = vpop.f32.mrf.mxu0
  %v6377 = vadd.f32 %v6364, %v6376
  %v6378 = vpop.f32.mrf.mxu0
  %6379 = vdwg.mxu0
  %6380 = vmatpush.bf16.msra.mxu0 %v4213
  %6381 = vmatpush.bf16.msra.mxu0 %v4209
  %6382 = vmatpush.bf16.msra.mxu0 %v4205
  %6383 = vmatpush.bf16.msra.mxu0 %v4201
  %6384 = vmatpush.bf16.msra.mxu0 %v4197
  %6385 = vmatpush.bf16.msra.mxu0 %v4193
  %6386 = vmatpush.bf16.msra.mxu0 %v4189
  %6387 = vmatpush.bf16.msra.mxu0 %v4185
  %6388 = vmatmul.bf16.gmra.mxu0 %v1058
  %v6389 = vpop.f32.mrf.mxu0
  %v6390 = vadd.f32 %v6377, %v6389
  %v6391 = vpop.f32.mrf.mxu0
  %6392 = vdwg.mxu0
  %6393 = vmatpush.bf16.msra.mxu0 %v4245
  %6394 = vmatpush.bf16.msra.mxu0 %v4241
  %6395 = vmatpush.bf16.msra.mxu0 %v4237
  %6396 = vmatpush.bf16.msra.mxu0 %v4233
  %6397 = vmatpush.bf16.msra.mxu0 %v4229
  %6398 = vmatpush.bf16.msra.mxu0 %v4225
  %6399 = vmatpush.bf16.msra.mxu0 %v4221
  %6400 = vmatpush.bf16.msra.mxu0 %v4217
  %6401 = vmatmul.bf16.gmra.mxu0 %v1059
  %v6402 = vpop.f32.mrf.mxu0
  %v6403 = vadd.f32 %v6390, %v6402
  %v6404 = vpop.f32.mrf.mxu0
  %6405 = vdwg.mxu0
  %6406 = vmatpush.bf16.msra.mxu0 %v4277
  %6407 = vmatpush.bf16.msra.mxu0 %v4273
  %6408 = vmatpush.bf16.msra.mxu0 %v4269
  %6409 = vmatpush.bf16.msra.mxu0 %v4265
  %6410 = vmatpush.bf16.msra.mxu0 %v4261
  %6411 = vmatpush.bf16.msra.mxu0 %v4257
  %6412 = vmatpush.bf16.msra.mxu0 %v4253
  %6413 = vmatpush.bf16.msra.mxu0 %v4249
  %6414 = vmatmul.bf16.gmra.mxu0 %v1060
  %v6415 = vpop.f32.mrf.mxu0
  %v6416 = vadd.f32 %v6403, %v6415
  %v6417 = vpop.f32.mrf.mxu0
  %6418 = vdwg.mxu0
  %6419 = vmatpush.bf16.msra.mxu0 %v4309
  %6420 = vmatpush.bf16.msra.mxu0 %v4305
  %6421 = vmatpush.bf16.msra.mxu0 %v4301
  %6422 = vmatpush.bf16.msra.mxu0 %v4297
  %6423 = vmatpush.bf16.msra.mxu0 %v4293
  %6424 = vmatpush.bf16.msra.mxu0 %v4289
  %6425 = vmatpush.bf16.msra.mxu0 %v4285
  %6426 = vmatpush.bf16.msra.mxu0 %v4281
  %6427 = vmatmul.bf16.gmra.mxu0 %v1061
  %v6428 = vpop.f32.mrf.mxu0
  %v6429 = vadd.f32 %v6416, %v6428
  %v6430 = vpop.f32.mrf.mxu0
  %6431 = vdwg.mxu0
  %6432 = vmatpush.bf16.msra.mxu0 %v4341
  %6433 = vmatpush.bf16.msra.mxu0 %v4337
  %6434 = vmatpush.bf16.msra.mxu0 %v4333
  %6435 = vmatpush.bf16.msra.mxu0 %v4329
  %6436 = vmatpush.bf16.msra.mxu0 %v4325
  %6437 = vmatpush.bf16.msra.mxu0 %v4321
  %6438 = vmatpush.bf16.msra.mxu0 %v4317
  %6439 = vmatpush.bf16.msra.mxu0 %v4313
  %6440 = vmatmul.bf16.gmra.mxu0 %v1062
  %v6441 = vpop.f32.mrf.mxu0
  %v6442 = vadd.f32 %v6429, %v6441
  %v6443 = vpop.f32.mrf.mxu0
  %6444 = vdwg.mxu0
  %6445 = vmatpush.bf16.msra.mxu0 %v4373
  %6446 = vmatpush.bf16.msra.mxu0 %v4369
  %6447 = vmatpush.bf16.msra.mxu0 %v4365
  %6448 = vmatpush.bf16.msra.mxu0 %v4361
  %6449 = vmatpush.bf16.msra.mxu0 %v4357
  %6450 = vmatpush.bf16.msra.mxu0 %v4353
  %6451 = vmatpush.bf16.msra.mxu0 %v4349
  %6452 = vmatpush.bf16.msra.mxu0 %v4345
  %6453 = vmatmul.bf16.gmra.mxu0 %v1063
  %v6454 = vpop.f32.mrf.mxu0
  %v6455 = vadd.f32 %v6442, %v6454
  %v6456 = vpop.f32.mrf.mxu0
  %6457 = vdwg.mxu0
  %6458 = vmatpush.bf16.msra.mxu0 %v4405
  %6459 = vmatpush.bf16.msra.mxu0 %v4401
  %6460 = vmatpush.bf16.msra.mxu0 %v4397
  %6461 = vmatpush.bf16.msra.mxu0 %v4393
  %6462 = vmatpush.bf16.msra.mxu0 %v4389
  %6463 = vmatpush.bf16.msra.mxu0 %v4385
  %6464 = vmatpush.bf16.msra.mxu0 %v4381
  %6465 = vmatpush.bf16.msra.mxu0 %v4377
  %6466 = vmatmul.bf16.gmra.mxu0 %v1064
  %v6467 = vpop.f32.mrf.mxu0
  %v6468 = vadd.f32 %v6455, %v6467
  %v6469 = vpop.f32.mrf.mxu0
  %6470 = vdwg.mxu0
  %6471 = vmatpush.bf16.msra.mxu0 %v4437
  %6472 = vmatpush.bf16.msra.mxu0 %v4433
  %6473 = vmatpush.bf16.msra.mxu0 %v4429
  %6474 = vmatpush.bf16.msra.mxu0 %v4425
  %6475 = vmatpush.bf16.msra.mxu0 %v4421
  %6476 = vmatpush.bf16.msra.mxu0 %v4417
  %6477 = vmatpush.bf16.msra.mxu0 %v4413
  %6478 = vmatpush.bf16.msra.mxu0 %v4409
  %6479 = vmatmul.bf16.gmra.mxu0 %v1065
  %v6480 = vpop.f32.mrf.mxu0
  %v6481 = vadd.f32 %v6468, %v6480
  %v6482 = vpop.f32.mrf.mxu0
  %6483 = vdwg.mxu0
  %6484 = vmatpush.bf16.msra.mxu0 %v4469
  %6485 = vmatpush.bf16.msra.mxu0 %v4465
  %6486 = vmatpush.bf16.msra.mxu0 %v4461
  %6487 = vmatpush.bf16.msra.mxu0 %v4457
  %6488 = vmatpush.bf16.msra.mxu0 %v4453
  %6489 = vmatpush.bf16.msra.mxu0 %v4449
  %6490 = vmatpush.bf16.msra.mxu0 %v4445
  %6491 = vmatpush.bf16.msra.mxu0 %v4441
  %6492 = vmatmul.bf16.gmra.mxu0 %v1066
  %v6493 = vpop.f32.mrf.mxu0
  %v6494 = vadd.f32 %v6481, %v6493
  %v6495 = vpop.f32.mrf.mxu0
  %6496 = vdwg.mxu0
  %6497 = vmatpush.bf16.msra.mxu0 %v4501
  %6498 = vmatpush.bf16.msra.mxu0 %v4497
  %6499 = vmatpush.bf16.msra.mxu0 %v4493
  %6500 = vmatpush.bf16.msra.mxu0 %v4489
  %6501 = vmatpush.bf16.msra.mxu0 %v4485
  %6502 = vmatpush.bf16.msra.mxu0 %v4481
  %6503 = vmatpush.bf16.msra.mxu0 %v4477
  %6504 = vmatpush.bf16.msra.mxu0 %v4473
  %6505 = vmatmul.bf16.gmra.mxu0 %v1067
  %v6506 = vpop.f32.mrf.mxu0
  %v6507 = vadd.f32 %v6494, %v6506
  %v6508 = vpop.f32.mrf.mxu0
  %6509 = vdwg.mxu0
  %6510 = vmatpush.bf16.msra.mxu0 %v4533
  %6511 = vmatpush.bf16.msra.mxu0 %v4529
  %6512 = vmatpush.bf16.msra.mxu0 %v4525
  %6513 = vmatpush.bf16.msra.mxu0 %v4521
  %6514 = vmatpush.bf16.msra.mxu0 %v4517
  %6515 = vmatpush.bf16.msra.mxu0 %v4513
  %6516 = vmatpush.bf16.msra.mxu0 %v4509
  %6517 = vmatpush.bf16.msra.mxu0 %v4505
  %6518 = vmatmul.bf16.gmra.mxu0 %v1068
  %v6519 = vpop.f32.mrf.mxu0
  %v6520 = vadd.f32 %v6507, %v6519
  %v6521 = vpop.f32.mrf.mxu0
  %6522 = vdwg.mxu0
  %6523 = vmatpush.bf16.msra.mxu0 %v4565
  %6524 = vmatpush.bf16.msra.mxu0 %v4561
  %6525 = vmatpush.bf16.msra.mxu0 %v4557
  %6526 = vmatpush.bf16.msra.mxu0 %v4553
  %6527 = vmatpush.bf16.msra.mxu0 %v4549
  %6528 = vmatpush.bf16.msra.mxu0 %v4545
  %6529 = vmatpush.bf16.msra.mxu0 %v4541
  %6530 = vmatpush.bf16.msra.mxu0 %v4537
  %6531 = vmatmul.bf16.gmra.mxu0 %v1069
  %v6532 = vpop.f32.mrf.mxu0
  %v6533 = vadd.f32 %v6520, %v6532
  %v6534 = vpop.f32.mrf.mxu0
  %6535 = vdwg.mxu0
  %6536 = vmatpush.bf16.msra.mxu0 %v4597
  %6537 = vmatpush.bf16.msra.mxu0 %v4593
  %6538 = vmatpush.bf16.msra.mxu0 %v4589
  %6539 = vmatpush.bf16.msra.mxu0 %v4585
  %6540 = vmatpush.bf16.msra.mxu0 %v4581
  %6541 = vmatpush.bf16.msra.mxu0 %v4577
  %6542 = vmatpush.bf16.msra.mxu0 %v4573
  %6543 = vmatpush.bf16.msra.mxu0 %v4569
  %6544 = vmatmul.bf16.gmra.mxu0 %v1070
  %v6545 = vpop.f32.mrf.mxu0
  %v6546 = vadd.f32 %v6533, %v6545
  %v6547 = vpop.f32.mrf.mxu0
  %6548 = vdwg.mxu0
  %6549 = vmatpush.bf16.msra.mxu0 %v4629
  %6550 = vmatpush.bf16.msra.mxu0 %v4625
  %6551 = vmatpush.bf16.msra.mxu0 %v4621
  %6552 = vmatpush.bf16.msra.mxu0 %v4617
  %6553 = vmatpush.bf16.msra.mxu0 %v4613
  %6554 = vmatpush.bf16.msra.mxu0 %v4609
  %6555 = vmatpush.bf16.msra.mxu0 %v4605
  %6556 = vmatpush.bf16.msra.mxu0 %v4601
  %6557 = vmatmul.bf16.gmra.mxu0 %v1071
  %v6558 = vpop.f32.mrf.mxu0
  %v6559 = vadd.f32 %v6546, %v6558
  %v6560 = vpop.f32.mrf.mxu0
  %6561 = vdwg.mxu0
  %6562 = vmatpush.bf16.msra.mxu0 %v4661
  %6563 = vmatpush.bf16.msra.mxu0 %v4657
  %6564 = vmatpush.bf16.msra.mxu0 %v4653
  %6565 = vmatpush.bf16.msra.mxu0 %v4649
  %6566 = vmatpush.bf16.msra.mxu0 %v4645
  %6567 = vmatpush.bf16.msra.mxu0 %v4641
  %6568 = vmatpush.bf16.msra.mxu0 %v4637
  %6569 = vmatpush.bf16.msra.mxu0 %v4633
  %6570 = vmatmul.bf16.gmra.mxu0 %v1072
  %v6571 = vpop.f32.mrf.mxu0
  %v6572 = vadd.f32 %v6559, %v6571
  %v6573 = vpop.f32.mrf.mxu0
  %6574 = vdwg.mxu0
  %6575 = vmatpush.bf16.msra.mxu0 %v4693
  %6576 = vmatpush.bf16.msra.mxu0 %v4689
  %6577 = vmatpush.bf16.msra.mxu0 %v4685
  %6578 = vmatpush.bf16.msra.mxu0 %v4681
  %6579 = vmatpush.bf16.msra.mxu0 %v4677
  %6580 = vmatpush.bf16.msra.mxu0 %v4673
  %6581 = vmatpush.bf16.msra.mxu0 %v4669
  %6582 = vmatpush.bf16.msra.mxu0 %v4665
  %6583 = vmatmul.bf16.gmra.mxu0 %v1073
  %v6584 = vpop.f32.mrf.mxu0
  %v6585 = vadd.f32 %v6572, %v6584
  %v6586 = vpop.f32.mrf.mxu0
  %6587 = vdwg.mxu0
  %6588 = vmatpush.bf16.msra.mxu0 %v4725
  %6589 = vmatpush.bf16.msra.mxu0 %v4721
  %6590 = vmatpush.bf16.msra.mxu0 %v4717
  %6591 = vmatpush.bf16.msra.mxu0 %v4713
  %6592 = vmatpush.bf16.msra.mxu0 %v4709
  %6593 = vmatpush.bf16.msra.mxu0 %v4705
  %6594 = vmatpush.bf16.msra.mxu0 %v4701
  %6595 = vmatpush.bf16.msra.mxu0 %v4697
  %6596 = vmatmul.bf16.gmra.mxu0 %v1074
  %v6597 = vpop.f32.mrf.mxu0
  %v6598 = vadd.f32 %v6585, %v6597
  %v6599 = vpop.f32.mrf.mxu0
  %6600 = vdwg.mxu0
  %6601 = vmatpush.bf16.msra.mxu0 %v4757
  %6602 = vmatpush.bf16.msra.mxu0 %v4753
  %6603 = vmatpush.bf16.msra.mxu0 %v4749
  %6604 = vmatpush.bf16.msra.mxu0 %v4745
  %6605 = vmatpush.bf16.msra.mxu0 %v4741
  %6606 = vmatpush.bf16.msra.mxu0 %v4737
  %6607 = vmatpush.bf16.msra.mxu0 %v4733
  %6608 = vmatpush.bf16.msra.mxu0 %v4729
  %6609 = vmatmul.bf16.gmra.mxu0 %v1075
  %v6610 = vpop.f32.mrf.mxu0
  %v6611 = vadd.f32 %v6598, %v6610
  %v6612 = vpop.f32.mrf.mxu0
  %6613 = vdwg.mxu0
  %6614 = vmatpush.bf16.msra.mxu0 %v4789
  %6615 = vmatpush.bf16.msra.mxu0 %v4785
  %6616 = vmatpush.bf16.msra.mxu0 %v4781
  %6617 = vmatpush.bf16.msra.mxu0 %v4777
  %6618 = vmatpush.bf16.msra.mxu0 %v4773
  %6619 = vmatpush.bf16.msra.mxu0 %v4769
  %6620 = vmatpush.bf16.msra.mxu0 %v4765
  %6621 = vmatpush.bf16.msra.mxu0 %v4761
  %6622 = vmatmul.bf16.gmra.mxu0 %v1076
  %v6623 = vpop.f32.mrf.mxu0
  %v6624 = vadd.f32 %v6611, %v6623
  %v6625 = vpop.f32.mrf.mxu0
  %6626 = vdwg.mxu0
  %6627 = vmatpush.bf16.msra.mxu0 %v4821
  %6628 = vmatpush.bf16.msra.mxu0 %v4817
  %6629 = vmatpush.bf16.msra.mxu0 %v4813
  %6630 = vmatpush.bf16.msra.mxu0 %v4809
  %6631 = vmatpush.bf16.msra.mxu0 %v4805
  %6632 = vmatpush.bf16.msra.mxu0 %v4801
  %6633 = vmatpush.bf16.msra.mxu0 %v4797
  %6634 = vmatpush.bf16.msra.mxu0 %v4793
  %6635 = vmatmul.bf16.gmra.mxu0 %v1077
  %v6636 = vpop.f32.mrf.mxu0
  %v6637 = vadd.f32 %v6624, %v6636
  %v6638 = vpop.f32.mrf.mxu0
  %6639 = vdwg.mxu0
  %6640 = vmatpush.bf16.msra.mxu0 %v4853
  %6641 = vmatpush.bf16.msra.mxu0 %v4849
  %6642 = vmatpush.bf16.msra.mxu0 %v4845
  %6643 = vmatpush.bf16.msra.mxu0 %v4841
  %6644 = vmatpush.bf16.msra.mxu0 %v4837
  %6645 = vmatpush.bf16.msra.mxu0 %v4833
  %6646 = vmatpush.bf16.msra.mxu0 %v4829
  %6647 = vmatpush.bf16.msra.mxu0 %v4825
  %6648 = vmatmul.bf16.gmra.mxu0 %v1078
  %v6649 = vpop.f32.mrf.mxu0
  %v6650 = vadd.f32 %v6637, %v6649
  %v6651 = vpop.f32.mrf.mxu0
  %6652 = vdwg.mxu0
  %6653 = vmatpush.bf16.msra.mxu0 %v4885
  %6654 = vmatpush.bf16.msra.mxu0 %v4881
  %6655 = vmatpush.bf16.msra.mxu0 %v4877
  %6656 = vmatpush.bf16.msra.mxu0 %v4873
  %6657 = vmatpush.bf16.msra.mxu0 %v4869
  %6658 = vmatpush.bf16.msra.mxu0 %v4865
  %6659 = vmatpush.bf16.msra.mxu0 %v4861
  %6660 = vmatpush.bf16.msra.mxu0 %v4857
  %6661 = vmatmul.bf16.gmra.mxu0 %v1079
  %v6662 = vpop.f32.mrf.mxu0
  %v6663 = vadd.f32 %v6650, %v6662
  %v6664 = vpop.f32.mrf.mxu0
  %6665 = vdwg.mxu0
  %6666 = vmatpush.bf16.msra.mxu0 %v4917
  %6667 = vmatpush.bf16.msra.mxu0 %v4913
  %6668 = vmatpush.bf16.msra.mxu0 %v4909
  %6669 = vmatpush.bf16.msra.mxu0 %v4905
  %6670 = vmatpush.bf16.msra.mxu0 %v4901
  %6671 = vmatpush.bf16.msra.mxu0 %v4897
  %6672 = vmatpush.bf16.msra.mxu0 %v4893
  %6673 = vmatpush.bf16.msra.mxu0 %v4889
  %6674 = vmatmul.bf16.gmra.mxu0 %v1080
  %v6675 = vpop.f32.mrf.mxu0
  %v6676 = vadd.f32 %v6663, %v6675
  %v6677 = vpop.f32.mrf.mxu0
  %6678 = vdwg.mxu0
  %6679 = vmatpush.bf16.msra.mxu0 %v4949
  %6680 = vmatpush.bf16.msra.mxu0 %v4945
  %6681 = vmatpush.bf16.msra.mxu0 %v4941
  %6682 = vmatpush.bf16.msra.mxu0 %v4937
  %6683 = vmatpush.bf16.msra.mxu0 %v4933
  %6684 = vmatpush.bf16.msra.mxu0 %v4929
  %6685 = vmatpush.bf16.msra.mxu0 %v4925
  %6686 = vmatpush.bf16.msra.mxu0 %v4921
  %6687 = vmatmul.bf16.gmra.mxu0 %v1081
  %v6688 = vpop.f32.mrf.mxu0
  %v6689 = vadd.f32 %v6676, %v6688
  %v6690 = vpop.f32.mrf.mxu0
  %6691 = vdwg.mxu0
  %6692 = vmatpush.bf16.msra.mxu0 %v4022
  %6693 = vmatpush.bf16.msra.mxu0 %v4018
  %6694 = vmatpush.bf16.msra.mxu0 %v4014
  %6695 = vmatpush.bf16.msra.mxu0 %v4010
  %6696 = vmatpush.bf16.msra.mxu0 %v4006
  %6697 = vmatpush.bf16.msra.mxu0 %v4002
  %6698 = vmatpush.bf16.msra.mxu0 %v3998
  %6699 = vmatpush.bf16.msra.mxu0 %v3994
  %6700 = vmatmul.bf16.gmra.mxu0 %v1052
  %v6701 = vpop.f32.mrf.mxu0
  %v6702 = vadd.f32 0.0, %v6701
  %v6703 = vpop.f32.mrf.mxu0
  %6704 = vdwg.mxu0
  %6705 = vmatpush.bf16.msra.mxu0 %v4054
  %6706 = vmatpush.bf16.msra.mxu0 %v4050
  %6707 = vmatpush.bf16.msra.mxu0 %v4046
  %6708 = vmatpush.bf16.msra.mxu0 %v4042
  %6709 = vmatpush.bf16.msra.mxu0 %v4038
  %6710 = vmatpush.bf16.msra.mxu0 %v4034
  %6711 = vmatpush.bf16.msra.mxu0 %v4030
  %6712 = vmatpush.bf16.msra.mxu0 %v4026
  %6713 = vmatmul.bf16.gmra.mxu0 %v1053
  %v6714 = vpop.f32.mrf.mxu0
  %v6715 = vadd.f32 %v6702, %v6714
  %v6716 = vpop.f32.mrf.mxu0
  %6717 = vdwg.mxu0
  %6718 = vmatpush.bf16.msra.mxu0 %v4086
  %6719 = vmatpush.bf16.msra.mxu0 %v4082
  %6720 = vmatpush.bf16.msra.mxu0 %v4078
  %6721 = vmatpush.bf16.msra.mxu0 %v4074
  %6722 = vmatpush.bf16.msra.mxu0 %v4070
  %6723 = vmatpush.bf16.msra.mxu0 %v4066
  %6724 = vmatpush.bf16.msra.mxu0 %v4062
  %6725 = vmatpush.bf16.msra.mxu0 %v4058
  %6726 = vmatmul.bf16.gmra.mxu0 %v1054
  %v6727 = vpop.f32.mrf.mxu0
  %v6728 = vadd.f32 %v6715, %v6727
  %v6729 = vpop.f32.mrf.mxu0
  %6730 = vdwg.mxu0
  %6731 = vmatpush.bf16.msra.mxu0 %v4118
  %6732 = vmatpush.bf16.msra.mxu0 %v4114
  %6733 = vmatpush.bf16.msra.mxu0 %v4110
  %6734 = vmatpush.bf16.msra.mxu0 %v4106
  %6735 = vmatpush.bf16.msra.mxu0 %v4102
  %6736 = vmatpush.bf16.msra.mxu0 %v4098
  %6737 = vmatpush.bf16.msra.mxu0 %v4094
  %6738 = vmatpush.bf16.msra.mxu0 %v4090
  %6739 = vmatmul.bf16.gmra.mxu0 %v1055
  %v6740 = vpop.f32.mrf.mxu0
  %v6741 = vadd.f32 %v6728, %v6740
  %v6742 = vpop.f32.mrf.mxu0
  %6743 = vdwg.mxu0
  %6744 = vmatpush.bf16.msra.mxu0 %v4150
  %6745 = vmatpush.bf16.msra.mxu0 %v4146
  %6746 = vmatpush.bf16.msra.mxu0 %v4142
  %6747 = vmatpush.bf16.msra.mxu0 %v4138
  %6748 = vmatpush.bf16.msra.mxu0 %v4134
  %6749 = vmatpush.bf16.msra.mxu0 %v4130
  %6750 = vmatpush.bf16.msra.mxu0 %v4126
  %6751 = vmatpush.bf16.msra.mxu0 %v4122
  %6752 = vmatmul.bf16.gmra.mxu0 %v1056
  %v6753 = vpop.f32.mrf.mxu0
  %v6754 = vadd.f32 %v6741, %v6753
  %v6755 = vpop.f32.mrf.mxu0
  %6756 = vdwg.mxu0
  %6757 = vmatpush.bf16.msra.mxu0 %v4182
  %6758 = vmatpush.bf16.msra.mxu0 %v4178
  %6759 = vmatpush.bf16.msra.mxu0 %v4174
  %6760 = vmatpush.bf16.msra.mxu0 %v4170
  %6761 = vmatpush.bf16.msra.mxu0 %v4166
  %6762 = vmatpush.bf16.msra.mxu0 %v4162
  %6763 = vmatpush.bf16.msra.mxu0 %v4158
  %6764 = vmatpush.bf16.msra.mxu0 %v4154
  %6765 = vmatmul.bf16.gmra.mxu0 %v1057
  %v6766 = vpop.f32.mrf.mxu0
  %v6767 = vadd.f32 %v6754, %v6766
  %v6768 = vpop.f32.mrf.mxu0
  %6769 = vdwg.mxu0
  %6770 = vmatpush.bf16.msra.mxu0 %v4214
  %6771 = vmatpush.bf16.msra.mxu0 %v4210
  %6772 = vmatpush.bf16.msra.mxu0 %v4206
  %6773 = vmatpush.bf16.msra.mxu0 %v4202
  %6774 = vmatpush.bf16.msra.mxu0 %v4198
  %6775 = vmatpush.bf16.msra.mxu0 %v4194
  %6776 = vmatpush.bf16.msra.mxu0 %v4190
  %6777 = vmatpush.bf16.msra.mxu0 %v4186
  %6778 = vmatmul.bf16.gmra.mxu0 %v1058
  %v6779 = vpop.f32.mrf.mxu0
  %v6780 = vadd.f32 %v6767, %v6779
  %v6781 = vpop.f32.mrf.mxu0
  %6782 = vdwg.mxu0
  %6783 = vmatpush.bf16.msra.mxu0 %v4246
  %6784 = vmatpush.bf16.msra.mxu0 %v4242
  %6785 = vmatpush.bf16.msra.mxu0 %v4238
  %6786 = vmatpush.bf16.msra.mxu0 %v4234
  %6787 = vmatpush.bf16.msra.mxu0 %v4230
  %6788 = vmatpush.bf16.msra.mxu0 %v4226
  %6789 = vmatpush.bf16.msra.mxu0 %v4222
  %6790 = vmatpush.bf16.msra.mxu0 %v4218
  %6791 = vmatmul.bf16.gmra.mxu0 %v1059
  %v6792 = vpop.f32.mrf.mxu0
  %v6793 = vadd.f32 %v6780, %v6792
  %v6794 = vpop.f32.mrf.mxu0
  %6795 = vdwg.mxu0
  %6796 = vmatpush.bf16.msra.mxu0 %v4278
  %6797 = vmatpush.bf16.msra.mxu0 %v4274
  %6798 = vmatpush.bf16.msra.mxu0 %v4270
  %6799 = vmatpush.bf16.msra.mxu0 %v4266
  %6800 = vmatpush.bf16.msra.mxu0 %v4262
  %6801 = vmatpush.bf16.msra.mxu0 %v4258
  %6802 = vmatpush.bf16.msra.mxu0 %v4254
  %6803 = vmatpush.bf16.msra.mxu0 %v4250
  %6804 = vmatmul.bf16.gmra.mxu0 %v1060
  %v6805 = vpop.f32.mrf.mxu0
  %v6806 = vadd.f32 %v6793, %v6805
  %v6807 = vpop.f32.mrf.mxu0
  %6808 = vdwg.mxu0
  %6809 = vmatpush.bf16.msra.mxu0 %v4310
  %6810 = vmatpush.bf16.msra.mxu0 %v4306
  %6811 = vmatpush.bf16.msra.mxu0 %v4302
  %6812 = vmatpush.bf16.msra.mxu0 %v4298
  %6813 = vmatpush.bf16.msra.mxu0 %v4294
  %6814 = vmatpush.bf16.msra.mxu0 %v4290
  %6815 = vmatpush.bf16.msra.mxu0 %v4286
  %6816 = vmatpush.bf16.msra.mxu0 %v4282
  %6817 = vmatmul.bf16.gmra.mxu0 %v1061
  %v6818 = vpop.f32.mrf.mxu0
  %v6819 = vadd.f32 %v6806, %v6818
  %v6820 = vpop.f32.mrf.mxu0
  %6821 = vdwg.mxu0
  %6822 = vmatpush.bf16.msra.mxu0 %v4342
  %6823 = vmatpush.bf16.msra.mxu0 %v4338
  %6824 = vmatpush.bf16.msra.mxu0 %v4334
  %6825 = vmatpush.bf16.msra.mxu0 %v4330
  %6826 = vmatpush.bf16.msra.mxu0 %v4326
  %6827 = vmatpush.bf16.msra.mxu0 %v4322
  %6828 = vmatpush.bf16.msra.mxu0 %v4318
  %6829 = vmatpush.bf16.msra.mxu0 %v4314
  %6830 = vmatmul.bf16.gmra.mxu0 %v1062
  %v6831 = vpop.f32.mrf.mxu0
  %v6832 = vadd.f32 %v6819, %v6831
  %v6833 = vpop.f32.mrf.mxu0
  %6834 = vdwg.mxu0
  %6835 = vmatpush.bf16.msra.mxu0 %v4374
  %6836 = vmatpush.bf16.msra.mxu0 %v4370
  %6837 = vmatpush.bf16.msra.mxu0 %v4366
  %6838 = vmatpush.bf16.msra.mxu0 %v4362
  %6839 = vmatpush.bf16.msra.mxu0 %v4358
  %6840 = vmatpush.bf16.msra.mxu0 %v4354
  %6841 = vmatpush.bf16.msra.mxu0 %v4350
  %6842 = vmatpush.bf16.msra.mxu0 %v4346
  %6843 = vmatmul.bf16.gmra.mxu0 %v1063
  %v6844 = vpop.f32.mrf.mxu0
  %v6845 = vadd.f32 %v6832, %v6844
  %v6846 = vpop.f32.mrf.mxu0
  %6847 = vdwg.mxu0
  %6848 = vmatpush.bf16.msra.mxu0 %v4406
  %6849 = vmatpush.bf16.msra.mxu0 %v4402
  %6850 = vmatpush.bf16.msra.mxu0 %v4398
  %6851 = vmatpush.bf16.msra.mxu0 %v4394
  %6852 = vmatpush.bf16.msra.mxu0 %v4390
  %6853 = vmatpush.bf16.msra.mxu0 %v4386
  %6854 = vmatpush.bf16.msra.mxu0 %v4382
  %6855 = vmatpush.bf16.msra.mxu0 %v4378
  %6856 = vmatmul.bf16.gmra.mxu0 %v1064
  %v6857 = vpop.f32.mrf.mxu0
  %v6858 = vadd.f32 %v6845, %v6857
  %v6859 = vpop.f32.mrf.mxu0
  %6860 = vdwg.mxu0
  %6861 = vmatpush.bf16.msra.mxu0 %v4438
  %6862 = vmatpush.bf16.msra.mxu0 %v4434
  %6863 = vmatpush.bf16.msra.mxu0 %v4430
  %6864 = vmatpush.bf16.msra.mxu0 %v4426
  %6865 = vmatpush.bf16.msra.mxu0 %v4422
  %6866 = vmatpush.bf16.msra.mxu0 %v4418
  %6867 = vmatpush.bf16.msra.mxu0 %v4414
  %6868 = vmatpush.bf16.msra.mxu0 %v4410
  %6869 = vmatmul.bf16.gmra.mxu0 %v1065
  %v6870 = vpop.f32.mrf.mxu0
  %v6871 = vadd.f32 %v6858, %v6870
  %v6872 = vpop.f32.mrf.mxu0
  %6873 = vdwg.mxu0
  %6874 = vmatpush.bf16.msra.mxu0 %v4470
  %6875 = vmatpush.bf16.msra.mxu0 %v4466
  %6876 = vmatpush.bf16.msra.mxu0 %v4462
  %6877 = vmatpush.bf16.msra.mxu0 %v4458
  %6878 = vmatpush.bf16.msra.mxu0 %v4454
  %6879 = vmatpush.bf16.msra.mxu0 %v4450
  %6880 = vmatpush.bf16.msra.mxu0 %v4446
  %6881 = vmatpush.bf16.msra.mxu0 %v4442
  %6882 = vmatmul.bf16.gmra.mxu0 %v1066
  %v6883 = vpop.f32.mrf.mxu0
  %v6884 = vadd.f32 %v6871, %v6883
  %v6885 = vpop.f32.mrf.mxu0
  %6886 = vdwg.mxu0
  %6887 = vmatpush.bf16.msra.mxu0 %v4502
  %6888 = vmatpush.bf16.msra.mxu0 %v4498
  %6889 = vmatpush.bf16.msra.mxu0 %v4494
  %6890 = vmatpush.bf16.msra.mxu0 %v4490
  %6891 = vmatpush.bf16.msra.mxu0 %v4486
  %6892 = vmatpush.bf16.msra.mxu0 %v4482
  %6893 = vmatpush.bf16.msra.mxu0 %v4478
  %6894 = vmatpush.bf16.msra.mxu0 %v4474
  %6895 = vmatmul.bf16.gmra.mxu0 %v1067
  %v6896 = vpop.f32.mrf.mxu0
  %v6897 = vadd.f32 %v6884, %v6896
  %v6898 = vpop.f32.mrf.mxu0
  %6899 = vdwg.mxu0
  %6900 = vmatpush.bf16.msra.mxu0 %v4534
  %6901 = vmatpush.bf16.msra.mxu0 %v4530
  %6902 = vmatpush.bf16.msra.mxu0 %v4526
  %6903 = vmatpush.bf16.msra.mxu0 %v4522
  %6904 = vmatpush.bf16.msra.mxu0 %v4518
  %6905 = vmatpush.bf16.msra.mxu0 %v4514
  %6906 = vmatpush.bf16.msra.mxu0 %v4510
  %6907 = vmatpush.bf16.msra.mxu0 %v4506
  %6908 = vmatmul.bf16.gmra.mxu0 %v1068
  %v6909 = vpop.f32.mrf.mxu0
  %v6910 = vadd.f32 %v6897, %v6909
  %v6911 = vpop.f32.mrf.mxu0
  %6912 = vdwg.mxu0
  %6913 = vmatpush.bf16.msra.mxu0 %v4566
  %6914 = vmatpush.bf16.msra.mxu0 %v4562
  %6915 = vmatpush.bf16.msra.mxu0 %v4558
  %6916 = vmatpush.bf16.msra.mxu0 %v4554
  %6917 = vmatpush.bf16.msra.mxu0 %v4550
  %6918 = vmatpush.bf16.msra.mxu0 %v4546
  %6919 = vmatpush.bf16.msra.mxu0 %v4542
  %6920 = vmatpush.bf16.msra.mxu0 %v4538
  %6921 = vmatmul.bf16.gmra.mxu0 %v1069
  %v6922 = vpop.f32.mrf.mxu0
  %v6923 = vadd.f32 %v6910, %v6922
  %v6924 = vpop.f32.mrf.mxu0
  %6925 = vdwg.mxu0
  %6926 = vmatpush.bf16.msra.mxu0 %v4598
  %6927 = vmatpush.bf16.msra.mxu0 %v4594
  %6928 = vmatpush.bf16.msra.mxu0 %v4590
  %6929 = vmatpush.bf16.msra.mxu0 %v4586
  %6930 = vmatpush.bf16.msra.mxu0 %v4582
  %6931 = vmatpush.bf16.msra.mxu0 %v4578
  %6932 = vmatpush.bf16.msra.mxu0 %v4574
  %6933 = vmatpush.bf16.msra.mxu0 %v4570
  %6934 = vmatmul.bf16.gmra.mxu0 %v1070
  %v6935 = vpop.f32.mrf.mxu0
  %v6936 = vadd.f32 %v6923, %v6935
  %v6937 = vpop.f32.mrf.mxu0
  %6938 = vdwg.mxu0
  %6939 = vmatpush.bf16.msra.mxu0 %v4630
  %6940 = vmatpush.bf16.msra.mxu0 %v4626
  %6941 = vmatpush.bf16.msra.mxu0 %v4622
  %6942 = vmatpush.bf16.msra.mxu0 %v4618
  %6943 = vmatpush.bf16.msra.mxu0 %v4614
  %6944 = vmatpush.bf16.msra.mxu0 %v4610
  %6945 = vmatpush.bf16.msra.mxu0 %v4606
  %6946 = vmatpush.bf16.msra.mxu0 %v4602
  %6947 = vmatmul.bf16.gmra.mxu0 %v1071
  %v6948 = vpop.f32.mrf.mxu0
  %v6949 = vadd.f32 %v6936, %v6948
  %v6950 = vpop.f32.mrf.mxu0
  %6951 = vdwg.mxu0
  %6952 = vmatpush.bf16.msra.mxu0 %v4662
  %6953 = vmatpush.bf16.msra.mxu0 %v4658
  %6954 = vmatpush.bf16.msra.mxu0 %v4654
  %6955 = vmatpush.bf16.msra.mxu0 %v4650
  %6956 = vmatpush.bf16.msra.mxu0 %v4646
  %6957 = vmatpush.bf16.msra.mxu0 %v4642
  %6958 = vmatpush.bf16.msra.mxu0 %v4638
  %6959 = vmatpush.bf16.msra.mxu0 %v4634
  %6960 = vmatmul.bf16.gmra.mxu0 %v1072
  %v6961 = vpop.f32.mrf.mxu0
  %v6962 = vadd.f32 %v6949, %v6961
  %v6963 = vpop.f32.mrf.mxu0
  %6964 = vdwg.mxu0
  %6965 = vmatpush.bf16.msra.mxu0 %v4694
  %6966 = vmatpush.bf16.msra.mxu0 %v4690
  %6967 = vmatpush.bf16.msra.mxu0 %v4686
  %6968 = vmatpush.bf16.msra.mxu0 %v4682
  %6969 = vmatpush.bf16.msra.mxu0 %v4678
  %6970 = vmatpush.bf16.msra.mxu0 %v4674
  %6971 = vmatpush.bf16.msra.mxu0 %v4670
  %6972 = vmatpush.bf16.msra.mxu0 %v4666
  %6973 = vmatmul.bf16.gmra.mxu0 %v1073
  %v6974 = vpop.f32.mrf.mxu0
  %v6975 = vadd.f32 %v6962, %v6974
  %v6976 = vpop.f32.mrf.mxu0
  %6977 = vdwg.mxu0
  %6978 = vmatpush.bf16.msra.mxu0 %v4726
  %6979 = vmatpush.bf16.msra.mxu0 %v4722
  %6980 = vmatpush.bf16.msra.mxu0 %v4718
  %6981 = vmatpush.bf16.msra.mxu0 %v4714
  %6982 = vmatpush.bf16.msra.mxu0 %v4710
  %6983 = vmatpush.bf16.msra.mxu0 %v4706
  %6984 = vmatpush.bf16.msra.mxu0 %v4702
  %6985 = vmatpush.bf16.msra.mxu0 %v4698
  %6986 = vmatmul.bf16.gmra.mxu0 %v1074
  %v6987 = vpop.f32.mrf.mxu0
  %v6988 = vadd.f32 %v6975, %v6987
  %v6989 = vpop.f32.mrf.mxu0
  %6990 = vdwg.mxu0
  %6991 = vmatpush.bf16.msra.mxu0 %v4758
  %6992 = vmatpush.bf16.msra.mxu0 %v4754
  %6993 = vmatpush.bf16.msra.mxu0 %v4750
  %6994 = vmatpush.bf16.msra.mxu0 %v4746
  %6995 = vmatpush.bf16.msra.mxu0 %v4742
  %6996 = vmatpush.bf16.msra.mxu0 %v4738
  %6997 = vmatpush.bf16.msra.mxu0 %v4734
  %6998 = vmatpush.bf16.msra.mxu0 %v4730
  %6999 = vmatmul.bf16.gmra.mxu0 %v1075
  %v7000 = vpop.f32.mrf.mxu0
  %v7001 = vadd.f32 %v6988, %v7000
  %v7002 = vpop.f32.mrf.mxu0
  %7003 = vdwg.mxu0
  %7004 = vmatpush.bf16.msra.mxu0 %v4790
  %7005 = vmatpush.bf16.msra.mxu0 %v4786
  %7006 = vmatpush.bf16.msra.mxu0 %v4782
  %7007 = vmatpush.bf16.msra.mxu0 %v4778
  %7008 = vmatpush.bf16.msra.mxu0 %v4774
  %7009 = vmatpush.bf16.msra.mxu0 %v4770
  %7010 = vmatpush.bf16.msra.mxu0 %v4766
  %7011 = vmatpush.bf16.msra.mxu0 %v4762
  %7012 = vmatmul.bf16.gmra.mxu0 %v1076
  %v7013 = vpop.f32.mrf.mxu0
  %v7014 = vadd.f32 %v7001, %v7013
  %v7015 = vpop.f32.mrf.mxu0
  %7016 = vdwg.mxu0
  %7017 = vmatpush.bf16.msra.mxu0 %v4822
  %7018 = vmatpush.bf16.msra.mxu0 %v4818
  %7019 = vmatpush.bf16.msra.mxu0 %v4814
  %7020 = vmatpush.bf16.msra.mxu0 %v4810
  %7021 = vmatpush.bf16.msra.mxu0 %v4806
  %7022 = vmatpush.bf16.msra.mxu0 %v4802
  %7023 = vmatpush.bf16.msra.mxu0 %v4798
  %7024 = vmatpush.bf16.msra.mxu0 %v4794
  %7025 = vmatmul.bf16.gmra.mxu0 %v1077
  %v7026 = vpop.f32.mrf.mxu0
  %v7027 = vadd.f32 %v7014, %v7026
  %v7028 = vpop.f32.mrf.mxu0
  %7029 = vdwg.mxu0
  %7030 = vmatpush.bf16.msra.mxu0 %v4854
  %7031 = vmatpush.bf16.msra.mxu0 %v4850
  %7032 = vmatpush.bf16.msra.mxu0 %v4846
  %7033 = vmatpush.bf16.msra.mxu0 %v4842
  %7034 = vmatpush.bf16.msra.mxu0 %v4838
  %7035 = vmatpush.bf16.msra.mxu0 %v4834
  %7036 = vmatpush.bf16.msra.mxu0 %v4830
  %7037 = vmatpush.bf16.msra.mxu0 %v4826
  %7038 = vmatmul.bf16.gmra.mxu0 %v1078
  %v7039 = vpop.f32.mrf.mxu0
  %v7040 = vadd.f32 %v7027, %v7039
  %v7041 = vpop.f32.mrf.mxu0
  %7042 = vdwg.mxu0
  %7043 = vmatpush.bf16.msra.mxu0 %v4886
  %7044 = vmatpush.bf16.msra.mxu0 %v4882
  %7045 = vmatpush.bf16.msra.mxu0 %v4878
  %7046 = vmatpush.bf16.msra.mxu0 %v4874
  %7047 = vmatpush.bf16.msra.mxu0 %v4870
  %7048 = vmatpush.bf16.msra.mxu0 %v4866
  %7049 = vmatpush.bf16.msra.mxu0 %v4862
  %7050 = vmatpush.bf16.msra.mxu0 %v4858
  %7051 = vmatmul.bf16.gmra.mxu0 %v1079
  %v7052 = vpop.f32.mrf.mxu0
  %v7053 = vadd.f32 %v7040, %v7052
  %v7054 = vpop.f32.mrf.mxu0
  %7055 = vdwg.mxu0
  %7056 = vmatpush.bf16.msra.mxu0 %v4918
  %7057 = vmatpush.bf16.msra.mxu0 %v4914
  %7058 = vmatpush.bf16.msra.mxu0 %v4910
  %7059 = vmatpush.bf16.msra.mxu0 %v4906
  %7060 = vmatpush.bf16.msra.mxu0 %v4902
  %7061 = vmatpush.bf16.msra.mxu0 %v4898
  %7062 = vmatpush.bf16.msra.mxu0 %v4894
  %7063 = vmatpush.bf16.msra.mxu0 %v4890
  %7064 = vmatmul.bf16.gmra.mxu0 %v1080
  %v7065 = vpop.f32.mrf.mxu0
  %v7066 = vadd.f32 %v7053, %v7065
  %v7067 = vpop.f32.mrf.mxu0
  %7068 = vdwg.mxu0
  %7069 = vmatpush.bf16.msra.mxu0 %v4950
  %7070 = vmatpush.bf16.msra.mxu0 %v4946
  %7071 = vmatpush.bf16.msra.mxu0 %v4942
  %7072 = vmatpush.bf16.msra.mxu0 %v4938
  %7073 = vmatpush.bf16.msra.mxu0 %v4934
  %7074 = vmatpush.bf16.msra.mxu0 %v4930
  %7075 = vmatpush.bf16.msra.mxu0 %v4926
  %7076 = vmatpush.bf16.msra.mxu0 %v4922
  %7077 = vmatmul.bf16.gmra.mxu0 %v1081
  %v7078 = vpop.f32.mrf.mxu0
  %v7079 = vadd.f32 %v7066, %v7078
  %v7080 = vpop.f32.mrf.mxu0
  %7081 = vdwg.mxu0
  %7082 = vmatpush.bf16.msra.mxu0 %v4023
  %7083 = vmatpush.bf16.msra.mxu0 %v4019
  %7084 = vmatpush.bf16.msra.mxu0 %v4015
  %7085 = vmatpush.bf16.msra.mxu0 %v4011
  %7086 = vmatpush.bf16.msra.mxu0 %v4007
  %7087 = vmatpush.bf16.msra.mxu0 %v4003
  %7088 = vmatpush.bf16.msra.mxu0 %v3999
  %7089 = vmatpush.bf16.msra.mxu0 %v3995
  %7090 = vmatmul.bf16.gmra.mxu0 %v1052
  %v7091 = vpop.f32.mrf.mxu0
  %v7092 = vadd.f32 0.0, %v7091
  %v7093 = vpop.f32.mrf.mxu0
  %7094 = vdwg.mxu0
  %7095 = vmatpush.bf16.msra.mxu0 %v4055
  %7096 = vmatpush.bf16.msra.mxu0 %v4051
  %7097 = vmatpush.bf16.msra.mxu0 %v4047
  %7098 = vmatpush.bf16.msra.mxu0 %v4043
  %7099 = vmatpush.bf16.msra.mxu0 %v4039
  %7100 = vmatpush.bf16.msra.mxu0 %v4035
  %7101 = vmatpush.bf16.msra.mxu0 %v4031
  %7102 = vmatpush.bf16.msra.mxu0 %v4027
  %7103 = vmatmul.bf16.gmra.mxu0 %v1053
  %v7104 = vpop.f32.mrf.mxu0
  %v7105 = vadd.f32 %v7092, %v7104
  %v7106 = vpop.f32.mrf.mxu0
  %7107 = vdwg.mxu0
  %7108 = vmatpush.bf16.msra.mxu0 %v4087
  %7109 = vmatpush.bf16.msra.mxu0 %v4083
  %7110 = vmatpush.bf16.msra.mxu0 %v4079
  %7111 = vmatpush.bf16.msra.mxu0 %v4075
  %7112 = vmatpush.bf16.msra.mxu0 %v4071
  %7113 = vmatpush.bf16.msra.mxu0 %v4067
  %7114 = vmatpush.bf16.msra.mxu0 %v4063
  %7115 = vmatpush.bf16.msra.mxu0 %v4059
  %7116 = vmatmul.bf16.gmra.mxu0 %v1054
  %v7117 = vpop.f32.mrf.mxu0
  %v7118 = vadd.f32 %v7105, %v7117
  %v7119 = vpop.f32.mrf.mxu0
  %7120 = vdwg.mxu0
  %7121 = vmatpush.bf16.msra.mxu0 %v4119
  %7122 = vmatpush.bf16.msra.mxu0 %v4115
  %7123 = vmatpush.bf16.msra.mxu0 %v4111
  %7124 = vmatpush.bf16.msra.mxu0 %v4107
  %7125 = vmatpush.bf16.msra.mxu0 %v4103
  %7126 = vmatpush.bf16.msra.mxu0 %v4099
  %7127 = vmatpush.bf16.msra.mxu0 %v4095
  %7128 = vmatpush.bf16.msra.mxu0 %v4091
  %7129 = vmatmul.bf16.gmra.mxu0 %v1055
  %v7130 = vpop.f32.mrf.mxu0
  %v7131 = vadd.f32 %v7118, %v7130
  %v7132 = vpop.f32.mrf.mxu0
  %7133 = vdwg.mxu0
  %7134 = vmatpush.bf16.msra.mxu0 %v4151
  %7135 = vmatpush.bf16.msra.mxu0 %v4147
  %7136 = vmatpush.bf16.msra.mxu0 %v4143
  %7137 = vmatpush.bf16.msra.mxu0 %v4139
  %7138 = vmatpush.bf16.msra.mxu0 %v4135
  %7139 = vmatpush.bf16.msra.mxu0 %v4131
  %7140 = vmatpush.bf16.msra.mxu0 %v4127
  %7141 = vmatpush.bf16.msra.mxu0 %v4123
  %7142 = vmatmul.bf16.gmra.mxu0 %v1056
  %v7143 = vpop.f32.mrf.mxu0
  %v7144 = vadd.f32 %v7131, %v7143
  %v7145 = vpop.f32.mrf.mxu0
  %7146 = vdwg.mxu0
  %7147 = vmatpush.bf16.msra.mxu0 %v4183
  %7148 = vmatpush.bf16.msra.mxu0 %v4179
  %7149 = vmatpush.bf16.msra.mxu0 %v4175
  %7150 = vmatpush.bf16.msra.mxu0 %v4171
  %7151 = vmatpush.bf16.msra.mxu0 %v4167
  %7152 = vmatpush.bf16.msra.mxu0 %v4163
  %7153 = vmatpush.bf16.msra.mxu0 %v4159
  %7154 = vmatpush.bf16.msra.mxu0 %v4155
  %7155 = vmatmul.bf16.gmra.mxu0 %v1057
  %v7156 = vpop.f32.mrf.mxu0
  %v7157 = vadd.f32 %v7144, %v7156
  %v7158 = vpop.f32.mrf.mxu0
  %7159 = vdwg.mxu0
  %7160 = vmatpush.bf16.msra.mxu0 %v4215
  %7161 = vmatpush.bf16.msra.mxu0 %v4211
  %7162 = vmatpush.bf16.msra.mxu0 %v4207
  %7163 = vmatpush.bf16.msra.mxu0 %v4203
  %7164 = vmatpush.bf16.msra.mxu0 %v4199
  %7165 = vmatpush.bf16.msra.mxu0 %v4195
  %7166 = vmatpush.bf16.msra.mxu0 %v4191
  %7167 = vmatpush.bf16.msra.mxu0 %v4187
  %7168 = vmatmul.bf16.gmra.mxu0 %v1058
  %v7169 = vpop.f32.mrf.mxu0
  %v7170 = vadd.f32 %v7157, %v7169
  %v7171 = vpop.f32.mrf.mxu0
  %7172 = vdwg.mxu0
  %7173 = vmatpush.bf16.msra.mxu0 %v4247
  %7174 = vmatpush.bf16.msra.mxu0 %v4243
  %7175 = vmatpush.bf16.msra.mxu0 %v4239
  %7176 = vmatpush.bf16.msra.mxu0 %v4235
  %7177 = vmatpush.bf16.msra.mxu0 %v4231
  %7178 = vmatpush.bf16.msra.mxu0 %v4227
  %7179 = vmatpush.bf16.msra.mxu0 %v4223
  %7180 = vmatpush.bf16.msra.mxu0 %v4219
  %7181 = vmatmul.bf16.gmra.mxu0 %v1059
  %v7182 = vpop.f32.mrf.mxu0
  %v7183 = vadd.f32 %v7170, %v7182
  %v7184 = vpop.f32.mrf.mxu0
  %7185 = vdwg.mxu0
  %7186 = vmatpush.bf16.msra.mxu0 %v4279
  %7187 = vmatpush.bf16.msra.mxu0 %v4275
  %7188 = vmatpush.bf16.msra.mxu0 %v4271
  %7189 = vmatpush.bf16.msra.mxu0 %v4267
  %7190 = vmatpush.bf16.msra.mxu0 %v4263
  %7191 = vmatpush.bf16.msra.mxu0 %v4259
  %7192 = vmatpush.bf16.msra.mxu0 %v4255
  %7193 = vmatpush.bf16.msra.mxu0 %v4251
  %7194 = vmatmul.bf16.gmra.mxu0 %v1060
  %v7195 = vpop.f32.mrf.mxu0
  %v7196 = vadd.f32 %v7183, %v7195
  %v7197 = vpop.f32.mrf.mxu0
  %7198 = vdwg.mxu0
  %7199 = vmatpush.bf16.msra.mxu0 %v4311
  %7200 = vmatpush.bf16.msra.mxu0 %v4307
  %7201 = vmatpush.bf16.msra.mxu0 %v4303
  %7202 = vmatpush.bf16.msra.mxu0 %v4299
  %7203 = vmatpush.bf16.msra.mxu0 %v4295
  %7204 = vmatpush.bf16.msra.mxu0 %v4291
  %7205 = vmatpush.bf16.msra.mxu0 %v4287
  %7206 = vmatpush.bf16.msra.mxu0 %v4283
  %7207 = vmatmul.bf16.gmra.mxu0 %v1061
  %v7208 = vpop.f32.mrf.mxu0
  %v7209 = vadd.f32 %v7196, %v7208
  %v7210 = vpop.f32.mrf.mxu0
  %7211 = vdwg.mxu0
  %7212 = vmatpush.bf16.msra.mxu0 %v4343
  %7213 = vmatpush.bf16.msra.mxu0 %v4339
  %7214 = vmatpush.bf16.msra.mxu0 %v4335
  %7215 = vmatpush.bf16.msra.mxu0 %v4331
  %7216 = vmatpush.bf16.msra.mxu0 %v4327
  %7217 = vmatpush.bf16.msra.mxu0 %v4323
  %7218 = vmatpush.bf16.msra.mxu0 %v4319
  %7219 = vmatpush.bf16.msra.mxu0 %v4315
  %7220 = vmatmul.bf16.gmra.mxu0 %v1062
  %v7221 = vpop.f32.mrf.mxu0
  %v7222 = vadd.f32 %v7209, %v7221
  %v7223 = vpop.f32.mrf.mxu0
  %7224 = vdwg.mxu0
  %7225 = vmatpush.bf16.msra.mxu0 %v4375
  %7226 = vmatpush.bf16.msra.mxu0 %v4371
  %7227 = vmatpush.bf16.msra.mxu0 %v4367
  %7228 = vmatpush.bf16.msra.mxu0 %v4363
  %7229 = vmatpush.bf16.msra.mxu0 %v4359
  %7230 = vmatpush.bf16.msra.mxu0 %v4355
  %7231 = vmatpush.bf16.msra.mxu0 %v4351
  %7232 = vmatpush.bf16.msra.mxu0 %v4347
  %7233 = vmatmul.bf16.gmra.mxu0 %v1063
  %v7234 = vpop.f32.mrf.mxu0
  %v7235 = vadd.f32 %v7222, %v7234
  %v7236 = vpop.f32.mrf.mxu0
  %7237 = vdwg.mxu0
  %7238 = vmatpush.bf16.msra.mxu0 %v4407
  %7239 = vmatpush.bf16.msra.mxu0 %v4403
  %7240 = vmatpush.bf16.msra.mxu0 %v4399
  %7241 = vmatpush.bf16.msra.mxu0 %v4395
  %7242 = vmatpush.bf16.msra.mxu0 %v4391
  %7243 = vmatpush.bf16.msra.mxu0 %v4387
  %7244 = vmatpush.bf16.msra.mxu0 %v4383
  %7245 = vmatpush.bf16.msra.mxu0 %v4379
  %7246 = vmatmul.bf16.gmra.mxu0 %v1064
  %v7247 = vpop.f32.mrf.mxu0
  %v7248 = vadd.f32 %v7235, %v7247
  %v7249 = vpop.f32.mrf.mxu0
  %7250 = vdwg.mxu0
  %7251 = vmatpush.bf16.msra.mxu0 %v4439
  %7252 = vmatpush.bf16.msra.mxu0 %v4435
  %7253 = vmatpush.bf16.msra.mxu0 %v4431
  %7254 = vmatpush.bf16.msra.mxu0 %v4427
  %7255 = vmatpush.bf16.msra.mxu0 %v4423
  %7256 = vmatpush.bf16.msra.mxu0 %v4419
  %7257 = vmatpush.bf16.msra.mxu0 %v4415
  %7258 = vmatpush.bf16.msra.mxu0 %v4411
  %7259 = vmatmul.bf16.gmra.mxu0 %v1065
  %v7260 = vpop.f32.mrf.mxu0
  %v7261 = vadd.f32 %v7248, %v7260
  %v7262 = vpop.f32.mrf.mxu0
  %7263 = vdwg.mxu0
  %7264 = vmatpush.bf16.msra.mxu0 %v4471
  %7265 = vmatpush.bf16.msra.mxu0 %v4467
  %7266 = vmatpush.bf16.msra.mxu0 %v4463
  %7267 = vmatpush.bf16.msra.mxu0 %v4459
  %7268 = vmatpush.bf16.msra.mxu0 %v4455
  %7269 = vmatpush.bf16.msra.mxu0 %v4451
  %7270 = vmatpush.bf16.msra.mxu0 %v4447
  %7271 = vmatpush.bf16.msra.mxu0 %v4443
  %7272 = vmatmul.bf16.gmra.mxu0 %v1066
  %v7273 = vpop.f32.mrf.mxu0
  %v7274 = vadd.f32 %v7261, %v7273
  %v7275 = vpop.f32.mrf.mxu0
  %7276 = vdwg.mxu0
  %7277 = vmatpush.bf16.msra.mxu0 %v4503
  %7278 = vmatpush.bf16.msra.mxu0 %v4499
  %7279 = vmatpush.bf16.msra.mxu0 %v4495
  %7280 = vmatpush.bf16.msra.mxu0 %v4491
  %7281 = vmatpush.bf16.msra.mxu0 %v4487
  %7282 = vmatpush.bf16.msra.mxu0 %v4483
  %7283 = vmatpush.bf16.msra.mxu0 %v4479
  %7284 = vmatpush.bf16.msra.mxu0 %v4475
  %7285 = vmatmul.bf16.gmra.mxu0 %v1067
  %v7286 = vpop.f32.mrf.mxu0
  %v7287 = vadd.f32 %v7274, %v7286
  %v7288 = vpop.f32.mrf.mxu0
  %7289 = vdwg.mxu0
  %7290 = vmatpush.bf16.msra.mxu0 %v4535
  %7291 = vmatpush.bf16.msra.mxu0 %v4531
  %7292 = vmatpush.bf16.msra.mxu0 %v4527
  %7293 = vmatpush.bf16.msra.mxu0 %v4523
  %7294 = vmatpush.bf16.msra.mxu0 %v4519
  %7295 = vmatpush.bf16.msra.mxu0 %v4515
  %7296 = vmatpush.bf16.msra.mxu0 %v4511
  %7297 = vmatpush.bf16.msra.mxu0 %v4507
  %7298 = vmatmul.bf16.gmra.mxu0 %v1068
  %v7299 = vpop.f32.mrf.mxu0
  %v7300 = vadd.f32 %v7287, %v7299
  %v7301 = vpop.f32.mrf.mxu0
  %7302 = vdwg.mxu0
  %7303 = vmatpush.bf16.msra.mxu0 %v4567
  %7304 = vmatpush.bf16.msra.mxu0 %v4563
  %7305 = vmatpush.bf16.msra.mxu0 %v4559
  %7306 = vmatpush.bf16.msra.mxu0 %v4555
  %7307 = vmatpush.bf16.msra.mxu0 %v4551
  %7308 = vmatpush.bf16.msra.mxu0 %v4547
  %7309 = vmatpush.bf16.msra.mxu0 %v4543
  %7310 = vmatpush.bf16.msra.mxu0 %v4539
  %7311 = vmatmul.bf16.gmra.mxu0 %v1069
  %v7312 = vpop.f32.mrf.mxu0
  %v7313 = vadd.f32 %v7300, %v7312
  %v7314 = vpop.f32.mrf.mxu0
  %7315 = vdwg.mxu0
  %7316 = vmatpush.bf16.msra.mxu0 %v4599
  %7317 = vmatpush.bf16.msra.mxu0 %v4595
  %7318 = vmatpush.bf16.msra.mxu0 %v4591
  %7319 = vmatpush.bf16.msra.mxu0 %v4587
  %7320 = vmatpush.bf16.msra.mxu0 %v4583
  %7321 = vmatpush.bf16.msra.mxu0 %v4579
  %7322 = vmatpush.bf16.msra.mxu0 %v4575
  %7323 = vmatpush.bf16.msra.mxu0 %v4571
  %7324 = vmatmul.bf16.gmra.mxu0 %v1070
  %v7325 = vpop.f32.mrf.mxu0
  %v7326 = vadd.f32 %v7313, %v7325
  %v7327 = vpop.f32.mrf.mxu0
  %7328 = vdwg.mxu0
  %7329 = vmatpush.bf16.msra.mxu0 %v4631
  %7330 = vmatpush.bf16.msra.mxu0 %v4627
  %7331 = vmatpush.bf16.msra.mxu0 %v4623
  %7332 = vmatpush.bf16.msra.mxu0 %v4619
  %7333 = vmatpush.bf16.msra.mxu0 %v4615
  %7334 = vmatpush.bf16.msra.mxu0 %v4611
  %7335 = vmatpush.bf16.msra.mxu0 %v4607
  %7336 = vmatpush.bf16.msra.mxu0 %v4603
  %7337 = vmatmul.bf16.gmra.mxu0 %v1071
  %v7338 = vpop.f32.mrf.mxu0
  %v7339 = vadd.f32 %v7326, %v7338
  %v7340 = vpop.f32.mrf.mxu0
  %7341 = vdwg.mxu0
  %7342 = vmatpush.bf16.msra.mxu0 %v4663
  %7343 = vmatpush.bf16.msra.mxu0 %v4659
  %7344 = vmatpush.bf16.msra.mxu0 %v4655
  %7345 = vmatpush.bf16.msra.mxu0 %v4651
  %7346 = vmatpush.bf16.msra.mxu0 %v4647
  %7347 = vmatpush.bf16.msra.mxu0 %v4643
  %7348 = vmatpush.bf16.msra.mxu0 %v4639
  %7349 = vmatpush.bf16.msra.mxu0 %v4635
  %7350 = vmatmul.bf16.gmra.mxu0 %v1072
  %v7351 = vpop.f32.mrf.mxu0
  %v7352 = vadd.f32 %v7339, %v7351
  %v7353 = vpop.f32.mrf.mxu0
  %7354 = vdwg.mxu0
  %7355 = vmatpush.bf16.msra.mxu0 %v4695
  %7356 = vmatpush.bf16.msra.mxu0 %v4691
  %7357 = vmatpush.bf16.msra.mxu0 %v4687
  %7358 = vmatpush.bf16.msra.mxu0 %v4683
  %7359 = vmatpush.bf16.msra.mxu0 %v4679
  %7360 = vmatpush.bf16.msra.mxu0 %v4675
  %7361 = vmatpush.bf16.msra.mxu0 %v4671
  %7362 = vmatpush.bf16.msra.mxu0 %v4667
  %7363 = vmatmul.bf16.gmra.mxu0 %v1073
  %v7364 = vpop.f32.mrf.mxu0
  %v7365 = vadd.f32 %v7352, %v7364
  %v7366 = vpop.f32.mrf.mxu0
  %7367 = vdwg.mxu0
  %7368 = vmatpush.bf16.msra.mxu0 %v4727
  %7369 = vmatpush.bf16.msra.mxu0 %v4723
  %7370 = vmatpush.bf16.msra.mxu0 %v4719
  %7371 = vmatpush.bf16.msra.mxu0 %v4715
  %7372 = vmatpush.bf16.msra.mxu0 %v4711
  %7373 = vmatpush.bf16.msra.mxu0 %v4707
  %7374 = vmatpush.bf16.msra.mxu0 %v4703
  %7375 = vmatpush.bf16.msra.mxu0 %v4699
  %7376 = vmatmul.bf16.gmra.mxu0 %v1074
  %v7377 = vpop.f32.mrf.mxu0
  %v7378 = vadd.f32 %v7365, %v7377
  %v7379 = vpop.f32.mrf.mxu0
  %7380 = vdwg.mxu0
  %7381 = vmatpush.bf16.msra.mxu0 %v4759
  %7382 = vmatpush.bf16.msra.mxu0 %v4755
  %7383 = vmatpush.bf16.msra.mxu0 %v4751
  %7384 = vmatpush.bf16.msra.mxu0 %v4747
  %7385 = vmatpush.bf16.msra.mxu0 %v4743
  %7386 = vmatpush.bf16.msra.mxu0 %v4739
  %7387 = vmatpush.bf16.msra.mxu0 %v4735
  %7388 = vmatpush.bf16.msra.mxu0 %v4731
  %7389 = vmatmul.bf16.gmra.mxu0 %v1075
  %v7390 = vpop.f32.mrf.mxu0
  %v7391 = vadd.f32 %v7378, %v7390
  %v7392 = vpop.f32.mrf.mxu0
  %7393 = vdwg.mxu0
  %7394 = vmatpush.bf16.msra.mxu0 %v4791
  %7395 = vmatpush.bf16.msra.mxu0 %v4787
  %7396 = vmatpush.bf16.msra.mxu0 %v4783
  %7397 = vmatpush.bf16.msra.mxu0 %v4779
  %7398 = vmatpush.bf16.msra.mxu0 %v4775
  %7399 = vmatpush.bf16.msra.mxu0 %v4771
  %7400 = vmatpush.bf16.msra.mxu0 %v4767
  %7401 = vmatpush.bf16.msra.mxu0 %v4763
  %7402 = vmatmul.bf16.gmra.mxu0 %v1076
  %v7403 = vpop.f32.mrf.mxu0
  %v7404 = vadd.f32 %v7391, %v7403
  %v7405 = vpop.f32.mrf.mxu0
  %7406 = vdwg.mxu0
  %7407 = vmatpush.bf16.msra.mxu0 %v4823
  %7408 = vmatpush.bf16.msra.mxu0 %v4819
  %7409 = vmatpush.bf16.msra.mxu0 %v4815
  %7410 = vmatpush.bf16.msra.mxu0 %v4811
  %7411 = vmatpush.bf16.msra.mxu0 %v4807
  %7412 = vmatpush.bf16.msra.mxu0 %v4803
  %7413 = vmatpush.bf16.msra.mxu0 %v4799
  %7414 = vmatpush.bf16.msra.mxu0 %v4795
  %7415 = vmatmul.bf16.gmra.mxu0 %v1077
  %v7416 = vpop.f32.mrf.mxu0
  %v7417 = vadd.f32 %v7404, %v7416
  %v7418 = vpop.f32.mrf.mxu0
  %7419 = vdwg.mxu0
  %7420 = vmatpush.bf16.msra.mxu0 %v4855
  %7421 = vmatpush.bf16.msra.mxu0 %v4851
  %7422 = vmatpush.bf16.msra.mxu0 %v4847
  %7423 = vmatpush.bf16.msra.mxu0 %v4843
  %7424 = vmatpush.bf16.msra.mxu0 %v4839
  %7425 = vmatpush.bf16.msra.mxu0 %v4835
  %7426 = vmatpush.bf16.msra.mxu0 %v4831
  %7427 = vmatpush.bf16.msra.mxu0 %v4827
  %7428 = vmatmul.bf16.gmra.mxu0 %v1078
  %v7429 = vpop.f32.mrf.mxu0
  %v7430 = vadd.f32 %v7417, %v7429
  %v7431 = vpop.f32.mrf.mxu0
  %7432 = vdwg.mxu0
  %7433 = vmatpush.bf16.msra.mxu0 %v4887
  %7434 = vmatpush.bf16.msra.mxu0 %v4883
  %7435 = vmatpush.bf16.msra.mxu0 %v4879
  %7436 = vmatpush.bf16.msra.mxu0 %v4875
  %7437 = vmatpush.bf16.msra.mxu0 %v4871
  %7438 = vmatpush.bf16.msra.mxu0 %v4867
  %7439 = vmatpush.bf16.msra.mxu0 %v4863
  %7440 = vmatpush.bf16.msra.mxu0 %v4859
  %7441 = vmatmul.bf16.gmra.mxu0 %v1079
  %v7442 = vpop.f32.mrf.mxu0
  %v7443 = vadd.f32 %v7430, %v7442
  %v7444 = vpop.f32.mrf.mxu0
  %7445 = vdwg.mxu0
  %7446 = vmatpush.bf16.msra.mxu0 %v4919
  %7447 = vmatpush.bf16.msra.mxu0 %v4915
  %7448 = vmatpush.bf16.msra.mxu0 %v4911
  %7449 = vmatpush.bf16.msra.mxu0 %v4907
  %7450 = vmatpush.bf16.msra.mxu0 %v4903
  %7451 = vmatpush.bf16.msra.mxu0 %v4899
  %7452 = vmatpush.bf16.msra.mxu0 %v4895
  %7453 = vmatpush.bf16.msra.mxu0 %v4891
  %7454 = vmatmul.bf16.gmra.mxu0 %v1080
  %v7455 = vpop.f32.mrf.mxu0
  %v7456 = vadd.f32 %v7443, %v7455
  %v7457 = vpop.f32.mrf.mxu0
  %7458 = vdwg.mxu0
  %7459 = vmatpush.bf16.msra.mxu0 %v4951
  %7460 = vmatpush.bf16.msra.mxu0 %v4947
  %7461 = vmatpush.bf16.msra.mxu0 %v4943
  %7462 = vmatpush.bf16.msra.mxu0 %v4939
  %7463 = vmatpush.bf16.msra.mxu0 %v4935
  %7464 = vmatpush.bf16.msra.mxu0 %v4931
  %7465 = vmatpush.bf16.msra.mxu0 %v4927
  %7466 = vmatpush.bf16.msra.mxu0 %v4923
  %7467 = vmatmul.bf16.gmra.mxu0 %v1081
  %v7468 = vpop.f32.mrf.mxu0
  %v7469 = vadd.f32 %v7456, %v7468
  %v7470 = vpop.f32.mrf.mxu0
  %7471 = vdwg.mxu0
  %s7472 = scalar_lea.vmem %s0, 120
  %v7473 = vld [vmem:[%s7472] sm:$0xff]
  %v7474 = vld [vmem:[%s7472 + $0x8] sm:$0xff]
  %v7475 = vld [vmem:[%s7472 + $0x10] sm:$0xff]
  %v7476 = vld [vmem:[%s7472 + $0x18] sm:$0xff]
  %v7477 = vld [vmem:[%s7472 + $0x20] sm:$0xff]
  %v7478 = vld [vmem:[%s7472 + $0x28] sm:$0xff]
  %v7479 = vld [vmem:[%s7472 + $0x30] sm:$0xff]
  %v7480 = vld [vmem:[%s7472 + $0x38] sm:$0xff]
  %v7481 = vld [vmem:[%s7472 + $0x40] sm:$0xff]
  %v7482 = vld [vmem:[%s7472 + $0x48] sm:$0xff]
  %v7483 = vld [vmem:[%s7472 + $0x50] sm:$0xff]
  %v7484 = vld [vmem:[%s7472 + $0x58] sm:$0xff]
  %v7485 = vld [vmem:[%s7472 + $0x60] sm:$0xff]
  %v7486 = vld [vmem:[%s7472 + $0x68] sm:$0xff]
  %v7487 = vld [vmem:[%s7472 + $0x70] sm:$0xff]
  %v7503 = vunpack.c.l.b16 %v7473
  %v7504 = vunpack.c.h.b16 %v7473
  %v7505 = vunpack.c.l.b16 %v7474
  %v7506 = vunpack.c.h.b16 %v7474
  %v7507 = vunpack.c.l.b16 %v7475
  %v7508 = vunpack.c.h.b16 %v7475
  %v7509 = vunpack.c.l.b16 %v7476
  %v7510 = vunpack.c.h.b16 %v7476
  %v7511 = vunpack.c.l.b16 %v7477
  %v7512 = vunpack.c.h.b16 %v7477
  %v7513 = vunpack.c.l.b16 %v7478
  %v7514 = vunpack.c.h.b16 %v7478
  %v7515 = vunpack.c.l.b16 %v7479
  %v7516 = vunpack.c.h.b16 %v7479
  %v7517 = vunpack.c.l.b16 %v7480
  %v7518 = vunpack.c.h.b16 %v7480
  %v7519 = vunpack.c.l.b16 %v7481
  %v7520 = vunpack.c.h.b16 %v7481
  %v7521 = vunpack.c.l.b16 %v7482
  %v7522 = vunpack.c.h.b16 %v7482
  %v7523 = vunpack.c.l.b16 %v7483
  %v7524 = vunpack.c.h.b16 %v7483
  %v7525 = vunpack.c.l.b16 %v7484
  %v7526 = vunpack.c.h.b16 %v7484
  %v7527 = vunpack.c.l.b16 %v7485
  %v7528 = vunpack.c.h.b16 %v7485
  %v7529 = vunpack.c.l.b16 %v7486
  %v7530 = vunpack.c.h.b16 %v7486
  %v7531 = vunpack.c.l.b16 %v7487
  %v7532 = vunpack.c.h.b16 %v7487
  %v7533 = vpack.c.b16 %v7503, %v7503
  %v7534 = vpack.c.b16 %v7504, %v7504
  %v7535 = vpack.c.b16 %v7505, %v7505
  %v7536 = vpack.c.b16 %v7506, %v7506
  %v7537 = vpack.c.b16 %v7507, %v7507
  %v7538 = vpack.c.b16 %v7508, %v7508
  %v7539 = vpack.c.b16 %v7509, %v7509
  %v7540 = vpack.c.b16 %v7510, %v7510
  %v7541 = vpack.c.b16 %v7511, %v7511
  %v7542 = vpack.c.b16 %v7512, %v7512
  %v7543 = vpack.c.b16 %v7513, %v7513
  %v7544 = vpack.c.b16 %v7514, %v7514
  %v7545 = vpack.c.b16 %v7515, %v7515
  %v7546 = vpack.c.b16 %v7516, %v7516
  %v7547 = vpack.c.b16 %v7517, %v7517
  %v7548 = vpack.c.b16 %v7518, %v7518
  %v7549 = vpack.c.b16 %v7519, %v7519
  %v7550 = vpack.c.b16 %v7520, %v7520
  %v7551 = vpack.c.b16 %v7521, %v7521
  %v7552 = vpack.c.b16 %v7522, %v7522
  %v7553 = vpack.c.b16 %v7523, %v7523
  %v7554 = vpack.c.b16 %v7524, %v7524
  %v7555 = vpack.c.b16 %v7525, %v7525
  %v7556 = vpack.c.b16 %v7526, %v7526
  %v7557 = vpack.c.b16 %v7527, %v7527
  %v7558 = vpack.c.b16 %v7528, %v7528
  %v7559 = vpack.c.b16 %v7529, %v7529
  %v7560 = vpack.c.b16 %v7530, %v7530
  %v7561 = vpack.c.b16 %v7531, %v7531
  %v7562 = vpack.c.b16 %v7532, %v7532
  %7593 = vmatpush.bf16.msra.mxu0 %v4020
  %7594 = vmatpush.bf16.msra.mxu0 %v4016
  %7595 = vmatpush.bf16.msra.mxu0 %v4012
  %7596 = vmatpush.bf16.msra.mxu0 %v4008
  %7597 = vmatpush.bf16.msra.mxu0 %v4004
  %7598 = vmatpush.bf16.msra.mxu0 %v4000
  %7599 = vmatpush.bf16.msra.mxu0 %v3996
  %7600 = vmatpush.bf16.msra.mxu0 %v3992
  %7601 = vmatmul.bf16.gmra.mxu0 %v7533
  %v7602 = vpop.f32.mrf.mxu0
  %v7603 = vadd.f32 0.0, %v7602
  %v7604 = vpop.f32.mrf.mxu0
  %7605 = vdwg.mxu0
  %7606 = vmatpush.bf16.msra.mxu0 %v4052
  %7607 = vmatpush.bf16.msra.mxu0 %v4048
  %7608 = vmatpush.bf16.msra.mxu0 %v4044
  %7609 = vmatpush.bf16.msra.mxu0 %v4040
  %7610 = vmatpush.bf16.msra.mxu0 %v4036
  %7611 = vmatpush.bf16.msra.mxu0 %v4032
  %7612 = vmatpush.bf16.msra.mxu0 %v4028
  %7613 = vmatpush.bf16.msra.mxu0 %v4024
  %7614 = vmatmul.bf16.gmra.mxu0 %v7534
  %v7615 = vpop.f32.mrf.mxu0
  %v7616 = vadd.f32 %v7603, %v7615
  %v7617 = vpop.f32.mrf.mxu0
  %7618 = vdwg.mxu0
  %7619 = vmatpush.bf16.msra.mxu0 %v4084
  %7620 = vmatpush.bf16.msra.mxu0 %v4080
  %7621 = vmatpush.bf16.msra.mxu0 %v4076
  %7622 = vmatpush.bf16.msra.mxu0 %v4072
  %7623 = vmatpush.bf16.msra.mxu0 %v4068
  %7624 = vmatpush.bf16.msra.mxu0 %v4064
  %7625 = vmatpush.bf16.msra.mxu0 %v4060
  %7626 = vmatpush.bf16.msra.mxu0 %v4056
  %7627 = vmatmul.bf16.gmra.mxu0 %v7535
  %v7628 = vpop.f32.mrf.mxu0
  %v7629 = vadd.f32 %v7616, %v7628
  %v7630 = vpop.f32.mrf.mxu0
  %7631 = vdwg.mxu0
  %7632 = vmatpush.bf16.msra.mxu0 %v4116
  %7633 = vmatpush.bf16.msra.mxu0 %v4112
  %7634 = vmatpush.bf16.msra.mxu0 %v4108
  %7635 = vmatpush.bf16.msra.mxu0 %v4104
  %7636 = vmatpush.bf16.msra.mxu0 %v4100
  %7637 = vmatpush.bf16.msra.mxu0 %v4096
  %7638 = vmatpush.bf16.msra.mxu0 %v4092
  %7639 = vmatpush.bf16.msra.mxu0 %v4088
  %7640 = vmatmul.bf16.gmra.mxu0 %v7536
  %v7641 = vpop.f32.mrf.mxu0
  %v7642 = vadd.f32 %v7629, %v7641
  %v7643 = vpop.f32.mrf.mxu0
  %7644 = vdwg.mxu0
  %7645 = vmatpush.bf16.msra.mxu0 %v4148
  %7646 = vmatpush.bf16.msra.mxu0 %v4144
  %7647 = vmatpush.bf16.msra.mxu0 %v4140
  %7648 = vmatpush.bf16.msra.mxu0 %v4136
  %7649 = vmatpush.bf16.msra.mxu0 %v4132
  %7650 = vmatpush.bf16.msra.mxu0 %v4128
  %7651 = vmatpush.bf16.msra.mxu0 %v4124
  %7652 = vmatpush.bf16.msra.mxu0 %v4120
  %7653 = vmatmul.bf16.gmra.mxu0 %v7537
  %v7654 = vpop.f32.mrf.mxu0
  %v7655 = vadd.f32 %v7642, %v7654
  %v7656 = vpop.f32.mrf.mxu0
  %7657 = vdwg.mxu0
  %7658 = vmatpush.bf16.msra.mxu0 %v4180
  %7659 = vmatpush.bf16.msra.mxu0 %v4176
  %7660 = vmatpush.bf16.msra.mxu0 %v4172
  %7661 = vmatpush.bf16.msra.mxu0 %v4168
  %7662 = vmatpush.bf16.msra.mxu0 %v4164
  %7663 = vmatpush.bf16.msra.mxu0 %v4160
  %7664 = vmatpush.bf16.msra.mxu0 %v4156
  %7665 = vmatpush.bf16.msra.mxu0 %v4152
  %7666 = vmatmul.bf16.gmra.mxu0 %v7538
  %v7667 = vpop.f32.mrf.mxu0
  %v7668 = vadd.f32 %v7655, %v7667
  %v7669 = vpop.f32.mrf.mxu0
  %7670 = vdwg.mxu0
  %7671 = vmatpush.bf16.msra.mxu0 %v4212
  %7672 = vmatpush.bf16.msra.mxu0 %v4208
  %7673 = vmatpush.bf16.msra.mxu0 %v4204
  %7674 = vmatpush.bf16.msra.mxu0 %v4200
  %7675 = vmatpush.bf16.msra.mxu0 %v4196
  %7676 = vmatpush.bf16.msra.mxu0 %v4192
  %7677 = vmatpush.bf16.msra.mxu0 %v4188
  %7678 = vmatpush.bf16.msra.mxu0 %v4184
  %7679 = vmatmul.bf16.gmra.mxu0 %v7539
  %v7680 = vpop.f32.mrf.mxu0
  %v7681 = vadd.f32 %v7668, %v7680
  %v7682 = vpop.f32.mrf.mxu0
  %7683 = vdwg.mxu0
  %7684 = vmatpush.bf16.msra.mxu0 %v4244
  %7685 = vmatpush.bf16.msra.mxu0 %v4240
  %7686 = vmatpush.bf16.msra.mxu0 %v4236
  %7687 = vmatpush.bf16.msra.mxu0 %v4232
  %7688 = vmatpush.bf16.msra.mxu0 %v4228
  %7689 = vmatpush.bf16.msra.mxu0 %v4224
  %7690 = vmatpush.bf16.msra.mxu0 %v4220
  %7691 = vmatpush.bf16.msra.mxu0 %v4216
  %7692 = vmatmul.bf16.gmra.mxu0 %v7540
  %v7693 = vpop.f32.mrf.mxu0
  %v7694 = vadd.f32 %v7681, %v7693
  %v7695 = vpop.f32.mrf.mxu0
  %7696 = vdwg.mxu0
  %7697 = vmatpush.bf16.msra.mxu0 %v4276
  %7698 = vmatpush.bf16.msra.mxu0 %v4272
  %7699 = vmatpush.bf16.msra.mxu0 %v4268
  %7700 = vmatpush.bf16.msra.mxu0 %v4264
  %7701 = vmatpush.bf16.msra.mxu0 %v4260
  %7702 = vmatpush.bf16.msra.mxu0 %v4256
  %7703 = vmatpush.bf16.msra.mxu0 %v4252
  %7704 = vmatpush.bf16.msra.mxu0 %v4248
  %7705 = vmatmul.bf16.gmra.mxu0 %v7541
  %v7706 = vpop.f32.mrf.mxu0
  %v7707 = vadd.f32 %v7694, %v7706
  %v7708 = vpop.f32.mrf.mxu0
  %7709 = vdwg.mxu0
  %7710 = vmatpush.bf16.msra.mxu0 %v4308
  %7711 = vmatpush.bf16.msra.mxu0 %v4304
  %7712 = vmatpush.bf16.msra.mxu0 %v4300
  %7713 = vmatpush.bf16.msra.mxu0 %v4296
  %7714 = vmatpush.bf16.msra.mxu0 %v4292
  %7715 = vmatpush.bf16.msra.mxu0 %v4288
  %7716 = vmatpush.bf16.msra.mxu0 %v4284
  %7717 = vmatpush.bf16.msra.mxu0 %v4280
  %7718 = vmatmul.bf16.gmra.mxu0 %v7542
  %v7719 = vpop.f32.mrf.mxu0
  %v7720 = vadd.f32 %v7707, %v7719
  %v7721 = vpop.f32.mrf.mxu0
  %7722 = vdwg.mxu0
  %7723 = vmatpush.bf16.msra.mxu0 %v4340
  %7724 = vmatpush.bf16.msra.mxu0 %v4336
  %7725 = vmatpush.bf16.msra.mxu0 %v4332
  %7726 = vmatpush.bf16.msra.mxu0 %v4328
  %7727 = vmatpush.bf16.msra.mxu0 %v4324
  %7728 = vmatpush.bf16.msra.mxu0 %v4320
  %7729 = vmatpush.bf16.msra.mxu0 %v4316
  %7730 = vmatpush.bf16.msra.mxu0 %v4312
  %7731 = vmatmul.bf16.gmra.mxu0 %v7543
  %v7732 = vpop.f32.mrf.mxu0
  %v7733 = vadd.f32 %v7720, %v7732
  %v7734 = vpop.f32.mrf.mxu0
  %7735 = vdwg.mxu0
  %7736 = vmatpush.bf16.msra.mxu0 %v4372
  %7737 = vmatpush.bf16.msra.mxu0 %v4368
  %7738 = vmatpush.bf16.msra.mxu0 %v4364
  %7739 = vmatpush.bf16.msra.mxu0 %v4360
  %7740 = vmatpush.bf16.msra.mxu0 %v4356
  %7741 = vmatpush.bf16.msra.mxu0 %v4352
  %7742 = vmatpush.bf16.msra.mxu0 %v4348
  %7743 = vmatpush.bf16.msra.mxu0 %v4344
  %7744 = vmatmul.bf16.gmra.mxu0 %v7544
  %v7745 = vpop.f32.mrf.mxu0
  %v7746 = vadd.f32 %v7733, %v7745
  %v7747 = vpop.f32.mrf.mxu0
  %7748 = vdwg.mxu0
  %7749 = vmatpush.bf16.msra.mxu0 %v4404
  %7750 = vmatpush.bf16.msra.mxu0 %v4400
  %7751 = vmatpush.bf16.msra.mxu0 %v4396
  %7752 = vmatpush.bf16.msra.mxu0 %v4392
  %7753 = vmatpush.bf16.msra.mxu0 %v4388
  %7754 = vmatpush.bf16.msra.mxu0 %v4384
  %7755 = vmatpush.bf16.msra.mxu0 %v4380
  %7756 = vmatpush.bf16.msra.mxu0 %v4376
  %7757 = vmatmul.bf16.gmra.mxu0 %v7545
  %v7758 = vpop.f32.mrf.mxu0
  %v7759 = vadd.f32 %v7746, %v7758
  %v7760 = vpop.f32.mrf.mxu0
  %7761 = vdwg.mxu0
  %7762 = vmatpush.bf16.msra.mxu0 %v4436
  %7763 = vmatpush.bf16.msra.mxu0 %v4432
  %7764 = vmatpush.bf16.msra.mxu0 %v4428
  %7765 = vmatpush.bf16.msra.mxu0 %v4424
  %7766 = vmatpush.bf16.msra.mxu0 %v4420
  %7767 = vmatpush.bf16.msra.mxu0 %v4416
  %7768 = vmatpush.bf16.msra.mxu0 %v4412
  %7769 = vmatpush.bf16.msra.mxu0 %v4408
  %7770 = vmatmul.bf16.gmra.mxu0 %v7546
  %v7771 = vpop.f32.mrf.mxu0
  %v7772 = vadd.f32 %v7759, %v7771
  %v7773 = vpop.f32.mrf.mxu0
  %7774 = vdwg.mxu0
  %7775 = vmatpush.bf16.msra.mxu0 %v4468
  %7776 = vmatpush.bf16.msra.mxu0 %v4464
  %7777 = vmatpush.bf16.msra.mxu0 %v4460
  %7778 = vmatpush.bf16.msra.mxu0 %v4456
  %7779 = vmatpush.bf16.msra.mxu0 %v4452
  %7780 = vmatpush.bf16.msra.mxu0 %v4448
  %7781 = vmatpush.bf16.msra.mxu0 %v4444
  %7782 = vmatpush.bf16.msra.mxu0 %v4440
  %7783 = vmatmul.bf16.gmra.mxu0 %v7547
  %v7784 = vpop.f32.mrf.mxu0
  %v7785 = vadd.f32 %v7772, %v7784
  %v7786 = vpop.f32.mrf.mxu0
  %7787 = vdwg.mxu0
  %7788 = vmatpush.bf16.msra.mxu0 %v4500
  %7789 = vmatpush.bf16.msra.mxu0 %v4496
  %7790 = vmatpush.bf16.msra.mxu0 %v4492
  %7791 = vmatpush.bf16.msra.mxu0 %v4488
  %7792 = vmatpush.bf16.msra.mxu0 %v4484
  %7793 = vmatpush.bf16.msra.mxu0 %v4480
  %7794 = vmatpush.bf16.msra.mxu0 %v4476
  %7795 = vmatpush.bf16.msra.mxu0 %v4472
  %7796 = vmatmul.bf16.gmra.mxu0 %v7548
  %v7797 = vpop.f32.mrf.mxu0
  %v7798 = vadd.f32 %v7785, %v7797
  %v7799 = vpop.f32.mrf.mxu0
  %7800 = vdwg.mxu0
  %7801 = vmatpush.bf16.msra.mxu0 %v4532
  %7802 = vmatpush.bf16.msra.mxu0 %v4528
  %7803 = vmatpush.bf16.msra.mxu0 %v4524
  %7804 = vmatpush.bf16.msra.mxu0 %v4520
  %7805 = vmatpush.bf16.msra.mxu0 %v4516
  %7806 = vmatpush.bf16.msra.mxu0 %v4512
  %7807 = vmatpush.bf16.msra.mxu0 %v4508
  %7808 = vmatpush.bf16.msra.mxu0 %v4504
  %7809 = vmatmul.bf16.gmra.mxu0 %v7549
  %v7810 = vpop.f32.mrf.mxu0
  %v7811 = vadd.f32 %v7798, %v7810
  %v7812 = vpop.f32.mrf.mxu0
  %7813 = vdwg.mxu0
  %7814 = vmatpush.bf16.msra.mxu0 %v4564
  %7815 = vmatpush.bf16.msra.mxu0 %v4560
  %7816 = vmatpush.bf16.msra.mxu0 %v4556
  %7817 = vmatpush.bf16.msra.mxu0 %v4552
  %7818 = vmatpush.bf16.msra.mxu0 %v4548
  %7819 = vmatpush.bf16.msra.mxu0 %v4544
  %7820 = vmatpush.bf16.msra.mxu0 %v4540
  %7821 = vmatpush.bf16.msra.mxu0 %v4536
  %7822 = vmatmul.bf16.gmra.mxu0 %v7550
  %v7823 = vpop.f32.mrf.mxu0
  %v7824 = vadd.f32 %v7811, %v7823
  %v7825 = vpop.f32.mrf.mxu0
  %7826 = vdwg.mxu0
  %7827 = vmatpush.bf16.msra.mxu0 %v4596
  %7828 = vmatpush.bf16.msra.mxu0 %v4592
  %7829 = vmatpush.bf16.msra.mxu0 %v4588
  %7830 = vmatpush.bf16.msra.mxu0 %v4584
  %7831 = vmatpush.bf16.msra.mxu0 %v4580
  %7832 = vmatpush.bf16.msra.mxu0 %v4576
  %7833 = vmatpush.bf16.msra.mxu0 %v4572
  %7834 = vmatpush.bf16.msra.mxu0 %v4568
  %7835 = vmatmul.bf16.gmra.mxu0 %v7551
  %v7836 = vpop.f32.mrf.mxu0
  %v7837 = vadd.f32 %v7824, %v7836
  %v7838 = vpop.f32.mrf.mxu0
  %7839 = vdwg.mxu0
  %7840 = vmatpush.bf16.msra.mxu0 %v4628
  %7841 = vmatpush.bf16.msra.mxu0 %v4624
  %7842 = vmatpush.bf16.msra.mxu0 %v4620
  %7843 = vmatpush.bf16.msra.mxu0 %v4616
  %7844 = vmatpush.bf16.msra.mxu0 %v4612
  %7845 = vmatpush.bf16.msra.mxu0 %v4608
  %7846 = vmatpush.bf16.msra.mxu0 %v4604
  %7847 = vmatpush.bf16.msra.mxu0 %v4600
  %7848 = vmatmul.bf16.gmra.mxu0 %v7552
  %v7849 = vpop.f32.mrf.mxu0
  %v7850 = vadd.f32 %v7837, %v7849
  %v7851 = vpop.f32.mrf.mxu0
  %7852 = vdwg.mxu0
  %7853 = vmatpush.bf16.msra.mxu0 %v4660
  %7854 = vmatpush.bf16.msra.mxu0 %v4656
  %7855 = vmatpush.bf16.msra.mxu0 %v4652
  %7856 = vmatpush.bf16.msra.mxu0 %v4648
  %7857 = vmatpush.bf16.msra.mxu0 %v4644
  %7858 = vmatpush.bf16.msra.mxu0 %v4640
  %7859 = vmatpush.bf16.msra.mxu0 %v4636
  %7860 = vmatpush.bf16.msra.mxu0 %v4632
  %7861 = vmatmul.bf16.gmra.mxu0 %v7553
  %v7862 = vpop.f32.mrf.mxu0
  %v7863 = vadd.f32 %v7850, %v7862
  %v7864 = vpop.f32.mrf.mxu0
  %7865 = vdwg.mxu0
  %7866 = vmatpush.bf16.msra.mxu0 %v4692
  %7867 = vmatpush.bf16.msra.mxu0 %v4688
  %7868 = vmatpush.bf16.msra.mxu0 %v4684
  %7869 = vmatpush.bf16.msra.mxu0 %v4680
  %7870 = vmatpush.bf16.msra.mxu0 %v4676
  %7871 = vmatpush.bf16.msra.mxu0 %v4672
  %7872 = vmatpush.bf16.msra.mxu0 %v4668
  %7873 = vmatpush.bf16.msra.mxu0 %v4664
  %7874 = vmatmul.bf16.gmra.mxu0 %v7554
  %v7875 = vpop.f32.mrf.mxu0
  %v7876 = vadd.f32 %v7863, %v7875
  %v7877 = vpop.f32.mrf.mxu0
  %7878 = vdwg.mxu0
  %7879 = vmatpush.bf16.msra.mxu0 %v4724
  %7880 = vmatpush.bf16.msra.mxu0 %v4720
  %7881 = vmatpush.bf16.msra.mxu0 %v4716
  %7882 = vmatpush.bf16.msra.mxu0 %v4712
  %7883 = vmatpush.bf16.msra.mxu0 %v4708
  %7884 = vmatpush.bf16.msra.mxu0 %v4704
  %7885 = vmatpush.bf16.msra.mxu0 %v4700
  %7886 = vmatpush.bf16.msra.mxu0 %v4696
  %7887 = vmatmul.bf16.gmra.mxu0 %v7555
  %v7888 = vpop.f32.mrf.mxu0
  %v7889 = vadd.f32 %v7876, %v7888
  %v7890 = vpop.f32.mrf.mxu0
  %7891 = vdwg.mxu0
  %7892 = vmatpush.bf16.msra.mxu0 %v4756
  %7893 = vmatpush.bf16.msra.mxu0 %v4752
  %7894 = vmatpush.bf16.msra.mxu0 %v4748
  %7895 = vmatpush.bf16.msra.mxu0 %v4744
  %7896 = vmatpush.bf16.msra.mxu0 %v4740
  %7897 = vmatpush.bf16.msra.mxu0 %v4736
  %7898 = vmatpush.bf16.msra.mxu0 %v4732
  %7899 = vmatpush.bf16.msra.mxu0 %v4728
  %7900 = vmatmul.bf16.gmra.mxu0 %v7556
  %v7901 = vpop.f32.mrf.mxu0
  %v7902 = vadd.f32 %v7889, %v7901
  %v7903 = vpop.f32.mrf.mxu0
  %7904 = vdwg.mxu0
  %7905 = vmatpush.bf16.msra.mxu0 %v4788
  %7906 = vmatpush.bf16.msra.mxu0 %v4784
  %7907 = vmatpush.bf16.msra.mxu0 %v4780
  %7908 = vmatpush.bf16.msra.mxu0 %v4776
  %7909 = vmatpush.bf16.msra.mxu0 %v4772
  %7910 = vmatpush.bf16.msra.mxu0 %v4768
  %7911 = vmatpush.bf16.msra.mxu0 %v4764
  %7912 = vmatpush.bf16.msra.mxu0 %v4760
  %7913 = vmatmul.bf16.gmra.mxu0 %v7557
  %v7914 = vpop.f32.mrf.mxu0
  %v7915 = vadd.f32 %v7902, %v7914
  %v7916 = vpop.f32.mrf.mxu0
  %7917 = vdwg.mxu0
  %7918 = vmatpush.bf16.msra.mxu0 %v4820
  %7919 = vmatpush.bf16.msra.mxu0 %v4816
  %7920 = vmatpush.bf16.msra.mxu0 %v4812
  %7921 = vmatpush.bf16.msra.mxu0 %v4808
  %7922 = vmatpush.bf16.msra.mxu0 %v4804
  %7923 = vmatpush.bf16.msra.mxu0 %v4800
  %7924 = vmatpush.bf16.msra.mxu0 %v4796
  %7925 = vmatpush.bf16.msra.mxu0 %v4792
  %7926 = vmatmul.bf16.gmra.mxu0 %v7558
  %v7927 = vpop.f32.mrf.mxu0
  %v7928 = vadd.f32 %v7915, %v7927
  %v7929 = vpop.f32.mrf.mxu0
  %7930 = vdwg.mxu0
  %7931 = vmatpush.bf16.msra.mxu0 %v4852
  %7932 = vmatpush.bf16.msra.mxu0 %v4848
  %7933 = vmatpush.bf16.msra.mxu0 %v4844
  %7934 = vmatpush.bf16.msra.mxu0 %v4840
  %7935 = vmatpush.bf16.msra.mxu0 %v4836
  %7936 = vmatpush.bf16.msra.mxu0 %v4832
  %7937 = vmatpush.bf16.msra.mxu0 %v4828
  %7938 = vmatpush.bf16.msra.mxu0 %v4824
  %7939 = vmatmul.bf16.gmra.mxu0 %v7559
  %v7940 = vpop.f32.mrf.mxu0
  %v7941 = vadd.f32 %v7928, %v7940
  %v7942 = vpop.f32.mrf.mxu0
  %7943 = vdwg.mxu0
  %7944 = vmatpush.bf16.msra.mxu0 %v4884
  %7945 = vmatpush.bf16.msra.mxu0 %v4880
  %7946 = vmatpush.bf16.msra.mxu0 %v4876
  %7947 = vmatpush.bf16.msra.mxu0 %v4872
  %7948 = vmatpush.bf16.msra.mxu0 %v4868
  %7949 = vmatpush.bf16.msra.mxu0 %v4864
  %7950 = vmatpush.bf16.msra.mxu0 %v4860
  %7951 = vmatpush.bf16.msra.mxu0 %v4856
  %7952 = vmatmul.bf16.gmra.mxu0 %v7560
  %v7953 = vpop.f32.mrf.mxu0
  %v7954 = vadd.f32 %v7941, %v7953
  %v7955 = vpop.f32.mrf.mxu0
  %7956 = vdwg.mxu0
  %7957 = vmatpush.bf16.msra.mxu0 %v4916
  %7958 = vmatpush.bf16.msra.mxu0 %v4912
  %7959 = vmatpush.bf16.msra.mxu0 %v4908
  %7960 = vmatpush.bf16.msra.mxu0 %v4904
  %7961 = vmatpush.bf16.msra.mxu0 %v4900
  %7962 = vmatpush.bf16.msra.mxu0 %v4896
  %7963 = vmatpush.bf16.msra.mxu0 %v4892
  %7964 = vmatpush.bf16.msra.mxu0 %v4888
  %7965 = vmatmul.bf16.gmra.mxu0 %v7561
  %v7966 = vpop.f32.mrf.mxu0
  %v7967 = vadd.f32 %v7954, %v7966
  %v7968 = vpop.f32.mrf.mxu0
  %7969 = vdwg.mxu0
  %7970 = vmatpush.bf16.msra.mxu0 %v4948
  %7971 = vmatpush.bf16.msra.mxu0 %v4944
  %7972 = vmatpush.bf16.msra.mxu0 %v4940
  %7973 = vmatpush.bf16.msra.mxu0 %v4936
  %7974 = vmatpush.bf16.msra.mxu0 %v4932
  %7975 = vmatpush.bf16.msra.mxu0 %v4928
  %7976 = vmatpush.bf16.msra.mxu0 %v4924
  %7977 = vmatpush.bf16.msra.mxu0 %v4920
  %7978 = vmatmul.bf16.gmra.mxu0 %v7562
  %v7979 = vpop.f32.mrf.mxu0
  %v7980 = vadd.f32 %v7967, %v7979
  %v7981 = vpop.f32.mrf.mxu0
  %7982 = vdwg.mxu0
  %7983 = vmatpush.bf16.msra.mxu0 %v4021
  %7984 = vmatpush.bf16.msra.mxu0 %v4017
  %7985 = vmatpush.bf16.msra.mxu0 %v4013
  %7986 = vmatpush.bf16.msra.mxu0 %v4009
  %7987 = vmatpush.bf16.msra.mxu0 %v4005
  %7988 = vmatpush.bf16.msra.mxu0 %v4001
  %7989 = vmatpush.bf16.msra.mxu0 %v3997
  %7990 = vmatpush.bf16.msra.mxu0 %v3993
  %7991 = vmatmul.bf16.gmra.mxu0 %v7533
  %v7992 = vpop.f32.mrf.mxu0
  %v7993 = vadd.f32 0.0, %v7992
  %v7994 = vpop.f32.mrf.mxu0
  %7995 = vdwg.mxu0
  %7996 = vmatpush.bf16.msra.mxu0 %v4053
  %7997 = vmatpush.bf16.msra.mxu0 %v4049
  %7998 = vmatpush.bf16.msra.mxu0 %v4045
  %7999 = vmatpush.bf16.msra.mxu0 %v4041
  %8000 = vmatpush.bf16.msra.mxu0 %v4037
  %8001 = vmatpush.bf16.msra.mxu0 %v4033
  %8002 = vmatpush.bf16.msra.mxu0 %v4029
  %8003 = vmatpush.bf16.msra.mxu0 %v4025
  %8004 = vmatmul.bf16.gmra.mxu0 %v7534
  %v8005 = vpop.f32.mrf.mxu0
  %v8006 = vadd.f32 %v7993, %v8005
  %v8007 = vpop.f32.mrf.mxu0
  %8008 = vdwg.mxu0
  %8009 = vmatpush.bf16.msra.mxu0 %v4085
  %8010 = vmatpush.bf16.msra.mxu0 %v4081
  %8011 = vmatpush.bf16.msra.mxu0 %v4077
  %8012 = vmatpush.bf16.msra.mxu0 %v4073
  %8013 = vmatpush.bf16.msra.mxu0 %v4069
  %8014 = vmatpush.bf16.msra.mxu0 %v4065
  %8015 = vmatpush.bf16.msra.mxu0 %v4061
  %8016 = vmatpush.bf16.msra.mxu0 %v4057
  %8017 = vmatmul.bf16.gmra.mxu0 %v7535
  %v8018 = vpop.f32.mrf.mxu0
  %v8019 = vadd.f32 %v8006, %v8018
  %v8020 = vpop.f32.mrf.mxu0
  %8021 = vdwg.mxu0
  %8022 = vmatpush.bf16.msra.mxu0 %v4117
  %8023 = vmatpush.bf16.msra.mxu0 %v4113
  %8024 = vmatpush.bf16.msra.mxu0 %v4109
  %8025 = vmatpush.bf16.msra.mxu0 %v4105
  %8026 = vmatpush.bf16.msra.mxu0 %v4101
  %8027 = vmatpush.bf16.msra.mxu0 %v4097
  %8028 = vmatpush.bf16.msra.mxu0 %v4093
  %8029 = vmatpush.bf16.msra.mxu0 %v4089
  %8030 = vmatmul.bf16.gmra.mxu0 %v7536
  %v8031 = vpop.f32.mrf.mxu0
  %v8032 = vadd.f32 %v8019, %v8031
  %v8033 = vpop.f32.mrf.mxu0
  %8034 = vdwg.mxu0
  %8035 = vmatpush.bf16.msra.mxu0 %v4149
  %8036 = vmatpush.bf16.msra.mxu0 %v4145
  %8037 = vmatpush.bf16.msra.mxu0 %v4141
  %8038 = vmatpush.bf16.msra.mxu0 %v4137
  %8039 = vmatpush.bf16.msra.mxu0 %v4133
  %8040 = vmatpush.bf16.msra.mxu0 %v4129
  %8041 = vmatpush.bf16.msra.mxu0 %v4125
  %8042 = vmatpush.bf16.msra.mxu0 %v4121
  %8043 = vmatmul.bf16.gmra.mxu0 %v7537
  %v8044 = vpop.f32.mrf.mxu0
  %v8045 = vadd.f32 %v8032, %v8044
  %v8046 = vpop.f32.mrf.mxu0
  %8047 = vdwg.mxu0
  %8048 = vmatpush.bf16.msra.mxu0 %v4181
  %8049 = vmatpush.bf16.msra.mxu0 %v4177
  %8050 = vmatpush.bf16.msra.mxu0 %v4173
  %8051 = vmatpush.bf16.msra.mxu0 %v4169
  %8052 = vmatpush.bf16.msra.mxu0 %v4165
  %8053 = vmatpush.bf16.msra.mxu0 %v4161
  %8054 = vmatpush.bf16.msra.mxu0 %v4157
  %8055 = vmatpush.bf16.msra.mxu0 %v4153
  %8056 = vmatmul.bf16.gmra.mxu0 %v7538
  %v8057 = vpop.f32.mrf.mxu0
  %v8058 = vadd.f32 %v8045, %v8057
  %v8059 = vpop.f32.mrf.mxu0
  %8060 = vdwg.mxu0
  %8061 = vmatpush.bf16.msra.mxu0 %v4213
  %8062 = vmatpush.bf16.msra.mxu0 %v4209
  %8063 = vmatpush.bf16.msra.mxu0 %v4205
  %8064 = vmatpush.bf16.msra.mxu0 %v4201
  %8065 = vmatpush.bf16.msra.mxu0 %v4197
  %8066 = vmatpush.bf16.msra.mxu0 %v4193
  %8067 = vmatpush.bf16.msra.mxu0 %v4189
  %8068 = vmatpush.bf16.msra.mxu0 %v4185
  %8069 = vmatmul.bf16.gmra.mxu0 %v7539
  %v8070 = vpop.f32.mrf.mxu0
  %v8071 = vadd.f32 %v8058, %v8070
  %v8072 = vpop.f32.mrf.mxu0
  %8073 = vdwg.mxu0
  %8074 = vmatpush.bf16.msra.mxu0 %v4245
  %8075 = vmatpush.bf16.msra.mxu0 %v4241
  %8076 = vmatpush.bf16.msra.mxu0 %v4237
  %8077 = vmatpush.bf16.msra.mxu0 %v4233
  %8078 = vmatpush.bf16.msra.mxu0 %v4229
  %8079 = vmatpush.bf16.msra.mxu0 %v4225
  %8080 = vmatpush.bf16.msra.mxu0 %v4221
  %8081 = vmatpush.bf16.msra.mxu0 %v4217
  %8082 = vmatmul.bf16.gmra.mxu0 %v7540
  %v8083 = vpop.f32.mrf.mxu0
  %v8084 = vadd.f32 %v8071, %v8083
  %v8085 = vpop.f32.mrf.mxu0
  %8086 = vdwg.mxu0
  %8087 = vmatpush.bf16.msra.mxu0 %v4277
  %8088 = vmatpush.bf16.msra.mxu0 %v4273
  %8089 = vmatpush.bf16.msra.mxu0 %v4269
  %8090 = vmatpush.bf16.msra.mxu0 %v4265
  %8091 = vmatpush.bf16.msra.mxu0 %v4261
  %8092 = vmatpush.bf16.msra.mxu0 %v4257
  %8093 = vmatpush.bf16.msra.mxu0 %v4253
  %8094 = vmatpush.bf16.msra.mxu0 %v4249
  %8095 = vmatmul.bf16.gmra.mxu0 %v7541
  %v8096 = vpop.f32.mrf.mxu0
  %v8097 = vadd.f32 %v8084, %v8096
  %v8098 = vpop.f32.mrf.mxu0
  %8099 = vdwg.mxu0
  %8100 = vmatpush.bf16.msra.mxu0 %v4309
  %8101 = vmatpush.bf16.msra.mxu0 %v4305
  %8102 = vmatpush.bf16.msra.mxu0 %v4301
  %8103 = vmatpush.bf16.msra.mxu0 %v4297
  %8104 = vmatpush.bf16.msra.mxu0 %v4293
  %8105 = vmatpush.bf16.msra.mxu0 %v4289
  %8106 = vmatpush.bf16.msra.mxu0 %v4285
  %8107 = vmatpush.bf16.msra.mxu0 %v4281
  %8108 = vmatmul.bf16.gmra.mxu0 %v7542
  %v8109 = vpop.f32.mrf.mxu0
  %v8110 = vadd.f32 %v8097, %v8109
  %v8111 = vpop.f32.mrf.mxu0
  %8112 = vdwg.mxu0
  %8113 = vmatpush.bf16.msra.mxu0 %v4341
  %8114 = vmatpush.bf16.msra.mxu0 %v4337
  %8115 = vmatpush.bf16.msra.mxu0 %v4333
  %8116 = vmatpush.bf16.msra.mxu0 %v4329
  %8117 = vmatpush.bf16.msra.mxu0 %v4325
  %8118 = vmatpush.bf16.msra.mxu0 %v4321
  %8119 = vmatpush.bf16.msra.mxu0 %v4317
  %8120 = vmatpush.bf16.msra.mxu0 %v4313
  %8121 = vmatmul.bf16.gmra.mxu0 %v7543
  %v8122 = vpop.f32.mrf.mxu0
  %v8123 = vadd.f32 %v8110, %v8122
  %v8124 = vpop.f32.mrf.mxu0
  %8125 = vdwg.mxu0
  %8126 = vmatpush.bf16.msra.mxu0 %v4373
  %8127 = vmatpush.bf16.msra.mxu0 %v4369
  %8128 = vmatpush.bf16.msra.mxu0 %v4365
  %8129 = vmatpush.bf16.msra.mxu0 %v4361
  %8130 = vmatpush.bf16.msra.mxu0 %v4357
  %8131 = vmatpush.bf16.msra.mxu0 %v4353
  %8132 = vmatpush.bf16.msra.mxu0 %v4349
  %8133 = vmatpush.bf16.msra.mxu0 %v4345
  %8134 = vmatmul.bf16.gmra.mxu0 %v7544
  %v8135 = vpop.f32.mrf.mxu0
  %v8136 = vadd.f32 %v8123, %v8135
  %v8137 = vpop.f32.mrf.mxu0
  %8138 = vdwg.mxu0
  %8139 = vmatpush.bf16.msra.mxu0 %v4405
  %8140 = vmatpush.bf16.msra.mxu0 %v4401
  %8141 = vmatpush.bf16.msra.mxu0 %v4397
  %8142 = vmatpush.bf16.msra.mxu0 %v4393
  %8143 = vmatpush.bf16.msra.mxu0 %v4389
  %8144 = vmatpush.bf16.msra.mxu0 %v4385
  %8145 = vmatpush.bf16.msra.mxu0 %v4381
  %8146 = vmatpush.bf16.msra.mxu0 %v4377
  %8147 = vmatmul.bf16.gmra.mxu0 %v7545
  %v8148 = vpop.f32.mrf.mxu0
  %v8149 = vadd.f32 %v8136, %v8148
  %v8150 = vpop.f32.mrf.mxu0
  %8151 = vdwg.mxu0
  %8152 = vmatpush.bf16.msra.mxu0 %v4437
  %8153 = vmatpush.bf16.msra.mxu0 %v4433
  %8154 = vmatpush.bf16.msra.mxu0 %v4429
  %8155 = vmatpush.bf16.msra.mxu0 %v4425
  %8156 = vmatpush.bf16.msra.mxu0 %v4421
  %8157 = vmatpush.bf16.msra.mxu0 %v4417
  %8158 = vmatpush.bf16.msra.mxu0 %v4413
  %8159 = vmatpush.bf16.msra.mxu0 %v4409
  %8160 = vmatmul.bf16.gmra.mxu0 %v7546
  %v8161 = vpop.f32.mrf.mxu0
  %v8162 = vadd.f32 %v8149, %v8161
  %v8163 = vpop.f32.mrf.mxu0
  %8164 = vdwg.mxu0
  %8165 = vmatpush.bf16.msra.mxu0 %v4469
  %8166 = vmatpush.bf16.msra.mxu0 %v4465
  %8167 = vmatpush.bf16.msra.mxu0 %v4461
  %8168 = vmatpush.bf16.msra.mxu0 %v4457
  %8169 = vmatpush.bf16.msra.mxu0 %v4453
  %8170 = vmatpush.bf16.msra.mxu0 %v4449
  %8171 = vmatpush.bf16.msra.mxu0 %v4445
  %8172 = vmatpush.bf16.msra.mxu0 %v4441
  %8173 = vmatmul.bf16.gmra.mxu0 %v7547
  %v8174 = vpop.f32.mrf.mxu0
  %v8175 = vadd.f32 %v8162, %v8174
  %v8176 = vpop.f32.mrf.mxu0
  %8177 = vdwg.mxu0
  %8178 = vmatpush.bf16.msra.mxu0 %v4501
  %8179 = vmatpush.bf16.msra.mxu0 %v4497
  %8180 = vmatpush.bf16.msra.mxu0 %v4493
  %8181 = vmatpush.bf16.msra.mxu0 %v4489
  %8182 = vmatpush.bf16.msra.mxu0 %v4485
  %8183 = vmatpush.bf16.msra.mxu0 %v4481
  %8184 = vmatpush.bf16.msra.mxu0 %v4477
  %8185 = vmatpush.bf16.msra.mxu0 %v4473
  %8186 = vmatmul.bf16.gmra.mxu0 %v7548
  %v8187 = vpop.f32.mrf.mxu0
  %v8188 = vadd.f32 %v8175, %v8187
  %v8189 = vpop.f32.mrf.mxu0
  %8190 = vdwg.mxu0
  %8191 = vmatpush.bf16.msra.mxu0 %v4533
  %8192 = vmatpush.bf16.msra.mxu0 %v4529
  %8193 = vmatpush.bf16.msra.mxu0 %v4525
  %8194 = vmatpush.bf16.msra.mxu0 %v4521
  %8195 = vmatpush.bf16.msra.mxu0 %v4517
  %8196 = vmatpush.bf16.msra.mxu0 %v4513
  %8197 = vmatpush.bf16.msra.mxu0 %v4509
  %8198 = vmatpush.bf16.msra.mxu0 %v4505
  %8199 = vmatmul.bf16.gmra.mxu0 %v7549
  %v8200 = vpop.f32.mrf.mxu0
  %v8201 = vadd.f32 %v8188, %v8200
  %v8202 = vpop.f32.mrf.mxu0
  %8203 = vdwg.mxu0
  %8204 = vmatpush.bf16.msra.mxu0 %v4565
  %8205 = vmatpush.bf16.msra.mxu0 %v4561
  %8206 = vmatpush.bf16.msra.mxu0 %v4557
  %8207 = vmatpush.bf16.msra.mxu0 %v4553
  %8208 = vmatpush.bf16.msra.mxu0 %v4549
  %8209 = vmatpush.bf16.msra.mxu0 %v4545
  %8210 = vmatpush.bf16.msra.mxu0 %v4541
  %8211 = vmatpush.bf16.msra.mxu0 %v4537
  %8212 = vmatmul.bf16.gmra.mxu0 %v7550
  %v8213 = vpop.f32.mrf.mxu0
  %v8214 = vadd.f32 %v8201, %v8213
  %v8215 = vpop.f32.mrf.mxu0
  %8216 = vdwg.mxu0
  %8217 = vmatpush.bf16.msra.mxu0 %v4597
  %8218 = vmatpush.bf16.msra.mxu0 %v4593
  %8219 = vmatpush.bf16.msra.mxu0 %v4589
  %8220 = vmatpush.bf16.msra.mxu0 %v4585
  %8221 = vmatpush.bf16.msra.mxu0 %v4581
  %8222 = vmatpush.bf16.msra.mxu0 %v4577
  %8223 = vmatpush.bf16.msra.mxu0 %v4573
  %8224 = vmatpush.bf16.msra.mxu0 %v4569
  %8225 = vmatmul.bf16.gmra.mxu0 %v7551
  %v8226 = vpop.f32.mrf.mxu0
  %v8227 = vadd.f32 %v8214, %v8226
  %v8228 = vpop.f32.mrf.mxu0
  %8229 = vdwg.mxu0
  %8230 = vmatpush.bf16.msra.mxu0 %v4629
  %8231 = vmatpush.bf16.msra.mxu0 %v4625
  %8232 = vmatpush.bf16.msra.mxu0 %v4621
  %8233 = vmatpush.bf16.msra.mxu0 %v4617
  %8234 = vmatpush.bf16.msra.mxu0 %v4613
  %8235 = vmatpush.bf16.msra.mxu0 %v4609
  %8236 = vmatpush.bf16.msra.mxu0 %v4605
  %8237 = vmatpush.bf16.msra.mxu0 %v4601
  %8238 = vmatmul.bf16.gmra.mxu0 %v7552
  %v8239 = vpop.f32.mrf.mxu0
  %v8240 = vadd.f32 %v8227, %v8239
  %v8241 = vpop.f32.mrf.mxu0
  %8242 = vdwg.mxu0
  %8243 = vmatpush.bf16.msra.mxu0 %v4661
  %8244 = vmatpush.bf16.msra.mxu0 %v4657
  %8245 = vmatpush.bf16.msra.mxu0 %v4653
  %8246 = vmatpush.bf16.msra.mxu0 %v4649
  %8247 = vmatpush.bf16.msra.mxu0 %v4645
  %8248 = vmatpush.bf16.msra.mxu0 %v4641
  %8249 = vmatpush.bf16.msra.mxu0 %v4637
  %8250 = vmatpush.bf16.msra.mxu0 %v4633
  %8251 = vmatmul.bf16.gmra.mxu0 %v7553
  %v8252 = vpop.f32.mrf.mxu0
  %v8253 = vadd.f32 %v8240, %v8252
  %v8254 = vpop.f32.mrf.mxu0
  %8255 = vdwg.mxu0
  %8256 = vmatpush.bf16.msra.mxu0 %v4693
  %8257 = vmatpush.bf16.msra.mxu0 %v4689
  %8258 = vmatpush.bf16.msra.mxu0 %v4685
  %8259 = vmatpush.bf16.msra.mxu0 %v4681
  %8260 = vmatpush.bf16.msra.mxu0 %v4677
  %8261 = vmatpush.bf16.msra.mxu0 %v4673
  %8262 = vmatpush.bf16.msra.mxu0 %v4669
  %8263 = vmatpush.bf16.msra.mxu0 %v4665
  %8264 = vmatmul.bf16.gmra.mxu0 %v7554
  %v8265 = vpop.f32.mrf.mxu0
  %v8266 = vadd.f32 %v8253, %v8265
  %v8267 = vpop.f32.mrf.mxu0
  %8268 = vdwg.mxu0
  %8269 = vmatpush.bf16.msra.mxu0 %v4725
  %8270 = vmatpush.bf16.msra.mxu0 %v4721
  %8271 = vmatpush.bf16.msra.mxu0 %v4717
  %8272 = vmatpush.bf16.msra.mxu0 %v4713
  %8273 = vmatpush.bf16.msra.mxu0 %v4709
  %8274 = vmatpush.bf16.msra.mxu0 %v4705
  %8275 = vmatpush.bf16.msra.mxu0 %v4701
  %8276 = vmatpush.bf16.msra.mxu0 %v4697
  %8277 = vmatmul.bf16.gmra.mxu0 %v7555
  %v8278 = vpop.f32.mrf.mxu0
  %v8279 = vadd.f32 %v8266, %v8278
  %v8280 = vpop.f32.mrf.mxu0
  %8281 = vdwg.mxu0
  %8282 = vmatpush.bf16.msra.mxu0 %v4757
  %8283 = vmatpush.bf16.msra.mxu0 %v4753
  %8284 = vmatpush.bf16.msra.mxu0 %v4749
  %8285 = vmatpush.bf16.msra.mxu0 %v4745
  %8286 = vmatpush.bf16.msra.mxu0 %v4741
  %8287 = vmatpush.bf16.msra.mxu0 %v4737
  %8288 = vmatpush.bf16.msra.mxu0 %v4733
  %8289 = vmatpush.bf16.msra.mxu0 %v4729
  %8290 = vmatmul.bf16.gmra.mxu0 %v7556
  %v8291 = vpop.f32.mrf.mxu0
  %v8292 = vadd.f32 %v8279, %v8291
  %v8293 = vpop.f32.mrf.mxu0
  %8294 = vdwg.mxu0
  %8295 = vmatpush.bf16.msra.mxu0 %v4789
  %8296 = vmatpush.bf16.msra.mxu0 %v4785
  %8297 = vmatpush.bf16.msra.mxu0 %v4781
  %8298 = vmatpush.bf16.msra.mxu0 %v4777
  %8299 = vmatpush.bf16.msra.mxu0 %v4773
  %8300 = vmatpush.bf16.msra.mxu0 %v4769
  %8301 = vmatpush.bf16.msra.mxu0 %v4765
  %8302 = vmatpush.bf16.msra.mxu0 %v4761
  %8303 = vmatmul.bf16.gmra.mxu0 %v7557
  %v8304 = vpop.f32.mrf.mxu0
  %v8305 = vadd.f32 %v8292, %v8304
  %v8306 = vpop.f32.mrf.mxu0
  %8307 = vdwg.mxu0
  %8308 = vmatpush.bf16.msra.mxu0 %v4821
  %8309 = vmatpush.bf16.msra.mxu0 %v4817
  %8310 = vmatpush.bf16.msra.mxu0 %v4813
  %8311 = vmatpush.bf16.msra.mxu0 %v4809
  %8312 = vmatpush.bf16.msra.mxu0 %v4805
  %8313 = vmatpush.bf16.msra.mxu0 %v4801
  %8314 = vmatpush.bf16.msra.mxu0 %v4797
  %8315 = vmatpush.bf16.msra.mxu0 %v4793
  %8316 = vmatmul.bf16.gmra.mxu0 %v7558
  %v8317 = vpop.f32.mrf.mxu0
  %v8318 = vadd.f32 %v8305, %v8317
  %v8319 = vpop.f32.mrf.mxu0
  %8320 = vdwg.mxu0
  %8321 = vmatpush.bf16.msra.mxu0 %v4853
  %8322 = vmatpush.bf16.msra.mxu0 %v4849
  %8323 = vmatpush.bf16.msra.mxu0 %v4845
  %8324 = vmatpush.bf16.msra.mxu0 %v4841
  %8325 = vmatpush.bf16.msra.mxu0 %v4837
  %8326 = vmatpush.bf16.msra.mxu0 %v4833
  %8327 = vmatpush.bf16.msra.mxu0 %v4829
  %8328 = vmatpush.bf16.msra.mxu0 %v4825
  %8329 = vmatmul.bf16.gmra.mxu0 %v7559
  %v8330 = vpop.f32.mrf.mxu0
  %v8331 = vadd.f32 %v8318, %v8330
  %v8332 = vpop.f32.mrf.mxu0
  %8333 = vdwg.mxu0
  %8334 = vmatpush.bf16.msra.mxu0 %v4885
  %8335 = vmatpush.bf16.msra.mxu0 %v4881
  %8336 = vmatpush.bf16.msra.mxu0 %v4877
  %8337 = vmatpush.bf16.msra.mxu0 %v4873
  %8338 = vmatpush.bf16.msra.mxu0 %v4869
  %8339 = vmatpush.bf16.msra.mxu0 %v4865
  %8340 = vmatpush.bf16.msra.mxu0 %v4861
  %8341 = vmatpush.bf16.msra.mxu0 %v4857
  %8342 = vmatmul.bf16.gmra.mxu0 %v7560
  %v8343 = vpop.f32.mrf.mxu0
  %v8344 = vadd.f32 %v8331, %v8343
  %v8345 = vpop.f32.mrf.mxu0
  %8346 = vdwg.mxu0
  %8347 = vmatpush.bf16.msra.mxu0 %v4917
  %8348 = vmatpush.bf16.msra.mxu0 %v4913
  %8349 = vmatpush.bf16.msra.mxu0 %v4909
  %8350 = vmatpush.bf16.msra.mxu0 %v4905
  %8351 = vmatpush.bf16.msra.mxu0 %v4901
  %8352 = vmatpush.bf16.msra.mxu0 %v4897
  %8353 = vmatpush.bf16.msra.mxu0 %v4893
  %8354 = vmatpush.bf16.msra.mxu0 %v4889
  %8355 = vmatmul.bf16.gmra.mxu0 %v7561
  %v8356 = vpop.f32.mrf.mxu0
  %v8357 = vadd.f32 %v8344, %v8356
  %v8358 = vpop.f32.mrf.mxu0
  %8359 = vdwg.mxu0
  %8360 = vmatpush.bf16.msra.mxu0 %v4949
  %8361 = vmatpush.bf16.msra.mxu0 %v4945
  %8362 = vmatpush.bf16.msra.mxu0 %v4941
  %8363 = vmatpush.bf16.msra.mxu0 %v4937
  %8364 = vmatpush.bf16.msra.mxu0 %v4933
  %8365 = vmatpush.bf16.msra.mxu0 %v4929
  %8366 = vmatpush.bf16.msra.mxu0 %v4925
  %8367 = vmatpush.bf16.msra.mxu0 %v4921
  %8368 = vmatmul.bf16.gmra.mxu0 %v7562
  %v8369 = vpop.f32.mrf.mxu0
  %v8370 = vadd.f32 %v8357, %v8369
  %v8371 = vpop.f32.mrf.mxu0
  %8372 = vdwg.mxu0
  %8373 = vmatpush.bf16.msra.mxu0 %v4022
  %8374 = vmatpush.bf16.msra.mxu0 %v4018
  %8375 = vmatpush.bf16.msra.mxu0 %v4014
  %8376 = vmatpush.bf16.msra.mxu0 %v4010
  %8377 = vmatpush.bf16.msra.mxu0 %v4006
  %8378 = vmatpush.bf16.msra.mxu0 %v4002
  %8379 = vmatpush.bf16.msra.mxu0 %v3998
  %8380 = vmatpush.bf16.msra.mxu0 %v3994
  %8381 = vmatmul.bf16.gmra.mxu0 %v7533
  %v8382 = vpop.f32.mrf.mxu0
  %v8383 = vadd.f32 0.0, %v8382
  %v8384 = vpop.f32.mrf.mxu0
  %8385 = vdwg.mxu0
  %8386 = vmatpush.bf16.msra.mxu0 %v4054
  %8387 = vmatpush.bf16.msra.mxu0 %v4050
  %8388 = vmatpush.bf16.msra.mxu0 %v4046
  %8389 = vmatpush.bf16.msra.mxu0 %v4042
  %8390 = vmatpush.bf16.msra.mxu0 %v4038
  %8391 = vmatpush.bf16.msra.mxu0 %v4034
  %8392 = vmatpush.bf16.msra.mxu0 %v4030
  %8393 = vmatpush.bf16.msra.mxu0 %v4026
  %8394 = vmatmul.bf16.gmra.mxu0 %v7534
  %v8395 = vpop.f32.mrf.mxu0
  %v8396 = vadd.f32 %v8383, %v8395
  %v8397 = vpop.f32.mrf.mxu0
  %8398 = vdwg.mxu0
  %8399 = vmatpush.bf16.msra.mxu0 %v4086
  %8400 = vmatpush.bf16.msra.mxu0 %v4082
  %8401 = vmatpush.bf16.msra.mxu0 %v4078
  %8402 = vmatpush.bf16.msra.mxu0 %v4074
  %8403 = vmatpush.bf16.msra.mxu0 %v4070
  %8404 = vmatpush.bf16.msra.mxu0 %v4066
  %8405 = vmatpush.bf16.msra.mxu0 %v4062
  %8406 = vmatpush.bf16.msra.mxu0 %v4058
  %8407 = vmatmul.bf16.gmra.mxu0 %v7535
  %v8408 = vpop.f32.mrf.mxu0
  %v8409 = vadd.f32 %v8396, %v8408
  %v8410 = vpop.f32.mrf.mxu0
  %8411 = vdwg.mxu0
  %8412 = vmatpush.bf16.msra.mxu0 %v4118
  %8413 = vmatpush.bf16.msra.mxu0 %v4114
  %8414 = vmatpush.bf16.msra.mxu0 %v4110
  %8415 = vmatpush.bf16.msra.mxu0 %v4106
  %8416 = vmatpush.bf16.msra.mxu0 %v4102
  %8417 = vmatpush.bf16.msra.mxu0 %v4098
  %8418 = vmatpush.bf16.msra.mxu0 %v4094
  %8419 = vmatpush.bf16.msra.mxu0 %v4090
  %8420 = vmatmul.bf16.gmra.mxu0 %v7536
  %v8421 = vpop.f32.mrf.mxu0
  %v8422 = vadd.f32 %v8409, %v8421
  %v8423 = vpop.f32.mrf.mxu0
  %8424 = vdwg.mxu0
  %8425 = vmatpush.bf16.msra.mxu0 %v4150
  %8426 = vmatpush.bf16.msra.mxu0 %v4146
  %8427 = vmatpush.bf16.msra.mxu0 %v4142
  %8428 = vmatpush.bf16.msra.mxu0 %v4138
  %8429 = vmatpush.bf16.msra.mxu0 %v4134
  %8430 = vmatpush.bf16.msra.mxu0 %v4130
  %8431 = vmatpush.bf16.msra.mxu0 %v4126
  %8432 = vmatpush.bf16.msra.mxu0 %v4122
  %8433 = vmatmul.bf16.gmra.mxu0 %v7537
  %v8434 = vpop.f32.mrf.mxu0
  %v8435 = vadd.f32 %v8422, %v8434
  %v8436 = vpop.f32.mrf.mxu0
  %8437 = vdwg.mxu0
  %8438 = vmatpush.bf16.msra.mxu0 %v4182
  %8439 = vmatpush.bf16.msra.mxu0 %v4178
  %8440 = vmatpush.bf16.msra.mxu0 %v4174
  %8441 = vmatpush.bf16.msra.mxu0 %v4170
  %8442 = vmatpush.bf16.msra.mxu0 %v4166
  %8443 = vmatpush.bf16.msra.mxu0 %v4162
  %8444 = vmatpush.bf16.msra.mxu0 %v4158
  %8445 = vmatpush.bf16.msra.mxu0 %v4154
  %8446 = vmatmul.bf16.gmra.mxu0 %v7538
  %v8447 = vpop.f32.mrf.mxu0
  %v8448 = vadd.f32 %v8435, %v8447
  %v8449 = vpop.f32.mrf.mxu0
  %8450 = vdwg.mxu0
  %8451 = vmatpush.bf16.msra.mxu0 %v4214
  %8452 = vmatpush.bf16.msra.mxu0 %v4210
  %8453 = vmatpush.bf16.msra.mxu0 %v4206
  %8454 = vmatpush.bf16.msra.mxu0 %v4202
  %8455 = vmatpush.bf16.msra.mxu0 %v4198
  %8456 = vmatpush.bf16.msra.mxu0 %v4194
  %8457 = vmatpush.bf16.msra.mxu0 %v4190
  %8458 = vmatpush.bf16.msra.mxu0 %v4186
  %8459 = vmatmul.bf16.gmra.mxu0 %v7539
  %v8460 = vpop.f32.mrf.mxu0
  %v8461 = vadd.f32 %v8448, %v8460
  %v8462 = vpop.f32.mrf.mxu0
  %8463 = vdwg.mxu0
  %8464 = vmatpush.bf16.msra.mxu0 %v4246
  %8465 = vmatpush.bf16.msra.mxu0 %v4242
  %8466 = vmatpush.bf16.msra.mxu0 %v4238
  %8467 = vmatpush.bf16.msra.mxu0 %v4234
  %8468 = vmatpush.bf16.msra.mxu0 %v4230
  %8469 = vmatpush.bf16.msra.mxu0 %v4226
  %8470 = vmatpush.bf16.msra.mxu0 %v4222
  %8471 = vmatpush.bf16.msra.mxu0 %v4218
  %8472 = vmatmul.bf16.gmra.mxu0 %v7540
  %v8473 = vpop.f32.mrf.mxu0
  %v8474 = vadd.f32 %v8461, %v8473
  %v8475 = vpop.f32.mrf.mxu0
  %8476 = vdwg.mxu0
  %8477 = vmatpush.bf16.msra.mxu0 %v4278
  %8478 = vmatpush.bf16.msra.mxu0 %v4274
  %8479 = vmatpush.bf16.msra.mxu0 %v4270
  %8480 = vmatpush.bf16.msra.mxu0 %v4266
  %8481 = vmatpush.bf16.msra.mxu0 %v4262
  %8482 = vmatpush.bf16.msra.mxu0 %v4258
  %8483 = vmatpush.bf16.msra.mxu0 %v4254
  %8484 = vmatpush.bf16.msra.mxu0 %v4250
  %8485 = vmatmul.bf16.gmra.mxu0 %v7541
  %v8486 = vpop.f32.mrf.mxu0
  %v8487 = vadd.f32 %v8474, %v8486
  %v8488 = vpop.f32.mrf.mxu0
  %8489 = vdwg.mxu0
  %8490 = vmatpush.bf16.msra.mxu0 %v4310
  %8491 = vmatpush.bf16.msra.mxu0 %v4306
  %8492 = vmatpush.bf16.msra.mxu0 %v4302
  %8493 = vmatpush.bf16.msra.mxu0 %v4298
  %8494 = vmatpush.bf16.msra.mxu0 %v4294
  %8495 = vmatpush.bf16.msra.mxu0 %v4290
  %8496 = vmatpush.bf16.msra.mxu0 %v4286
  %8497 = vmatpush.bf16.msra.mxu0 %v4282
  %8498 = vmatmul.bf16.gmra.mxu0 %v7542
  %v8499 = vpop.f32.mrf.mxu0
  %v8500 = vadd.f32 %v8487, %v8499
  %v8501 = vpop.f32.mrf.mxu0
  %8502 = vdwg.mxu0
  %8503 = vmatpush.bf16.msra.mxu0 %v4342
  %8504 = vmatpush.bf16.msra.mxu0 %v4338
  %8505 = vmatpush.bf16.msra.mxu0 %v4334
  %8506 = vmatpush.bf16.msra.mxu0 %v4330
  %8507 = vmatpush.bf16.msra.mxu0 %v4326
  %8508 = vmatpush.bf16.msra.mxu0 %v4322
  %8509 = vmatpush.bf16.msra.mxu0 %v4318
  %8510 = vmatpush.bf16.msra.mxu0 %v4314
  %8511 = vmatmul.bf16.gmra.mxu0 %v7543
  %v8512 = vpop.f32.mrf.mxu0
  %v8513 = vadd.f32 %v8500, %v8512
  %v8514 = vpop.f32.mrf.mxu0
  %8515 = vdwg.mxu0
  %8516 = vmatpush.bf16.msra.mxu0 %v4374
  %8517 = vmatpush.bf16.msra.mxu0 %v4370
  %8518 = vmatpush.bf16.msra.mxu0 %v4366
  %8519 = vmatpush.bf16.msra.mxu0 %v4362
  %8520 = vmatpush.bf16.msra.mxu0 %v4358
  %8521 = vmatpush.bf16.msra.mxu0 %v4354
  %8522 = vmatpush.bf16.msra.mxu0 %v4350
  %8523 = vmatpush.bf16.msra.mxu0 %v4346
  %8524 = vmatmul.bf16.gmra.mxu0 %v7544
  %v8525 = vpop.f32.mrf.mxu0
  %v8526 = vadd.f32 %v8513, %v8525
  %v8527 = vpop.f32.mrf.mxu0
  %8528 = vdwg.mxu0
  %8529 = vmatpush.bf16.msra.mxu0 %v4406
  %8530 = vmatpush.bf16.msra.mxu0 %v4402
  %8531 = vmatpush.bf16.msra.mxu0 %v4398
  %8532 = vmatpush.bf16.msra.mxu0 %v4394
  %8533 = vmatpush.bf16.msra.mxu0 %v4390
  %8534 = vmatpush.bf16.msra.mxu0 %v4386
  %8535 = vmatpush.bf16.msra.mxu0 %v4382
  %8536 = vmatpush.bf16.msra.mxu0 %v4378
  %8537 = vmatmul.bf16.gmra.mxu0 %v7545
  %v8538 = vpop.f32.mrf.mxu0
  %v8539 = vadd.f32 %v8526, %v8538
  %v8540 = vpop.f32.mrf.mxu0
  %8541 = vdwg.mxu0
  %8542 = vmatpush.bf16.msra.mxu0 %v4438
  %8543 = vmatpush.bf16.msra.mxu0 %v4434
  %8544 = vmatpush.bf16.msra.mxu0 %v4430
  %8545 = vmatpush.bf16.msra.mxu0 %v4426
  %8546 = vmatpush.bf16.msra.mxu0 %v4422
  %8547 = vmatpush.bf16.msra.mxu0 %v4418
  %8548 = vmatpush.bf16.msra.mxu0 %v4414
  %8549 = vmatpush.bf16.msra.mxu0 %v4410
  %8550 = vmatmul.bf16.gmra.mxu0 %v7546
  %v8551 = vpop.f32.mrf.mxu0
  %v8552 = vadd.f32 %v8539, %v8551
  %v8553 = vpop.f32.mrf.mxu0
  %8554 = vdwg.mxu0
  %8555 = vmatpush.bf16.msra.mxu0 %v4470
  %8556 = vmatpush.bf16.msra.mxu0 %v4466
  %8557 = vmatpush.bf16.msra.mxu0 %v4462
  %8558 = vmatpush.bf16.msra.mxu0 %v4458
  %8559 = vmatpush.bf16.msra.mxu0 %v4454
  %8560 = vmatpush.bf16.msra.mxu0 %v4450
  %8561 = vmatpush.bf16.msra.mxu0 %v4446
  %8562 = vmatpush.bf16.msra.mxu0 %v4442
  %8563 = vmatmul.bf16.gmra.mxu0 %v7547
  %v8564 = vpop.f32.mrf.mxu0
  %v8565 = vadd.f32 %v8552, %v8564
  %v8566 = vpop.f32.mrf.mxu0
  %8567 = vdwg.mxu0
  %8568 = vmatpush.bf16.msra.mxu0 %v4502
  %8569 = vmatpush.bf16.msra.mxu0 %v4498
  %8570 = vmatpush.bf16.msra.mxu0 %v4494
  %8571 = vmatpush.bf16.msra.mxu0 %v4490
  %8572 = vmatpush.bf16.msra.mxu0 %v4486
  %8573 = vmatpush.bf16.msra.mxu0 %v4482
  %8574 = vmatpush.bf16.msra.mxu0 %v4478
  %8575 = vmatpush.bf16.msra.mxu0 %v4474
  %8576 = vmatmul.bf16.gmra.mxu0 %v7548
  %v8577 = vpop.f32.mrf.mxu0
  %v8578 = vadd.f32 %v8565, %v8577
  %v8579 = vpop.f32.mrf.mxu0
  %8580 = vdwg.mxu0
  %8581 = vmatpush.bf16.msra.mxu0 %v4534
  %8582 = vmatpush.bf16.msra.mxu0 %v4530
  %8583 = vmatpush.bf16.msra.mxu0 %v4526
  %8584 = vmatpush.bf16.msra.mxu0 %v4522
  %8585 = vmatpush.bf16.msra.mxu0 %v4518
  %8586 = vmatpush.bf16.msra.mxu0 %v4514
  %8587 = vmatpush.bf16.msra.mxu0 %v4510
  %8588 = vmatpush.bf16.msra.mxu0 %v4506
  %8589 = vmatmul.bf16.gmra.mxu0 %v7549
  %v8590 = vpop.f32.mrf.mxu0
  %v8591 = vadd.f32 %v8578, %v8590
  %v8592 = vpop.f32.mrf.mxu0
  %8593 = vdwg.mxu0
  %8594 = vmatpush.bf16.msra.mxu0 %v4566
  %8595 = vmatpush.bf16.msra.mxu0 %v4562
  %8596 = vmatpush.bf16.msra.mxu0 %v4558
  %8597 = vmatpush.bf16.msra.mxu0 %v4554
  %8598 = vmatpush.bf16.msra.mxu0 %v4550
  %8599 = vmatpush.bf16.msra.mxu0 %v4546
  %8600 = vmatpush.bf16.msra.mxu0 %v4542
  %8601 = vmatpush.bf16.msra.mxu0 %v4538
  %8602 = vmatmul.bf16.gmra.mxu0 %v7550
  %v8603 = vpop.f32.mrf.mxu0
  %v8604 = vadd.f32 %v8591, %v8603
  %v8605 = vpop.f32.mrf.mxu0
  %8606 = vdwg.mxu0
  %8607 = vmatpush.bf16.msra.mxu0 %v4598
  %8608 = vmatpush.bf16.msra.mxu0 %v4594
  %8609 = vmatpush.bf16.msra.mxu0 %v4590
  %8610 = vmatpush.bf16.msra.mxu0 %v4586
  %8611 = vmatpush.bf16.msra.mxu0 %v4582
  %8612 = vmatpush.bf16.msra.mxu0 %v4578
  %8613 = vmatpush.bf16.msra.mxu0 %v4574
  %8614 = vmatpush.bf16.msra.mxu0 %v4570
  %8615 = vmatmul.bf16.gmra.mxu0 %v7551
  %v8616 = vpop.f32.mrf.mxu0
  %v8617 = vadd.f32 %v8604, %v8616
  %v8618 = vpop.f32.mrf.mxu0
  %8619 = vdwg.mxu0
  %8620 = vmatpush.bf16.msra.mxu0 %v4630
  %8621 = vmatpush.bf16.msra.mxu0 %v4626
  %8622 = vmatpush.bf16.msra.mxu0 %v4622
  %8623 = vmatpush.bf16.msra.mxu0 %v4618
  %8624 = vmatpush.bf16.msra.mxu0 %v4614
  %8625 = vmatpush.bf16.msra.mxu0 %v4610
  %8626 = vmatpush.bf16.msra.mxu0 %v4606
  %8627 = vmatpush.bf16.msra.mxu0 %v4602
  %8628 = vmatmul.bf16.gmra.mxu0 %v7552
  %v8629 = vpop.f32.mrf.mxu0
  %v8630 = vadd.f32 %v8617, %v8629
  %v8631 = vpop.f32.mrf.mxu0
  %8632 = vdwg.mxu0
  %8633 = vmatpush.bf16.msra.mxu0 %v4662
  %8634 = vmatpush.bf16.msra.mxu0 %v4658
  %8635 = vmatpush.bf16.msra.mxu0 %v4654
  %8636 = vmatpush.bf16.msra.mxu0 %v4650
  %8637 = vmatpush.bf16.msra.mxu0 %v4646
  %8638 = vmatpush.bf16.msra.mxu0 %v4642
  %8639 = vmatpush.bf16.msra.mxu0 %v4638
  %8640 = vmatpush.bf16.msra.mxu0 %v4634
  %8641 = vmatmul.bf16.gmra.mxu0 %v7553
  %v8642 = vpop.f32.mrf.mxu0
  %v8643 = vadd.f32 %v8630, %v8642
  %v8644 = vpop.f32.mrf.mxu0
  %8645 = vdwg.mxu0
  %8646 = vmatpush.bf16.msra.mxu0 %v4694
  %8647 = vmatpush.bf16.msra.mxu0 %v4690
  %8648 = vmatpush.bf16.msra.mxu0 %v4686
  %8649 = vmatpush.bf16.msra.mxu0 %v4682
  %8650 = vmatpush.bf16.msra.mxu0 %v4678
  %8651 = vmatpush.bf16.msra.mxu0 %v4674
  %8652 = vmatpush.bf16.msra.mxu0 %v4670
  %8653 = vmatpush.bf16.msra.mxu0 %v4666
  %8654 = vmatmul.bf16.gmra.mxu0 %v7554
  %v8655 = vpop.f32.mrf.mxu0
  %v8656 = vadd.f32 %v8643, %v8655
  %v8657 = vpop.f32.mrf.mxu0
  %8658 = vdwg.mxu0
  %8659 = vmatpush.bf16.msra.mxu0 %v4726
  %8660 = vmatpush.bf16.msra.mxu0 %v4722
  %8661 = vmatpush.bf16.msra.mxu0 %v4718
  %8662 = vmatpush.bf16.msra.mxu0 %v4714
  %8663 = vmatpush.bf16.msra.mxu0 %v4710
  %8664 = vmatpush.bf16.msra.mxu0 %v4706
  %8665 = vmatpush.bf16.msra.mxu0 %v4702
  %8666 = vmatpush.bf16.msra.mxu0 %v4698
  %8667 = vmatmul.bf16.gmra.mxu0 %v7555
  %v8668 = vpop.f32.mrf.mxu0
  %v8669 = vadd.f32 %v8656, %v8668
  %v8670 = vpop.f32.mrf.mxu0
  %8671 = vdwg.mxu0
  %8672 = vmatpush.bf16.msra.mxu0 %v4758
  %8673 = vmatpush.bf16.msra.mxu0 %v4754
  %8674 = vmatpush.bf16.msra.mxu0 %v4750
  %8675 = vmatpush.bf16.msra.mxu0 %v4746
  %8676 = vmatpush.bf16.msra.mxu0 %v4742
  %8677 = vmatpush.bf16.msra.mxu0 %v4738
  %8678 = vmatpush.bf16.msra.mxu0 %v4734
  %8679 = vmatpush.bf16.msra.mxu0 %v4730
  %8680 = vmatmul.bf16.gmra.mxu0 %v7556
  %v8681 = vpop.f32.mrf.mxu0
  %v8682 = vadd.f32 %v8669, %v8681
  %v8683 = vpop.f32.mrf.mxu0
  %8684 = vdwg.mxu0
  %8685 = vmatpush.bf16.msra.mxu0 %v4790
  %8686 = vmatpush.bf16.msra.mxu0 %v4786
  %8687 = vmatpush.bf16.msra.mxu0 %v4782
  %8688 = vmatpush.bf16.msra.mxu0 %v4778
  %8689 = vmatpush.bf16.msra.mxu0 %v4774
  %8690 = vmatpush.bf16.msra.mxu0 %v4770
  %8691 = vmatpush.bf16.msra.mxu0 %v4766
  %8692 = vmatpush.bf16.msra.mxu0 %v4762
  %8693 = vmatmul.bf16.gmra.mxu0 %v7557
  %v8694 = vpop.f32.mrf.mxu0
  %v8695 = vadd.f32 %v8682, %v8694
  %v8696 = vpop.f32.mrf.mxu0
  %8697 = vdwg.mxu0
  %8698 = vmatpush.bf16.msra.mxu0 %v4822
  %8699 = vmatpush.bf16.msra.mxu0 %v4818
  %8700 = vmatpush.bf16.msra.mxu0 %v4814
  %8701 = vmatpush.bf16.msra.mxu0 %v4810
  %8702 = vmatpush.bf16.msra.mxu0 %v4806
  %8703 = vmatpush.bf16.msra.mxu0 %v4802
  %8704 = vmatpush.bf16.msra.mxu0 %v4798
  %8705 = vmatpush.bf16.msra.mxu0 %v4794
  %8706 = vmatmul.bf16.gmra.mxu0 %v7558
  %v8707 = vpop.f32.mrf.mxu0
  %v8708 = vadd.f32 %v8695, %v8707
  %v8709 = vpop.f32.mrf.mxu0
  %8710 = vdwg.mxu0
  %8711 = vmatpush.bf16.msra.mxu0 %v4854
  %8712 = vmatpush.bf16.msra.mxu0 %v4850
  %8713 = vmatpush.bf16.msra.mxu0 %v4846
  %8714 = vmatpush.bf16.msra.mxu0 %v4842
  %8715 = vmatpush.bf16.msra.mxu0 %v4838
  %8716 = vmatpush.bf16.msra.mxu0 %v4834
  %8717 = vmatpush.bf16.msra.mxu0 %v4830
  %8718 = vmatpush.bf16.msra.mxu0 %v4826
  %8719 = vmatmul.bf16.gmra.mxu0 %v7559
  %v8720 = vpop.f32.mrf.mxu0
  %v8721 = vadd.f32 %v8708, %v8720
  %v8722 = vpop.f32.mrf.mxu0
  %8723 = vdwg.mxu0
  %8724 = vmatpush.bf16.msra.mxu0 %v4886
  %8725 = vmatpush.bf16.msra.mxu0 %v4882
  %8726 = vmatpush.bf16.msra.mxu0 %v4878
  %8727 = vmatpush.bf16.msra.mxu0 %v4874
  %8728 = vmatpush.bf16.msra.mxu0 %v4870
  %8729 = vmatpush.bf16.msra.mxu0 %v4866
  %8730 = vmatpush.bf16.msra.mxu0 %v4862
  %8731 = vmatpush.bf16.msra.mxu0 %v4858
  %8732 = vmatmul.bf16.gmra.mxu0 %v7560
  %v8733 = vpop.f32.mrf.mxu0
  %v8734 = vadd.f32 %v8721, %v8733
  %v8735 = vpop.f32.mrf.mxu0
  %8736 = vdwg.mxu0
  %8737 = vmatpush.bf16.msra.mxu0 %v4918
  %8738 = vmatpush.bf16.msra.mxu0 %v4914
  %8739 = vmatpush.bf16.msra.mxu0 %v4910
  %8740 = vmatpush.bf16.msra.mxu0 %v4906
  %8741 = vmatpush.bf16.msra.mxu0 %v4902
  %8742 = vmatpush.bf16.msra.mxu0 %v4898
  %8743 = vmatpush.bf16.msra.mxu0 %v4894
  %8744 = vmatpush.bf16.msra.mxu0 %v4890
  %8745 = vmatmul.bf16.gmra.mxu0 %v7561
  %v8746 = vpop.f32.mrf.mxu0
  %v8747 = vadd.f32 %v8734, %v8746
  %v8748 = vpop.f32.mrf.mxu0
  %8749 = vdwg.mxu0
  %8750 = vmatpush.bf16.msra.mxu0 %v4950
  %8751 = vmatpush.bf16.msra.mxu0 %v4946
  %8752 = vmatpush.bf16.msra.mxu0 %v4942
  %8753 = vmatpush.bf16.msra.mxu0 %v4938
  %8754 = vmatpush.bf16.msra.mxu0 %v4934
  %8755 = vmatpush.bf16.msra.mxu0 %v4930
  %8756 = vmatpush.bf16.msra.mxu0 %v4926
  %8757 = vmatpush.bf16.msra.mxu0 %v4922
  %8758 = vmatmul.bf16.gmra.mxu0 %v7562
  %v8759 = vpop.f32.mrf.mxu0
  %v8760 = vadd.f32 %v8747, %v8759
  %v8761 = vpop.f32.mrf.mxu0
  %8762 = vdwg.mxu0
  %8763 = vmatpush.bf16.msra.mxu0 %v4023
  %8764 = vmatpush.bf16.msra.mxu0 %v4019
  %8765 = vmatpush.bf16.msra.mxu0 %v4015
  %8766 = vmatpush.bf16.msra.mxu0 %v4011
  %8767 = vmatpush.bf16.msra.mxu0 %v4007
  %8768 = vmatpush.bf16.msra.mxu0 %v4003
  %8769 = vmatpush.bf16.msra.mxu0 %v3999
  %8770 = vmatpush.bf16.msra.mxu0 %v3995
  %8771 = vmatmul.bf16.gmra.mxu0 %v7533
  %v8772 = vpop.f32.mrf.mxu0
  %v8773 = vadd.f32 0.0, %v8772
  %v8774 = vpop.f32.mrf.mxu0
  %8775 = vdwg.mxu0
  %8776 = vmatpush.bf16.msra.mxu0 %v4055
  %8777 = vmatpush.bf16.msra.mxu0 %v4051
  %8778 = vmatpush.bf16.msra.mxu0 %v4047
  %8779 = vmatpush.bf16.msra.mxu0 %v4043
  %8780 = vmatpush.bf16.msra.mxu0 %v4039
  %8781 = vmatpush.bf16.msra.mxu0 %v4035
  %8782 = vmatpush.bf16.msra.mxu0 %v4031
  %8783 = vmatpush.bf16.msra.mxu0 %v4027
  %8784 = vmatmul.bf16.gmra.mxu0 %v7534
  %v8785 = vpop.f32.mrf.mxu0
  %v8786 = vadd.f32 %v8773, %v8785
  %v8787 = vpop.f32.mrf.mxu0
  %8788 = vdwg.mxu0
  %8789 = vmatpush.bf16.msra.mxu0 %v4087
  %8790 = vmatpush.bf16.msra.mxu0 %v4083
  %8791 = vmatpush.bf16.msra.mxu0 %v4079
  %8792 = vmatpush.bf16.msra.mxu0 %v4075
  %8793 = vmatpush.bf16.msra.mxu0 %v4071
  %8794 = vmatpush.bf16.msra.mxu0 %v4067
  %8795 = vmatpush.bf16.msra.mxu0 %v4063
  %8796 = vmatpush.bf16.msra.mxu0 %v4059
  %8797 = vmatmul.bf16.gmra.mxu0 %v7535
  %v8798 = vpop.f32.mrf.mxu0
  %v8799 = vadd.f32 %v8786, %v8798
  %v8800 = vpop.f32.mrf.mxu0
  %8801 = vdwg.mxu0
  %8802 = vmatpush.bf16.msra.mxu0 %v4119
  %8803 = vmatpush.bf16.msra.mxu0 %v4115
  %8804 = vmatpush.bf16.msra.mxu0 %v4111
  %8805 = vmatpush.bf16.msra.mxu0 %v4107
  %8806 = vmatpush.bf16.msra.mxu0 %v4103
  %8807 = vmatpush.bf16.msra.mxu0 %v4099
  %8808 = vmatpush.bf16.msra.mxu0 %v4095
  %8809 = vmatpush.bf16.msra.mxu0 %v4091
  %8810 = vmatmul.bf16.gmra.mxu0 %v7536
  %v8811 = vpop.f32.mrf.mxu0
  %v8812 = vadd.f32 %v8799, %v8811
  %v8813 = vpop.f32.mrf.mxu0
  %8814 = vdwg.mxu0
  %8815 = vmatpush.bf16.msra.mxu0 %v4151
  %8816 = vmatpush.bf16.msra.mxu0 %v4147
  %8817 = vmatpush.bf16.msra.mxu0 %v4143
  %8818 = vmatpush.bf16.msra.mxu0 %v4139
  %8819 = vmatpush.bf16.msra.mxu0 %v4135
  %8820 = vmatpush.bf16.msra.mxu0 %v4131
  %8821 = vmatpush.bf16.msra.mxu0 %v4127
  %8822 = vmatpush.bf16.msra.mxu0 %v4123
  %8823 = vmatmul.bf16.gmra.mxu0 %v7537
  %v8824 = vpop.f32.mrf.mxu0
  %v8825 = vadd.f32 %v8812, %v8824
  %v8826 = vpop.f32.mrf.mxu0
  %8827 = vdwg.mxu0
  %8828 = vmatpush.bf16.msra.mxu0 %v4183
  %8829 = vmatpush.bf16.msra.mxu0 %v4179
  %8830 = vmatpush.bf16.msra.mxu0 %v4175
  %8831 = vmatpush.bf16.msra.mxu0 %v4171
  %8832 = vmatpush.bf16.msra.mxu0 %v4167
  %8833 = vmatpush.bf16.msra.mxu0 %v4163
  %8834 = vmatpush.bf16.msra.mxu0 %v4159
  %8835 = vmatpush.bf16.msra.mxu0 %v4155
  %8836 = vmatmul.bf16.gmra.mxu0 %v7538
  %v8837 = vpop.f32.mrf.mxu0
  %v8838 = vadd.f32 %v8825, %v8837
  %v8839 = vpop.f32.mrf.mxu0
  %8840 = vdwg.mxu0
  %8841 = vmatpush.bf16.msra.mxu0 %v4215
  %8842 = vmatpush.bf16.msra.mxu0 %v4211
  %8843 = vmatpush.bf16.msra.mxu0 %v4207
  %8844 = vmatpush.bf16.msra.mxu0 %v4203
  %8845 = vmatpush.bf16.msra.mxu0 %v4199
  %8846 = vmatpush.bf16.msra.mxu0 %v4195
  %8847 = vmatpush.bf16.msra.mxu0 %v4191
  %8848 = vmatpush.bf16.msra.mxu0 %v4187
  %8849 = vmatmul.bf16.gmra.mxu0 %v7539
  %v8850 = vpop.f32.mrf.mxu0
  %v8851 = vadd.f32 %v8838, %v8850
  %v8852 = vpop.f32.mrf.mxu0
  %8853 = vdwg.mxu0
  %8854 = vmatpush.bf16.msra.mxu0 %v4247
  %8855 = vmatpush.bf16.msra.mxu0 %v4243
  %8856 = vmatpush.bf16.msra.mxu0 %v4239
  %8857 = vmatpush.bf16.msra.mxu0 %v4235
  %8858 = vmatpush.bf16.msra.mxu0 %v4231
  %8859 = vmatpush.bf16.msra.mxu0 %v4227
  %8860 = vmatpush.bf16.msra.mxu0 %v4223
  %8861 = vmatpush.bf16.msra.mxu0 %v4219
  %8862 = vmatmul.bf16.gmra.mxu0 %v7540
  %v8863 = vpop.f32.mrf.mxu0
  %v8864 = vadd.f32 %v8851, %v8863
  %v8865 = vpop.f32.mrf.mxu0
  %8866 = vdwg.mxu0
  %8867 = vmatpush.bf16.msra.mxu0 %v4279
  %8868 = vmatpush.bf16.msra.mxu0 %v4275
  %8869 = vmatpush.bf16.msra.mxu0 %v4271
  %8870 = vmatpush.bf16.msra.mxu0 %v4267
  %8871 = vmatpush.bf16.msra.mxu0 %v4263
  %8872 = vmatpush.bf16.msra.mxu0 %v4259
  %8873 = vmatpush.bf16.msra.mxu0 %v4255
  %8874 = vmatpush.bf16.msra.mxu0 %v4251
  %8875 = vmatmul.bf16.gmra.mxu0 %v7541
  %v8876 = vpop.f32.mrf.mxu0
  %v8877 = vadd.f32 %v8864, %v8876
  %v8878 = vpop.f32.mrf.mxu0
  %8879 = vdwg.mxu0
  %8880 = vmatpush.bf16.msra.mxu0 %v4311
  %8881 = vmatpush.bf16.msra.mxu0 %v4307
  %8882 = vmatpush.bf16.msra.mxu0 %v4303
  %8883 = vmatpush.bf16.msra.mxu0 %v4299
  %8884 = vmatpush.bf16.msra.mxu0 %v4295
  %8885 = vmatpush.bf16.msra.mxu0 %v4291
  %8886 = vmatpush.bf16.msra.mxu0 %v4287
  %8887 = vmatpush.bf16.msra.mxu0 %v4283
  %8888 = vmatmul.bf16.gmra.mxu0 %v7542
  %v8889 = vpop.f32.mrf.mxu0
  %v8890 = vadd.f32 %v8877, %v8889
  %v8891 = vpop.f32.mrf.mxu0
  %8892 = vdwg.mxu0
  %8893 = vmatpush.bf16.msra.mxu0 %v4343
  %8894 = vmatpush.bf16.msra.mxu0 %v4339
  %8895 = vmatpush.bf16.msra.mxu0 %v4335
  %8896 = vmatpush.bf16.msra.mxu0 %v4331
  %8897 = vmatpush.bf16.msra.mxu0 %v4327
  %8898 = vmatpush.bf16.msra.mxu0 %v4323
  %8899 = vmatpush.bf16.msra.mxu0 %v4319
  %8900 = vmatpush.bf16.msra.mxu0 %v4315
  %8901 = vmatmul.bf16.gmra.mxu0 %v7543
  %v8902 = vpop.f32.mrf.mxu0
  %v8903 = vadd.f32 %v8890, %v8902
  %v8904 = vpop.f32.mrf.mxu0
  %8905 = vdwg.mxu0
  %8906 = vmatpush.bf16.msra.mxu0 %v4375
  %8907 = vmatpush.bf16.msra.mxu0 %v4371
  %8908 = vmatpush.bf16.msra.mxu0 %v4367
  %8909 = vmatpush.bf16.msra.mxu0 %v4363
  %8910 = vmatpush.bf16.msra.mxu0 %v4359
  %8911 = vmatpush.bf16.msra.mxu0 %v4355
  %8912 = vmatpush.bf16.msra.mxu0 %v4351
  %8913 = vmatpush.bf16.msra.mxu0 %v4347
  %8914 = vmatmul.bf16.gmra.mxu0 %v7544
  %v8915 = vpop.f32.mrf.mxu0
  %v8916 = vadd.f32 %v8903, %v8915
  %v8917 = vpop.f32.mrf.mxu0
  %8918 = vdwg.mxu0
  %8919 = vmatpush.bf16.msra.mxu0 %v4407
  %8920 = vmatpush.bf16.msra.mxu0 %v4403
  %8921 = vmatpush.bf16.msra.mxu0 %v4399
  %8922 = vmatpush.bf16.msra.mxu0 %v4395
  %8923 = vmatpush.bf16.msra.mxu0 %v4391
  %8924 = vmatpush.bf16.msra.mxu0 %v4387
  %8925 = vmatpush.bf16.msra.mxu0 %v4383
  %8926 = vmatpush.bf16.msra.mxu0 %v4379
  %8927 = vmatmul.bf16.gmra.mxu0 %v7545
  %v8928 = vpop.f32.mrf.mxu0
  %v8929 = vadd.f32 %v8916, %v8928
  %v8930 = vpop.f32.mrf.mxu0
  %8931 = vdwg.mxu0
  %8932 = vmatpush.bf16.msra.mxu0 %v4439
  %8933 = vmatpush.bf16.msra.mxu0 %v4435
  %8934 = vmatpush.bf16.msra.mxu0 %v4431
  %8935 = vmatpush.bf16.msra.mxu0 %v4427
  %8936 = vmatpush.bf16.msra.mxu0 %v4423
  %8937 = vmatpush.bf16.msra.mxu0 %v4419
  %8938 = vmatpush.bf16.msra.mxu0 %v4415
  %8939 = vmatpush.bf16.msra.mxu0 %v4411
  %8940 = vmatmul.bf16.gmra.mxu0 %v7546
  %v8941 = vpop.f32.mrf.mxu0
  %v8942 = vadd.f32 %v8929, %v8941
  %v8943 = vpop.f32.mrf.mxu0
  %8944 = vdwg.mxu0
  %8945 = vmatpush.bf16.msra.mxu0 %v4471
  %8946 = vmatpush.bf16.msra.mxu0 %v4467
  %8947 = vmatpush.bf16.msra.mxu0 %v4463
  %8948 = vmatpush.bf16.msra.mxu0 %v4459
  %8949 = vmatpush.bf16.msra.mxu0 %v4455
  %8950 = vmatpush.bf16.msra.mxu0 %v4451
  %8951 = vmatpush.bf16.msra.mxu0 %v4447
  %8952 = vmatpush.bf16.msra.mxu0 %v4443
  %8953 = vmatmul.bf16.gmra.mxu0 %v7547
  %v8954 = vpop.f32.mrf.mxu0
  %v8955 = vadd.f32 %v8942, %v8954
  %v8956 = vpop.f32.mrf.mxu0
  %8957 = vdwg.mxu0
  %8958 = vmatpush.bf16.msra.mxu0 %v4503
  %8959 = vmatpush.bf16.msra.mxu0 %v4499
  %8960 = vmatpush.bf16.msra.mxu0 %v4495
  %8961 = vmatpush.bf16.msra.mxu0 %v4491
  %8962 = vmatpush.bf16.msra.mxu0 %v4487
  %8963 = vmatpush.bf16.msra.mxu0 %v4483
  %8964 = vmatpush.bf16.msra.mxu0 %v4479
  %8965 = vmatpush.bf16.msra.mxu0 %v4475
  %8966 = vmatmul.bf16.gmra.mxu0 %v7548
  %v8967 = vpop.f32.mrf.mxu0
  %v8968 = vadd.f32 %v8955, %v8967
  %v8969 = vpop.f32.mrf.mxu0
  %8970 = vdwg.mxu0
  %8971 = vmatpush.bf16.msra.mxu0 %v4535
  %8972 = vmatpush.bf16.msra.mxu0 %v4531
  %8973 = vmatpush.bf16.msra.mxu0 %v4527
  %8974 = vmatpush.bf16.msra.mxu0 %v4523
  %8975 = vmatpush.bf16.msra.mxu0 %v4519
  %8976 = vmatpush.bf16.msra.mxu0 %v4515
  %8977 = vmatpush.bf16.msra.mxu0 %v4511
  %8978 = vmatpush.bf16.msra.mxu0 %v4507
  %8979 = vmatmul.bf16.gmra.mxu0 %v7549
  %v8980 = vpop.f32.mrf.mxu0
  %v8981 = vadd.f32 %v8968, %v8980
  %v8982 = vpop.f32.mrf.mxu0
  %8983 = vdwg.mxu0
  %8984 = vmatpush.bf16.msra.mxu0 %v4567
  %8985 = vmatpush.bf16.msra.mxu0 %v4563
  %8986 = vmatpush.bf16.msra.mxu0 %v4559
  %8987 = vmatpush.bf16.msra.mxu0 %v4555
  %8988 = vmatpush.bf16.msra.mxu0 %v4551
  %8989 = vmatpush.bf16.msra.mxu0 %v4547
  %8990 = vmatpush.bf16.msra.mxu0 %v4543
  %8991 = vmatpush.bf16.msra.mxu0 %v4539
  %8992 = vmatmul.bf16.gmra.mxu0 %v7550
  %v8993 = vpop.f32.mrf.mxu0
  %v8994 = vadd.f32 %v8981, %v8993
  %v8995 = vpop.f32.mrf.mxu0
  %8996 = vdwg.mxu0
  %8997 = vmatpush.bf16.msra.mxu0 %v4599
  %8998 = vmatpush.bf16.msra.mxu0 %v4595
  %8999 = vmatpush.bf16.msra.mxu0 %v4591
  %9000 = vmatpush.bf16.msra.mxu0 %v4587
  %9001 = vmatpush.bf16.msra.mxu0 %v4583
  %9002 = vmatpush.bf16.msra.mxu0 %v4579
  %9003 = vmatpush.bf16.msra.mxu0 %v4575
  %9004 = vmatpush.bf16.msra.mxu0 %v4571
  %9005 = vmatmul.bf16.gmra.mxu0 %v7551
  %v9006 = vpop.f32.mrf.mxu0
  %v9007 = vadd.f32 %v8994, %v9006
  %v9008 = vpop.f32.mrf.mxu0
  %9009 = vdwg.mxu0
  %9010 = vmatpush.bf16.msra.mxu0 %v4631
  %9011 = vmatpush.bf16.msra.mxu0 %v4627
  %9012 = vmatpush.bf16.msra.mxu0 %v4623
  %9013 = vmatpush.bf16.msra.mxu0 %v4619
  %9014 = vmatpush.bf16.msra.mxu0 %v4615
  %9015 = vmatpush.bf16.msra.mxu0 %v4611
  %9016 = vmatpush.bf16.msra.mxu0 %v4607
  %9017 = vmatpush.bf16.msra.mxu0 %v4603
  %9018 = vmatmul.bf16.gmra.mxu0 %v7552
  %v9019 = vpop.f32.mrf.mxu0
  %v9020 = vadd.f32 %v9007, %v9019
  %v9021 = vpop.f32.mrf.mxu0
  %9022 = vdwg.mxu0
  %9023 = vmatpush.bf16.msra.mxu0 %v4663
  %9024 = vmatpush.bf16.msra.mxu0 %v4659
  %9025 = vmatpush.bf16.msra.mxu0 %v4655
  %9026 = vmatpush.bf16.msra.mxu0 %v4651
  %9027 = vmatpush.bf16.msra.mxu0 %v4647
  %9028 = vmatpush.bf16.msra.mxu0 %v4643
  %9029 = vmatpush.bf16.msra.mxu0 %v4639
  %9030 = vmatpush.bf16.msra.mxu0 %v4635
  %9031 = vmatmul.bf16.gmra.mxu0 %v7553
  %v9032 = vpop.f32.mrf.mxu0
  %v9033 = vadd.f32 %v9020, %v9032
  %v9034 = vpop.f32.mrf.mxu0
  %9035 = vdwg.mxu0
  %9036 = vmatpush.bf16.msra.mxu0 %v4695
  %9037 = vmatpush.bf16.msra.mxu0 %v4691
  %9038 = vmatpush.bf16.msra.mxu0 %v4687
  %9039 = vmatpush.bf16.msra.mxu0 %v4683
  %9040 = vmatpush.bf16.msra.mxu0 %v4679
  %9041 = vmatpush.bf16.msra.mxu0 %v4675
  %9042 = vmatpush.bf16.msra.mxu0 %v4671
  %9043 = vmatpush.bf16.msra.mxu0 %v4667
  %9044 = vmatmul.bf16.gmra.mxu0 %v7554
  %v9045 = vpop.f32.mrf.mxu0
  %v9046 = vadd.f32 %v9033, %v9045
  %v9047 = vpop.f32.mrf.mxu0
  %9048 = vdwg.mxu0
  %9049 = vmatpush.bf16.msra.mxu0 %v4727
  %9050 = vmatpush.bf16.msra.mxu0 %v4723
  %9051 = vmatpush.bf16.msra.mxu0 %v4719
  %9052 = vmatpush.bf16.msra.mxu0 %v4715
  %9053 = vmatpush.bf16.msra.mxu0 %v4711
  %9054 = vmatpush.bf16.msra.mxu0 %v4707
  %9055 = vmatpush.bf16.msra.mxu0 %v4703
  %9056 = vmatpush.bf16.msra.mxu0 %v4699
  %9057 = vmatmul.bf16.gmra.mxu0 %v7555
  %v9058 = vpop.f32.mrf.mxu0
  %v9059 = vadd.f32 %v9046, %v9058
  %v9060 = vpop.f32.mrf.mxu0
  %9061 = vdwg.mxu0
  %9062 = vmatpush.bf16.msra.mxu0 %v4759
  %9063 = vmatpush.bf16.msra.mxu0 %v4755
  %9064 = vmatpush.bf16.msra.mxu0 %v4751
  %9065 = vmatpush.bf16.msra.mxu0 %v4747
  %9066 = vmatpush.bf16.msra.mxu0 %v4743
  %9067 = vmatpush.bf16.msra.mxu0 %v4739
  %9068 = vmatpush.bf16.msra.mxu0 %v4735
  %9069 = vmatpush.bf16.msra.mxu0 %v4731
  %9070 = vmatmul.bf16.gmra.mxu0 %v7556
  %v9071 = vpop.f32.mrf.mxu0
  %v9072 = vadd.f32 %v9059, %v9071
  %v9073 = vpop.f32.mrf.mxu0
  %9074 = vdwg.mxu0
  %9075 = vmatpush.bf16.msra.mxu0 %v4791
  %9076 = vmatpush.bf16.msra.mxu0 %v4787
  %9077 = vmatpush.bf16.msra.mxu0 %v4783
  %9078 = vmatpush.bf16.msra.mxu0 %v4779
  %9079 = vmatpush.bf16.msra.mxu0 %v4775
  %9080 = vmatpush.bf16.msra.mxu0 %v4771
  %9081 = vmatpush.bf16.msra.mxu0 %v4767
  %9082 = vmatpush.bf16.msra.mxu0 %v4763
  %9083 = vmatmul.bf16.gmra.mxu0 %v7557
  %v9084 = vpop.f32.mrf.mxu0
  %v9085 = vadd.f32 %v9072, %v9084
  %v9086 = vpop.f32.mrf.mxu0
  %9087 = vdwg.mxu0
  %9088 = vmatpush.bf16.msra.mxu0 %v4823
  %9089 = vmatpush.bf16.msra.mxu0 %v4819
  %9090 = vmatpush.bf16.msra.mxu0 %v4815
  %9091 = vmatpush.bf16.msra.mxu0 %v4811
  %9092 = vmatpush.bf16.msra.mxu0 %v4807
  %9093 = vmatpush.bf16.msra.mxu0 %v4803
  %9094 = vmatpush.bf16.msra.mxu0 %v4799
  %9095 = vmatpush.bf16.msra.mxu0 %v4795
  %9096 = vmatmul.bf16.gmra.mxu0 %v7558
  %v9097 = vpop.f32.mrf.mxu0
  %v9098 = vadd.f32 %v9085, %v9097
  %v9099 = vpop.f32.mrf.mxu0
  %9100 = vdwg.mxu0
  %9101 = vmatpush.bf16.msra.mxu0 %v4855
  %9102 = vmatpush.bf16.msra.mxu0 %v4851
  %9103 = vmatpush.bf16.msra.mxu0 %v4847
  %9104 = vmatpush.bf16.msra.mxu0 %v4843
  %9105 = vmatpush.bf16.msra.mxu0 %v4839
  %9106 = vmatpush.bf16.msra.mxu0 %v4835
  %9107 = vmatpush.bf16.msra.mxu0 %v4831
  %9108 = vmatpush.bf16.msra.mxu0 %v4827
  %9109 = vmatmul.bf16.gmra.mxu0 %v7559
  %v9110 = vpop.f32.mrf.mxu0
  %v9111 = vadd.f32 %v9098, %v9110
  %v9112 = vpop.f32.mrf.mxu0
  %9113 = vdwg.mxu0
  %9114 = vmatpush.bf16.msra.mxu0 %v4887
  %9115 = vmatpush.bf16.msra.mxu0 %v4883
  %9116 = vmatpush.bf16.msra.mxu0 %v4879
  %9117 = vmatpush.bf16.msra.mxu0 %v4875
  %9118 = vmatpush.bf16.msra.mxu0 %v4871
  %9119 = vmatpush.bf16.msra.mxu0 %v4867
  %9120 = vmatpush.bf16.msra.mxu0 %v4863
  %9121 = vmatpush.bf16.msra.mxu0 %v4859
  %9122 = vmatmul.bf16.gmra.mxu0 %v7560
  %v9123 = vpop.f32.mrf.mxu0
  %v9124 = vadd.f32 %v9111, %v9123
  %v9125 = vpop.f32.mrf.mxu0
  %9126 = vdwg.mxu0
  %9127 = vmatpush.bf16.msra.mxu0 %v4919
  %9128 = vmatpush.bf16.msra.mxu0 %v4915
  %9129 = vmatpush.bf16.msra.mxu0 %v4911
  %9130 = vmatpush.bf16.msra.mxu0 %v4907
  %9131 = vmatpush.bf16.msra.mxu0 %v4903
  %9132 = vmatpush.bf16.msra.mxu0 %v4899
  %9133 = vmatpush.bf16.msra.mxu0 %v4895
  %9134 = vmatpush.bf16.msra.mxu0 %v4891
  %9135 = vmatmul.bf16.gmra.mxu0 %v7561
  %v9136 = vpop.f32.mrf.mxu0
  %v9137 = vadd.f32 %v9124, %v9136
  %v9138 = vpop.f32.mrf.mxu0
  %9139 = vdwg.mxu0
  %9140 = vmatpush.bf16.msra.mxu0 %v4951
  %9141 = vmatpush.bf16.msra.mxu0 %v4947
  %9142 = vmatpush.bf16.msra.mxu0 %v4943
  %9143 = vmatpush.bf16.msra.mxu0 %v4939
  %9144 = vmatpush.bf16.msra.mxu0 %v4935
  %9145 = vmatpush.bf16.msra.mxu0 %v4931
  %9146 = vmatpush.bf16.msra.mxu0 %v4927
  %9147 = vmatpush.bf16.msra.mxu0 %v4923
  %9148 = vmatmul.bf16.gmra.mxu0 %v7562
  %v9149 = vpop.f32.mrf.mxu0
  %v9150 = vadd.f32 %v9137, %v9149
  %v9151 = vpop.f32.mrf.mxu0
  %9152 = vdwg.mxu0
  %v9153 = vmax.f32 %v6299, %v7980
  %v9154 = vmax.f32 %v6689, %v8370
  %v9155 = vmax.f32 %v7079, %v8760
  %v9156 = vmax.f32 %v7469, %v9150
  %s9157 = scalar_lea.vmem %s0, 240
  %v9158 = vld [vmem:[%s9157] sm:$0xff]
  %v9159 = vld [vmem:[%s9157 + $0x8] sm:$0xff]
  %v9160 = vld [vmem:[%s9157 + $0x10] sm:$0xff]
  %v9161 = vld [vmem:[%s9157 + $0x18] sm:$0xff]
  %v9162 = vld [vmem:[%s9157 + $0x20] sm:$0xff]
  %v9163 = vld [vmem:[%s9157 + $0x28] sm:$0xff]
  %v9164 = vld [vmem:[%s9157 + $0x30] sm:$0xff]
  %v9165 = vld [vmem:[%s9157 + $0x38] sm:$0xff]
  %v9166 = vld [vmem:[%s9157 + $0x40] sm:$0xff]
  %v9167 = vld [vmem:[%s9157 + $0x48] sm:$0xff]
  %v9168 = vld [vmem:[%s9157 + $0x50] sm:$0xff]
  %v9169 = vld [vmem:[%s9157 + $0x58] sm:$0xff]
  %v9170 = vld [vmem:[%s9157 + $0x60] sm:$0xff]
  %v9171 = vld [vmem:[%s9157 + $0x68] sm:$0xff]
  %v9172 = vld [vmem:[%s9157 + $0x70] sm:$0xff]
  %v9188 = vunpack.c.l.b16 %v9158
  %v9189 = vunpack.c.h.b16 %v9158
  %v9190 = vunpack.c.l.b16 %v9159
  %v9191 = vunpack.c.h.b16 %v9159
  %v9192 = vunpack.c.l.b16 %v9160
  %v9193 = vunpack.c.h.b16 %v9160
  %v9194 = vunpack.c.l.b16 %v9161
  %v9195 = vunpack.c.h.b16 %v9161
  %v9196 = vunpack.c.l.b16 %v9162
  %v9197 = vunpack.c.h.b16 %v9162
  %v9198 = vunpack.c.l.b16 %v9163
  %v9199 = vunpack.c.h.b16 %v9163
  %v9200 = vunpack.c.l.b16 %v9164
  %v9201 = vunpack.c.h.b16 %v9164
  %v9202 = vunpack.c.l.b16 %v9165
  %v9203 = vunpack.c.h.b16 %v9165
  %v9204 = vunpack.c.l.b16 %v9166
  %v9205 = vunpack.c.h.b16 %v9166
  %v9206 = vunpack.c.l.b16 %v9167
  %v9207 = vunpack.c.h.b16 %v9167
  %v9208 = vunpack.c.l.b16 %v9168
  %v9209 = vunpack.c.h.b16 %v9168
  %v9210 = vunpack.c.l.b16 %v9169
  %v9211 = vunpack.c.h.b16 %v9169
  %v9212 = vunpack.c.l.b16 %v9170
  %v9213 = vunpack.c.h.b16 %v9170
  %v9214 = vunpack.c.l.b16 %v9171
  %v9215 = vunpack.c.h.b16 %v9171
  %v9216 = vunpack.c.l.b16 %v9172
  %v9217 = vunpack.c.h.b16 %v9172
  %v9218 = vpack.c.b16 %v9188, %v9188
  %v9219 = vpack.c.b16 %v9189, %v9189
  %v9220 = vpack.c.b16 %v9190, %v9190
  %v9221 = vpack.c.b16 %v9191, %v9191
  %v9222 = vpack.c.b16 %v9192, %v9192
  %v9223 = vpack.c.b16 %v9193, %v9193
  %v9224 = vpack.c.b16 %v9194, %v9194
  %v9225 = vpack.c.b16 %v9195, %v9195
  %v9226 = vpack.c.b16 %v9196, %v9196
  %v9227 = vpack.c.b16 %v9197, %v9197
  %v9228 = vpack.c.b16 %v9198, %v9198
  %v9229 = vpack.c.b16 %v9199, %v9199
  %v9230 = vpack.c.b16 %v9200, %v9200
  %v9231 = vpack.c.b16 %v9201, %v9201
  %v9232 = vpack.c.b16 %v9202, %v9202
  %v9233 = vpack.c.b16 %v9203, %v9203
  %v9234 = vpack.c.b16 %v9204, %v9204
  %v9235 = vpack.c.b16 %v9205, %v9205
  %v9236 = vpack.c.b16 %v9206, %v9206
  %v9237 = vpack.c.b16 %v9207, %v9207
  %v9238 = vpack.c.b16 %v9208, %v9208
  %v9239 = vpack.c.b16 %v9209, %v9209
  %v9240 = vpack.c.b16 %v9210, %v9210
  %v9241 = vpack.c.b16 %v9211, %v9211
  %v9242 = vpack.c.b16 %v9212, %v9212
  %v9243 = vpack.c.b16 %v9213, %v9213
  %v9244 = vpack.c.b16 %v9214, %v9214
  %v9245 = vpack.c.b16 %v9215, %v9215
  %v9246 = vpack.c.b16 %v9216, %v9216
  %v9247 = vpack.c.b16 %v9217, %v9217
  %9278 = vmatpush.bf16.msra.mxu0 %v4020
  %9279 = vmatpush.bf16.msra.mxu0 %v4016
  %9280 = vmatpush.bf16.msra.mxu0 %v4012
  %9281 = vmatpush.bf16.msra.mxu0 %v4008
  %9282 = vmatpush.bf16.msra.mxu0 %v4004
  %9283 = vmatpush.bf16.msra.mxu0 %v4000
  %9284 = vmatpush.bf16.msra.mxu0 %v3996
  %9285 = vmatpush.bf16.msra.mxu0 %v3992
  %9286 = vmatmul.bf16.gmra.mxu0 %v9218
  %v9287 = vpop.f32.mrf.mxu0
  %v9288 = vadd.f32 0.0, %v9287
  %v9289 = vpop.f32.mrf.mxu0
  %9290 = vdwg.mxu0
  %9291 = vmatpush.bf16.msra.mxu0 %v4052
  %9292 = vmatpush.bf16.msra.mxu0 %v4048
  %9293 = vmatpush.bf16.msra.mxu0 %v4044
  %9294 = vmatpush.bf16.msra.mxu0 %v4040
  %9295 = vmatpush.bf16.msra.mxu0 %v4036
  %9296 = vmatpush.bf16.msra.mxu0 %v4032
  %9297 = vmatpush.bf16.msra.mxu0 %v4028
  %9298 = vmatpush.bf16.msra.mxu0 %v4024
  %9299 = vmatmul.bf16.gmra.mxu0 %v9219
  %v9300 = vpop.f32.mrf.mxu0
  %v9301 = vadd.f32 %v9288, %v9300
  %v9302 = vpop.f32.mrf.mxu0
  %9303 = vdwg.mxu0
  %9304 = vmatpush.bf16.msra.mxu0 %v4084
  %9305 = vmatpush.bf16.msra.mxu0 %v4080
  %9306 = vmatpush.bf16.msra.mxu0 %v4076
  %9307 = vmatpush.bf16.msra.mxu0 %v4072
  %9308 = vmatpush.bf16.msra.mxu0 %v4068
  %9309 = vmatpush.bf16.msra.mxu0 %v4064
  %9310 = vmatpush.bf16.msra.mxu0 %v4060
  %9311 = vmatpush.bf16.msra.mxu0 %v4056
  %9312 = vmatmul.bf16.gmra.mxu0 %v9220
  %v9313 = vpop.f32.mrf.mxu0
  %v9314 = vadd.f32 %v9301, %v9313
  %v9315 = vpop.f32.mrf.mxu0
  %9316 = vdwg.mxu0
  %9317 = vmatpush.bf16.msra.mxu0 %v4116
  %9318 = vmatpush.bf16.msra.mxu0 %v4112
  %9319 = vmatpush.bf16.msra.mxu0 %v4108
  %9320 = vmatpush.bf16.msra.mxu0 %v4104
  %9321 = vmatpush.bf16.msra.mxu0 %v4100
  %9322 = vmatpush.bf16.msra.mxu0 %v4096
  %9323 = vmatpush.bf16.msra.mxu0 %v4092
  %9324 = vmatpush.bf16.msra.mxu0 %v4088
  %9325 = vmatmul.bf16.gmra.mxu0 %v9221
  %v9326 = vpop.f32.mrf.mxu0
  %v9327 = vadd.f32 %v9314, %v9326
  %v9328 = vpop.f32.mrf.mxu0
  %9329 = vdwg.mxu0
  %9330 = vmatpush.bf16.msra.mxu0 %v4148
  %9331 = vmatpush.bf16.msra.mxu0 %v4144
  %9332 = vmatpush.bf16.msra.mxu0 %v4140
  %9333 = vmatpush.bf16.msra.mxu0 %v4136
  %9334 = vmatpush.bf16.msra.mxu0 %v4132
  %9335 = vmatpush.bf16.msra.mxu0 %v4128
  %9336 = vmatpush.bf16.msra.mxu0 %v4124
  %9337 = vmatpush.bf16.msra.mxu0 %v4120
  %9338 = vmatmul.bf16.gmra.mxu0 %v9222
  %v9339 = vpop.f32.mrf.mxu0
  %v9340 = vadd.f32 %v9327, %v9339
  %v9341 = vpop.f32.mrf.mxu0
  %9342 = vdwg.mxu0
  %9343 = vmatpush.bf16.msra.mxu0 %v4180
  %9344 = vmatpush.bf16.msra.mxu0 %v4176
  %9345 = vmatpush.bf16.msra.mxu0 %v4172
  %9346 = vmatpush.bf16.msra.mxu0 %v4168
  %9347 = vmatpush.bf16.msra.mxu0 %v4164
  %9348 = vmatpush.bf16.msra.mxu0 %v4160
  %9349 = vmatpush.bf16.msra.mxu0 %v4156
  %9350 = vmatpush.bf16.msra.mxu0 %v4152
  %9351 = vmatmul.bf16.gmra.mxu0 %v9223
  %v9352 = vpop.f32.mrf.mxu0
  %v9353 = vadd.f32 %v9340, %v9352
  %v9354 = vpop.f32.mrf.mxu0
  %9355 = vdwg.mxu0
  %9356 = vmatpush.bf16.msra.mxu0 %v4212
  %9357 = vmatpush.bf16.msra.mxu0 %v4208
  %9358 = vmatpush.bf16.msra.mxu0 %v4204
  %9359 = vmatpush.bf16.msra.mxu0 %v4200
  %9360 = vmatpush.bf16.msra.mxu0 %v4196
  %9361 = vmatpush.bf16.msra.mxu0 %v4192
  %9362 = vmatpush.bf16.msra.mxu0 %v4188
  %9363 = vmatpush.bf16.msra.mxu0 %v4184
  %9364 = vmatmul.bf16.gmra.mxu0 %v9224
  %v9365 = vpop.f32.mrf.mxu0
  %v9366 = vadd.f32 %v9353, %v9365
  %v9367 = vpop.f32.mrf.mxu0
  %9368 = vdwg.mxu0
  %9369 = vmatpush.bf16.msra.mxu0 %v4244
  %9370 = vmatpush.bf16.msra.mxu0 %v4240
  %9371 = vmatpush.bf16.msra.mxu0 %v4236
  %9372 = vmatpush.bf16.msra.mxu0 %v4232
  %9373 = vmatpush.bf16.msra.mxu0 %v4228
  %9374 = vmatpush.bf16.msra.mxu0 %v4224
  %9375 = vmatpush.bf16.msra.mxu0 %v4220
  %9376 = vmatpush.bf16.msra.mxu0 %v4216
  %9377 = vmatmul.bf16.gmra.mxu0 %v9225
  %v9378 = vpop.f32.mrf.mxu0
  %v9379 = vadd.f32 %v9366, %v9378
  %v9380 = vpop.f32.mrf.mxu0
  %9381 = vdwg.mxu0
  %9382 = vmatpush.bf16.msra.mxu0 %v4276
  %9383 = vmatpush.bf16.msra.mxu0 %v4272
  %9384 = vmatpush.bf16.msra.mxu0 %v4268
  %9385 = vmatpush.bf16.msra.mxu0 %v4264
  %9386 = vmatpush.bf16.msra.mxu0 %v4260
  %9387 = vmatpush.bf16.msra.mxu0 %v4256
  %9388 = vmatpush.bf16.msra.mxu0 %v4252
  %9389 = vmatpush.bf16.msra.mxu0 %v4248
  %9390 = vmatmul.bf16.gmra.mxu0 %v9226
  %v9391 = vpop.f32.mrf.mxu0
  %v9392 = vadd.f32 %v9379, %v9391
  %v9393 = vpop.f32.mrf.mxu0
  %9394 = vdwg.mxu0
  %9395 = vmatpush.bf16.msra.mxu0 %v4308
  %9396 = vmatpush.bf16.msra.mxu0 %v4304
  %9397 = vmatpush.bf16.msra.mxu0 %v4300
  %9398 = vmatpush.bf16.msra.mxu0 %v4296
  %9399 = vmatpush.bf16.msra.mxu0 %v4292
  %9400 = vmatpush.bf16.msra.mxu0 %v4288
  %9401 = vmatpush.bf16.msra.mxu0 %v4284
  %9402 = vmatpush.bf16.msra.mxu0 %v4280
  %9403 = vmatmul.bf16.gmra.mxu0 %v9227
  %v9404 = vpop.f32.mrf.mxu0
  %v9405 = vadd.f32 %v9392, %v9404
  %v9406 = vpop.f32.mrf.mxu0
  %9407 = vdwg.mxu0
  %9408 = vmatpush.bf16.msra.mxu0 %v4340
  %9409 = vmatpush.bf16.msra.mxu0 %v4336
  %9410 = vmatpush.bf16.msra.mxu0 %v4332
  %9411 = vmatpush.bf16.msra.mxu0 %v4328
  %9412 = vmatpush.bf16.msra.mxu0 %v4324
  %9413 = vmatpush.bf16.msra.mxu0 %v4320
  %9414 = vmatpush.bf16.msra.mxu0 %v4316
  %9415 = vmatpush.bf16.msra.mxu0 %v4312
  %9416 = vmatmul.bf16.gmra.mxu0 %v9228
  %v9417 = vpop.f32.mrf.mxu0
  %v9418 = vadd.f32 %v9405, %v9417
  %v9419 = vpop.f32.mrf.mxu0
  %9420 = vdwg.mxu0
  %9421 = vmatpush.bf16.msra.mxu0 %v4372
  %9422 = vmatpush.bf16.msra.mxu0 %v4368
  %9423 = vmatpush.bf16.msra.mxu0 %v4364
  %9424 = vmatpush.bf16.msra.mxu0 %v4360
  %9425 = vmatpush.bf16.msra.mxu0 %v4356
  %9426 = vmatpush.bf16.msra.mxu0 %v4352
  %9427 = vmatpush.bf16.msra.mxu0 %v4348
  %9428 = vmatpush.bf16.msra.mxu0 %v4344
  %9429 = vmatmul.bf16.gmra.mxu0 %v9229
  %v9430 = vpop.f32.mrf.mxu0
  %v9431 = vadd.f32 %v9418, %v9430
  %v9432 = vpop.f32.mrf.mxu0
  %9433 = vdwg.mxu0
  %9434 = vmatpush.bf16.msra.mxu0 %v4404
  %9435 = vmatpush.bf16.msra.mxu0 %v4400
  %9436 = vmatpush.bf16.msra.mxu0 %v4396
  %9437 = vmatpush.bf16.msra.mxu0 %v4392
  %9438 = vmatpush.bf16.msra.mxu0 %v4388
  %9439 = vmatpush.bf16.msra.mxu0 %v4384
  %9440 = vmatpush.bf16.msra.mxu0 %v4380
  %9441 = vmatpush.bf16.msra.mxu0 %v4376
  %9442 = vmatmul.bf16.gmra.mxu0 %v9230
  %v9443 = vpop.f32.mrf.mxu0
  %v9444 = vadd.f32 %v9431, %v9443
  %v9445 = vpop.f32.mrf.mxu0
  %9446 = vdwg.mxu0
  %9447 = vmatpush.bf16.msra.mxu0 %v4436
  %9448 = vmatpush.bf16.msra.mxu0 %v4432
  %9449 = vmatpush.bf16.msra.mxu0 %v4428
  %9450 = vmatpush.bf16.msra.mxu0 %v4424
  %9451 = vmatpush.bf16.msra.mxu0 %v4420
  %9452 = vmatpush.bf16.msra.mxu0 %v4416
  %9453 = vmatpush.bf16.msra.mxu0 %v4412
  %9454 = vmatpush.bf16.msra.mxu0 %v4408
  %9455 = vmatmul.bf16.gmra.mxu0 %v9231
  %v9456 = vpop.f32.mrf.mxu0
  %v9457 = vadd.f32 %v9444, %v9456
  %v9458 = vpop.f32.mrf.mxu0
  %9459 = vdwg.mxu0
  %9460 = vmatpush.bf16.msra.mxu0 %v4468
  %9461 = vmatpush.bf16.msra.mxu0 %v4464
  %9462 = vmatpush.bf16.msra.mxu0 %v4460
  %9463 = vmatpush.bf16.msra.mxu0 %v4456
  %9464 = vmatpush.bf16.msra.mxu0 %v4452
  %9465 = vmatpush.bf16.msra.mxu0 %v4448
  %9466 = vmatpush.bf16.msra.mxu0 %v4444
  %9467 = vmatpush.bf16.msra.mxu0 %v4440
  %9468 = vmatmul.bf16.gmra.mxu0 %v9232
  %v9469 = vpop.f32.mrf.mxu0
  %v9470 = vadd.f32 %v9457, %v9469
  %v9471 = vpop.f32.mrf.mxu0
  %9472 = vdwg.mxu0
  %9473 = vmatpush.bf16.msra.mxu0 %v4500
  %9474 = vmatpush.bf16.msra.mxu0 %v4496
  %9475 = vmatpush.bf16.msra.mxu0 %v4492
  %9476 = vmatpush.bf16.msra.mxu0 %v4488
  %9477 = vmatpush.bf16.msra.mxu0 %v4484
  %9478 = vmatpush.bf16.msra.mxu0 %v4480
  %9479 = vmatpush.bf16.msra.mxu0 %v4476
  %9480 = vmatpush.bf16.msra.mxu0 %v4472
  %9481 = vmatmul.bf16.gmra.mxu0 %v9233
  %v9482 = vpop.f32.mrf.mxu0
  %v9483 = vadd.f32 %v9470, %v9482
  %v9484 = vpop.f32.mrf.mxu0
  %9485 = vdwg.mxu0
  %9486 = vmatpush.bf16.msra.mxu0 %v4532
  %9487 = vmatpush.bf16.msra.mxu0 %v4528
  %9488 = vmatpush.bf16.msra.mxu0 %v4524
  %9489 = vmatpush.bf16.msra.mxu0 %v4520
  %9490 = vmatpush.bf16.msra.mxu0 %v4516
  %9491 = vmatpush.bf16.msra.mxu0 %v4512
  %9492 = vmatpush.bf16.msra.mxu0 %v4508
  %9493 = vmatpush.bf16.msra.mxu0 %v4504
  %9494 = vmatmul.bf16.gmra.mxu0 %v9234
  %v9495 = vpop.f32.mrf.mxu0
  %v9496 = vadd.f32 %v9483, %v9495
  %v9497 = vpop.f32.mrf.mxu0
  %9498 = vdwg.mxu0
  %9499 = vmatpush.bf16.msra.mxu0 %v4564
  %9500 = vmatpush.bf16.msra.mxu0 %v4560
  %9501 = vmatpush.bf16.msra.mxu0 %v4556
  %9502 = vmatpush.bf16.msra.mxu0 %v4552
  %9503 = vmatpush.bf16.msra.mxu0 %v4548
  %9504 = vmatpush.bf16.msra.mxu0 %v4544
  %9505 = vmatpush.bf16.msra.mxu0 %v4540
  %9506 = vmatpush.bf16.msra.mxu0 %v4536
  %9507 = vmatmul.bf16.gmra.mxu0 %v9235
  %v9508 = vpop.f32.mrf.mxu0
  %v9509 = vadd.f32 %v9496, %v9508
  %v9510 = vpop.f32.mrf.mxu0
  %9511 = vdwg.mxu0
  %9512 = vmatpush.bf16.msra.mxu0 %v4596
  %9513 = vmatpush.bf16.msra.mxu0 %v4592
  %9514 = vmatpush.bf16.msra.mxu0 %v4588
  %9515 = vmatpush.bf16.msra.mxu0 %v4584
  %9516 = vmatpush.bf16.msra.mxu0 %v4580
  %9517 = vmatpush.bf16.msra.mxu0 %v4576
  %9518 = vmatpush.bf16.msra.mxu0 %v4572
  %9519 = vmatpush.bf16.msra.mxu0 %v4568
  %9520 = vmatmul.bf16.gmra.mxu0 %v9236
  %v9521 = vpop.f32.mrf.mxu0
  %v9522 = vadd.f32 %v9509, %v9521
  %v9523 = vpop.f32.mrf.mxu0
  %9524 = vdwg.mxu0
  %9525 = vmatpush.bf16.msra.mxu0 %v4628
  %9526 = vmatpush.bf16.msra.mxu0 %v4624
  %9527 = vmatpush.bf16.msra.mxu0 %v4620
  %9528 = vmatpush.bf16.msra.mxu0 %v4616
  %9529 = vmatpush.bf16.msra.mxu0 %v4612
  %9530 = vmatpush.bf16.msra.mxu0 %v4608
  %9531 = vmatpush.bf16.msra.mxu0 %v4604
  %9532 = vmatpush.bf16.msra.mxu0 %v4600
  %9533 = vmatmul.bf16.gmra.mxu0 %v9237
  %v9534 = vpop.f32.mrf.mxu0
  %v9535 = vadd.f32 %v9522, %v9534
  %v9536 = vpop.f32.mrf.mxu0
  %9537 = vdwg.mxu0
  %9538 = vmatpush.bf16.msra.mxu0 %v4660
  %9539 = vmatpush.bf16.msra.mxu0 %v4656
  %9540 = vmatpush.bf16.msra.mxu0 %v4652
  %9541 = vmatpush.bf16.msra.mxu0 %v4648
  %9542 = vmatpush.bf16.msra.mxu0 %v4644
  %9543 = vmatpush.bf16.msra.mxu0 %v4640
  %9544 = vmatpush.bf16.msra.mxu0 %v4636
  %9545 = vmatpush.bf16.msra.mxu0 %v4632
  %9546 = vmatmul.bf16.gmra.mxu0 %v9238
  %v9547 = vpop.f32.mrf.mxu0
  %v9548 = vadd.f32 %v9535, %v9547
  %v9549 = vpop.f32.mrf.mxu0
  %9550 = vdwg.mxu0
  %9551 = vmatpush.bf16.msra.mxu0 %v4692
  %9552 = vmatpush.bf16.msra.mxu0 %v4688
  %9553 = vmatpush.bf16.msra.mxu0 %v4684
  %9554 = vmatpush.bf16.msra.mxu0 %v4680
  %9555 = vmatpush.bf16.msra.mxu0 %v4676
  %9556 = vmatpush.bf16.msra.mxu0 %v4672
  %9557 = vmatpush.bf16.msra.mxu0 %v4668
  %9558 = vmatpush.bf16.msra.mxu0 %v4664
  %9559 = vmatmul.bf16.gmra.mxu0 %v9239
  %v9560 = vpop.f32.mrf.mxu0
  %v9561 = vadd.f32 %v9548, %v9560
  %v9562 = vpop.f32.mrf.mxu0
  %9563 = vdwg.mxu0
  %9564 = vmatpush.bf16.msra.mxu0 %v4724
  %9565 = vmatpush.bf16.msra.mxu0 %v4720
  %9566 = vmatpush.bf16.msra.mxu0 %v4716
  %9567 = vmatpush.bf16.msra.mxu0 %v4712
  %9568 = vmatpush.bf16.msra.mxu0 %v4708
  %9569 = vmatpush.bf16.msra.mxu0 %v4704
  %9570 = vmatpush.bf16.msra.mxu0 %v4700
  %9571 = vmatpush.bf16.msra.mxu0 %v4696
  %9572 = vmatmul.bf16.gmra.mxu0 %v9240
  %v9573 = vpop.f32.mrf.mxu0
  %v9574 = vadd.f32 %v9561, %v9573
  %v9575 = vpop.f32.mrf.mxu0
  %9576 = vdwg.mxu0
  %9577 = vmatpush.bf16.msra.mxu0 %v4756
  %9578 = vmatpush.bf16.msra.mxu0 %v4752
  %9579 = vmatpush.bf16.msra.mxu0 %v4748
  %9580 = vmatpush.bf16.msra.mxu0 %v4744
  %9581 = vmatpush.bf16.msra.mxu0 %v4740
  %9582 = vmatpush.bf16.msra.mxu0 %v4736
  %9583 = vmatpush.bf16.msra.mxu0 %v4732
  %9584 = vmatpush.bf16.msra.mxu0 %v4728
  %9585 = vmatmul.bf16.gmra.mxu0 %v9241
  %v9586 = vpop.f32.mrf.mxu0
  %v9587 = vadd.f32 %v9574, %v9586
  %v9588 = vpop.f32.mrf.mxu0
  %9589 = vdwg.mxu0
  %9590 = vmatpush.bf16.msra.mxu0 %v4788
  %9591 = vmatpush.bf16.msra.mxu0 %v4784
  %9592 = vmatpush.bf16.msra.mxu0 %v4780
  %9593 = vmatpush.bf16.msra.mxu0 %v4776
  %9594 = vmatpush.bf16.msra.mxu0 %v4772
  %9595 = vmatpush.bf16.msra.mxu0 %v4768
  %9596 = vmatpush.bf16.msra.mxu0 %v4764
  %9597 = vmatpush.bf16.msra.mxu0 %v4760
  %9598 = vmatmul.bf16.gmra.mxu0 %v9242
  %v9599 = vpop.f32.mrf.mxu0
  %v9600 = vadd.f32 %v9587, %v9599
  %v9601 = vpop.f32.mrf.mxu0
  %9602 = vdwg.mxu0
  %9603 = vmatpush.bf16.msra.mxu0 %v4820
  %9604 = vmatpush.bf16.msra.mxu0 %v4816
  %9605 = vmatpush.bf16.msra.mxu0 %v4812
  %9606 = vmatpush.bf16.msra.mxu0 %v4808
  %9607 = vmatpush.bf16.msra.mxu0 %v4804
  %9608 = vmatpush.bf16.msra.mxu0 %v4800
  %9609 = vmatpush.bf16.msra.mxu0 %v4796
  %9610 = vmatpush.bf16.msra.mxu0 %v4792
  %9611 = vmatmul.bf16.gmra.mxu0 %v9243
  %v9612 = vpop.f32.mrf.mxu0
  %v9613 = vadd.f32 %v9600, %v9612
  %v9614 = vpop.f32.mrf.mxu0
  %9615 = vdwg.mxu0
  %9616 = vmatpush.bf16.msra.mxu0 %v4852
  %9617 = vmatpush.bf16.msra.mxu0 %v4848
  %9618 = vmatpush.bf16.msra.mxu0 %v4844
  %9619 = vmatpush.bf16.msra.mxu0 %v4840
  %9620 = vmatpush.bf16.msra.mxu0 %v4836
  %9621 = vmatpush.bf16.msra.mxu0 %v4832
  %9622 = vmatpush.bf16.msra.mxu0 %v4828
  %9623 = vmatpush.bf16.msra.mxu0 %v4824
  %9624 = vmatmul.bf16.gmra.mxu0 %v9244
  %v9625 = vpop.f32.mrf.mxu0
  %v9626 = vadd.f32 %v9613, %v9625
  %v9627 = vpop.f32.mrf.mxu0
  %9628 = vdwg.mxu0
  %9629 = vmatpush.bf16.msra.mxu0 %v4884
  %9630 = vmatpush.bf16.msra.mxu0 %v4880
  %9631 = vmatpush.bf16.msra.mxu0 %v4876
  %9632 = vmatpush.bf16.msra.mxu0 %v4872
  %9633 = vmatpush.bf16.msra.mxu0 %v4868
  %9634 = vmatpush.bf16.msra.mxu0 %v4864
  %9635 = vmatpush.bf16.msra.mxu0 %v4860
  %9636 = vmatpush.bf16.msra.mxu0 %v4856
  %9637 = vmatmul.bf16.gmra.mxu0 %v9245
  %v9638 = vpop.f32.mrf.mxu0
  %v9639 = vadd.f32 %v9626, %v9638
  %v9640 = vpop.f32.mrf.mxu0
  %9641 = vdwg.mxu0
  %9642 = vmatpush.bf16.msra.mxu0 %v4916
  %9643 = vmatpush.bf16.msra.mxu0 %v4912
  %9644 = vmatpush.bf16.msra.mxu0 %v4908
  %9645 = vmatpush.bf16.msra.mxu0 %v4904
  %9646 = vmatpush.bf16.msra.mxu0 %v4900
  %9647 = vmatpush.bf16.msra.mxu0 %v4896
  %9648 = vmatpush.bf16.msra.mxu0 %v4892
  %9649 = vmatpush.bf16.msra.mxu0 %v4888
  %9650 = vmatmul.bf16.gmra.mxu0 %v9246
  %v9651 = vpop.f32.mrf.mxu0
  %v9652 = vadd.f32 %v9639, %v9651
  %v9653 = vpop.f32.mrf.mxu0
  %9654 = vdwg.mxu0
  %9655 = vmatpush.bf16.msra.mxu0 %v4948
  %9656 = vmatpush.bf16.msra.mxu0 %v4944
  %9657 = vmatpush.bf16.msra.mxu0 %v4940
  %9658 = vmatpush.bf16.msra.mxu0 %v4936
  %9659 = vmatpush.bf16.msra.mxu0 %v4932
  %9660 = vmatpush.bf16.msra.mxu0 %v4928
  %9661 = vmatpush.bf16.msra.mxu0 %v4924
  %9662 = vmatpush.bf16.msra.mxu0 %v4920
  %9663 = vmatmul.bf16.gmra.mxu0 %v9247
  %v9664 = vpop.f32.mrf.mxu0
  %v9665 = vadd.f32 %v9652, %v9664
  %v9666 = vpop.f32.mrf.mxu0
  %9667 = vdwg.mxu0
  %9668 = vmatpush.bf16.msra.mxu0 %v4021
  %9669 = vmatpush.bf16.msra.mxu0 %v4017
  %9670 = vmatpush.bf16.msra.mxu0 %v4013
  %9671 = vmatpush.bf16.msra.mxu0 %v4009
  %9672 = vmatpush.bf16.msra.mxu0 %v4005
  %9673 = vmatpush.bf16.msra.mxu0 %v4001
  %9674 = vmatpush.bf16.msra.mxu0 %v3997
  %9675 = vmatpush.bf16.msra.mxu0 %v3993
  %9676 = vmatmul.bf16.gmra.mxu0 %v9218
  %v9677 = vpop.f32.mrf.mxu0
  %v9678 = vadd.f32 0.0, %v9677
  %v9679 = vpop.f32.mrf.mxu0
  %9680 = vdwg.mxu0
  %9681 = vmatpush.bf16.msra.mxu0 %v4053
  %9682 = vmatpush.bf16.msra.mxu0 %v4049
  %9683 = vmatpush.bf16.msra.mxu0 %v4045
  %9684 = vmatpush.bf16.msra.mxu0 %v4041
  %9685 = vmatpush.bf16.msra.mxu0 %v4037
  %9686 = vmatpush.bf16.msra.mxu0 %v4033
  %9687 = vmatpush.bf16.msra.mxu0 %v4029
  %9688 = vmatpush.bf16.msra.mxu0 %v4025
  %9689 = vmatmul.bf16.gmra.mxu0 %v9219
  %v9690 = vpop.f32.mrf.mxu0
  %v9691 = vadd.f32 %v9678, %v9690
  %v9692 = vpop.f32.mrf.mxu0
  %9693 = vdwg.mxu0
  %9694 = vmatpush.bf16.msra.mxu0 %v4085
  %9695 = vmatpush.bf16.msra.mxu0 %v4081
  %9696 = vmatpush.bf16.msra.mxu0 %v4077
  %9697 = vmatpush.bf16.msra.mxu0 %v4073
  %9698 = vmatpush.bf16.msra.mxu0 %v4069
  %9699 = vmatpush.bf16.msra.mxu0 %v4065
  %9700 = vmatpush.bf16.msra.mxu0 %v4061
  %9701 = vmatpush.bf16.msra.mxu0 %v4057
  %9702 = vmatmul.bf16.gmra.mxu0 %v9220
  %v9703 = vpop.f32.mrf.mxu0
  %v9704 = vadd.f32 %v9691, %v9703
  %v9705 = vpop.f32.mrf.mxu0
  %9706 = vdwg.mxu0
  %9707 = vmatpush.bf16.msra.mxu0 %v4117
  %9708 = vmatpush.bf16.msra.mxu0 %v4113
  %9709 = vmatpush.bf16.msra.mxu0 %v4109
  %9710 = vmatpush.bf16.msra.mxu0 %v4105
  %9711 = vmatpush.bf16.msra.mxu0 %v4101
  %9712 = vmatpush.bf16.msra.mxu0 %v4097
  %9713 = vmatpush.bf16.msra.mxu0 %v4093
  %9714 = vmatpush.bf16.msra.mxu0 %v4089
  %9715 = vmatmul.bf16.gmra.mxu0 %v9221
  %v9716 = vpop.f32.mrf.mxu0
  %v9717 = vadd.f32 %v9704, %v9716
  %v9718 = vpop.f32.mrf.mxu0
  %9719 = vdwg.mxu0
  %9720 = vmatpush.bf16.msra.mxu0 %v4149
  %9721 = vmatpush.bf16.msra.mxu0 %v4145
  %9722 = vmatpush.bf16.msra.mxu0 %v4141
  %9723 = vmatpush.bf16.msra.mxu0 %v4137
  %9724 = vmatpush.bf16.msra.mxu0 %v4133
  %9725 = vmatpush.bf16.msra.mxu0 %v4129
  %9726 = vmatpush.bf16.msra.mxu0 %v4125
  %9727 = vmatpush.bf16.msra.mxu0 %v4121
  %9728 = vmatmul.bf16.gmra.mxu0 %v9222
  %v9729 = vpop.f32.mrf.mxu0
  %v9730 = vadd.f32 %v9717, %v9729
  %v9731 = vpop.f32.mrf.mxu0
  %9732 = vdwg.mxu0
  %9733 = vmatpush.bf16.msra.mxu0 %v4181
  %9734 = vmatpush.bf16.msra.mxu0 %v4177
  %9735 = vmatpush.bf16.msra.mxu0 %v4173
  %9736 = vmatpush.bf16.msra.mxu0 %v4169
  %9737 = vmatpush.bf16.msra.mxu0 %v4165
  %9738 = vmatpush.bf16.msra.mxu0 %v4161
  %9739 = vmatpush.bf16.msra.mxu0 %v4157
  %9740 = vmatpush.bf16.msra.mxu0 %v4153
  %9741 = vmatmul.bf16.gmra.mxu0 %v9223
  %v9742 = vpop.f32.mrf.mxu0
  %v9743 = vadd.f32 %v9730, %v9742
  %v9744 = vpop.f32.mrf.mxu0
  %9745 = vdwg.mxu0
  %9746 = vmatpush.bf16.msra.mxu0 %v4213
  %9747 = vmatpush.bf16.msra.mxu0 %v4209
  %9748 = vmatpush.bf16.msra.mxu0 %v4205
  %9749 = vmatpush.bf16.msra.mxu0 %v4201
  %9750 = vmatpush.bf16.msra.mxu0 %v4197
  %9751 = vmatpush.bf16.msra.mxu0 %v4193
  %9752 = vmatpush.bf16.msra.mxu0 %v4189
  %9753 = vmatpush.bf16.msra.mxu0 %v4185
  %9754 = vmatmul.bf16.gmra.mxu0 %v9224
  %v9755 = vpop.f32.mrf.mxu0
  %v9756 = vadd.f32 %v9743, %v9755
  %v9757 = vpop.f32.mrf.mxu0
  %9758 = vdwg.mxu0
  %9759 = vmatpush.bf16.msra.mxu0 %v4245
  %9760 = vmatpush.bf16.msra.mxu0 %v4241
  %9761 = vmatpush.bf16.msra.mxu0 %v4237
  %9762 = vmatpush.bf16.msra.mxu0 %v4233
  %9763 = vmatpush.bf16.msra.mxu0 %v4229
  %9764 = vmatpush.bf16.msra.mxu0 %v4225
  %9765 = vmatpush.bf16.msra.mxu0 %v4221
  %9766 = vmatpush.bf16.msra.mxu0 %v4217
  %9767 = vmatmul.bf16.gmra.mxu0 %v9225
  %v9768 = vpop.f32.mrf.mxu0
  %v9769 = vadd.f32 %v9756, %v9768
  %v9770 = vpop.f32.mrf.mxu0
  %9771 = vdwg.mxu0
  %9772 = vmatpush.bf16.msra.mxu0 %v4277
  %9773 = vmatpush.bf16.msra.mxu0 %v4273
  %9774 = vmatpush.bf16.msra.mxu0 %v4269
  %9775 = vmatpush.bf16.msra.mxu0 %v4265
  %9776 = vmatpush.bf16.msra.mxu0 %v4261
  %9777 = vmatpush.bf16.msra.mxu0 %v4257
  %9778 = vmatpush.bf16.msra.mxu0 %v4253
  %9779 = vmatpush.bf16.msra.mxu0 %v4249
  %9780 = vmatmul.bf16.gmra.mxu0 %v9226
  %v9781 = vpop.f32.mrf.mxu0
  %v9782 = vadd.f32 %v9769, %v9781
  %v9783 = vpop.f32.mrf.mxu0
  %9784 = vdwg.mxu0
  %9785 = vmatpush.bf16.msra.mxu0 %v4309
  %9786 = vmatpush.bf16.msra.mxu0 %v4305
  %9787 = vmatpush.bf16.msra.mxu0 %v4301
  %9788 = vmatpush.bf16.msra.mxu0 %v4297
  %9789 = vmatpush.bf16.msra.mxu0 %v4293
  %9790 = vmatpush.bf16.msra.mxu0 %v4289
  %9791 = vmatpush.bf16.msra.mxu0 %v4285
  %9792 = vmatpush.bf16.msra.mxu0 %v4281
  %9793 = vmatmul.bf16.gmra.mxu0 %v9227
  %v9794 = vpop.f32.mrf.mxu0
  %v9795 = vadd.f32 %v9782, %v9794
  %v9796 = vpop.f32.mrf.mxu0
  %9797 = vdwg.mxu0
  %9798 = vmatpush.bf16.msra.mxu0 %v4341
  %9799 = vmatpush.bf16.msra.mxu0 %v4337
  %9800 = vmatpush.bf16.msra.mxu0 %v4333
  %9801 = vmatpush.bf16.msra.mxu0 %v4329
  %9802 = vmatpush.bf16.msra.mxu0 %v4325
  %9803 = vmatpush.bf16.msra.mxu0 %v4321
  %9804 = vmatpush.bf16.msra.mxu0 %v4317
  %9805 = vmatpush.bf16.msra.mxu0 %v4313
  %9806 = vmatmul.bf16.gmra.mxu0 %v9228
  %v9807 = vpop.f32.mrf.mxu0
  %v9808 = vadd.f32 %v9795, %v9807
  %v9809 = vpop.f32.mrf.mxu0
  %9810 = vdwg.mxu0
  %9811 = vmatpush.bf16.msra.mxu0 %v4373
  %9812 = vmatpush.bf16.msra.mxu0 %v4369
  %9813 = vmatpush.bf16.msra.mxu0 %v4365
  %9814 = vmatpush.bf16.msra.mxu0 %v4361
  %9815 = vmatpush.bf16.msra.mxu0 %v4357
  %9816 = vmatpush.bf16.msra.mxu0 %v4353
  %9817 = vmatpush.bf16.msra.mxu0 %v4349
  %9818 = vmatpush.bf16.msra.mxu0 %v4345
  %9819 = vmatmul.bf16.gmra.mxu0 %v9229
  %v9820 = vpop.f32.mrf.mxu0
  %v9821 = vadd.f32 %v9808, %v9820
  %v9822 = vpop.f32.mrf.mxu0
  %9823 = vdwg.mxu0
  %9824 = vmatpush.bf16.msra.mxu0 %v4405
  %9825 = vmatpush.bf16.msra.mxu0 %v4401
  %9826 = vmatpush.bf16.msra.mxu0 %v4397
  %9827 = vmatpush.bf16.msra.mxu0 %v4393
  %9828 = vmatpush.bf16.msra.mxu0 %v4389
  %9829 = vmatpush.bf16.msra.mxu0 %v4385
  %9830 = vmatpush.bf16.msra.mxu0 %v4381
  %9831 = vmatpush.bf16.msra.mxu0 %v4377
  %9832 = vmatmul.bf16.gmra.mxu0 %v9230
  %v9833 = vpop.f32.mrf.mxu0
  %v9834 = vadd.f32 %v9821, %v9833
  %v9835 = vpop.f32.mrf.mxu0
  %9836 = vdwg.mxu0
  %9837 = vmatpush.bf16.msra.mxu0 %v4437
  %9838 = vmatpush.bf16.msra.mxu0 %v4433
  %9839 = vmatpush.bf16.msra.mxu0 %v4429
  %9840 = vmatpush.bf16.msra.mxu0 %v4425
  %9841 = vmatpush.bf16.msra.mxu0 %v4421
  %9842 = vmatpush.bf16.msra.mxu0 %v4417
  %9843 = vmatpush.bf16.msra.mxu0 %v4413
  %9844 = vmatpush.bf16.msra.mxu0 %v4409
  %9845 = vmatmul.bf16.gmra.mxu0 %v9231
  %v9846 = vpop.f32.mrf.mxu0
  %v9847 = vadd.f32 %v9834, %v9846
  %v9848 = vpop.f32.mrf.mxu0
  %9849 = vdwg.mxu0
  %9850 = vmatpush.bf16.msra.mxu0 %v4469
  %9851 = vmatpush.bf16.msra.mxu0 %v4465
  %9852 = vmatpush.bf16.msra.mxu0 %v4461
  %9853 = vmatpush.bf16.msra.mxu0 %v4457
  %9854 = vmatpush.bf16.msra.mxu0 %v4453
  %9855 = vmatpush.bf16.msra.mxu0 %v4449
  %9856 = vmatpush.bf16.msra.mxu0 %v4445
  %9857 = vmatpush.bf16.msra.mxu0 %v4441
  %9858 = vmatmul.bf16.gmra.mxu0 %v9232
  %v9859 = vpop.f32.mrf.mxu0
  %v9860 = vadd.f32 %v9847, %v9859
  %v9861 = vpop.f32.mrf.mxu0
  %9862 = vdwg.mxu0
  %9863 = vmatpush.bf16.msra.mxu0 %v4501
  %9864 = vmatpush.bf16.msra.mxu0 %v4497
  %9865 = vmatpush.bf16.msra.mxu0 %v4493
  %9866 = vmatpush.bf16.msra.mxu0 %v4489
  %9867 = vmatpush.bf16.msra.mxu0 %v4485
  %9868 = vmatpush.bf16.msra.mxu0 %v4481
  %9869 = vmatpush.bf16.msra.mxu0 %v4477
  %9870 = vmatpush.bf16.msra.mxu0 %v4473
  %9871 = vmatmul.bf16.gmra.mxu0 %v9233
  %v9872 = vpop.f32.mrf.mxu0
  %v9873 = vadd.f32 %v9860, %v9872
  %v9874 = vpop.f32.mrf.mxu0
  %9875 = vdwg.mxu0
  %9876 = vmatpush.bf16.msra.mxu0 %v4533
  %9877 = vmatpush.bf16.msra.mxu0 %v4529
  %9878 = vmatpush.bf16.msra.mxu0 %v4525
  %9879 = vmatpush.bf16.msra.mxu0 %v4521
  %9880 = vmatpush.bf16.msra.mxu0 %v4517
  %9881 = vmatpush.bf16.msra.mxu0 %v4513
  %9882 = vmatpush.bf16.msra.mxu0 %v4509
  %9883 = vmatpush.bf16.msra.mxu0 %v4505
  %9884 = vmatmul.bf16.gmra.mxu0 %v9234
  %v9885 = vpop.f32.mrf.mxu0
  %v9886 = vadd.f32 %v9873, %v9885
  %v9887 = vpop.f32.mrf.mxu0
  %9888 = vdwg.mxu0
  %9889 = vmatpush.bf16.msra.mxu0 %v4565
  %9890 = vmatpush.bf16.msra.mxu0 %v4561
  %9891 = vmatpush.bf16.msra.mxu0 %v4557
  %9892 = vmatpush.bf16.msra.mxu0 %v4553
  %9893 = vmatpush.bf16.msra.mxu0 %v4549
  %9894 = vmatpush.bf16.msra.mxu0 %v4545
  %9895 = vmatpush.bf16.msra.mxu0 %v4541
  %9896 = vmatpush.bf16.msra.mxu0 %v4537
  %9897 = vmatmul.bf16.gmra.mxu0 %v9235
  %v9898 = vpop.f32.mrf.mxu0
  %v9899 = vadd.f32 %v9886, %v9898
  %v9900 = vpop.f32.mrf.mxu0
  %9901 = vdwg.mxu0
  %9902 = vmatpush.bf16.msra.mxu0 %v4597
  %9903 = vmatpush.bf16.msra.mxu0 %v4593
  %9904 = vmatpush.bf16.msra.mxu0 %v4589
  %9905 = vmatpush.bf16.msra.mxu0 %v4585
  %9906 = vmatpush.bf16.msra.mxu0 %v4581
  %9907 = vmatpush.bf16.msra.mxu0 %v4577
  %9908 = vmatpush.bf16.msra.mxu0 %v4573
  %9909 = vmatpush.bf16.msra.mxu0 %v4569
  %9910 = vmatmul.bf16.gmra.mxu0 %v9236
  %v9911 = vpop.f32.mrf.mxu0
  %v9912 = vadd.f32 %v9899, %v9911
  %v9913 = vpop.f32.mrf.mxu0
  %9914 = vdwg.mxu0
  %9915 = vmatpush.bf16.msra.mxu0 %v4629
  %9916 = vmatpush.bf16.msra.mxu0 %v4625
  %9917 = vmatpush.bf16.msra.mxu0 %v4621
  %9918 = vmatpush.bf16.msra.mxu0 %v4617
  %9919 = vmatpush.bf16.msra.mxu0 %v4613
  %9920 = vmatpush.bf16.msra.mxu0 %v4609
  %9921 = vmatpush.bf16.msra.mxu0 %v4605
  %9922 = vmatpush.bf16.msra.mxu0 %v4601
  %9923 = vmatmul.bf16.gmra.mxu0 %v9237
  %v9924 = vpop.f32.mrf.mxu0
  %v9925 = vadd.f32 %v9912, %v9924
  %v9926 = vpop.f32.mrf.mxu0
  %9927 = vdwg.mxu0
  %9928 = vmatpush.bf16.msra.mxu0 %v4661
  %9929 = vmatpush.bf16.msra.mxu0 %v4657
  %9930 = vmatpush.bf16.msra.mxu0 %v4653
  %9931 = vmatpush.bf16.msra.mxu0 %v4649
  %9932 = vmatpush.bf16.msra.mxu0 %v4645
  %9933 = vmatpush.bf16.msra.mxu0 %v4641
  %9934 = vmatpush.bf16.msra.mxu0 %v4637
  %9935 = vmatpush.bf16.msra.mxu0 %v4633
  %9936 = vmatmul.bf16.gmra.mxu0 %v9238
  %v9937 = vpop.f32.mrf.mxu0
  %v9938 = vadd.f32 %v9925, %v9937
  %v9939 = vpop.f32.mrf.mxu0
  %9940 = vdwg.mxu0
  %9941 = vmatpush.bf16.msra.mxu0 %v4693
  %9942 = vmatpush.bf16.msra.mxu0 %v4689
  %9943 = vmatpush.bf16.msra.mxu0 %v4685
  %9944 = vmatpush.bf16.msra.mxu0 %v4681
  %9945 = vmatpush.bf16.msra.mxu0 %v4677
  %9946 = vmatpush.bf16.msra.mxu0 %v4673
  %9947 = vmatpush.bf16.msra.mxu0 %v4669
  %9948 = vmatpush.bf16.msra.mxu0 %v4665
  %9949 = vmatmul.bf16.gmra.mxu0 %v9239
  %v9950 = vpop.f32.mrf.mxu0
  %v9951 = vadd.f32 %v9938, %v9950
  %v9952 = vpop.f32.mrf.mxu0
  %9953 = vdwg.mxu0
  %9954 = vmatpush.bf16.msra.mxu0 %v4725
  %9955 = vmatpush.bf16.msra.mxu0 %v4721
  %9956 = vmatpush.bf16.msra.mxu0 %v4717
  %9957 = vmatpush.bf16.msra.mxu0 %v4713
  %9958 = vmatpush.bf16.msra.mxu0 %v4709
  %9959 = vmatpush.bf16.msra.mxu0 %v4705
  %9960 = vmatpush.bf16.msra.mxu0 %v4701
  %9961 = vmatpush.bf16.msra.mxu0 %v4697
  %9962 = vmatmul.bf16.gmra.mxu0 %v9240
  %v9963 = vpop.f32.mrf.mxu0
  %v9964 = vadd.f32 %v9951, %v9963
  %v9965 = vpop.f32.mrf.mxu0
  %9966 = vdwg.mxu0
  %9967 = vmatpush.bf16.msra.mxu0 %v4757
  %9968 = vmatpush.bf16.msra.mxu0 %v4753
  %9969 = vmatpush.bf16.msra.mxu0 %v4749
  %9970 = vmatpush.bf16.msra.mxu0 %v4745
  %9971 = vmatpush.bf16.msra.mxu0 %v4741
  %9972 = vmatpush.bf16.msra.mxu0 %v4737
  %9973 = vmatpush.bf16.msra.mxu0 %v4733
  %9974 = vmatpush.bf16.msra.mxu0 %v4729
  %9975 = vmatmul.bf16.gmra.mxu0 %v9241
  %v9976 = vpop.f32.mrf.mxu0
  %v9977 = vadd.f32 %v9964, %v9976
  %v9978 = vpop.f32.mrf.mxu0
  %9979 = vdwg.mxu0
  %9980 = vmatpush.bf16.msra.mxu0 %v4789
  %9981 = vmatpush.bf16.msra.mxu0 %v4785
  %9982 = vmatpush.bf16.msra.mxu0 %v4781
  %9983 = vmatpush.bf16.msra.mxu0 %v4777
  %9984 = vmatpush.bf16.msra.mxu0 %v4773
  %9985 = vmatpush.bf16.msra.mxu0 %v4769
  %9986 = vmatpush.bf16.msra.mxu0 %v4765
  %9987 = vmatpush.bf16.msra.mxu0 %v4761
  %9988 = vmatmul.bf16.gmra.mxu0 %v9242
  %v9989 = vpop.f32.mrf.mxu0
  %v9990 = vadd.f32 %v9977, %v9989
  %v9991 = vpop.f32.mrf.mxu0
  %9992 = vdwg.mxu0
  %9993 = vmatpush.bf16.msra.mxu0 %v4821
  %9994 = vmatpush.bf16.msra.mxu0 %v4817
  %9995 = vmatpush.bf16.msra.mxu0 %v4813
  %9996 = vmatpush.bf16.msra.mxu0 %v4809
  %9997 = vmatpush.bf16.msra.mxu0 %v4805
  %9998 = vmatpush.bf16.msra.mxu0 %v4801
  %9999 = vmatpush.bf16.msra.mxu0 %v4797
  %10000 = vmatpush.bf16.msra.mxu0 %v4793
  %10001 = vmatmul.bf16.gmra.mxu0 %v9243
  %v10002 = vpop.f32.mrf.mxu0
  %v10003 = vadd.f32 %v9990, %v10002
  %v10004 = vpop.f32.mrf.mxu0
  %10005 = vdwg.mxu0
  %10006 = vmatpush.bf16.msra.mxu0 %v4853
  %10007 = vmatpush.bf16.msra.mxu0 %v4849
  %10008 = vmatpush.bf16.msra.mxu0 %v4845
  %10009 = vmatpush.bf16.msra.mxu0 %v4841
  %10010 = vmatpush.bf16.msra.mxu0 %v4837
  %10011 = vmatpush.bf16.msra.mxu0 %v4833
  %10012 = vmatpush.bf16.msra.mxu0 %v4829
  %10013 = vmatpush.bf16.msra.mxu0 %v4825
  %10014 = vmatmul.bf16.gmra.mxu0 %v9244
  %v10015 = vpop.f32.mrf.mxu0
  %v10016 = vadd.f32 %v10003, %v10015
  %v10017 = vpop.f32.mrf.mxu0
  %10018 = vdwg.mxu0
  %10019 = vmatpush.bf16.msra.mxu0 %v4885
  %10020 = vmatpush.bf16.msra.mxu0 %v4881
  %10021 = vmatpush.bf16.msra.mxu0 %v4877
  %10022 = vmatpush.bf16.msra.mxu0 %v4873
  %10023 = vmatpush.bf16.msra.mxu0 %v4869
  %10024 = vmatpush.bf16.msra.mxu0 %v4865
  %10025 = vmatpush.bf16.msra.mxu0 %v4861
  %10026 = vmatpush.bf16.msra.mxu0 %v4857
  %10027 = vmatmul.bf16.gmra.mxu0 %v9245
  %v10028 = vpop.f32.mrf.mxu0
  %v10029 = vadd.f32 %v10016, %v10028
  %v10030 = vpop.f32.mrf.mxu0
  %10031 = vdwg.mxu0
  %10032 = vmatpush.bf16.msra.mxu0 %v4917
  %10033 = vmatpush.bf16.msra.mxu0 %v4913
  %10034 = vmatpush.bf16.msra.mxu0 %v4909
  %10035 = vmatpush.bf16.msra.mxu0 %v4905
  %10036 = vmatpush.bf16.msra.mxu0 %v4901
  %10037 = vmatpush.bf16.msra.mxu0 %v4897
  %10038 = vmatpush.bf16.msra.mxu0 %v4893
  %10039 = vmatpush.bf16.msra.mxu0 %v4889
  %10040 = vmatmul.bf16.gmra.mxu0 %v9246
  %v10041 = vpop.f32.mrf.mxu0
  %v10042 = vadd.f32 %v10029, %v10041
  %v10043 = vpop.f32.mrf.mxu0
  %10044 = vdwg.mxu0
  %10045 = vmatpush.bf16.msra.mxu0 %v4949
  %10046 = vmatpush.bf16.msra.mxu0 %v4945
  %10047 = vmatpush.bf16.msra.mxu0 %v4941
  %10048 = vmatpush.bf16.msra.mxu0 %v4937
  %10049 = vmatpush.bf16.msra.mxu0 %v4933
  %10050 = vmatpush.bf16.msra.mxu0 %v4929
  %10051 = vmatpush.bf16.msra.mxu0 %v4925
  %10052 = vmatpush.bf16.msra.mxu0 %v4921
  %10053 = vmatmul.bf16.gmra.mxu0 %v9247
  %v10054 = vpop.f32.mrf.mxu0
  %v10055 = vadd.f32 %v10042, %v10054
  %v10056 = vpop.f32.mrf.mxu0
  %10057 = vdwg.mxu0
  %10058 = vmatpush.bf16.msra.mxu0 %v4022
  %10059 = vmatpush.bf16.msra.mxu0 %v4018
  %10060 = vmatpush.bf16.msra.mxu0 %v4014
  %10061 = vmatpush.bf16.msra.mxu0 %v4010
  %10062 = vmatpush.bf16.msra.mxu0 %v4006
  %10063 = vmatpush.bf16.msra.mxu0 %v4002
  %10064 = vmatpush.bf16.msra.mxu0 %v3998
  %10065 = vmatpush.bf16.msra.mxu0 %v3994
  %10066 = vmatmul.bf16.gmra.mxu0 %v9218
  %v10067 = vpop.f32.mrf.mxu0
  %v10068 = vadd.f32 0.0, %v10067
  %v10069 = vpop.f32.mrf.mxu0
  %10070 = vdwg.mxu0
  %10071 = vmatpush.bf16.msra.mxu0 %v4054
  %10072 = vmatpush.bf16.msra.mxu0 %v4050
  %10073 = vmatpush.bf16.msra.mxu0 %v4046
  %10074 = vmatpush.bf16.msra.mxu0 %v4042
  %10075 = vmatpush.bf16.msra.mxu0 %v4038
  %10076 = vmatpush.bf16.msra.mxu0 %v4034
  %10077 = vmatpush.bf16.msra.mxu0 %v4030
  %10078 = vmatpush.bf16.msra.mxu0 %v4026
  %10079 = vmatmul.bf16.gmra.mxu0 %v9219
  %v10080 = vpop.f32.mrf.mxu0
  %v10081 = vadd.f32 %v10068, %v10080
  %v10082 = vpop.f32.mrf.mxu0
  %10083 = vdwg.mxu0
  %10084 = vmatpush.bf16.msra.mxu0 %v4086
  %10085 = vmatpush.bf16.msra.mxu0 %v4082
  %10086 = vmatpush.bf16.msra.mxu0 %v4078
  %10087 = vmatpush.bf16.msra.mxu0 %v4074
  %10088 = vmatpush.bf16.msra.mxu0 %v4070
  %10089 = vmatpush.bf16.msra.mxu0 %v4066
  %10090 = vmatpush.bf16.msra.mxu0 %v4062
  %10091 = vmatpush.bf16.msra.mxu0 %v4058
  %10092 = vmatmul.bf16.gmra.mxu0 %v9220
  %v10093 = vpop.f32.mrf.mxu0
  %v10094 = vadd.f32 %v10081, %v10093
  %v10095 = vpop.f32.mrf.mxu0
  %10096 = vdwg.mxu0
  %10097 = vmatpush.bf16.msra.mxu0 %v4118
  %10098 = vmatpush.bf16.msra.mxu0 %v4114
  %10099 = vmatpush.bf16.msra.mxu0 %v4110
  %10100 = vmatpush.bf16.msra.mxu0 %v4106
  %10101 = vmatpush.bf16.msra.mxu0 %v4102
  %10102 = vmatpush.bf16.msra.mxu0 %v4098
  %10103 = vmatpush.bf16.msra.mxu0 %v4094
  %10104 = vmatpush.bf16.msra.mxu0 %v4090
  %10105 = vmatmul.bf16.gmra.mxu0 %v9221
  %v10106 = vpop.f32.mrf.mxu0
  %v10107 = vadd.f32 %v10094, %v10106
  %v10108 = vpop.f32.mrf.mxu0
  %10109 = vdwg.mxu0
  %10110 = vmatpush.bf16.msra.mxu0 %v4150
  %10111 = vmatpush.bf16.msra.mxu0 %v4146
  %10112 = vmatpush.bf16.msra.mxu0 %v4142
  %10113 = vmatpush.bf16.msra.mxu0 %v4138
  %10114 = vmatpush.bf16.msra.mxu0 %v4134
  %10115 = vmatpush.bf16.msra.mxu0 %v4130
  %10116 = vmatpush.bf16.msra.mxu0 %v4126
  %10117 = vmatpush.bf16.msra.mxu0 %v4122
  %10118 = vmatmul.bf16.gmra.mxu0 %v9222
  %v10119 = vpop.f32.mrf.mxu0
  %v10120 = vadd.f32 %v10107, %v10119
  %v10121 = vpop.f32.mrf.mxu0
  %10122 = vdwg.mxu0
  %10123 = vmatpush.bf16.msra.mxu0 %v4182
  %10124 = vmatpush.bf16.msra.mxu0 %v4178
  %10125 = vmatpush.bf16.msra.mxu0 %v4174
  %10126 = vmatpush.bf16.msra.mxu0 %v4170
  %10127 = vmatpush.bf16.msra.mxu0 %v4166
  %10128 = vmatpush.bf16.msra.mxu0 %v4162
  %10129 = vmatpush.bf16.msra.mxu0 %v4158
  %10130 = vmatpush.bf16.msra.mxu0 %v4154
  %10131 = vmatmul.bf16.gmra.mxu0 %v9223
  %v10132 = vpop.f32.mrf.mxu0
  %v10133 = vadd.f32 %v10120, %v10132
  %v10134 = vpop.f32.mrf.mxu0
  %10135 = vdwg.mxu0
  %10136 = vmatpush.bf16.msra.mxu0 %v4214
  %10137 = vmatpush.bf16.msra.mxu0 %v4210
  %10138 = vmatpush.bf16.msra.mxu0 %v4206
  %10139 = vmatpush.bf16.msra.mxu0 %v4202
  %10140 = vmatpush.bf16.msra.mxu0 %v4198
  %10141 = vmatpush.bf16.msra.mxu0 %v4194
  %10142 = vmatpush.bf16.msra.mxu0 %v4190
  %10143 = vmatpush.bf16.msra.mxu0 %v4186
  %10144 = vmatmul.bf16.gmra.mxu0 %v9224
  %v10145 = vpop.f32.mrf.mxu0
  %v10146 = vadd.f32 %v10133, %v10145
  %v10147 = vpop.f32.mrf.mxu0
  %10148 = vdwg.mxu0
  %10149 = vmatpush.bf16.msra.mxu0 %v4246
  %10150 = vmatpush.bf16.msra.mxu0 %v4242
  %10151 = vmatpush.bf16.msra.mxu0 %v4238
  %10152 = vmatpush.bf16.msra.mxu0 %v4234
  %10153 = vmatpush.bf16.msra.mxu0 %v4230
  %10154 = vmatpush.bf16.msra.mxu0 %v4226
  %10155 = vmatpush.bf16.msra.mxu0 %v4222
  %10156 = vmatpush.bf16.msra.mxu0 %v4218
  %10157 = vmatmul.bf16.gmra.mxu0 %v9225
  %v10158 = vpop.f32.mrf.mxu0
  %v10159 = vadd.f32 %v10146, %v10158
  %v10160 = vpop.f32.mrf.mxu0
  %10161 = vdwg.mxu0
  %10162 = vmatpush.bf16.msra.mxu0 %v4278
  %10163 = vmatpush.bf16.msra.mxu0 %v4274
  %10164 = vmatpush.bf16.msra.mxu0 %v4270
  %10165 = vmatpush.bf16.msra.mxu0 %v4266
  %10166 = vmatpush.bf16.msra.mxu0 %v4262
  %10167 = vmatpush.bf16.msra.mxu0 %v4258
  %10168 = vmatpush.bf16.msra.mxu0 %v4254
  %10169 = vmatpush.bf16.msra.mxu0 %v4250
  %10170 = vmatmul.bf16.gmra.mxu0 %v9226
  %v10171 = vpop.f32.mrf.mxu0
  %v10172 = vadd.f32 %v10159, %v10171
  %v10173 = vpop.f32.mrf.mxu0
  %10174 = vdwg.mxu0
  %10175 = vmatpush.bf16.msra.mxu0 %v4310
  %10176 = vmatpush.bf16.msra.mxu0 %v4306
  %10177 = vmatpush.bf16.msra.mxu0 %v4302
  %10178 = vmatpush.bf16.msra.mxu0 %v4298
  %10179 = vmatpush.bf16.msra.mxu0 %v4294
  %10180 = vmatpush.bf16.msra.mxu0 %v4290
  %10181 = vmatpush.bf16.msra.mxu0 %v4286
  %10182 = vmatpush.bf16.msra.mxu0 %v4282
  %10183 = vmatmul.bf16.gmra.mxu0 %v9227
  %v10184 = vpop.f32.mrf.mxu0
  %v10185 = vadd.f32 %v10172, %v10184
  %v10186 = vpop.f32.mrf.mxu0
  %10187 = vdwg.mxu0
  %10188 = vmatpush.bf16.msra.mxu0 %v4342
  %10189 = vmatpush.bf16.msra.mxu0 %v4338
  %10190 = vmatpush.bf16.msra.mxu0 %v4334
  %10191 = vmatpush.bf16.msra.mxu0 %v4330
  %10192 = vmatpush.bf16.msra.mxu0 %v4326
  %10193 = vmatpush.bf16.msra.mxu0 %v4322
  %10194 = vmatpush.bf16.msra.mxu0 %v4318
  %10195 = vmatpush.bf16.msra.mxu0 %v4314
  %10196 = vmatmul.bf16.gmra.mxu0 %v9228
  %v10197 = vpop.f32.mrf.mxu0
  %v10198 = vadd.f32 %v10185, %v10197
  %v10199 = vpop.f32.mrf.mxu0
  %10200 = vdwg.mxu0
  %10201 = vmatpush.bf16.msra.mxu0 %v4374
  %10202 = vmatpush.bf16.msra.mxu0 %v4370
  %10203 = vmatpush.bf16.msra.mxu0 %v4366
  %10204 = vmatpush.bf16.msra.mxu0 %v4362
  %10205 = vmatpush.bf16.msra.mxu0 %v4358
  %10206 = vmatpush.bf16.msra.mxu0 %v4354
  %10207 = vmatpush.bf16.msra.mxu0 %v4350
  %10208 = vmatpush.bf16.msra.mxu0 %v4346
  %10209 = vmatmul.bf16.gmra.mxu0 %v9229
  %v10210 = vpop.f32.mrf.mxu0
  %v10211 = vadd.f32 %v10198, %v10210
  %v10212 = vpop.f32.mrf.mxu0
  %10213 = vdwg.mxu0
  %10214 = vmatpush.bf16.msra.mxu0 %v4406
  %10215 = vmatpush.bf16.msra.mxu0 %v4402
  %10216 = vmatpush.bf16.msra.mxu0 %v4398
  %10217 = vmatpush.bf16.msra.mxu0 %v4394
  %10218 = vmatpush.bf16.msra.mxu0 %v4390
  %10219 = vmatpush.bf16.msra.mxu0 %v4386
  %10220 = vmatpush.bf16.msra.mxu0 %v4382
  %10221 = vmatpush.bf16.msra.mxu0 %v4378
  %10222 = vmatmul.bf16.gmra.mxu0 %v9230
  %v10223 = vpop.f32.mrf.mxu0
  %v10224 = vadd.f32 %v10211, %v10223
  %v10225 = vpop.f32.mrf.mxu0
  %10226 = vdwg.mxu0
  %10227 = vmatpush.bf16.msra.mxu0 %v4438
  %10228 = vmatpush.bf16.msra.mxu0 %v4434
  %10229 = vmatpush.bf16.msra.mxu0 %v4430
  %10230 = vmatpush.bf16.msra.mxu0 %v4426
  %10231 = vmatpush.bf16.msra.mxu0 %v4422
  %10232 = vmatpush.bf16.msra.mxu0 %v4418
  %10233 = vmatpush.bf16.msra.mxu0 %v4414
  %10234 = vmatpush.bf16.msra.mxu0 %v4410
  %10235 = vmatmul.bf16.gmra.mxu0 %v9231
  %v10236 = vpop.f32.mrf.mxu0
  %v10237 = vadd.f32 %v10224, %v10236
  %v10238 = vpop.f32.mrf.mxu0
  %10239 = vdwg.mxu0
  %10240 = vmatpush.bf16.msra.mxu0 %v4470
  %10241 = vmatpush.bf16.msra.mxu0 %v4466
  %10242 = vmatpush.bf16.msra.mxu0 %v4462
  %10243 = vmatpush.bf16.msra.mxu0 %v4458
  %10244 = vmatpush.bf16.msra.mxu0 %v4454
  %10245 = vmatpush.bf16.msra.mxu0 %v4450
  %10246 = vmatpush.bf16.msra.mxu0 %v4446
  %10247 = vmatpush.bf16.msra.mxu0 %v4442
  %10248 = vmatmul.bf16.gmra.mxu0 %v9232
  %v10249 = vpop.f32.mrf.mxu0
  %v10250 = vadd.f32 %v10237, %v10249
  %v10251 = vpop.f32.mrf.mxu0
  %10252 = vdwg.mxu0
  %10253 = vmatpush.bf16.msra.mxu0 %v4502
  %10254 = vmatpush.bf16.msra.mxu0 %v4498
  %10255 = vmatpush.bf16.msra.mxu0 %v4494
  %10256 = vmatpush.bf16.msra.mxu0 %v4490
  %10257 = vmatpush.bf16.msra.mxu0 %v4486
  %10258 = vmatpush.bf16.msra.mxu0 %v4482
  %10259 = vmatpush.bf16.msra.mxu0 %v4478
  %10260 = vmatpush.bf16.msra.mxu0 %v4474
  %10261 = vmatmul.bf16.gmra.mxu0 %v9233
  %v10262 = vpop.f32.mrf.mxu0
  %v10263 = vadd.f32 %v10250, %v10262
  %v10264 = vpop.f32.mrf.mxu0
  %10265 = vdwg.mxu0
  %10266 = vmatpush.bf16.msra.mxu0 %v4534
  %10267 = vmatpush.bf16.msra.mxu0 %v4530
  %10268 = vmatpush.bf16.msra.mxu0 %v4526
  %10269 = vmatpush.bf16.msra.mxu0 %v4522
  %10270 = vmatpush.bf16.msra.mxu0 %v4518
  %10271 = vmatpush.bf16.msra.mxu0 %v4514
  %10272 = vmatpush.bf16.msra.mxu0 %v4510
  %10273 = vmatpush.bf16.msra.mxu0 %v4506
  %10274 = vmatmul.bf16.gmra.mxu0 %v9234
  %v10275 = vpop.f32.mrf.mxu0
  %v10276 = vadd.f32 %v10263, %v10275
  %v10277 = vpop.f32.mrf.mxu0
  %10278 = vdwg.mxu0
  %10279 = vmatpush.bf16.msra.mxu0 %v4566
  %10280 = vmatpush.bf16.msra.mxu0 %v4562
  %10281 = vmatpush.bf16.msra.mxu0 %v4558
  %10282 = vmatpush.bf16.msra.mxu0 %v4554
  %10283 = vmatpush.bf16.msra.mxu0 %v4550
  %10284 = vmatpush.bf16.msra.mxu0 %v4546
  %10285 = vmatpush.bf16.msra.mxu0 %v4542
  %10286 = vmatpush.bf16.msra.mxu0 %v4538
  %10287 = vmatmul.bf16.gmra.mxu0 %v9235
  %v10288 = vpop.f32.mrf.mxu0
  %v10289 = vadd.f32 %v10276, %v10288
  %v10290 = vpop.f32.mrf.mxu0
  %10291 = vdwg.mxu0
  %10292 = vmatpush.bf16.msra.mxu0 %v4598
  %10293 = vmatpush.bf16.msra.mxu0 %v4594
  %10294 = vmatpush.bf16.msra.mxu0 %v4590
  %10295 = vmatpush.bf16.msra.mxu0 %v4586
  %10296 = vmatpush.bf16.msra.mxu0 %v4582
  %10297 = vmatpush.bf16.msra.mxu0 %v4578
  %10298 = vmatpush.bf16.msra.mxu0 %v4574
  %10299 = vmatpush.bf16.msra.mxu0 %v4570
  %10300 = vmatmul.bf16.gmra.mxu0 %v9236
  %v10301 = vpop.f32.mrf.mxu0
  %v10302 = vadd.f32 %v10289, %v10301
  %v10303 = vpop.f32.mrf.mxu0
  %10304 = vdwg.mxu0
  %10305 = vmatpush.bf16.msra.mxu0 %v4630
  %10306 = vmatpush.bf16.msra.mxu0 %v4626
  %10307 = vmatpush.bf16.msra.mxu0 %v4622
  %10308 = vmatpush.bf16.msra.mxu0 %v4618
  %10309 = vmatpush.bf16.msra.mxu0 %v4614
  %10310 = vmatpush.bf16.msra.mxu0 %v4610
  %10311 = vmatpush.bf16.msra.mxu0 %v4606
  %10312 = vmatpush.bf16.msra.mxu0 %v4602
  %10313 = vmatmul.bf16.gmra.mxu0 %v9237
  %v10314 = vpop.f32.mrf.mxu0
  %v10315 = vadd.f32 %v10302, %v10314
  %v10316 = vpop.f32.mrf.mxu0
  %10317 = vdwg.mxu0
  %10318 = vmatpush.bf16.msra.mxu0 %v4662
  %10319 = vmatpush.bf16.msra.mxu0 %v4658
  %10320 = vmatpush.bf16.msra.mxu0 %v4654
  %10321 = vmatpush.bf16.msra.mxu0 %v4650
  %10322 = vmatpush.bf16.msra.mxu0 %v4646
  %10323 = vmatpush.bf16.msra.mxu0 %v4642
  %10324 = vmatpush.bf16.msra.mxu0 %v4638
  %10325 = vmatpush.bf16.msra.mxu0 %v4634
  %10326 = vmatmul.bf16.gmra.mxu0 %v9238
  %v10327 = vpop.f32.mrf.mxu0
  %v10328 = vadd.f32 %v10315, %v10327
  %v10329 = vpop.f32.mrf.mxu0
  %10330 = vdwg.mxu0
  %10331 = vmatpush.bf16.msra.mxu0 %v4694
  %10332 = vmatpush.bf16.msra.mxu0 %v4690
  %10333 = vmatpush.bf16.msra.mxu0 %v4686
  %10334 = vmatpush.bf16.msra.mxu0 %v4682
  %10335 = vmatpush.bf16.msra.mxu0 %v4678
  %10336 = vmatpush.bf16.msra.mxu0 %v4674
  %10337 = vmatpush.bf16.msra.mxu0 %v4670
  %10338 = vmatpush.bf16.msra.mxu0 %v4666
  %10339 = vmatmul.bf16.gmra.mxu0 %v9239
  %v10340 = vpop.f32.mrf.mxu0
  %v10341 = vadd.f32 %v10328, %v10340
  %v10342 = vpop.f32.mrf.mxu0
  %10343 = vdwg.mxu0
  %10344 = vmatpush.bf16.msra.mxu0 %v4726
  %10345 = vmatpush.bf16.msra.mxu0 %v4722
  %10346 = vmatpush.bf16.msra.mxu0 %v4718
  %10347 = vmatpush.bf16.msra.mxu0 %v4714
  %10348 = vmatpush.bf16.msra.mxu0 %v4710
  %10349 = vmatpush.bf16.msra.mxu0 %v4706
  %10350 = vmatpush.bf16.msra.mxu0 %v4702
  %10351 = vmatpush.bf16.msra.mxu0 %v4698
  %10352 = vmatmul.bf16.gmra.mxu0 %v9240
  %v10353 = vpop.f32.mrf.mxu0
  %v10354 = vadd.f32 %v10341, %v10353
  %v10355 = vpop.f32.mrf.mxu0
  %10356 = vdwg.mxu0
  %10357 = vmatpush.bf16.msra.mxu0 %v4758
  %10358 = vmatpush.bf16.msra.mxu0 %v4754
  %10359 = vmatpush.bf16.msra.mxu0 %v4750
  %10360 = vmatpush.bf16.msra.mxu0 %v4746
  %10361 = vmatpush.bf16.msra.mxu0 %v4742
  %10362 = vmatpush.bf16.msra.mxu0 %v4738
  %10363 = vmatpush.bf16.msra.mxu0 %v4734
  %10364 = vmatpush.bf16.msra.mxu0 %v4730
  %10365 = vmatmul.bf16.gmra.mxu0 %v9241
  %v10366 = vpop.f32.mrf.mxu0
  %v10367 = vadd.f32 %v10354, %v10366
  %v10368 = vpop.f32.mrf.mxu0
  %10369 = vdwg.mxu0
  %10370 = vmatpush.bf16.msra.mxu0 %v4790
  %10371 = vmatpush.bf16.msra.mxu0 %v4786
  %10372 = vmatpush.bf16.msra.mxu0 %v4782
  %10373 = vmatpush.bf16.msra.mxu0 %v4778
  %10374 = vmatpush.bf16.msra.mxu0 %v4774
  %10375 = vmatpush.bf16.msra.mxu0 %v4770
  %10376 = vmatpush.bf16.msra.mxu0 %v4766
  %10377 = vmatpush.bf16.msra.mxu0 %v4762
  %10378 = vmatmul.bf16.gmra.mxu0 %v9242
  %v10379 = vpop.f32.mrf.mxu0
  %v10380 = vadd.f32 %v10367, %v10379
  %v10381 = vpop.f32.mrf.mxu0
  %10382 = vdwg.mxu0
  %10383 = vmatpush.bf16.msra.mxu0 %v4822
  %10384 = vmatpush.bf16.msra.mxu0 %v4818
  %10385 = vmatpush.bf16.msra.mxu0 %v4814
  %10386 = vmatpush.bf16.msra.mxu0 %v4810
  %10387 = vmatpush.bf16.msra.mxu0 %v4806
  %10388 = vmatpush.bf16.msra.mxu0 %v4802
  %10389 = vmatpush.bf16.msra.mxu0 %v4798
  %10390 = vmatpush.bf16.msra.mxu0 %v4794
  %10391 = vmatmul.bf16.gmra.mxu0 %v9243
  %v10392 = vpop.f32.mrf.mxu0
  %v10393 = vadd.f32 %v10380, %v10392
  %v10394 = vpop.f32.mrf.mxu0
  %10395 = vdwg.mxu0
  %10396 = vmatpush.bf16.msra.mxu0 %v4854
  %10397 = vmatpush.bf16.msra.mxu0 %v4850
  %10398 = vmatpush.bf16.msra.mxu0 %v4846
  %10399 = vmatpush.bf16.msra.mxu0 %v4842
  %10400 = vmatpush.bf16.msra.mxu0 %v4838
  %10401 = vmatpush.bf16.msra.mxu0 %v4834
  %10402 = vmatpush.bf16.msra.mxu0 %v4830
  %10403 = vmatpush.bf16.msra.mxu0 %v4826
  %10404 = vmatmul.bf16.gmra.mxu0 %v9244
  %v10405 = vpop.f32.mrf.mxu0
  %v10406 = vadd.f32 %v10393, %v10405
  %v10407 = vpop.f32.mrf.mxu0
  %10408 = vdwg.mxu0
  %10409 = vmatpush.bf16.msra.mxu0 %v4886
  %10410 = vmatpush.bf16.msra.mxu0 %v4882
  %10411 = vmatpush.bf16.msra.mxu0 %v4878
  %10412 = vmatpush.bf16.msra.mxu0 %v4874
  %10413 = vmatpush.bf16.msra.mxu0 %v4870
  %10414 = vmatpush.bf16.msra.mxu0 %v4866
  %10415 = vmatpush.bf16.msra.mxu0 %v4862
  %10416 = vmatpush.bf16.msra.mxu0 %v4858
  %10417 = vmatmul.bf16.gmra.mxu0 %v9245
  %v10418 = vpop.f32.mrf.mxu0
  %v10419 = vadd.f32 %v10406, %v10418
  %v10420 = vpop.f32.mrf.mxu0
  %10421 = vdwg.mxu0
  %10422 = vmatpush.bf16.msra.mxu0 %v4918
  %10423 = vmatpush.bf16.msra.mxu0 %v4914
  %10424 = vmatpush.bf16.msra.mxu0 %v4910
  %10425 = vmatpush.bf16.msra.mxu0 %v4906
  %10426 = vmatpush.bf16.msra.mxu0 %v4902
  %10427 = vmatpush.bf16.msra.mxu0 %v4898
  %10428 = vmatpush.bf16.msra.mxu0 %v4894
  %10429 = vmatpush.bf16.msra.mxu0 %v4890
  %10430 = vmatmul.bf16.gmra.mxu0 %v9246
  %v10431 = vpop.f32.mrf.mxu0
  %v10432 = vadd.f32 %v10419, %v10431
  %v10433 = vpop.f32.mrf.mxu0
  %10434 = vdwg.mxu0
  %10435 = vmatpush.bf16.msra.mxu0 %v4950
  %10436 = vmatpush.bf16.msra.mxu0 %v4946
  %10437 = vmatpush.bf16.msra.mxu0 %v4942
  %10438 = vmatpush.bf16.msra.mxu0 %v4938
  %10439 = vmatpush.bf16.msra.mxu0 %v4934
  %10440 = vmatpush.bf16.msra.mxu0 %v4930
  %10441 = vmatpush.bf16.msra.mxu0 %v4926
  %10442 = vmatpush.bf16.msra.mxu0 %v4922
  %10443 = vmatmul.bf16.gmra.mxu0 %v9247
  %v10444 = vpop.f32.mrf.mxu0
  %v10445 = vadd.f32 %v10432, %v10444
  %v10446 = vpop.f32.mrf.mxu0
  %10447 = vdwg.mxu0
  %10448 = vmatpush.bf16.msra.mxu0 %v4023
  %10449 = vmatpush.bf16.msra.mxu0 %v4019
  %10450 = vmatpush.bf16.msra.mxu0 %v4015
  %10451 = vmatpush.bf16.msra.mxu0 %v4011
  %10452 = vmatpush.bf16.msra.mxu0 %v4007
  %10453 = vmatpush.bf16.msra.mxu0 %v4003
  %10454 = vmatpush.bf16.msra.mxu0 %v3999
  %10455 = vmatpush.bf16.msra.mxu0 %v3995
  %10456 = vmatmul.bf16.gmra.mxu0 %v9218
  %v10457 = vpop.f32.mrf.mxu0
  %v10458 = vadd.f32 0.0, %v10457
  %v10459 = vpop.f32.mrf.mxu0
  %10460 = vdwg.mxu0
  %10461 = vmatpush.bf16.msra.mxu0 %v4055
  %10462 = vmatpush.bf16.msra.mxu0 %v4051
  %10463 = vmatpush.bf16.msra.mxu0 %v4047
  %10464 = vmatpush.bf16.msra.mxu0 %v4043
  %10465 = vmatpush.bf16.msra.mxu0 %v4039
  %10466 = vmatpush.bf16.msra.mxu0 %v4035
  %10467 = vmatpush.bf16.msra.mxu0 %v4031
  %10468 = vmatpush.bf16.msra.mxu0 %v4027
  %10469 = vmatmul.bf16.gmra.mxu0 %v9219
  %v10470 = vpop.f32.mrf.mxu0
  %v10471 = vadd.f32 %v10458, %v10470
  %v10472 = vpop.f32.mrf.mxu0
  %10473 = vdwg.mxu0
  %10474 = vmatpush.bf16.msra.mxu0 %v4087
  %10475 = vmatpush.bf16.msra.mxu0 %v4083
  %10476 = vmatpush.bf16.msra.mxu0 %v4079
  %10477 = vmatpush.bf16.msra.mxu0 %v4075
  %10478 = vmatpush.bf16.msra.mxu0 %v4071
  %10479 = vmatpush.bf16.msra.mxu0 %v4067
  %10480 = vmatpush.bf16.msra.mxu0 %v4063
  %10481 = vmatpush.bf16.msra.mxu0 %v4059
  %10482 = vmatmul.bf16.gmra.mxu0 %v9220
  %v10483 = vpop.f32.mrf.mxu0
  %v10484 = vadd.f32 %v10471, %v10483
  %v10485 = vpop.f32.mrf.mxu0
  %10486 = vdwg.mxu0
  %10487 = vmatpush.bf16.msra.mxu0 %v4119
  %10488 = vmatpush.bf16.msra.mxu0 %v4115
  %10489 = vmatpush.bf16.msra.mxu0 %v4111
  %10490 = vmatpush.bf16.msra.mxu0 %v4107
  %10491 = vmatpush.bf16.msra.mxu0 %v4103
  %10492 = vmatpush.bf16.msra.mxu0 %v4099
  %10493 = vmatpush.bf16.msra.mxu0 %v4095
  %10494 = vmatpush.bf16.msra.mxu0 %v4091
  %10495 = vmatmul.bf16.gmra.mxu0 %v9221
  %v10496 = vpop.f32.mrf.mxu0
  %v10497 = vadd.f32 %v10484, %v10496
  %v10498 = vpop.f32.mrf.mxu0
  %10499 = vdwg.mxu0
  %10500 = vmatpush.bf16.msra.mxu0 %v4151
  %10501 = vmatpush.bf16.msra.mxu0 %v4147
  %10502 = vmatpush.bf16.msra.mxu0 %v4143
  %10503 = vmatpush.bf16.msra.mxu0 %v4139
  %10504 = vmatpush.bf16.msra.mxu0 %v4135
  %10505 = vmatpush.bf16.msra.mxu0 %v4131
  %10506 = vmatpush.bf16.msra.mxu0 %v4127
  %10507 = vmatpush.bf16.msra.mxu0 %v4123
  %10508 = vmatmul.bf16.gmra.mxu0 %v9222
  %v10509 = vpop.f32.mrf.mxu0
  %v10510 = vadd.f32 %v10497, %v10509
  %v10511 = vpop.f32.mrf.mxu0
  %10512 = vdwg.mxu0
  %10513 = vmatpush.bf16.msra.mxu0 %v4183
  %10514 = vmatpush.bf16.msra.mxu0 %v4179
  %10515 = vmatpush.bf16.msra.mxu0 %v4175
  %10516 = vmatpush.bf16.msra.mxu0 %v4171
  %10517 = vmatpush.bf16.msra.mxu0 %v4167
  %10518 = vmatpush.bf16.msra.mxu0 %v4163
  %10519 = vmatpush.bf16.msra.mxu0 %v4159
  %10520 = vmatpush.bf16.msra.mxu0 %v4155
  %10521 = vmatmul.bf16.gmra.mxu0 %v9223
  %v10522 = vpop.f32.mrf.mxu0
  %v10523 = vadd.f32 %v10510, %v10522
  %v10524 = vpop.f32.mrf.mxu0
  %10525 = vdwg.mxu0
  %10526 = vmatpush.bf16.msra.mxu0 %v4215
  %10527 = vmatpush.bf16.msra.mxu0 %v4211
  %10528 = vmatpush.bf16.msra.mxu0 %v4207
  %10529 = vmatpush.bf16.msra.mxu0 %v4203
  %10530 = vmatpush.bf16.msra.mxu0 %v4199
  %10531 = vmatpush.bf16.msra.mxu0 %v4195
  %10532 = vmatpush.bf16.msra.mxu0 %v4191
  %10533 = vmatpush.bf16.msra.mxu0 %v4187
  %10534 = vmatmul.bf16.gmra.mxu0 %v9224
  %v10535 = vpop.f32.mrf.mxu0
  %v10536 = vadd.f32 %v10523, %v10535
  %v10537 = vpop.f32.mrf.mxu0
  %10538 = vdwg.mxu0
  %10539 = vmatpush.bf16.msra.mxu0 %v4247
  %10540 = vmatpush.bf16.msra.mxu0 %v4243
  %10541 = vmatpush.bf16.msra.mxu0 %v4239
  %10542 = vmatpush.bf16.msra.mxu0 %v4235
  %10543 = vmatpush.bf16.msra.mxu0 %v4231
  %10544 = vmatpush.bf16.msra.mxu0 %v4227
  %10545 = vmatpush.bf16.msra.mxu0 %v4223
  %10546 = vmatpush.bf16.msra.mxu0 %v4219
  %10547 = vmatmul.bf16.gmra.mxu0 %v9225
  %v10548 = vpop.f32.mrf.mxu0
  %v10549 = vadd.f32 %v10536, %v10548
  %v10550 = vpop.f32.mrf.mxu0
  %10551 = vdwg.mxu0
  %10552 = vmatpush.bf16.msra.mxu0 %v4279
  %10553 = vmatpush.bf16.msra.mxu0 %v4275
  %10554 = vmatpush.bf16.msra.mxu0 %v4271
  %10555 = vmatpush.bf16.msra.mxu0 %v4267
  %10556 = vmatpush.bf16.msra.mxu0 %v4263
  %10557 = vmatpush.bf16.msra.mxu0 %v4259
  %10558 = vmatpush.bf16.msra.mxu0 %v4255
  %10559 = vmatpush.bf16.msra.mxu0 %v4251
  %10560 = vmatmul.bf16.gmra.mxu0 %v9226
  %v10561 = vpop.f32.mrf.mxu0
  %v10562 = vadd.f32 %v10549, %v10561
  %v10563 = vpop.f32.mrf.mxu0
  %10564 = vdwg.mxu0
  %10565 = vmatpush.bf16.msra.mxu0 %v4311
  %10566 = vmatpush.bf16.msra.mxu0 %v4307
  %10567 = vmatpush.bf16.msra.mxu0 %v4303
  %10568 = vmatpush.bf16.msra.mxu0 %v4299
  %10569 = vmatpush.bf16.msra.mxu0 %v4295
  %10570 = vmatpush.bf16.msra.mxu0 %v4291
  %10571 = vmatpush.bf16.msra.mxu0 %v4287
  %10572 = vmatpush.bf16.msra.mxu0 %v4283
  %10573 = vmatmul.bf16.gmra.mxu0 %v9227
  %v10574 = vpop.f32.mrf.mxu0
  %v10575 = vadd.f32 %v10562, %v10574
  %v10576 = vpop.f32.mrf.mxu0
  %10577 = vdwg.mxu0
  %10578 = vmatpush.bf16.msra.mxu0 %v4343
  %10579 = vmatpush.bf16.msra.mxu0 %v4339
  %10580 = vmatpush.bf16.msra.mxu0 %v4335
  %10581 = vmatpush.bf16.msra.mxu0 %v4331
  %10582 = vmatpush.bf16.msra.mxu0 %v4327
  %10583 = vmatpush.bf16.msra.mxu0 %v4323
  %10584 = vmatpush.bf16.msra.mxu0 %v4319
  %10585 = vmatpush.bf16.msra.mxu0 %v4315
  %10586 = vmatmul.bf16.gmra.mxu0 %v9228
  %v10587 = vpop.f32.mrf.mxu0
  %v10588 = vadd.f32 %v10575, %v10587
  %v10589 = vpop.f32.mrf.mxu0
  %10590 = vdwg.mxu0
  %10591 = vmatpush.bf16.msra.mxu0 %v4375
  %10592 = vmatpush.bf16.msra.mxu0 %v4371
  %10593 = vmatpush.bf16.msra.mxu0 %v4367
  %10594 = vmatpush.bf16.msra.mxu0 %v4363
  %10595 = vmatpush.bf16.msra.mxu0 %v4359
  %10596 = vmatpush.bf16.msra.mxu0 %v4355
  %10597 = vmatpush.bf16.msra.mxu0 %v4351
  %10598 = vmatpush.bf16.msra.mxu0 %v4347
  %10599 = vmatmul.bf16.gmra.mxu0 %v9229
  %v10600 = vpop.f32.mrf.mxu0
  %v10601 = vadd.f32 %v10588, %v10600
  %v10602 = vpop.f32.mrf.mxu0
  %10603 = vdwg.mxu0
  %10604 = vmatpush.bf16.msra.mxu0 %v4407
  %10605 = vmatpush.bf16.msra.mxu0 %v4403
  %10606 = vmatpush.bf16.msra.mxu0 %v4399
  %10607 = vmatpush.bf16.msra.mxu0 %v4395
  %10608 = vmatpush.bf16.msra.mxu0 %v4391
  %10609 = vmatpush.bf16.msra.mxu0 %v4387
  %10610 = vmatpush.bf16.msra.mxu0 %v4383
  %10611 = vmatpush.bf16.msra.mxu0 %v4379
  %10612 = vmatmul.bf16.gmra.mxu0 %v9230
  %v10613 = vpop.f32.mrf.mxu0
  %v10614 = vadd.f32 %v10601, %v10613
  %v10615 = vpop.f32.mrf.mxu0
  %10616 = vdwg.mxu0
  %10617 = vmatpush.bf16.msra.mxu0 %v4439
  %10618 = vmatpush.bf16.msra.mxu0 %v4435
  %10619 = vmatpush.bf16.msra.mxu0 %v4431
  %10620 = vmatpush.bf16.msra.mxu0 %v4427
  %10621 = vmatpush.bf16.msra.mxu0 %v4423
  %10622 = vmatpush.bf16.msra.mxu0 %v4419
  %10623 = vmatpush.bf16.msra.mxu0 %v4415
  %10624 = vmatpush.bf16.msra.mxu0 %v4411
  %10625 = vmatmul.bf16.gmra.mxu0 %v9231
  %v10626 = vpop.f32.mrf.mxu0
  %v10627 = vadd.f32 %v10614, %v10626
  %v10628 = vpop.f32.mrf.mxu0
  %10629 = vdwg.mxu0
  %10630 = vmatpush.bf16.msra.mxu0 %v4471
  %10631 = vmatpush.bf16.msra.mxu0 %v4467
  %10632 = vmatpush.bf16.msra.mxu0 %v4463
  %10633 = vmatpush.bf16.msra.mxu0 %v4459
  %10634 = vmatpush.bf16.msra.mxu0 %v4455
  %10635 = vmatpush.bf16.msra.mxu0 %v4451
  %10636 = vmatpush.bf16.msra.mxu0 %v4447
  %10637 = vmatpush.bf16.msra.mxu0 %v4443
  %10638 = vmatmul.bf16.gmra.mxu0 %v9232
  %v10639 = vpop.f32.mrf.mxu0
  %v10640 = vadd.f32 %v10627, %v10639
  %v10641 = vpop.f32.mrf.mxu0
  %10642 = vdwg.mxu0
  %10643 = vmatpush.bf16.msra.mxu0 %v4503
  %10644 = vmatpush.bf16.msra.mxu0 %v4499
  %10645 = vmatpush.bf16.msra.mxu0 %v4495
  %10646 = vmatpush.bf16.msra.mxu0 %v4491
  %10647 = vmatpush.bf16.msra.mxu0 %v4487
  %10648 = vmatpush.bf16.msra.mxu0 %v4483
  %10649 = vmatpush.bf16.msra.mxu0 %v4479
  %10650 = vmatpush.bf16.msra.mxu0 %v4475
  %10651 = vmatmul.bf16.gmra.mxu0 %v9233
  %v10652 = vpop.f32.mrf.mxu0
  %v10653 = vadd.f32 %v10640, %v10652
  %v10654 = vpop.f32.mrf.mxu0
  %10655 = vdwg.mxu0
  %10656 = vmatpush.bf16.msra.mxu0 %v4535
  %10657 = vmatpush.bf16.msra.mxu0 %v4531
  %10658 = vmatpush.bf16.msra.mxu0 %v4527
  %10659 = vmatpush.bf16.msra.mxu0 %v4523
  %10660 = vmatpush.bf16.msra.mxu0 %v4519
  %10661 = vmatpush.bf16.msra.mxu0 %v4515
  %10662 = vmatpush.bf16.msra.mxu0 %v4511
  %10663 = vmatpush.bf16.msra.mxu0 %v4507
  %10664 = vmatmul.bf16.gmra.mxu0 %v9234
  %v10665 = vpop.f32.mrf.mxu0
  %v10666 = vadd.f32 %v10653, %v10665
  %v10667 = vpop.f32.mrf.mxu0
  %10668 = vdwg.mxu0
  %10669 = vmatpush.bf16.msra.mxu0 %v4567
  %10670 = vmatpush.bf16.msra.mxu0 %v4563
  %10671 = vmatpush.bf16.msra.mxu0 %v4559
  %10672 = vmatpush.bf16.msra.mxu0 %v4555
  %10673 = vmatpush.bf16.msra.mxu0 %v4551
  %10674 = vmatpush.bf16.msra.mxu0 %v4547
  %10675 = vmatpush.bf16.msra.mxu0 %v4543
  %10676 = vmatpush.bf16.msra.mxu0 %v4539
  %10677 = vmatmul.bf16.gmra.mxu0 %v9235
  %v10678 = vpop.f32.mrf.mxu0
  %v10679 = vadd.f32 %v10666, %v10678
  %v10680 = vpop.f32.mrf.mxu0
  %10681 = vdwg.mxu0
  %10682 = vmatpush.bf16.msra.mxu0 %v4599
  %10683 = vmatpush.bf16.msra.mxu0 %v4595
  %10684 = vmatpush.bf16.msra.mxu0 %v4591
  %10685 = vmatpush.bf16.msra.mxu0 %v4587
  %10686 = vmatpush.bf16.msra.mxu0 %v4583
  %10687 = vmatpush.bf16.msra.mxu0 %v4579
  %10688 = vmatpush.bf16.msra.mxu0 %v4575
  %10689 = vmatpush.bf16.msra.mxu0 %v4571
  %10690 = vmatmul.bf16.gmra.mxu0 %v9236
  %v10691 = vpop.f32.mrf.mxu0
  %v10692 = vadd.f32 %v10679, %v10691
  %v10693 = vpop.f32.mrf.mxu0
  %10694 = vdwg.mxu0
  %10695 = vmatpush.bf16.msra.mxu0 %v4631
  %10696 = vmatpush.bf16.msra.mxu0 %v4627
  %10697 = vmatpush.bf16.msra.mxu0 %v4623
  %10698 = vmatpush.bf16.msra.mxu0 %v4619
  %10699 = vmatpush.bf16.msra.mxu0 %v4615
  %10700 = vmatpush.bf16.msra.mxu0 %v4611
  %10701 = vmatpush.bf16.msra.mxu0 %v4607
  %10702 = vmatpush.bf16.msra.mxu0 %v4603
  %10703 = vmatmul.bf16.gmra.mxu0 %v9237
  %v10704 = vpop.f32.mrf.mxu0
  %v10705 = vadd.f32 %v10692, %v10704
  %v10706 = vpop.f32.mrf.mxu0
  %10707 = vdwg.mxu0
  %10708 = vmatpush.bf16.msra.mxu0 %v4663
  %10709 = vmatpush.bf16.msra.mxu0 %v4659
  %10710 = vmatpush.bf16.msra.mxu0 %v4655
  %10711 = vmatpush.bf16.msra.mxu0 %v4651
  %10712 = vmatpush.bf16.msra.mxu0 %v4647
  %10713 = vmatpush.bf16.msra.mxu0 %v4643
  %10714 = vmatpush.bf16.msra.mxu0 %v4639
  %10715 = vmatpush.bf16.msra.mxu0 %v4635
  %10716 = vmatmul.bf16.gmra.mxu0 %v9238
  %v10717 = vpop.f32.mrf.mxu0
  %v10718 = vadd.f32 %v10705, %v10717
  %v10719 = vpop.f32.mrf.mxu0
  %10720 = vdwg.mxu0
  %10721 = vmatpush.bf16.msra.mxu0 %v4695
  %10722 = vmatpush.bf16.msra.mxu0 %v4691
  %10723 = vmatpush.bf16.msra.mxu0 %v4687
  %10724 = vmatpush.bf16.msra.mxu0 %v4683
  %10725 = vmatpush.bf16.msra.mxu0 %v4679
  %10726 = vmatpush.bf16.msra.mxu0 %v4675
  %10727 = vmatpush.bf16.msra.mxu0 %v4671
  %10728 = vmatpush.bf16.msra.mxu0 %v4667
  %10729 = vmatmul.bf16.gmra.mxu0 %v9239
  %v10730 = vpop.f32.mrf.mxu0
  %v10731 = vadd.f32 %v10718, %v10730
  %v10732 = vpop.f32.mrf.mxu0
  %10733 = vdwg.mxu0
  %10734 = vmatpush.bf16.msra.mxu0 %v4727
  %10735 = vmatpush.bf16.msra.mxu0 %v4723
  %10736 = vmatpush.bf16.msra.mxu0 %v4719
  %10737 = vmatpush.bf16.msra.mxu0 %v4715
  %10738 = vmatpush.bf16.msra.mxu0 %v4711
  %10739 = vmatpush.bf16.msra.mxu0 %v4707
  %10740 = vmatpush.bf16.msra.mxu0 %v4703
  %10741 = vmatpush.bf16.msra.mxu0 %v4699
  %10742 = vmatmul.bf16.gmra.mxu0 %v9240
  %v10743 = vpop.f32.mrf.mxu0
  %v10744 = vadd.f32 %v10731, %v10743
  %v10745 = vpop.f32.mrf.mxu0
  %10746 = vdwg.mxu0
  %10747 = vmatpush.bf16.msra.mxu0 %v4759
  %10748 = vmatpush.bf16.msra.mxu0 %v4755
  %10749 = vmatpush.bf16.msra.mxu0 %v4751
  %10750 = vmatpush.bf16.msra.mxu0 %v4747
  %10751 = vmatpush.bf16.msra.mxu0 %v4743
  %10752 = vmatpush.bf16.msra.mxu0 %v4739
  %10753 = vmatpush.bf16.msra.mxu0 %v4735
  %10754 = vmatpush.bf16.msra.mxu0 %v4731
  %10755 = vmatmul.bf16.gmra.mxu0 %v9241
  %v10756 = vpop.f32.mrf.mxu0
  %v10757 = vadd.f32 %v10744, %v10756
  %v10758 = vpop.f32.mrf.mxu0
  %10759 = vdwg.mxu0
  %10760 = vmatpush.bf16.msra.mxu0 %v4791
  %10761 = vmatpush.bf16.msra.mxu0 %v4787
  %10762 = vmatpush.bf16.msra.mxu0 %v4783
  %10763 = vmatpush.bf16.msra.mxu0 %v4779
  %10764 = vmatpush.bf16.msra.mxu0 %v4775
  %10765 = vmatpush.bf16.msra.mxu0 %v4771
  %10766 = vmatpush.bf16.msra.mxu0 %v4767
  %10767 = vmatpush.bf16.msra.mxu0 %v4763
  %10768 = vmatmul.bf16.gmra.mxu0 %v9242
  %v10769 = vpop.f32.mrf.mxu0
  %v10770 = vadd.f32 %v10757, %v10769
  %v10771 = vpop.f32.mrf.mxu0
  %10772 = vdwg.mxu0
  %10773 = vmatpush.bf16.msra.mxu0 %v4823
  %10774 = vmatpush.bf16.msra.mxu0 %v4819
  %10775 = vmatpush.bf16.msra.mxu0 %v4815
  %10776 = vmatpush.bf16.msra.mxu0 %v4811
  %10777 = vmatpush.bf16.msra.mxu0 %v4807
  %10778 = vmatpush.bf16.msra.mxu0 %v4803
  %10779 = vmatpush.bf16.msra.mxu0 %v4799
  %10780 = vmatpush.bf16.msra.mxu0 %v4795
  %10781 = vmatmul.bf16.gmra.mxu0 %v9243
  %v10782 = vpop.f32.mrf.mxu0
  %v10783 = vadd.f32 %v10770, %v10782
  %v10784 = vpop.f32.mrf.mxu0
  %10785 = vdwg.mxu0
  %10786 = vmatpush.bf16.msra.mxu0 %v4855
  %10787 = vmatpush.bf16.msra.mxu0 %v4851
  %10788 = vmatpush.bf16.msra.mxu0 %v4847
  %10789 = vmatpush.bf16.msra.mxu0 %v4843
  %10790 = vmatpush.bf16.msra.mxu0 %v4839
  %10791 = vmatpush.bf16.msra.mxu0 %v4835
  %10792 = vmatpush.bf16.msra.mxu0 %v4831
  %10793 = vmatpush.bf16.msra.mxu0 %v4827
  %10794 = vmatmul.bf16.gmra.mxu0 %v9244
  %v10795 = vpop.f32.mrf.mxu0
  %v10796 = vadd.f32 %v10783, %v10795
  %v10797 = vpop.f32.mrf.mxu0
  %10798 = vdwg.mxu0
  %10799 = vmatpush.bf16.msra.mxu0 %v4887
  %10800 = vmatpush.bf16.msra.mxu0 %v4883
  %10801 = vmatpush.bf16.msra.mxu0 %v4879
  %10802 = vmatpush.bf16.msra.mxu0 %v4875
  %10803 = vmatpush.bf16.msra.mxu0 %v4871
  %10804 = vmatpush.bf16.msra.mxu0 %v4867
  %10805 = vmatpush.bf16.msra.mxu0 %v4863
  %10806 = vmatpush.bf16.msra.mxu0 %v4859
  %10807 = vmatmul.bf16.gmra.mxu0 %v9245
  %v10808 = vpop.f32.mrf.mxu0
  %v10809 = vadd.f32 %v10796, %v10808
  %v10810 = vpop.f32.mrf.mxu0
  %10811 = vdwg.mxu0
  %10812 = vmatpush.bf16.msra.mxu0 %v4919
  %10813 = vmatpush.bf16.msra.mxu0 %v4915
  %10814 = vmatpush.bf16.msra.mxu0 %v4911
  %10815 = vmatpush.bf16.msra.mxu0 %v4907
  %10816 = vmatpush.bf16.msra.mxu0 %v4903
  %10817 = vmatpush.bf16.msra.mxu0 %v4899
  %10818 = vmatpush.bf16.msra.mxu0 %v4895
  %10819 = vmatpush.bf16.msra.mxu0 %v4891
  %10820 = vmatmul.bf16.gmra.mxu0 %v9246
  %v10821 = vpop.f32.mrf.mxu0
  %v10822 = vadd.f32 %v10809, %v10821
  %v10823 = vpop.f32.mrf.mxu0
  %10824 = vdwg.mxu0
  %10825 = vmatpush.bf16.msra.mxu0 %v4951
  %10826 = vmatpush.bf16.msra.mxu0 %v4947
  %10827 = vmatpush.bf16.msra.mxu0 %v4943
  %10828 = vmatpush.bf16.msra.mxu0 %v4939
  %10829 = vmatpush.bf16.msra.mxu0 %v4935
  %10830 = vmatpush.bf16.msra.mxu0 %v4931
  %10831 = vmatpush.bf16.msra.mxu0 %v4927
  %10832 = vmatpush.bf16.msra.mxu0 %v4923
  %10833 = vmatmul.bf16.gmra.mxu0 %v9247
  %v10834 = vpop.f32.mrf.mxu0
  %v10835 = vadd.f32 %v10822, %v10834
  %v10836 = vpop.f32.mrf.mxu0
  %10837 = vdwg.mxu0
  %v10838 = vmax.f32 %v9153, %v9665
  %v10839 = vmax.f32 %v9154, %v10055
  %v10840 = vmax.f32 %v9155, %v10445
  %v10841 = vmax.f32 %v9156, %v10835
  %s10842 = scalar_lea.vmem %s0, 360
  %v10843 = vld [vmem:[%s10842] sm:$0xff]
  %v10844 = vld [vmem:[%s10842 + $0x8] sm:$0xff]
  %v10845 = vld [vmem:[%s10842 + $0x10] sm:$0xff]
  %v10846 = vld [vmem:[%s10842 + $0x18] sm:$0xff]
  %v10847 = vld [vmem:[%s10842 + $0x20] sm:$0xff]
  %v10848 = vld [vmem:[%s10842 + $0x28] sm:$0xff]
  %v10849 = vld [vmem:[%s10842 + $0x30] sm:$0xff]
  %v10850 = vld [vmem:[%s10842 + $0x38] sm:$0xff]
  %v10851 = vld [vmem:[%s10842 + $0x40] sm:$0xff]
  %v10852 = vld [vmem:[%s10842 + $0x48] sm:$0xff]
  %v10853 = vld [vmem:[%s10842 + $0x50] sm:$0xff]
  %v10854 = vld [vmem:[%s10842 + $0x58] sm:$0xff]
  %v10855 = vld [vmem:[%s10842 + $0x60] sm:$0xff]
  %v10856 = vld [vmem:[%s10842 + $0x68] sm:$0xff]
  %v10857 = vld [vmem:[%s10842 + $0x70] sm:$0xff]
  %v10873 = vunpack.c.l.b16 %v10843
  %v10874 = vunpack.c.h.b16 %v10843
  %v10875 = vunpack.c.l.b16 %v10844
  %v10876 = vunpack.c.h.b16 %v10844
  %v10877 = vunpack.c.l.b16 %v10845
  %v10878 = vunpack.c.h.b16 %v10845
  %v10879 = vunpack.c.l.b16 %v10846
  %v10880 = vunpack.c.h.b16 %v10846
  %v10881 = vunpack.c.l.b16 %v10847
  %v10882 = vunpack.c.h.b16 %v10847
  %v10883 = vunpack.c.l.b16 %v10848
  %v10884 = vunpack.c.h.b16 %v10848
  %v10885 = vunpack.c.l.b16 %v10849
  %v10886 = vunpack.c.h.b16 %v10849
  %v10887 = vunpack.c.l.b16 %v10850
  %v10888 = vunpack.c.h.b16 %v10850
  %v10889 = vunpack.c.l.b16 %v10851
  %v10890 = vunpack.c.h.b16 %v10851
  %v10891 = vunpack.c.l.b16 %v10852
  %v10892 = vunpack.c.h.b16 %v10852
  %v10893 = vunpack.c.l.b16 %v10853
  %v10894 = vunpack.c.h.b16 %v10853
  %v10895 = vunpack.c.l.b16 %v10854
  %v10896 = vunpack.c.h.b16 %v10854
  %v10897 = vunpack.c.l.b16 %v10855
  %v10898 = vunpack.c.h.b16 %v10855
  %v10899 = vunpack.c.l.b16 %v10856
  %v10900 = vunpack.c.h.b16 %v10856
  %v10901 = vunpack.c.l.b16 %v10857
  %v10902 = vunpack.c.h.b16 %v10857
  %v10903 = vpack.c.b16 %v10873, %v10873
  %v10904 = vpack.c.b16 %v10874, %v10874
  %v10905 = vpack.c.b16 %v10875, %v10875
  %v10906 = vpack.c.b16 %v10876, %v10876
  %v10907 = vpack.c.b16 %v10877, %v10877
  %v10908 = vpack.c.b16 %v10878, %v10878
  %v10909 = vpack.c.b16 %v10879, %v10879
  %v10910 = vpack.c.b16 %v10880, %v10880
  %v10911 = vpack.c.b16 %v10881, %v10881
  %v10912 = vpack.c.b16 %v10882, %v10882
  %v10913 = vpack.c.b16 %v10883, %v10883
  %v10914 = vpack.c.b16 %v10884, %v10884
  %v10915 = vpack.c.b16 %v10885, %v10885
  %v10916 = vpack.c.b16 %v10886, %v10886
  %v10917 = vpack.c.b16 %v10887, %v10887
  %v10918 = vpack.c.b16 %v10888, %v10888
  %v10919 = vpack.c.b16 %v10889, %v10889
  %v10920 = vpack.c.b16 %v10890, %v10890
  %v10921 = vpack.c.b16 %v10891, %v10891
  %v10922 = vpack.c.b16 %v10892, %v10892
  %v10923 = vpack.c.b16 %v10893, %v10893
  %v10924 = vpack.c.b16 %v10894, %v10894
  %v10925 = vpack.c.b16 %v10895, %v10895
  %v10926 = vpack.c.b16 %v10896, %v10896
  %v10927 = vpack.c.b16 %v10897, %v10897
  %v10928 = vpack.c.b16 %v10898, %v10898
  %v10929 = vpack.c.b16 %v10899, %v10899
  %v10930 = vpack.c.b16 %v10900, %v10900
  %v10931 = vpack.c.b16 %v10901, %v10901
  %v10932 = vpack.c.b16 %v10902, %v10902
  %10963 = vmatpush.bf16.msra.mxu0 %v4020
  %10964 = vmatpush.bf16.msra.mxu0 %v4016
  %10965 = vmatpush.bf16.msra.mxu0 %v4012
  %10966 = vmatpush.bf16.msra.mxu0 %v4008
  %10967 = vmatpush.bf16.msra.mxu0 %v4004
  %10968 = vmatpush.bf16.msra.mxu0 %v4000
  %10969 = vmatpush.bf16.msra.mxu0 %v3996
  %10970 = vmatpush.bf16.msra.mxu0 %v3992
  %10971 = vmatmul.bf16.gmra.mxu0 %v10903
  %v10972 = vpop.f32.mrf.mxu0
  %v10973 = vadd.f32 0.0, %v10972
  %v10974 = vpop.f32.mrf.mxu0
  %10975 = vdwg.mxu0
  %10976 = vmatpush.bf16.msra.mxu0 %v4052
  %10977 = vmatpush.bf16.msra.mxu0 %v4048
  %10978 = vmatpush.bf16.msra.mxu0 %v4044
  %10979 = vmatpush.bf16.msra.mxu0 %v4040
  %10980 = vmatpush.bf16.msra.mxu0 %v4036
  %10981 = vmatpush.bf16.msra.mxu0 %v4032
  %10982 = vmatpush.bf16.msra.mxu0 %v4028
  %10983 = vmatpush.bf16.msra.mxu0 %v4024
  %10984 = vmatmul.bf16.gmra.mxu0 %v10904
  %v10985 = vpop.f32.mrf.mxu0
  %v10986 = vadd.f32 %v10973, %v10985
  %v10987 = vpop.f32.mrf.mxu0
  %10988 = vdwg.mxu0
  %10989 = vmatpush.bf16.msra.mxu0 %v4084
  %10990 = vmatpush.bf16.msra.mxu0 %v4080
  %10991 = vmatpush.bf16.msra.mxu0 %v4076
  %10992 = vmatpush.bf16.msra.mxu0 %v4072
  %10993 = vmatpush.bf16.msra.mxu0 %v4068
  %10994 = vmatpush.bf16.msra.mxu0 %v4064
  %10995 = vmatpush.bf16.msra.mxu0 %v4060
  %10996 = vmatpush.bf16.msra.mxu0 %v4056
  %10997 = vmatmul.bf16.gmra.mxu0 %v10905
  %v10998 = vpop.f32.mrf.mxu0
  %v10999 = vadd.f32 %v10986, %v10998
  %v11000 = vpop.f32.mrf.mxu0
  %11001 = vdwg.mxu0
  %11002 = vmatpush.bf16.msra.mxu0 %v4116
  %11003 = vmatpush.bf16.msra.mxu0 %v4112
  %11004 = vmatpush.bf16.msra.mxu0 %v4108
  %11005 = vmatpush.bf16.msra.mxu0 %v4104
  %11006 = vmatpush.bf16.msra.mxu0 %v4100
  %11007 = vmatpush.bf16.msra.mxu0 %v4096
  %11008 = vmatpush.bf16.msra.mxu0 %v4092
  %11009 = vmatpush.bf16.msra.mxu0 %v4088
  %11010 = vmatmul.bf16.gmra.mxu0 %v10906
  %v11011 = vpop.f32.mrf.mxu0
  %v11012 = vadd.f32 %v10999, %v11011
  %v11013 = vpop.f32.mrf.mxu0
  %11014 = vdwg.mxu0
  %11015 = vmatpush.bf16.msra.mxu0 %v4148
  %11016 = vmatpush.bf16.msra.mxu0 %v4144
  %11017 = vmatpush.bf16.msra.mxu0 %v4140
  %11018 = vmatpush.bf16.msra.mxu0 %v4136
  %11019 = vmatpush.bf16.msra.mxu0 %v4132
  %11020 = vmatpush.bf16.msra.mxu0 %v4128
  %11021 = vmatpush.bf16.msra.mxu0 %v4124
  %11022 = vmatpush.bf16.msra.mxu0 %v4120
  %11023 = vmatmul.bf16.gmra.mxu0 %v10907
  %v11024 = vpop.f32.mrf.mxu0
  %v11025 = vadd.f32 %v11012, %v11024
  %v11026 = vpop.f32.mrf.mxu0
  %11027 = vdwg.mxu0
  %11028 = vmatpush.bf16.msra.mxu0 %v4180
  %11029 = vmatpush.bf16.msra.mxu0 %v4176
  %11030 = vmatpush.bf16.msra.mxu0 %v4172
  %11031 = vmatpush.bf16.msra.mxu0 %v4168
  %11032 = vmatpush.bf16.msra.mxu0 %v4164
  %11033 = vmatpush.bf16.msra.mxu0 %v4160
  %11034 = vmatpush.bf16.msra.mxu0 %v4156
  %11035 = vmatpush.bf16.msra.mxu0 %v4152
  %11036 = vmatmul.bf16.gmra.mxu0 %v10908
  %v11037 = vpop.f32.mrf.mxu0
  %v11038 = vadd.f32 %v11025, %v11037
  %v11039 = vpop.f32.mrf.mxu0
  %11040 = vdwg.mxu0
  %11041 = vmatpush.bf16.msra.mxu0 %v4212
  %11042 = vmatpush.bf16.msra.mxu0 %v4208
  %11043 = vmatpush.bf16.msra.mxu0 %v4204
  %11044 = vmatpush.bf16.msra.mxu0 %v4200
  %11045 = vmatpush.bf16.msra.mxu0 %v4196
  %11046 = vmatpush.bf16.msra.mxu0 %v4192
  %11047 = vmatpush.bf16.msra.mxu0 %v4188
  %11048 = vmatpush.bf16.msra.mxu0 %v4184
  %11049 = vmatmul.bf16.gmra.mxu0 %v10909
  %v11050 = vpop.f32.mrf.mxu0
  %v11051 = vadd.f32 %v11038, %v11050
  %v11052 = vpop.f32.mrf.mxu0
  %11053 = vdwg.mxu0
  %11054 = vmatpush.bf16.msra.mxu0 %v4244
  %11055 = vmatpush.bf16.msra.mxu0 %v4240
  %11056 = vmatpush.bf16.msra.mxu0 %v4236
  %11057 = vmatpush.bf16.msra.mxu0 %v4232
  %11058 = vmatpush.bf16.msra.mxu0 %v4228
  %11059 = vmatpush.bf16.msra.mxu0 %v4224
  %11060 = vmatpush.bf16.msra.mxu0 %v4220
  %11061 = vmatpush.bf16.msra.mxu0 %v4216
  %11062 = vmatmul.bf16.gmra.mxu0 %v10910
  %v11063 = vpop.f32.mrf.mxu0
  %v11064 = vadd.f32 %v11051, %v11063
  %v11065 = vpop.f32.mrf.mxu0
  %11066 = vdwg.mxu0
  %11067 = vmatpush.bf16.msra.mxu0 %v4276
  %11068 = vmatpush.bf16.msra.mxu0 %v4272
  %11069 = vmatpush.bf16.msra.mxu0 %v4268
  %11070 = vmatpush.bf16.msra.mxu0 %v4264
  %11071 = vmatpush.bf16.msra.mxu0 %v4260
  %11072 = vmatpush.bf16.msra.mxu0 %v4256
  %11073 = vmatpush.bf16.msra.mxu0 %v4252
  %11074 = vmatpush.bf16.msra.mxu0 %v4248
  %11075 = vmatmul.bf16.gmra.mxu0 %v10911
  %v11076 = vpop.f32.mrf.mxu0
  %v11077 = vadd.f32 %v11064, %v11076
  %v11078 = vpop.f32.mrf.mxu0
  %11079 = vdwg.mxu0
  %11080 = vmatpush.bf16.msra.mxu0 %v4308
  %11081 = vmatpush.bf16.msra.mxu0 %v4304
  %11082 = vmatpush.bf16.msra.mxu0 %v4300
  %11083 = vmatpush.bf16.msra.mxu0 %v4296
  %11084 = vmatpush.bf16.msra.mxu0 %v4292
  %11085 = vmatpush.bf16.msra.mxu0 %v4288
  %11086 = vmatpush.bf16.msra.mxu0 %v4284
  %11087 = vmatpush.bf16.msra.mxu0 %v4280
  %11088 = vmatmul.bf16.gmra.mxu0 %v10912
  %v11089 = vpop.f32.mrf.mxu0
  %v11090 = vadd.f32 %v11077, %v11089
  %v11091 = vpop.f32.mrf.mxu0
  %11092 = vdwg.mxu0
  %11093 = vmatpush.bf16.msra.mxu0 %v4340
  %11094 = vmatpush.bf16.msra.mxu0 %v4336
  %11095 = vmatpush.bf16.msra.mxu0 %v4332
  %11096 = vmatpush.bf16.msra.mxu0 %v4328
  %11097 = vmatpush.bf16.msra.mxu0 %v4324
  %11098 = vmatpush.bf16.msra.mxu0 %v4320
  %11099 = vmatpush.bf16.msra.mxu0 %v4316
  %11100 = vmatpush.bf16.msra.mxu0 %v4312
  %11101 = vmatmul.bf16.gmra.mxu0 %v10913
  %v11102 = vpop.f32.mrf.mxu0
  %v11103 = vadd.f32 %v11090, %v11102
  %v11104 = vpop.f32.mrf.mxu0
  %11105 = vdwg.mxu0
  %11106 = vmatpush.bf16.msra.mxu0 %v4372
  %11107 = vmatpush.bf16.msra.mxu0 %v4368
  %11108 = vmatpush.bf16.msra.mxu0 %v4364
  %11109 = vmatpush.bf16.msra.mxu0 %v4360
  %11110 = vmatpush.bf16.msra.mxu0 %v4356
  %11111 = vmatpush.bf16.msra.mxu0 %v4352
  %11112 = vmatpush.bf16.msra.mxu0 %v4348
  %11113 = vmatpush.bf16.msra.mxu0 %v4344
  %11114 = vmatmul.bf16.gmra.mxu0 %v10914
  %v11115 = vpop.f32.mrf.mxu0
  %v11116 = vadd.f32 %v11103, %v11115
  %v11117 = vpop.f32.mrf.mxu0
  %11118 = vdwg.mxu0
  %11119 = vmatpush.bf16.msra.mxu0 %v4404
  %11120 = vmatpush.bf16.msra.mxu0 %v4400
  %11121 = vmatpush.bf16.msra.mxu0 %v4396
  %11122 = vmatpush.bf16.msra.mxu0 %v4392
  %11123 = vmatpush.bf16.msra.mxu0 %v4388
  %11124 = vmatpush.bf16.msra.mxu0 %v4384
  %11125 = vmatpush.bf16.msra.mxu0 %v4380
  %11126 = vmatpush.bf16.msra.mxu0 %v4376
  %11127 = vmatmul.bf16.gmra.mxu0 %v10915
  %v11128 = vpop.f32.mrf.mxu0
  %v11129 = vadd.f32 %v11116, %v11128
  %v11130 = vpop.f32.mrf.mxu0
  %11131 = vdwg.mxu0
  %11132 = vmatpush.bf16.msra.mxu0 %v4436
  %11133 = vmatpush.bf16.msra.mxu0 %v4432
  %11134 = vmatpush.bf16.msra.mxu0 %v4428
  %11135 = vmatpush.bf16.msra.mxu0 %v4424
  %11136 = vmatpush.bf16.msra.mxu0 %v4420
  %11137 = vmatpush.bf16.msra.mxu0 %v4416
  %11138 = vmatpush.bf16.msra.mxu0 %v4412
  %11139 = vmatpush.bf16.msra.mxu0 %v4408
  %11140 = vmatmul.bf16.gmra.mxu0 %v10916
  %v11141 = vpop.f32.mrf.mxu0
  %v11142 = vadd.f32 %v11129, %v11141
  %v11143 = vpop.f32.mrf.mxu0
  %11144 = vdwg.mxu0
  %11145 = vmatpush.bf16.msra.mxu0 %v4468
  %11146 = vmatpush.bf16.msra.mxu0 %v4464
  %11147 = vmatpush.bf16.msra.mxu0 %v4460
  %11148 = vmatpush.bf16.msra.mxu0 %v4456
  %11149 = vmatpush.bf16.msra.mxu0 %v4452
  %11150 = vmatpush.bf16.msra.mxu0 %v4448
  %11151 = vmatpush.bf16.msra.mxu0 %v4444
  %11152 = vmatpush.bf16.msra.mxu0 %v4440
  %11153 = vmatmul.bf16.gmra.mxu0 %v10917
  %v11154 = vpop.f32.mrf.mxu0
  %v11155 = vadd.f32 %v11142, %v11154
  %v11156 = vpop.f32.mrf.mxu0
  %11157 = vdwg.mxu0
  %11158 = vmatpush.bf16.msra.mxu0 %v4500
  %11159 = vmatpush.bf16.msra.mxu0 %v4496
  %11160 = vmatpush.bf16.msra.mxu0 %v4492
  %11161 = vmatpush.bf16.msra.mxu0 %v4488
  %11162 = vmatpush.bf16.msra.mxu0 %v4484
  %11163 = vmatpush.bf16.msra.mxu0 %v4480
  %11164 = vmatpush.bf16.msra.mxu0 %v4476
  %11165 = vmatpush.bf16.msra.mxu0 %v4472
  %11166 = vmatmul.bf16.gmra.mxu0 %v10918
  %v11167 = vpop.f32.mrf.mxu0
  %v11168 = vadd.f32 %v11155, %v11167
  %v11169 = vpop.f32.mrf.mxu0
  %11170 = vdwg.mxu0
  %11171 = vmatpush.bf16.msra.mxu0 %v4532
  %11172 = vmatpush.bf16.msra.mxu0 %v4528
  %11173 = vmatpush.bf16.msra.mxu0 %v4524
  %11174 = vmatpush.bf16.msra.mxu0 %v4520
  %11175 = vmatpush.bf16.msra.mxu0 %v4516
  %11176 = vmatpush.bf16.msra.mxu0 %v4512
  %11177 = vmatpush.bf16.msra.mxu0 %v4508
  %11178 = vmatpush.bf16.msra.mxu0 %v4504
  %11179 = vmatmul.bf16.gmra.mxu0 %v10919
  %v11180 = vpop.f32.mrf.mxu0
  %v11181 = vadd.f32 %v11168, %v11180
  %v11182 = vpop.f32.mrf.mxu0
  %11183 = vdwg.mxu0
  %11184 = vmatpush.bf16.msra.mxu0 %v4564
  %11185 = vmatpush.bf16.msra.mxu0 %v4560
  %11186 = vmatpush.bf16.msra.mxu0 %v4556
  %11187 = vmatpush.bf16.msra.mxu0 %v4552
  %11188 = vmatpush.bf16.msra.mxu0 %v4548
  %11189 = vmatpush.bf16.msra.mxu0 %v4544
  %11190 = vmatpush.bf16.msra.mxu0 %v4540
  %11191 = vmatpush.bf16.msra.mxu0 %v4536
  %11192 = vmatmul.bf16.gmra.mxu0 %v10920
  %v11193 = vpop.f32.mrf.mxu0
  %v11194 = vadd.f32 %v11181, %v11193
  %v11195 = vpop.f32.mrf.mxu0
  %11196 = vdwg.mxu0
  %11197 = vmatpush.bf16.msra.mxu0 %v4596
  %11198 = vmatpush.bf16.msra.mxu0 %v4592
  %11199 = vmatpush.bf16.msra.mxu0 %v4588
  %11200 = vmatpush.bf16.msra.mxu0 %v4584
  %11201 = vmatpush.bf16.msra.mxu0 %v4580
  %11202 = vmatpush.bf16.msra.mxu0 %v4576
  %11203 = vmatpush.bf16.msra.mxu0 %v4572
  %11204 = vmatpush.bf16.msra.mxu0 %v4568
  %11205 = vmatmul.bf16.gmra.mxu0 %v10921
  %v11206 = vpop.f32.mrf.mxu0
  %v11207 = vadd.f32 %v11194, %v11206
  %v11208 = vpop.f32.mrf.mxu0
  %11209 = vdwg.mxu0
  %11210 = vmatpush.bf16.msra.mxu0 %v4628
  %11211 = vmatpush.bf16.msra.mxu0 %v4624
  %11212 = vmatpush.bf16.msra.mxu0 %v4620
  %11213 = vmatpush.bf16.msra.mxu0 %v4616
  %11214 = vmatpush.bf16.msra.mxu0 %v4612
  %11215 = vmatpush.bf16.msra.mxu0 %v4608
  %11216 = vmatpush.bf16.msra.mxu0 %v4604
  %11217 = vmatpush.bf16.msra.mxu0 %v4600
  %11218 = vmatmul.bf16.gmra.mxu0 %v10922
  %v11219 = vpop.f32.mrf.mxu0
  %v11220 = vadd.f32 %v11207, %v11219
  %v11221 = vpop.f32.mrf.mxu0
  %11222 = vdwg.mxu0
  %11223 = vmatpush.bf16.msra.mxu0 %v4660
  %11224 = vmatpush.bf16.msra.mxu0 %v4656
  %11225 = vmatpush.bf16.msra.mxu0 %v4652
  %11226 = vmatpush.bf16.msra.mxu0 %v4648
  %11227 = vmatpush.bf16.msra.mxu0 %v4644
  %11228 = vmatpush.bf16.msra.mxu0 %v4640
  %11229 = vmatpush.bf16.msra.mxu0 %v4636
  %11230 = vmatpush.bf16.msra.mxu0 %v4632
  %11231 = vmatmul.bf16.gmra.mxu0 %v10923
  %v11232 = vpop.f32.mrf.mxu0
  %v11233 = vadd.f32 %v11220, %v11232
  %v11234 = vpop.f32.mrf.mxu0
  %11235 = vdwg.mxu0
  %11236 = vmatpush.bf16.msra.mxu0 %v4692
  %11237 = vmatpush.bf16.msra.mxu0 %v4688
  %11238 = vmatpush.bf16.msra.mxu0 %v4684
  %11239 = vmatpush.bf16.msra.mxu0 %v4680
  %11240 = vmatpush.bf16.msra.mxu0 %v4676
  %11241 = vmatpush.bf16.msra.mxu0 %v4672
  %11242 = vmatpush.bf16.msra.mxu0 %v4668
  %11243 = vmatpush.bf16.msra.mxu0 %v4664
  %11244 = vmatmul.bf16.gmra.mxu0 %v10924
  %v11245 = vpop.f32.mrf.mxu0
  %v11246 = vadd.f32 %v11233, %v11245
  %v11247 = vpop.f32.mrf.mxu0
  %11248 = vdwg.mxu0
  %11249 = vmatpush.bf16.msra.mxu0 %v4724
  %11250 = vmatpush.bf16.msra.mxu0 %v4720
  %11251 = vmatpush.bf16.msra.mxu0 %v4716
  %11252 = vmatpush.bf16.msra.mxu0 %v4712
  %11253 = vmatpush.bf16.msra.mxu0 %v4708
  %11254 = vmatpush.bf16.msra.mxu0 %v4704
  %11255 = vmatpush.bf16.msra.mxu0 %v4700
  %11256 = vmatpush.bf16.msra.mxu0 %v4696
  %11257 = vmatmul.bf16.gmra.mxu0 %v10925
  %v11258 = vpop.f32.mrf.mxu0
  %v11259 = vadd.f32 %v11246, %v11258
  %v11260 = vpop.f32.mrf.mxu0
  %11261 = vdwg.mxu0
  %11262 = vmatpush.bf16.msra.mxu0 %v4756
  %11263 = vmatpush.bf16.msra.mxu0 %v4752
  %11264 = vmatpush.bf16.msra.mxu0 %v4748
  %11265 = vmatpush.bf16.msra.mxu0 %v4744
  %11266 = vmatpush.bf16.msra.mxu0 %v4740
  %11267 = vmatpush.bf16.msra.mxu0 %v4736
  %11268 = vmatpush.bf16.msra.mxu0 %v4732
  %11269 = vmatpush.bf16.msra.mxu0 %v4728
  %11270 = vmatmul.bf16.gmra.mxu0 %v10926
  %v11271 = vpop.f32.mrf.mxu0
  %v11272 = vadd.f32 %v11259, %v11271
  %v11273 = vpop.f32.mrf.mxu0
  %11274 = vdwg.mxu0
  %11275 = vmatpush.bf16.msra.mxu0 %v4788
  %11276 = vmatpush.bf16.msra.mxu0 %v4784
  %11277 = vmatpush.bf16.msra.mxu0 %v4780
  %11278 = vmatpush.bf16.msra.mxu0 %v4776
  %11279 = vmatpush.bf16.msra.mxu0 %v4772
  %11280 = vmatpush.bf16.msra.mxu0 %v4768
  %11281 = vmatpush.bf16.msra.mxu0 %v4764
  %11282 = vmatpush.bf16.msra.mxu0 %v4760
  %11283 = vmatmul.bf16.gmra.mxu0 %v10927
  %v11284 = vpop.f32.mrf.mxu0
  %v11285 = vadd.f32 %v11272, %v11284
  %v11286 = vpop.f32.mrf.mxu0
  %11287 = vdwg.mxu0
  %11288 = vmatpush.bf16.msra.mxu0 %v4820
  %11289 = vmatpush.bf16.msra.mxu0 %v4816
  %11290 = vmatpush.bf16.msra.mxu0 %v4812
  %11291 = vmatpush.bf16.msra.mxu0 %v4808
  %11292 = vmatpush.bf16.msra.mxu0 %v4804
  %11293 = vmatpush.bf16.msra.mxu0 %v4800
  %11294 = vmatpush.bf16.msra.mxu0 %v4796
  %11295 = vmatpush.bf16.msra.mxu0 %v4792
  %11296 = vmatmul.bf16.gmra.mxu0 %v10928
  %v11297 = vpop.f32.mrf.mxu0
  %v11298 = vadd.f32 %v11285, %v11297
  %v11299 = vpop.f32.mrf.mxu0
  %11300 = vdwg.mxu0
  %11301 = vmatpush.bf16.msra.mxu0 %v4852
  %11302 = vmatpush.bf16.msra.mxu0 %v4848
  %11303 = vmatpush.bf16.msra.mxu0 %v4844
  %11304 = vmatpush.bf16.msra.mxu0 %v4840
  %11305 = vmatpush.bf16.msra.mxu0 %v4836
  %11306 = vmatpush.bf16.msra.mxu0 %v4832
  %11307 = vmatpush.bf16.msra.mxu0 %v4828
  %11308 = vmatpush.bf16.msra.mxu0 %v4824
  %11309 = vmatmul.bf16.gmra.mxu0 %v10929
  %v11310 = vpop.f32.mrf.mxu0
  %v11311 = vadd.f32 %v11298, %v11310
  %v11312 = vpop.f32.mrf.mxu0
  %11313 = vdwg.mxu0
  %11314 = vmatpush.bf16.msra.mxu0 %v4884
  %11315 = vmatpush.bf16.msra.mxu0 %v4880
  %11316 = vmatpush.bf16.msra.mxu0 %v4876
  %11317 = vmatpush.bf16.msra.mxu0 %v4872
  %11318 = vmatpush.bf16.msra.mxu0 %v4868
  %11319 = vmatpush.bf16.msra.mxu0 %v4864
  %11320 = vmatpush.bf16.msra.mxu0 %v4860
  %11321 = vmatpush.bf16.msra.mxu0 %v4856
  %11322 = vmatmul.bf16.gmra.mxu0 %v10930
  %v11323 = vpop.f32.mrf.mxu0
  %v11324 = vadd.f32 %v11311, %v11323
  %v11325 = vpop.f32.mrf.mxu0
  %11326 = vdwg.mxu0
  %11327 = vmatpush.bf16.msra.mxu0 %v4916
  %11328 = vmatpush.bf16.msra.mxu0 %v4912
  %11329 = vmatpush.bf16.msra.mxu0 %v4908
  %11330 = vmatpush.bf16.msra.mxu0 %v4904
  %11331 = vmatpush.bf16.msra.mxu0 %v4900
  %11332 = vmatpush.bf16.msra.mxu0 %v4896
  %11333 = vmatpush.bf16.msra.mxu0 %v4892
  %11334 = vmatpush.bf16.msra.mxu0 %v4888
  %11335 = vmatmul.bf16.gmra.mxu0 %v10931
  %v11336 = vpop.f32.mrf.mxu0
  %v11337 = vadd.f32 %v11324, %v11336
  %v11338 = vpop.f32.mrf.mxu0
  %11339 = vdwg.mxu0
  %11340 = vmatpush.bf16.msra.mxu0 %v4948
  %11341 = vmatpush.bf16.msra.mxu0 %v4944
  %11342 = vmatpush.bf16.msra.mxu0 %v4940
  %11343 = vmatpush.bf16.msra.mxu0 %v4936
  %11344 = vmatpush.bf16.msra.mxu0 %v4932
  %11345 = vmatpush.bf16.msra.mxu0 %v4928
  %11346 = vmatpush.bf16.msra.mxu0 %v4924
  %11347 = vmatpush.bf16.msra.mxu0 %v4920
  %11348 = vmatmul.bf16.gmra.mxu0 %v10932
  %v11349 = vpop.f32.mrf.mxu0
  %v11350 = vadd.f32 %v11337, %v11349
  %v11351 = vpop.f32.mrf.mxu0
  %11352 = vdwg.mxu0
  %11353 = vmatpush.bf16.msra.mxu0 %v4021
  %11354 = vmatpush.bf16.msra.mxu0 %v4017
  %11355 = vmatpush.bf16.msra.mxu0 %v4013
  %11356 = vmatpush.bf16.msra.mxu0 %v4009
  %11357 = vmatpush.bf16.msra.mxu0 %v4005
  %11358 = vmatpush.bf16.msra.mxu0 %v4001
  %11359 = vmatpush.bf16.msra.mxu0 %v3997
  %11360 = vmatpush.bf16.msra.mxu0 %v3993
  %11361 = vmatmul.bf16.gmra.mxu0 %v10903
  %v11362 = vpop.f32.mrf.mxu0
  %v11363 = vadd.f32 0.0, %v11362
  %v11364 = vpop.f32.mrf.mxu0
  %11365 = vdwg.mxu0
  %11366 = vmatpush.bf16.msra.mxu0 %v4053
  %11367 = vmatpush.bf16.msra.mxu0 %v4049
  %11368 = vmatpush.bf16.msra.mxu0 %v4045
  %11369 = vmatpush.bf16.msra.mxu0 %v4041
  %11370 = vmatpush.bf16.msra.mxu0 %v4037
  %11371 = vmatpush.bf16.msra.mxu0 %v4033
  %11372 = vmatpush.bf16.msra.mxu0 %v4029
  %11373 = vmatpush.bf16.msra.mxu0 %v4025
  %11374 = vmatmul.bf16.gmra.mxu0 %v10904
  %v11375 = vpop.f32.mrf.mxu0
  %v11376 = vadd.f32 %v11363, %v11375
  %v11377 = vpop.f32.mrf.mxu0
  %11378 = vdwg.mxu0
  %11379 = vmatpush.bf16.msra.mxu0 %v4085
  %11380 = vmatpush.bf16.msra.mxu0 %v4081
  %11381 = vmatpush.bf16.msra.mxu0 %v4077
  %11382 = vmatpush.bf16.msra.mxu0 %v4073
  %11383 = vmatpush.bf16.msra.mxu0 %v4069
  %11384 = vmatpush.bf16.msra.mxu0 %v4065
  %11385 = vmatpush.bf16.msra.mxu0 %v4061
  %11386 = vmatpush.bf16.msra.mxu0 %v4057
  %11387 = vmatmul.bf16.gmra.mxu0 %v10905
  %v11388 = vpop.f32.mrf.mxu0
  %v11389 = vadd.f32 %v11376, %v11388
  %v11390 = vpop.f32.mrf.mxu0
  %11391 = vdwg.mxu0
  %11392 = vmatpush.bf16.msra.mxu0 %v4117
  %11393 = vmatpush.bf16.msra.mxu0 %v4113
  %11394 = vmatpush.bf16.msra.mxu0 %v4109
  %11395 = vmatpush.bf16.msra.mxu0 %v4105
  %11396 = vmatpush.bf16.msra.mxu0 %v4101
  %11397 = vmatpush.bf16.msra.mxu0 %v4097
  %11398 = vmatpush.bf16.msra.mxu0 %v4093
  %11399 = vmatpush.bf16.msra.mxu0 %v4089
  %11400 = vmatmul.bf16.gmra.mxu0 %v10906
  %v11401 = vpop.f32.mrf.mxu0
  %v11402 = vadd.f32 %v11389, %v11401
  %v11403 = vpop.f32.mrf.mxu0
  %11404 = vdwg.mxu0
  %11405 = vmatpush.bf16.msra.mxu0 %v4149
  %11406 = vmatpush.bf16.msra.mxu0 %v4145
  %11407 = vmatpush.bf16.msra.mxu0 %v4141
  %11408 = vmatpush.bf16.msra.mxu0 %v4137
  %11409 = vmatpush.bf16.msra.mxu0 %v4133
  %11410 = vmatpush.bf16.msra.mxu0 %v4129
  %11411 = vmatpush.bf16.msra.mxu0 %v4125
  %11412 = vmatpush.bf16.msra.mxu0 %v4121
  %11413 = vmatmul.bf16.gmra.mxu0 %v10907
  %v11414 = vpop.f32.mrf.mxu0
  %v11415 = vadd.f32 %v11402, %v11414
  %v11416 = vpop.f32.mrf.mxu0
  %11417 = vdwg.mxu0
  %11418 = vmatpush.bf16.msra.mxu0 %v4181
  %11419 = vmatpush.bf16.msra.mxu0 %v4177
  %11420 = vmatpush.bf16.msra.mxu0 %v4173
  %11421 = vmatpush.bf16.msra.mxu0 %v4169
  %11422 = vmatpush.bf16.msra.mxu0 %v4165
  %11423 = vmatpush.bf16.msra.mxu0 %v4161
  %11424 = vmatpush.bf16.msra.mxu0 %v4157
  %11425 = vmatpush.bf16.msra.mxu0 %v4153
  %11426 = vmatmul.bf16.gmra.mxu0 %v10908
  %v11427 = vpop.f32.mrf.mxu0
  %v11428 = vadd.f32 %v11415, %v11427
  %v11429 = vpop.f32.mrf.mxu0
  %11430 = vdwg.mxu0
  %11431 = vmatpush.bf16.msra.mxu0 %v4213
  %11432 = vmatpush.bf16.msra.mxu0 %v4209
  %11433 = vmatpush.bf16.msra.mxu0 %v4205
  %11434 = vmatpush.bf16.msra.mxu0 %v4201
  %11435 = vmatpush.bf16.msra.mxu0 %v4197
  %11436 = vmatpush.bf16.msra.mxu0 %v4193
  %11437 = vmatpush.bf16.msra.mxu0 %v4189
  %11438 = vmatpush.bf16.msra.mxu0 %v4185
  %11439 = vmatmul.bf16.gmra.mxu0 %v10909
  %v11440 = vpop.f32.mrf.mxu0
  %v11441 = vadd.f32 %v11428, %v11440
  %v11442 = vpop.f32.mrf.mxu0
  %11443 = vdwg.mxu0
  %11444 = vmatpush.bf16.msra.mxu0 %v4245
  %11445 = vmatpush.bf16.msra.mxu0 %v4241
  %11446 = vmatpush.bf16.msra.mxu0 %v4237
  %11447 = vmatpush.bf16.msra.mxu0 %v4233
  %11448 = vmatpush.bf16.msra.mxu0 %v4229
  %11449 = vmatpush.bf16.msra.mxu0 %v4225
  %11450 = vmatpush.bf16.msra.mxu0 %v4221
  %11451 = vmatpush.bf16.msra.mxu0 %v4217
  %11452 = vmatmul.bf16.gmra.mxu0 %v10910
  %v11453 = vpop.f32.mrf.mxu0
  %v11454 = vadd.f32 %v11441, %v11453
  %v11455 = vpop.f32.mrf.mxu0
  %11456 = vdwg.mxu0
  %11457 = vmatpush.bf16.msra.mxu0 %v4277
  %11458 = vmatpush.bf16.msra.mxu0 %v4273
  %11459 = vmatpush.bf16.msra.mxu0 %v4269
  %11460 = vmatpush.bf16.msra.mxu0 %v4265
  %11461 = vmatpush.bf16.msra.mxu0 %v4261
  %11462 = vmatpush.bf16.msra.mxu0 %v4257
  %11463 = vmatpush.bf16.msra.mxu0 %v4253
  %11464 = vmatpush.bf16.msra.mxu0 %v4249
  %11465 = vmatmul.bf16.gmra.mxu0 %v10911
  %v11466 = vpop.f32.mrf.mxu0
  %v11467 = vadd.f32 %v11454, %v11466
  %v11468 = vpop.f32.mrf.mxu0
  %11469 = vdwg.mxu0
  %11470 = vmatpush.bf16.msra.mxu0 %v4309
  %11471 = vmatpush.bf16.msra.mxu0 %v4305
  %11472 = vmatpush.bf16.msra.mxu0 %v4301
  %11473 = vmatpush.bf16.msra.mxu0 %v4297
  %11474 = vmatpush.bf16.msra.mxu0 %v4293
  %11475 = vmatpush.bf16.msra.mxu0 %v4289
  %11476 = vmatpush.bf16.msra.mxu0 %v4285
  %11477 = vmatpush.bf16.msra.mxu0 %v4281
  %11478 = vmatmul.bf16.gmra.mxu0 %v10912
  %v11479 = vpop.f32.mrf.mxu0
  %v11480 = vadd.f32 %v11467, %v11479
  %v11481 = vpop.f32.mrf.mxu0
  %11482 = vdwg.mxu0
  %11483 = vmatpush.bf16.msra.mxu0 %v4341
  %11484 = vmatpush.bf16.msra.mxu0 %v4337
  %11485 = vmatpush.bf16.msra.mxu0 %v4333
  %11486 = vmatpush.bf16.msra.mxu0 %v4329
  %11487 = vmatpush.bf16.msra.mxu0 %v4325
  %11488 = vmatpush.bf16.msra.mxu0 %v4321
  %11489 = vmatpush.bf16.msra.mxu0 %v4317
  %11490 = vmatpush.bf16.msra.mxu0 %v4313
  %11491 = vmatmul.bf16.gmra.mxu0 %v10913
  %v11492 = vpop.f32.mrf.mxu0
  %v11493 = vadd.f32 %v11480, %v11492
  %v11494 = vpop.f32.mrf.mxu0
  %11495 = vdwg.mxu0
  %11496 = vmatpush.bf16.msra.mxu0 %v4373
  %11497 = vmatpush.bf16.msra.mxu0 %v4369
  %11498 = vmatpush.bf16.msra.mxu0 %v4365
  %11499 = vmatpush.bf16.msra.mxu0 %v4361
  %11500 = vmatpush.bf16.msra.mxu0 %v4357
  %11501 = vmatpush.bf16.msra.mxu0 %v4353
  %11502 = vmatpush.bf16.msra.mxu0 %v4349
  %11503 = vmatpush.bf16.msra.mxu0 %v4345
  %11504 = vmatmul.bf16.gmra.mxu0 %v10914
  %v11505 = vpop.f32.mrf.mxu0
  %v11506 = vadd.f32 %v11493, %v11505
  %v11507 = vpop.f32.mrf.mxu0
  %11508 = vdwg.mxu0
  %11509 = vmatpush.bf16.msra.mxu0 %v4405
  %11510 = vmatpush.bf16.msra.mxu0 %v4401
  %11511 = vmatpush.bf16.msra.mxu0 %v4397
  %11512 = vmatpush.bf16.msra.mxu0 %v4393
  %11513 = vmatpush.bf16.msra.mxu0 %v4389
  %11514 = vmatpush.bf16.msra.mxu0 %v4385
  %11515 = vmatpush.bf16.msra.mxu0 %v4381
  %11516 = vmatpush.bf16.msra.mxu0 %v4377
  %11517 = vmatmul.bf16.gmra.mxu0 %v10915
  %v11518 = vpop.f32.mrf.mxu0
  %v11519 = vadd.f32 %v11506, %v11518
  %v11520 = vpop.f32.mrf.mxu0
  %11521 = vdwg.mxu0
  %11522 = vmatpush.bf16.msra.mxu0 %v4437
  %11523 = vmatpush.bf16.msra.mxu0 %v4433
  %11524 = vmatpush.bf16.msra.mxu0 %v4429
  %11525 = vmatpush.bf16.msra.mxu0 %v4425
  %11526 = vmatpush.bf16.msra.mxu0 %v4421
  %11527 = vmatpush.bf16.msra.mxu0 %v4417
  %11528 = vmatpush.bf16.msra.mxu0 %v4413
  %11529 = vmatpush.bf16.msra.mxu0 %v4409
  %11530 = vmatmul.bf16.gmra.mxu0 %v10916
  %v11531 = vpop.f32.mrf.mxu0
  %v11532 = vadd.f32 %v11519, %v11531
  %v11533 = vpop.f32.mrf.mxu0
  %11534 = vdwg.mxu0
  %11535 = vmatpush.bf16.msra.mxu0 %v4469
  %11536 = vmatpush.bf16.msra.mxu0 %v4465
  %11537 = vmatpush.bf16.msra.mxu0 %v4461
  %11538 = vmatpush.bf16.msra.mxu0 %v4457
  %11539 = vmatpush.bf16.msra.mxu0 %v4453
  %11540 = vmatpush.bf16.msra.mxu0 %v4449
  %11541 = vmatpush.bf16.msra.mxu0 %v4445
  %11542 = vmatpush.bf16.msra.mxu0 %v4441
  %11543 = vmatmul.bf16.gmra.mxu0 %v10917
  %v11544 = vpop.f32.mrf.mxu0
  %v11545 = vadd.f32 %v11532, %v11544
  %v11546 = vpop.f32.mrf.mxu0
  %11547 = vdwg.mxu0
  %11548 = vmatpush.bf16.msra.mxu0 %v4501
  %11549 = vmatpush.bf16.msra.mxu0 %v4497
  %11550 = vmatpush.bf16.msra.mxu0 %v4493
  %11551 = vmatpush.bf16.msra.mxu0 %v4489
  %11552 = vmatpush.bf16.msra.mxu0 %v4485
  %11553 = vmatpush.bf16.msra.mxu0 %v4481
  %11554 = vmatpush.bf16.msra.mxu0 %v4477
  %11555 = vmatpush.bf16.msra.mxu0 %v4473
  %11556 = vmatmul.bf16.gmra.mxu0 %v10918
  %v11557 = vpop.f32.mrf.mxu0
  %v11558 = vadd.f32 %v11545, %v11557
  %v11559 = vpop.f32.mrf.mxu0
  %11560 = vdwg.mxu0
  %11561 = vmatpush.bf16.msra.mxu0 %v4533
  %11562 = vmatpush.bf16.msra.mxu0 %v4529
  %11563 = vmatpush.bf16.msra.mxu0 %v4525
  %11564 = vmatpush.bf16.msra.mxu0 %v4521
  %11565 = vmatpush.bf16.msra.mxu0 %v4517
  %11566 = vmatpush.bf16.msra.mxu0 %v4513
  %11567 = vmatpush.bf16.msra.mxu0 %v4509
  %11568 = vmatpush.bf16.msra.mxu0 %v4505
  %11569 = vmatmul.bf16.gmra.mxu0 %v10919
  %v11570 = vpop.f32.mrf.mxu0
  %v11571 = vadd.f32 %v11558, %v11570
  %v11572 = vpop.f32.mrf.mxu0
  %11573 = vdwg.mxu0
  %11574 = vmatpush.bf16.msra.mxu0 %v4565
  %11575 = vmatpush.bf16.msra.mxu0 %v4561
  %11576 = vmatpush.bf16.msra.mxu0 %v4557
  %11577 = vmatpush.bf16.msra.mxu0 %v4553
  %11578 = vmatpush.bf16.msra.mxu0 %v4549
  %11579 = vmatpush.bf16.msra.mxu0 %v4545
  %11580 = vmatpush.bf16.msra.mxu0 %v4541
  %11581 = vmatpush.bf16.msra.mxu0 %v4537
  %11582 = vmatmul.bf16.gmra.mxu0 %v10920
  %v11583 = vpop.f32.mrf.mxu0
  %v11584 = vadd.f32 %v11571, %v11583
  %v11585 = vpop.f32.mrf.mxu0
  %11586 = vdwg.mxu0
  %11587 = vmatpush.bf16.msra.mxu0 %v4597
  %11588 = vmatpush.bf16.msra.mxu0 %v4593
  %11589 = vmatpush.bf16.msra.mxu0 %v4589
  %11590 = vmatpush.bf16.msra.mxu0 %v4585
  %11591 = vmatpush.bf16.msra.mxu0 %v4581
  %11592 = vmatpush.bf16.msra.mxu0 %v4577
  %11593 = vmatpush.bf16.msra.mxu0 %v4573
  %11594 = vmatpush.bf16.msra.mxu0 %v4569
  %11595 = vmatmul.bf16.gmra.mxu0 %v10921
  %v11596 = vpop.f32.mrf.mxu0
  %v11597 = vadd.f32 %v11584, %v11596
  %v11598 = vpop.f32.mrf.mxu0
  %11599 = vdwg.mxu0
  %11600 = vmatpush.bf16.msra.mxu0 %v4629
  %11601 = vmatpush.bf16.msra.mxu0 %v4625
  %11602 = vmatpush.bf16.msra.mxu0 %v4621
  %11603 = vmatpush.bf16.msra.mxu0 %v4617
  %11604 = vmatpush.bf16.msra.mxu0 %v4613
  %11605 = vmatpush.bf16.msra.mxu0 %v4609
  %11606 = vmatpush.bf16.msra.mxu0 %v4605
  %11607 = vmatpush.bf16.msra.mxu0 %v4601
  %11608 = vmatmul.bf16.gmra.mxu0 %v10922
  %v11609 = vpop.f32.mrf.mxu0
  %v11610 = vadd.f32 %v11597, %v11609
  %v11611 = vpop.f32.mrf.mxu0
  %11612 = vdwg.mxu0
  %11613 = vmatpush.bf16.msra.mxu0 %v4661
  %11614 = vmatpush.bf16.msra.mxu0 %v4657
  %11615 = vmatpush.bf16.msra.mxu0 %v4653
  %11616 = vmatpush.bf16.msra.mxu0 %v4649
  %11617 = vmatpush.bf16.msra.mxu0 %v4645
  %11618 = vmatpush.bf16.msra.mxu0 %v4641
  %11619 = vmatpush.bf16.msra.mxu0 %v4637
  %11620 = vmatpush.bf16.msra.mxu0 %v4633
  %11621 = vmatmul.bf16.gmra.mxu0 %v10923
  %v11622 = vpop.f32.mrf.mxu0
  %v11623 = vadd.f32 %v11610, %v11622
  %v11624 = vpop.f32.mrf.mxu0
  %11625 = vdwg.mxu0
  %11626 = vmatpush.bf16.msra.mxu0 %v4693
  %11627 = vmatpush.bf16.msra.mxu0 %v4689
  %11628 = vmatpush.bf16.msra.mxu0 %v4685
  %11629 = vmatpush.bf16.msra.mxu0 %v4681
  %11630 = vmatpush.bf16.msra.mxu0 %v4677
  %11631 = vmatpush.bf16.msra.mxu0 %v4673
  %11632 = vmatpush.bf16.msra.mxu0 %v4669
  %11633 = vmatpush.bf16.msra.mxu0 %v4665
  %11634 = vmatmul.bf16.gmra.mxu0 %v10924
  %v11635 = vpop.f32.mrf.mxu0
  %v11636 = vadd.f32 %v11623, %v11635
  %v11637 = vpop.f32.mrf.mxu0
  %11638 = vdwg.mxu0
  %11639 = vmatpush.bf16.msra.mxu0 %v4725
  %11640 = vmatpush.bf16.msra.mxu0 %v4721
  %11641 = vmatpush.bf16.msra.mxu0 %v4717
  %11642 = vmatpush.bf16.msra.mxu0 %v4713
  %11643 = vmatpush.bf16.msra.mxu0 %v4709
  %11644 = vmatpush.bf16.msra.mxu0 %v4705
  %11645 = vmatpush.bf16.msra.mxu0 %v4701
  %11646 = vmatpush.bf16.msra.mxu0 %v4697
  %11647 = vmatmul.bf16.gmra.mxu0 %v10925
  %v11648 = vpop.f32.mrf.mxu0
  %v11649 = vadd.f32 %v11636, %v11648
  %v11650 = vpop.f32.mrf.mxu0
  %11651 = vdwg.mxu0
  %11652 = vmatpush.bf16.msra.mxu0 %v4757
  %11653 = vmatpush.bf16.msra.mxu0 %v4753
  %11654 = vmatpush.bf16.msra.mxu0 %v4749
  %11655 = vmatpush.bf16.msra.mxu0 %v4745
  %11656 = vmatpush.bf16.msra.mxu0 %v4741
  %11657 = vmatpush.bf16.msra.mxu0 %v4737
  %11658 = vmatpush.bf16.msra.mxu0 %v4733
  %11659 = vmatpush.bf16.msra.mxu0 %v4729
  %11660 = vmatmul.bf16.gmra.mxu0 %v10926
  %v11661 = vpop.f32.mrf.mxu0
  %v11662 = vadd.f32 %v11649, %v11661
  %v11663 = vpop.f32.mrf.mxu0
  %11664 = vdwg.mxu0
  %11665 = vmatpush.bf16.msra.mxu0 %v4789
  %11666 = vmatpush.bf16.msra.mxu0 %v4785
  %11667 = vmatpush.bf16.msra.mxu0 %v4781
  %11668 = vmatpush.bf16.msra.mxu0 %v4777
  %11669 = vmatpush.bf16.msra.mxu0 %v4773
  %11670 = vmatpush.bf16.msra.mxu0 %v4769
  %11671 = vmatpush.bf16.msra.mxu0 %v4765
  %11672 = vmatpush.bf16.msra.mxu0 %v4761
  %11673 = vmatmul.bf16.gmra.mxu0 %v10927
  %v11674 = vpop.f32.mrf.mxu0
  %v11675 = vadd.f32 %v11662, %v11674
  %v11676 = vpop.f32.mrf.mxu0
  %11677 = vdwg.mxu0
  %11678 = vmatpush.bf16.msra.mxu0 %v4821
  %11679 = vmatpush.bf16.msra.mxu0 %v4817
  %11680 = vmatpush.bf16.msra.mxu0 %v4813
  %11681 = vmatpush.bf16.msra.mxu0 %v4809
  %11682 = vmatpush.bf16.msra.mxu0 %v4805
  %11683 = vmatpush.bf16.msra.mxu0 %v4801
  %11684 = vmatpush.bf16.msra.mxu0 %v4797
  %11685 = vmatpush.bf16.msra.mxu0 %v4793
  %11686 = vmatmul.bf16.gmra.mxu0 %v10928
  %v11687 = vpop.f32.mrf.mxu0
  %v11688 = vadd.f32 %v11675, %v11687
  %v11689 = vpop.f32.mrf.mxu0
  %11690 = vdwg.mxu0
  %11691 = vmatpush.bf16.msra.mxu0 %v4853
  %11692 = vmatpush.bf16.msra.mxu0 %v4849
  %11693 = vmatpush.bf16.msra.mxu0 %v4845
  %11694 = vmatpush.bf16.msra.mxu0 %v4841
  %11695 = vmatpush.bf16.msra.mxu0 %v4837
  %11696 = vmatpush.bf16.msra.mxu0 %v4833
  %11697 = vmatpush.bf16.msra.mxu0 %v4829
  %11698 = vmatpush.bf16.msra.mxu0 %v4825
  %11699 = vmatmul.bf16.gmra.mxu0 %v10929
  %v11700 = vpop.f32.mrf.mxu0
  %v11701 = vadd.f32 %v11688, %v11700
  %v11702 = vpop.f32.mrf.mxu0
  %11703 = vdwg.mxu0
  %11704 = vmatpush.bf16.msra.mxu0 %v4885
  %11705 = vmatpush.bf16.msra.mxu0 %v4881
  %11706 = vmatpush.bf16.msra.mxu0 %v4877
  %11707 = vmatpush.bf16.msra.mxu0 %v4873
  %11708 = vmatpush.bf16.msra.mxu0 %v4869
  %11709 = vmatpush.bf16.msra.mxu0 %v4865
  %11710 = vmatpush.bf16.msra.mxu0 %v4861
  %11711 = vmatpush.bf16.msra.mxu0 %v4857
  %11712 = vmatmul.bf16.gmra.mxu0 %v10930
  %v11713 = vpop.f32.mrf.mxu0
  %v11714 = vadd.f32 %v11701, %v11713
  %v11715 = vpop.f32.mrf.mxu0
  %11716 = vdwg.mxu0
  %11717 = vmatpush.bf16.msra.mxu0 %v4917
  %11718 = vmatpush.bf16.msra.mxu0 %v4913
  %11719 = vmatpush.bf16.msra.mxu0 %v4909
  %11720 = vmatpush.bf16.msra.mxu0 %v4905
  %11721 = vmatpush.bf16.msra.mxu0 %v4901
  %11722 = vmatpush.bf16.msra.mxu0 %v4897
  %11723 = vmatpush.bf16.msra.mxu0 %v4893
  %11724 = vmatpush.bf16.msra.mxu0 %v4889
  %11725 = vmatmul.bf16.gmra.mxu0 %v10931
  %v11726 = vpop.f32.mrf.mxu0
  %v11727 = vadd.f32 %v11714, %v11726
  %v11728 = vpop.f32.mrf.mxu0
  %11729 = vdwg.mxu0
  %11730 = vmatpush.bf16.msra.mxu0 %v4949
  %11731 = vmatpush.bf16.msra.mxu0 %v4945
  %11732 = vmatpush.bf16.msra.mxu0 %v4941
  %11733 = vmatpush.bf16.msra.mxu0 %v4937
  %11734 = vmatpush.bf16.msra.mxu0 %v4933
  %11735 = vmatpush.bf16.msra.mxu0 %v4929
  %11736 = vmatpush.bf16.msra.mxu0 %v4925
  %11737 = vmatpush.bf16.msra.mxu0 %v4921
  %11738 = vmatmul.bf16.gmra.mxu0 %v10932
  %v11739 = vpop.f32.mrf.mxu0
  %v11740 = vadd.f32 %v11727, %v11739
  %v11741 = vpop.f32.mrf.mxu0
  %11742 = vdwg.mxu0
  %11743 = vmatpush.bf16.msra.mxu0 %v4022
  %11744 = vmatpush.bf16.msra.mxu0 %v4018
  %11745 = vmatpush.bf16.msra.mxu0 %v4014
  %11746 = vmatpush.bf16.msra.mxu0 %v4010
  %11747 = vmatpush.bf16.msra.mxu0 %v4006
  %11748 = vmatpush.bf16.msra.mxu0 %v4002
  %11749 = vmatpush.bf16.msra.mxu0 %v3998
  %11750 = vmatpush.bf16.msra.mxu0 %v3994
  %11751 = vmatmul.bf16.gmra.mxu0 %v10903
  %v11752 = vpop.f32.mrf.mxu0
  %v11753 = vadd.f32 0.0, %v11752
  %v11754 = vpop.f32.mrf.mxu0
  %11755 = vdwg.mxu0
  %11756 = vmatpush.bf16.msra.mxu0 %v4054
  %11757 = vmatpush.bf16.msra.mxu0 %v4050
  %11758 = vmatpush.bf16.msra.mxu0 %v4046
  %11759 = vmatpush.bf16.msra.mxu0 %v4042
  %11760 = vmatpush.bf16.msra.mxu0 %v4038
  %11761 = vmatpush.bf16.msra.mxu0 %v4034
  %11762 = vmatpush.bf16.msra.mxu0 %v4030
  %11763 = vmatpush.bf16.msra.mxu0 %v4026
  %11764 = vmatmul.bf16.gmra.mxu0 %v10904
  %v11765 = vpop.f32.mrf.mxu0
  %v11766 = vadd.f32 %v11753, %v11765
  %v11767 = vpop.f32.mrf.mxu0
  %11768 = vdwg.mxu0
  %11769 = vmatpush.bf16.msra.mxu0 %v4086
  %11770 = vmatpush.bf16.msra.mxu0 %v4082
  %11771 = vmatpush.bf16.msra.mxu0 %v4078
  %11772 = vmatpush.bf16.msra.mxu0 %v4074
  %11773 = vmatpush.bf16.msra.mxu0 %v4070
  %11774 = vmatpush.bf16.msra.mxu0 %v4066
  %11775 = vmatpush.bf16.msra.mxu0 %v4062
  %11776 = vmatpush.bf16.msra.mxu0 %v4058
  %11777 = vmatmul.bf16.gmra.mxu0 %v10905
  %v11778 = vpop.f32.mrf.mxu0
  %v11779 = vadd.f32 %v11766, %v11778
  %v11780 = vpop.f32.mrf.mxu0
  %11781 = vdwg.mxu0
  %11782 = vmatpush.bf16.msra.mxu0 %v4118
  %11783 = vmatpush.bf16.msra.mxu0 %v4114
  %11784 = vmatpush.bf16.msra.mxu0 %v4110
  %11785 = vmatpush.bf16.msra.mxu0 %v4106
  %11786 = vmatpush.bf16.msra.mxu0 %v4102
  %11787 = vmatpush.bf16.msra.mxu0 %v4098
  %11788 = vmatpush.bf16.msra.mxu0 %v4094
  %11789 = vmatpush.bf16.msra.mxu0 %v4090
  %11790 = vmatmul.bf16.gmra.mxu0 %v10906
  %v11791 = vpop.f32.mrf.mxu0
  %v11792 = vadd.f32 %v11779, %v11791
  %v11793 = vpop.f32.mrf.mxu0
  %11794 = vdwg.mxu0
  %11795 = vmatpush.bf16.msra.mxu0 %v4150
  %11796 = vmatpush.bf16.msra.mxu0 %v4146
  %11797 = vmatpush.bf16.msra.mxu0 %v4142
  %11798 = vmatpush.bf16.msra.mxu0 %v4138
  %11799 = vmatpush.bf16.msra.mxu0 %v4134
  %11800 = vmatpush.bf16.msra.mxu0 %v4130
  %11801 = vmatpush.bf16.msra.mxu0 %v4126
  %11802 = vmatpush.bf16.msra.mxu0 %v4122
  %11803 = vmatmul.bf16.gmra.mxu0 %v10907
  %v11804 = vpop.f32.mrf.mxu0
  %v11805 = vadd.f32 %v11792, %v11804
  %v11806 = vpop.f32.mrf.mxu0
  %11807 = vdwg.mxu0
  %11808 = vmatpush.bf16.msra.mxu0 %v4182
  %11809 = vmatpush.bf16.msra.mxu0 %v4178
  %11810 = vmatpush.bf16.msra.mxu0 %v4174
  %11811 = vmatpush.bf16.msra.mxu0 %v4170
  %11812 = vmatpush.bf16.msra.mxu0 %v4166
  %11813 = vmatpush.bf16.msra.mxu0 %v4162
  %11814 = vmatpush.bf16.msra.mxu0 %v4158
  %11815 = vmatpush.bf16.msra.mxu0 %v4154
  %11816 = vmatmul.bf16.gmra.mxu0 %v10908
  %v11817 = vpop.f32.mrf.mxu0
  %v11818 = vadd.f32 %v11805, %v11817
  %v11819 = vpop.f32.mrf.mxu0
  %11820 = vdwg.mxu0
  %11821 = vmatpush.bf16.msra.mxu0 %v4214
  %11822 = vmatpush.bf16.msra.mxu0 %v4210
  %11823 = vmatpush.bf16.msra.mxu0 %v4206
  %11824 = vmatpush.bf16.msra.mxu0 %v4202
  %11825 = vmatpush.bf16.msra.mxu0 %v4198
  %11826 = vmatpush.bf16.msra.mxu0 %v4194
  %11827 = vmatpush.bf16.msra.mxu0 %v4190
  %11828 = vmatpush.bf16.msra.mxu0 %v4186
  %11829 = vmatmul.bf16.gmra.mxu0 %v10909
  %v11830 = vpop.f32.mrf.mxu0
  %v11831 = vadd.f32 %v11818, %v11830
  %v11832 = vpop.f32.mrf.mxu0
  %11833 = vdwg.mxu0
  %11834 = vmatpush.bf16.msra.mxu0 %v4246
  %11835 = vmatpush.bf16.msra.mxu0 %v4242
  %11836 = vmatpush.bf16.msra.mxu0 %v4238
  %11837 = vmatpush.bf16.msra.mxu0 %v4234
  %11838 = vmatpush.bf16.msra.mxu0 %v4230
  %11839 = vmatpush.bf16.msra.mxu0 %v4226
  %11840 = vmatpush.bf16.msra.mxu0 %v4222
  %11841 = vmatpush.bf16.msra.mxu0 %v4218
  %11842 = vmatmul.bf16.gmra.mxu0 %v10910
  %v11843 = vpop.f32.mrf.mxu0
  %v11844 = vadd.f32 %v11831, %v11843
  %v11845 = vpop.f32.mrf.mxu0
  %11846 = vdwg.mxu0
  %11847 = vmatpush.bf16.msra.mxu0 %v4278
  %11848 = vmatpush.bf16.msra.mxu0 %v4274
  %11849 = vmatpush.bf16.msra.mxu0 %v4270
  %11850 = vmatpush.bf16.msra.mxu0 %v4266
  %11851 = vmatpush.bf16.msra.mxu0 %v4262
  %11852 = vmatpush.bf16.msra.mxu0 %v4258
  %11853 = vmatpush.bf16.msra.mxu0 %v4254
  %11854 = vmatpush.bf16.msra.mxu0 %v4250
  %11855 = vmatmul.bf16.gmra.mxu0 %v10911
  %v11856 = vpop.f32.mrf.mxu0
  %v11857 = vadd.f32 %v11844, %v11856
  %v11858 = vpop.f32.mrf.mxu0
  %11859 = vdwg.mxu0
  %11860 = vmatpush.bf16.msra.mxu0 %v4310
  %11861 = vmatpush.bf16.msra.mxu0 %v4306
  %11862 = vmatpush.bf16.msra.mxu0 %v4302
  %11863 = vmatpush.bf16.msra.mxu0 %v4298
  %11864 = vmatpush.bf16.msra.mxu0 %v4294
  %11865 = vmatpush.bf16.msra.mxu0 %v4290
  %11866 = vmatpush.bf16.msra.mxu0 %v4286
  %11867 = vmatpush.bf16.msra.mxu0 %v4282
  %11868 = vmatmul.bf16.gmra.mxu0 %v10912
  %v11869 = vpop.f32.mrf.mxu0
  %v11870 = vadd.f32 %v11857, %v11869
  %v11871 = vpop.f32.mrf.mxu0
  %11872 = vdwg.mxu0
  %11873 = vmatpush.bf16.msra.mxu0 %v4342
  %11874 = vmatpush.bf16.msra.mxu0 %v4338
  %11875 = vmatpush.bf16.msra.mxu0 %v4334
  %11876 = vmatpush.bf16.msra.mxu0 %v4330
  %11877 = vmatpush.bf16.msra.mxu0 %v4326
  %11878 = vmatpush.bf16.msra.mxu0 %v4322
  %11879 = vmatpush.bf16.msra.mxu0 %v4318
  %11880 = vmatpush.bf16.msra.mxu0 %v4314
  %11881 = vmatmul.bf16.gmra.mxu0 %v10913
  %v11882 = vpop.f32.mrf.mxu0
  %v11883 = vadd.f32 %v11870, %v11882
  %v11884 = vpop.f32.mrf.mxu0
  %11885 = vdwg.mxu0
  %11886 = vmatpush.bf16.msra.mxu0 %v4374
  %11887 = vmatpush.bf16.msra.mxu0 %v4370
  %11888 = vmatpush.bf16.msra.mxu0 %v4366
  %11889 = vmatpush.bf16.msra.mxu0 %v4362
  %11890 = vmatpush.bf16.msra.mxu0 %v4358
  %11891 = vmatpush.bf16.msra.mxu0 %v4354
  %11892 = vmatpush.bf16.msra.mxu0 %v4350
  %11893 = vmatpush.bf16.msra.mxu0 %v4346
  %11894 = vmatmul.bf16.gmra.mxu0 %v10914
  %v11895 = vpop.f32.mrf.mxu0
  %v11896 = vadd.f32 %v11883, %v11895
  %v11897 = vpop.f32.mrf.mxu0
  %11898 = vdwg.mxu0
  %11899 = vmatpush.bf16.msra.mxu0 %v4406
  %11900 = vmatpush.bf16.msra.mxu0 %v4402
  %11901 = vmatpush.bf16.msra.mxu0 %v4398
  %11902 = vmatpush.bf16.msra.mxu0 %v4394
  %11903 = vmatpush.bf16.msra.mxu0 %v4390
  %11904 = vmatpush.bf16.msra.mxu0 %v4386
  %11905 = vmatpush.bf16.msra.mxu0 %v4382
  %11906 = vmatpush.bf16.msra.mxu0 %v4378
  %11907 = vmatmul.bf16.gmra.mxu0 %v10915
  %v11908 = vpop.f32.mrf.mxu0
  %v11909 = vadd.f32 %v11896, %v11908
  %v11910 = vpop.f32.mrf.mxu0
  %11911 = vdwg.mxu0
  %11912 = vmatpush.bf16.msra.mxu0 %v4438
  %11913 = vmatpush.bf16.msra.mxu0 %v4434
  %11914 = vmatpush.bf16.msra.mxu0 %v4430
  %11915 = vmatpush.bf16.msra.mxu0 %v4426
  %11916 = vmatpush.bf16.msra.mxu0 %v4422
  %11917 = vmatpush.bf16.msra.mxu0 %v4418
  %11918 = vmatpush.bf16.msra.mxu0 %v4414
  %11919 = vmatpush.bf16.msra.mxu0 %v4410
  %11920 = vmatmul.bf16.gmra.mxu0 %v10916
  %v11921 = vpop.f32.mrf.mxu0
  %v11922 = vadd.f32 %v11909, %v11921
  %v11923 = vpop.f32.mrf.mxu0
  %11924 = vdwg.mxu0
  %11925 = vmatpush.bf16.msra.mxu0 %v4470
  %11926 = vmatpush.bf16.msra.mxu0 %v4466
  %11927 = vmatpush.bf16.msra.mxu0 %v4462
  %11928 = vmatpush.bf16.msra.mxu0 %v4458
  %11929 = vmatpush.bf16.msra.mxu0 %v4454
  %11930 = vmatpush.bf16.msra.mxu0 %v4450
  %11931 = vmatpush.bf16.msra.mxu0 %v4446
  %11932 = vmatpush.bf16.msra.mxu0 %v4442
  %11933 = vmatmul.bf16.gmra.mxu0 %v10917
  %v11934 = vpop.f32.mrf.mxu0
  %v11935 = vadd.f32 %v11922, %v11934
  %v11936 = vpop.f32.mrf.mxu0
  %11937 = vdwg.mxu0
  %11938 = vmatpush.bf16.msra.mxu0 %v4502
  %11939 = vmatpush.bf16.msra.mxu0 %v4498
  %11940 = vmatpush.bf16.msra.mxu0 %v4494
  %11941 = vmatpush.bf16.msra.mxu0 %v4490
  %11942 = vmatpush.bf16.msra.mxu0 %v4486
  %11943 = vmatpush.bf16.msra.mxu0 %v4482
  %11944 = vmatpush.bf16.msra.mxu0 %v4478
  %11945 = vmatpush.bf16.msra.mxu0 %v4474
  %11946 = vmatmul.bf16.gmra.mxu0 %v10918
  %v11947 = vpop.f32.mrf.mxu0
  %v11948 = vadd.f32 %v11935, %v11947
  %v11949 = vpop.f32.mrf.mxu0
  %11950 = vdwg.mxu0
  %11951 = vmatpush.bf16.msra.mxu0 %v4534
  %11952 = vmatpush.bf16.msra.mxu0 %v4530
  %11953 = vmatpush.bf16.msra.mxu0 %v4526
  %11954 = vmatpush.bf16.msra.mxu0 %v4522
  %11955 = vmatpush.bf16.msra.mxu0 %v4518
  %11956 = vmatpush.bf16.msra.mxu0 %v4514
  %11957 = vmatpush.bf16.msra.mxu0 %v4510
  %11958 = vmatpush.bf16.msra.mxu0 %v4506
  %11959 = vmatmul.bf16.gmra.mxu0 %v10919
  %v11960 = vpop.f32.mrf.mxu0
  %v11961 = vadd.f32 %v11948, %v11960
  %v11962 = vpop.f32.mrf.mxu0
  %11963 = vdwg.mxu0
  %11964 = vmatpush.bf16.msra.mxu0 %v4566
  %11965 = vmatpush.bf16.msra.mxu0 %v4562
  %11966 = vmatpush.bf16.msra.mxu0 %v4558
  %11967 = vmatpush.bf16.msra.mxu0 %v4554
  %11968 = vmatpush.bf16.msra.mxu0 %v4550
  %11969 = vmatpush.bf16.msra.mxu0 %v4546
  %11970 = vmatpush.bf16.msra.mxu0 %v4542
  %11971 = vmatpush.bf16.msra.mxu0 %v4538
  %11972 = vmatmul.bf16.gmra.mxu0 %v10920
  %v11973 = vpop.f32.mrf.mxu0
  %v11974 = vadd.f32 %v11961, %v11973
  %v11975 = vpop.f32.mrf.mxu0
  %11976 = vdwg.mxu0
  %11977 = vmatpush.bf16.msra.mxu0 %v4598
  %11978 = vmatpush.bf16.msra.mxu0 %v4594
  %11979 = vmatpush.bf16.msra.mxu0 %v4590
  %11980 = vmatpush.bf16.msra.mxu0 %v4586
  %11981 = vmatpush.bf16.msra.mxu0 %v4582
  %11982 = vmatpush.bf16.msra.mxu0 %v4578
  %11983 = vmatpush.bf16.msra.mxu0 %v4574
  %11984 = vmatpush.bf16.msra.mxu0 %v4570
  %11985 = vmatmul.bf16.gmra.mxu0 %v10921
  %v11986 = vpop.f32.mrf.mxu0
  %v11987 = vadd.f32 %v11974, %v11986
  %v11988 = vpop.f32.mrf.mxu0
  %11989 = vdwg.mxu0
  %11990 = vmatpush.bf16.msra.mxu0 %v4630
  %11991 = vmatpush.bf16.msra.mxu0 %v4626
  %11992 = vmatpush.bf16.msra.mxu0 %v4622
  %11993 = vmatpush.bf16.msra.mxu0 %v4618
  %11994 = vmatpush.bf16.msra.mxu0 %v4614
  %11995 = vmatpush.bf16.msra.mxu0 %v4610
  %11996 = vmatpush.bf16.msra.mxu0 %v4606
  %11997 = vmatpush.bf16.msra.mxu0 %v4602
  %11998 = vmatmul.bf16.gmra.mxu0 %v10922
  %v11999 = vpop.f32.mrf.mxu0
  %v12000 = vadd.f32 %v11987, %v11999
  %v12001 = vpop.f32.mrf.mxu0
  %12002 = vdwg.mxu0
  %12003 = vmatpush.bf16.msra.mxu0 %v4662
  %12004 = vmatpush.bf16.msra.mxu0 %v4658
  %12005 = vmatpush.bf16.msra.mxu0 %v4654
  %12006 = vmatpush.bf16.msra.mxu0 %v4650
  %12007 = vmatpush.bf16.msra.mxu0 %v4646
  %12008 = vmatpush.bf16.msra.mxu0 %v4642
  %12009 = vmatpush.bf16.msra.mxu0 %v4638
  %12010 = vmatpush.bf16.msra.mxu0 %v4634
  %12011 = vmatmul.bf16.gmra.mxu0 %v10923
  %v12012 = vpop.f32.mrf.mxu0
  %v12013 = vadd.f32 %v12000, %v12012
  %v12014 = vpop.f32.mrf.mxu0
  %12015 = vdwg.mxu0
  %12016 = vmatpush.bf16.msra.mxu0 %v4694
  %12017 = vmatpush.bf16.msra.mxu0 %v4690
  %12018 = vmatpush.bf16.msra.mxu0 %v4686
  %12019 = vmatpush.bf16.msra.mxu0 %v4682
  %12020 = vmatpush.bf16.msra.mxu0 %v4678
  %12021 = vmatpush.bf16.msra.mxu0 %v4674
  %12022 = vmatpush.bf16.msra.mxu0 %v4670
  %12023 = vmatpush.bf16.msra.mxu0 %v4666
  %12024 = vmatmul.bf16.gmra.mxu0 %v10924
  %v12025 = vpop.f32.mrf.mxu0
  %v12026 = vadd.f32 %v12013, %v12025
  %v12027 = vpop.f32.mrf.mxu0
  %12028 = vdwg.mxu0
  %12029 = vmatpush.bf16.msra.mxu0 %v4726
  %12030 = vmatpush.bf16.msra.mxu0 %v4722
  %12031 = vmatpush.bf16.msra.mxu0 %v4718
  %12032 = vmatpush.bf16.msra.mxu0 %v4714
  %12033 = vmatpush.bf16.msra.mxu0 %v4710
  %12034 = vmatpush.bf16.msra.mxu0 %v4706
  %12035 = vmatpush.bf16.msra.mxu0 %v4702
  %12036 = vmatpush.bf16.msra.mxu0 %v4698
  %12037 = vmatmul.bf16.gmra.mxu0 %v10925
  %v12038 = vpop.f32.mrf.mxu0
  %v12039 = vadd.f32 %v12026, %v12038
  %v12040 = vpop.f32.mrf.mxu0
  %12041 = vdwg.mxu0
  %12042 = vmatpush.bf16.msra.mxu0 %v4758
  %12043 = vmatpush.bf16.msra.mxu0 %v4754
  %12044 = vmatpush.bf16.msra.mxu0 %v4750
  %12045 = vmatpush.bf16.msra.mxu0 %v4746
  %12046 = vmatpush.bf16.msra.mxu0 %v4742
  %12047 = vmatpush.bf16.msra.mxu0 %v4738
  %12048 = vmatpush.bf16.msra.mxu0 %v4734
  %12049 = vmatpush.bf16.msra.mxu0 %v4730
  %12050 = vmatmul.bf16.gmra.mxu0 %v10926
  %v12051 = vpop.f32.mrf.mxu0
  %v12052 = vadd.f32 %v12039, %v12051
  %v12053 = vpop.f32.mrf.mxu0
  %12054 = vdwg.mxu0
  %12055 = vmatpush.bf16.msra.mxu0 %v4790
  %12056 = vmatpush.bf16.msra.mxu0 %v4786
  %12057 = vmatpush.bf16.msra.mxu0 %v4782
  %12058 = vmatpush.bf16.msra.mxu0 %v4778
  %12059 = vmatpush.bf16.msra.mxu0 %v4774
  %12060 = vmatpush.bf16.msra.mxu0 %v4770
  %12061 = vmatpush.bf16.msra.mxu0 %v4766
  %12062 = vmatpush.bf16.msra.mxu0 %v4762
  %12063 = vmatmul.bf16.gmra.mxu0 %v10927
  %v12064 = vpop.f32.mrf.mxu0
  %v12065 = vadd.f32 %v12052, %v12064
  %v12066 = vpop.f32.mrf.mxu0
  %12067 = vdwg.mxu0
  %12068 = vmatpush.bf16.msra.mxu0 %v4822
  %12069 = vmatpush.bf16.msra.mxu0 %v4818
  %12070 = vmatpush.bf16.msra.mxu0 %v4814
  %12071 = vmatpush.bf16.msra.mxu0 %v4810
  %12072 = vmatpush.bf16.msra.mxu0 %v4806
  %12073 = vmatpush.bf16.msra.mxu0 %v4802
  %12074 = vmatpush.bf16.msra.mxu0 %v4798
  %12075 = vmatpush.bf16.msra.mxu0 %v4794
  %12076 = vmatmul.bf16.gmra.mxu0 %v10928
  %v12077 = vpop.f32.mrf.mxu0
  %v12078 = vadd.f32 %v12065, %v12077
  %v12079 = vpop.f32.mrf.mxu0
  %12080 = vdwg.mxu0
  %12081 = vmatpush.bf16.msra.mxu0 %v4854
  %12082 = vmatpush.bf16.msra.mxu0 %v4850
  %12083 = vmatpush.bf16.msra.mxu0 %v4846
  %12084 = vmatpush.bf16.msra.mxu0 %v4842
  %12085 = vmatpush.bf16.msra.mxu0 %v4838
  %12086 = vmatpush.bf16.msra.mxu0 %v4834
  %12087 = vmatpush.bf16.msra.mxu0 %v4830
  %12088 = vmatpush.bf16.msra.mxu0 %v4826
  %12089 = vmatmul.bf16.gmra.mxu0 %v10929
  %v12090 = vpop.f32.mrf.mxu0
  %v12091 = vadd.f32 %v12078, %v12090
  %v12092 = vpop.f32.mrf.mxu0
  %12093 = vdwg.mxu0
  %12094 = vmatpush.bf16.msra.mxu0 %v4886
  %12095 = vmatpush.bf16.msra.mxu0 %v4882
  %12096 = vmatpush.bf16.msra.mxu0 %v4878
  %12097 = vmatpush.bf16.msra.mxu0 %v4874
  %12098 = vmatpush.bf16.msra.mxu0 %v4870
  %12099 = vmatpush.bf16.msra.mxu0 %v4866
  %12100 = vmatpush.bf16.msra.mxu0 %v4862
  %12101 = vmatpush.bf16.msra.mxu0 %v4858
  %12102 = vmatmul.bf16.gmra.mxu0 %v10930
  %v12103 = vpop.f32.mrf.mxu0
  %v12104 = vadd.f32 %v12091, %v12103
  %v12105 = vpop.f32.mrf.mxu0
  %12106 = vdwg.mxu0
  %12107 = vmatpush.bf16.msra.mxu0 %v4918
  %12108 = vmatpush.bf16.msra.mxu0 %v4914
  %12109 = vmatpush.bf16.msra.mxu0 %v4910
  %12110 = vmatpush.bf16.msra.mxu0 %v4906
  %12111 = vmatpush.bf16.msra.mxu0 %v4902
  %12112 = vmatpush.bf16.msra.mxu0 %v4898
  %12113 = vmatpush.bf16.msra.mxu0 %v4894
  %12114 = vmatpush.bf16.msra.mxu0 %v4890
  %12115 = vmatmul.bf16.gmra.mxu0 %v10931
  %v12116 = vpop.f32.mrf.mxu0
  %v12117 = vadd.f32 %v12104, %v12116
  %v12118 = vpop.f32.mrf.mxu0
  %12119 = vdwg.mxu0
  %12120 = vmatpush.bf16.msra.mxu0 %v4950
  %12121 = vmatpush.bf16.msra.mxu0 %v4946
  %12122 = vmatpush.bf16.msra.mxu0 %v4942
  %12123 = vmatpush.bf16.msra.mxu0 %v4938
  %12124 = vmatpush.bf16.msra.mxu0 %v4934
  %12125 = vmatpush.bf16.msra.mxu0 %v4930
  %12126 = vmatpush.bf16.msra.mxu0 %v4926
  %12127 = vmatpush.bf16.msra.mxu0 %v4922
  %12128 = vmatmul.bf16.gmra.mxu0 %v10932
  %v12129 = vpop.f32.mrf.mxu0
  %v12130 = vadd.f32 %v12117, %v12129
  %v12131 = vpop.f32.mrf.mxu0
  %12132 = vdwg.mxu0
  %12133 = vmatpush.bf16.msra.mxu0 %v4023
  %12134 = vmatpush.bf16.msra.mxu0 %v4019
  %12135 = vmatpush.bf16.msra.mxu0 %v4015
  %12136 = vmatpush.bf16.msra.mxu0 %v4011
  %12137 = vmatpush.bf16.msra.mxu0 %v4007
  %12138 = vmatpush.bf16.msra.mxu0 %v4003
  %12139 = vmatpush.bf16.msra.mxu0 %v3999
  %12140 = vmatpush.bf16.msra.mxu0 %v3995
  %12141 = vmatmul.bf16.gmra.mxu0 %v10903
  %v12142 = vpop.f32.mrf.mxu0
  %v12143 = vadd.f32 0.0, %v12142
  %v12144 = vpop.f32.mrf.mxu0
  %12145 = vdwg.mxu0
  %12146 = vmatpush.bf16.msra.mxu0 %v4055
  %12147 = vmatpush.bf16.msra.mxu0 %v4051
  %12148 = vmatpush.bf16.msra.mxu0 %v4047
  %12149 = vmatpush.bf16.msra.mxu0 %v4043
  %12150 = vmatpush.bf16.msra.mxu0 %v4039
  %12151 = vmatpush.bf16.msra.mxu0 %v4035
  %12152 = vmatpush.bf16.msra.mxu0 %v4031
  %12153 = vmatpush.bf16.msra.mxu0 %v4027
  %12154 = vmatmul.bf16.gmra.mxu0 %v10904
  %v12155 = vpop.f32.mrf.mxu0
  %v12156 = vadd.f32 %v12143, %v12155
  %v12157 = vpop.f32.mrf.mxu0
  %12158 = vdwg.mxu0
  %12159 = vmatpush.bf16.msra.mxu0 %v4087
  %12160 = vmatpush.bf16.msra.mxu0 %v4083
  %12161 = vmatpush.bf16.msra.mxu0 %v4079
  %12162 = vmatpush.bf16.msra.mxu0 %v4075
  %12163 = vmatpush.bf16.msra.mxu0 %v4071
  %12164 = vmatpush.bf16.msra.mxu0 %v4067
  %12165 = vmatpush.bf16.msra.mxu0 %v4063
  %12166 = vmatpush.bf16.msra.mxu0 %v4059
  %12167 = vmatmul.bf16.gmra.mxu0 %v10905
  %v12168 = vpop.f32.mrf.mxu0
  %v12169 = vadd.f32 %v12156, %v12168
  %v12170 = vpop.f32.mrf.mxu0
  %12171 = vdwg.mxu0
  %12172 = vmatpush.bf16.msra.mxu0 %v4119
  %12173 = vmatpush.bf16.msra.mxu0 %v4115
  %12174 = vmatpush.bf16.msra.mxu0 %v4111
  %12175 = vmatpush.bf16.msra.mxu0 %v4107
  %12176 = vmatpush.bf16.msra.mxu0 %v4103
  %12177 = vmatpush.bf16.msra.mxu0 %v4099
  %12178 = vmatpush.bf16.msra.mxu0 %v4095
  %12179 = vmatpush.bf16.msra.mxu0 %v4091
  %12180 = vmatmul.bf16.gmra.mxu0 %v10906
  %v12181 = vpop.f32.mrf.mxu0
  %v12182 = vadd.f32 %v12169, %v12181
  %v12183 = vpop.f32.mrf.mxu0
  %12184 = vdwg.mxu0
  %12185 = vmatpush.bf16.msra.mxu0 %v4151
  %12186 = vmatpush.bf16.msra.mxu0 %v4147
  %12187 = vmatpush.bf16.msra.mxu0 %v4143
  %12188 = vmatpush.bf16.msra.mxu0 %v4139
  %12189 = vmatpush.bf16.msra.mxu0 %v4135
  %12190 = vmatpush.bf16.msra.mxu0 %v4131
  %12191 = vmatpush.bf16.msra.mxu0 %v4127
  %12192 = vmatpush.bf16.msra.mxu0 %v4123
  %12193 = vmatmul.bf16.gmra.mxu0 %v10907
  %v12194 = vpop.f32.mrf.mxu0
  %v12195 = vadd.f32 %v12182, %v12194
  %v12196 = vpop.f32.mrf.mxu0
  %12197 = vdwg.mxu0
  %12198 = vmatpush.bf16.msra.mxu0 %v4183
  %12199 = vmatpush.bf16.msra.mxu0 %v4179
  %12200 = vmatpush.bf16.msra.mxu0 %v4175
  %12201 = vmatpush.bf16.msra.mxu0 %v4171
  %12202 = vmatpush.bf16.msra.mxu0 %v4167
  %12203 = vmatpush.bf16.msra.mxu0 %v4163
  %12204 = vmatpush.bf16.msra.mxu0 %v4159
  %12205 = vmatpush.bf16.msra.mxu0 %v4155
  %12206 = vmatmul.bf16.gmra.mxu0 %v10908
  %v12207 = vpop.f32.mrf.mxu0
  %v12208 = vadd.f32 %v12195, %v12207
  %v12209 = vpop.f32.mrf.mxu0
  %12210 = vdwg.mxu0
  %12211 = vmatpush.bf16.msra.mxu0 %v4215
  %12212 = vmatpush.bf16.msra.mxu0 %v4211
  %12213 = vmatpush.bf16.msra.mxu0 %v4207
  %12214 = vmatpush.bf16.msra.mxu0 %v4203
  %12215 = vmatpush.bf16.msra.mxu0 %v4199
  %12216 = vmatpush.bf16.msra.mxu0 %v4195
  %12217 = vmatpush.bf16.msra.mxu0 %v4191
  %12218 = vmatpush.bf16.msra.mxu0 %v4187
  %12219 = vmatmul.bf16.gmra.mxu0 %v10909
  %v12220 = vpop.f32.mrf.mxu0
  %v12221 = vadd.f32 %v12208, %v12220
  %v12222 = vpop.f32.mrf.mxu0
  %12223 = vdwg.mxu0
  %12224 = vmatpush.bf16.msra.mxu0 %v4247
  %12225 = vmatpush.bf16.msra.mxu0 %v4243
  %12226 = vmatpush.bf16.msra.mxu0 %v4239
  %12227 = vmatpush.bf16.msra.mxu0 %v4235
  %12228 = vmatpush.bf16.msra.mxu0 %v4231
  %12229 = vmatpush.bf16.msra.mxu0 %v4227
  %12230 = vmatpush.bf16.msra.mxu0 %v4223
  %12231 = vmatpush.bf16.msra.mxu0 %v4219
  %12232 = vmatmul.bf16.gmra.mxu0 %v10910
  %v12233 = vpop.f32.mrf.mxu0
  %v12234 = vadd.f32 %v12221, %v12233
  %v12235 = vpop.f32.mrf.mxu0
  %12236 = vdwg.mxu0
  %12237 = vmatpush.bf16.msra.mxu0 %v4279
  %12238 = vmatpush.bf16.msra.mxu0 %v4275
  %12239 = vmatpush.bf16.msra.mxu0 %v4271
  %12240 = vmatpush.bf16.msra.mxu0 %v4267
  %12241 = vmatpush.bf16.msra.mxu0 %v4263
  %12242 = vmatpush.bf16.msra.mxu0 %v4259
  %12243 = vmatpush.bf16.msra.mxu0 %v4255
  %12244 = vmatpush.bf16.msra.mxu0 %v4251
  %12245 = vmatmul.bf16.gmra.mxu0 %v10911
  %v12246 = vpop.f32.mrf.mxu0
  %v12247 = vadd.f32 %v12234, %v12246
  %v12248 = vpop.f32.mrf.mxu0
  %12249 = vdwg.mxu0
  %12250 = vmatpush.bf16.msra.mxu0 %v4311
  %12251 = vmatpush.bf16.msra.mxu0 %v4307
  %12252 = vmatpush.bf16.msra.mxu0 %v4303
  %12253 = vmatpush.bf16.msra.mxu0 %v4299
  %12254 = vmatpush.bf16.msra.mxu0 %v4295
  %12255 = vmatpush.bf16.msra.mxu0 %v4291
  %12256 = vmatpush.bf16.msra.mxu0 %v4287
  %12257 = vmatpush.bf16.msra.mxu0 %v4283
  %12258 = vmatmul.bf16.gmra.mxu0 %v10912
  %v12259 = vpop.f32.mrf.mxu0
  %v12260 = vadd.f32 %v12247, %v12259
  %v12261 = vpop.f32.mrf.mxu0
  %12262 = vdwg.mxu0
  %12263 = vmatpush.bf16.msra.mxu0 %v4343
  %12264 = vmatpush.bf16.msra.mxu0 %v4339
  %12265 = vmatpush.bf16.msra.mxu0 %v4335
  %12266 = vmatpush.bf16.msra.mxu0 %v4331
  %12267 = vmatpush.bf16.msra.mxu0 %v4327
  %12268 = vmatpush.bf16.msra.mxu0 %v4323
  %12269 = vmatpush.bf16.msra.mxu0 %v4319
  %12270 = vmatpush.bf16.msra.mxu0 %v4315
  %12271 = vmatmul.bf16.gmra.mxu0 %v10913
  %v12272 = vpop.f32.mrf.mxu0
  %v12273 = vadd.f32 %v12260, %v12272
  %v12274 = vpop.f32.mrf.mxu0
  %12275 = vdwg.mxu0
  %12276 = vmatpush.bf16.msra.mxu0 %v4375
  %12277 = vmatpush.bf16.msra.mxu0 %v4371
  %12278 = vmatpush.bf16.msra.mxu0 %v4367
  %12279 = vmatpush.bf16.msra.mxu0 %v4363
  %12280 = vmatpush.bf16.msra.mxu0 %v4359
  %12281 = vmatpush.bf16.msra.mxu0 %v4355
  %12282 = vmatpush.bf16.msra.mxu0 %v4351
  %12283 = vmatpush.bf16.msra.mxu0 %v4347
  %12284 = vmatmul.bf16.gmra.mxu0 %v10914
  %v12285 = vpop.f32.mrf.mxu0
  %v12286 = vadd.f32 %v12273, %v12285
  %v12287 = vpop.f32.mrf.mxu0
  %12288 = vdwg.mxu0
  %12289 = vmatpush.bf16.msra.mxu0 %v4407
  %12290 = vmatpush.bf16.msra.mxu0 %v4403
  %12291 = vmatpush.bf16.msra.mxu0 %v4399
  %12292 = vmatpush.bf16.msra.mxu0 %v4395
  %12293 = vmatpush.bf16.msra.mxu0 %v4391
  %12294 = vmatpush.bf16.msra.mxu0 %v4387
  %12295 = vmatpush.bf16.msra.mxu0 %v4383
  %12296 = vmatpush.bf16.msra.mxu0 %v4379
  %12297 = vmatmul.bf16.gmra.mxu0 %v10915
  %v12298 = vpop.f32.mrf.mxu0
  %v12299 = vadd.f32 %v12286, %v12298
  %v12300 = vpop.f32.mrf.mxu0
  %12301 = vdwg.mxu0
  %12302 = vmatpush.bf16.msra.mxu0 %v4439
  %12303 = vmatpush.bf16.msra.mxu0 %v4435
  %12304 = vmatpush.bf16.msra.mxu0 %v4431
  %12305 = vmatpush.bf16.msra.mxu0 %v4427
  %12306 = vmatpush.bf16.msra.mxu0 %v4423
  %12307 = vmatpush.bf16.msra.mxu0 %v4419
  %12308 = vmatpush.bf16.msra.mxu0 %v4415
  %12309 = vmatpush.bf16.msra.mxu0 %v4411
  %12310 = vmatmul.bf16.gmra.mxu0 %v10916
  %v12311 = vpop.f32.mrf.mxu0
  %v12312 = vadd.f32 %v12299, %v12311
  %v12313 = vpop.f32.mrf.mxu0
  %12314 = vdwg.mxu0
  %12315 = vmatpush.bf16.msra.mxu0 %v4471
  %12316 = vmatpush.bf16.msra.mxu0 %v4467
  %12317 = vmatpush.bf16.msra.mxu0 %v4463
  %12318 = vmatpush.bf16.msra.mxu0 %v4459
  %12319 = vmatpush.bf16.msra.mxu0 %v4455
  %12320 = vmatpush.bf16.msra.mxu0 %v4451
  %12321 = vmatpush.bf16.msra.mxu0 %v4447
  %12322 = vmatpush.bf16.msra.mxu0 %v4443
  %12323 = vmatmul.bf16.gmra.mxu0 %v10917
  %v12324 = vpop.f32.mrf.mxu0
  %v12325 = vadd.f32 %v12312, %v12324
  %v12326 = vpop.f32.mrf.mxu0
  %12327 = vdwg.mxu0
  %12328 = vmatpush.bf16.msra.mxu0 %v4503
  %12329 = vmatpush.bf16.msra.mxu0 %v4499
  %12330 = vmatpush.bf16.msra.mxu0 %v4495
  %12331 = vmatpush.bf16.msra.mxu0 %v4491
  %12332 = vmatpush.bf16.msra.mxu0 %v4487
  %12333 = vmatpush.bf16.msra.mxu0 %v4483
  %12334 = vmatpush.bf16.msra.mxu0 %v4479
  %12335 = vmatpush.bf16.msra.mxu0 %v4475
  %12336 = vmatmul.bf16.gmra.mxu0 %v10918
  %v12337 = vpop.f32.mrf.mxu0
  %v12338 = vadd.f32 %v12325, %v12337
  %v12339 = vpop.f32.mrf.mxu0
  %12340 = vdwg.mxu0
  %12341 = vmatpush.bf16.msra.mxu0 %v4535
  %12342 = vmatpush.bf16.msra.mxu0 %v4531
  %12343 = vmatpush.bf16.msra.mxu0 %v4527
  %12344 = vmatpush.bf16.msra.mxu0 %v4523
  %12345 = vmatpush.bf16.msra.mxu0 %v4519
  %12346 = vmatpush.bf16.msra.mxu0 %v4515
  %12347 = vmatpush.bf16.msra.mxu0 %v4511
  %12348 = vmatpush.bf16.msra.mxu0 %v4507
  %12349 = vmatmul.bf16.gmra.mxu0 %v10919
  %v12350 = vpop.f32.mrf.mxu0
  %v12351 = vadd.f32 %v12338, %v12350
  %v12352 = vpop.f32.mrf.mxu0
  %12353 = vdwg.mxu0
  %12354 = vmatpush.bf16.msra.mxu0 %v4567
  %12355 = vmatpush.bf16.msra.mxu0 %v4563
  %12356 = vmatpush.bf16.msra.mxu0 %v4559
  %12357 = vmatpush.bf16.msra.mxu0 %v4555
  %12358 = vmatpush.bf16.msra.mxu0 %v4551
  %12359 = vmatpush.bf16.msra.mxu0 %v4547
  %12360 = vmatpush.bf16.msra.mxu0 %v4543
  %12361 = vmatpush.bf16.msra.mxu0 %v4539
  %12362 = vmatmul.bf16.gmra.mxu0 %v10920
  %v12363 = vpop.f32.mrf.mxu0
  %v12364 = vadd.f32 %v12351, %v12363
  %v12365 = vpop.f32.mrf.mxu0
  %12366 = vdwg.mxu0
  %12367 = vmatpush.bf16.msra.mxu0 %v4599
  %12368 = vmatpush.bf16.msra.mxu0 %v4595
  %12369 = vmatpush.bf16.msra.mxu0 %v4591
  %12370 = vmatpush.bf16.msra.mxu0 %v4587
  %12371 = vmatpush.bf16.msra.mxu0 %v4583
  %12372 = vmatpush.bf16.msra.mxu0 %v4579
  %12373 = vmatpush.bf16.msra.mxu0 %v4575
  %12374 = vmatpush.bf16.msra.mxu0 %v4571
  %12375 = vmatmul.bf16.gmra.mxu0 %v10921
  %v12376 = vpop.f32.mrf.mxu0
  %v12377 = vadd.f32 %v12364, %v12376
  %v12378 = vpop.f32.mrf.mxu0
  %12379 = vdwg.mxu0
  %12380 = vmatpush.bf16.msra.mxu0 %v4631
  %12381 = vmatpush.bf16.msra.mxu0 %v4627
  %12382 = vmatpush.bf16.msra.mxu0 %v4623
  %12383 = vmatpush.bf16.msra.mxu0 %v4619
  %12384 = vmatpush.bf16.msra.mxu0 %v4615
  %12385 = vmatpush.bf16.msra.mxu0 %v4611
  %12386 = vmatpush.bf16.msra.mxu0 %v4607
  %12387 = vmatpush.bf16.msra.mxu0 %v4603
  %12388 = vmatmul.bf16.gmra.mxu0 %v10922
  %v12389 = vpop.f32.mrf.mxu0
  %v12390 = vadd.f32 %v12377, %v12389
  %v12391 = vpop.f32.mrf.mxu0
  %12392 = vdwg.mxu0
  %12393 = vmatpush.bf16.msra.mxu0 %v4663
  %12394 = vmatpush.bf16.msra.mxu0 %v4659
  %12395 = vmatpush.bf16.msra.mxu0 %v4655
  %12396 = vmatpush.bf16.msra.mxu0 %v4651
  %12397 = vmatpush.bf16.msra.mxu0 %v4647
  %12398 = vmatpush.bf16.msra.mxu0 %v4643
  %12399 = vmatpush.bf16.msra.mxu0 %v4639
  %12400 = vmatpush.bf16.msra.mxu0 %v4635
  %12401 = vmatmul.bf16.gmra.mxu0 %v10923
  %v12402 = vpop.f32.mrf.mxu0
  %v12403 = vadd.f32 %v12390, %v12402
  %v12404 = vpop.f32.mrf.mxu0
  %12405 = vdwg.mxu0
  %12406 = vmatpush.bf16.msra.mxu0 %v4695
  %12407 = vmatpush.bf16.msra.mxu0 %v4691
  %12408 = vmatpush.bf16.msra.mxu0 %v4687
  %12409 = vmatpush.bf16.msra.mxu0 %v4683
  %12410 = vmatpush.bf16.msra.mxu0 %v4679
  %12411 = vmatpush.bf16.msra.mxu0 %v4675
  %12412 = vmatpush.bf16.msra.mxu0 %v4671
  %12413 = vmatpush.bf16.msra.mxu0 %v4667
  %12414 = vmatmul.bf16.gmra.mxu0 %v10924
  %v12415 = vpop.f32.mrf.mxu0
  %v12416 = vadd.f32 %v12403, %v12415
  %v12417 = vpop.f32.mrf.mxu0
  %12418 = vdwg.mxu0
  %12419 = vmatpush.bf16.msra.mxu0 %v4727
  %12420 = vmatpush.bf16.msra.mxu0 %v4723
  %12421 = vmatpush.bf16.msra.mxu0 %v4719
  %12422 = vmatpush.bf16.msra.mxu0 %v4715
  %12423 = vmatpush.bf16.msra.mxu0 %v4711
  %12424 = vmatpush.bf16.msra.mxu0 %v4707
  %12425 = vmatpush.bf16.msra.mxu0 %v4703
  %12426 = vmatpush.bf16.msra.mxu0 %v4699
  %12427 = vmatmul.bf16.gmra.mxu0 %v10925
  %v12428 = vpop.f32.mrf.mxu0
  %v12429 = vadd.f32 %v12416, %v12428
  %v12430 = vpop.f32.mrf.mxu0
  %12431 = vdwg.mxu0
  %12432 = vmatpush.bf16.msra.mxu0 %v4759
  %12433 = vmatpush.bf16.msra.mxu0 %v4755
  %12434 = vmatpush.bf16.msra.mxu0 %v4751
  %12435 = vmatpush.bf16.msra.mxu0 %v4747
  %12436 = vmatpush.bf16.msra.mxu0 %v4743
  %12437 = vmatpush.bf16.msra.mxu0 %v4739
  %12438 = vmatpush.bf16.msra.mxu0 %v4735
  %12439 = vmatpush.bf16.msra.mxu0 %v4731
  %12440 = vmatmul.bf16.gmra.mxu0 %v10926
  %v12441 = vpop.f32.mrf.mxu0
  %v12442 = vadd.f32 %v12429, %v12441
  %v12443 = vpop.f32.mrf.mxu0
  %12444 = vdwg.mxu0
  %12445 = vmatpush.bf16.msra.mxu0 %v4791
  %12446 = vmatpush.bf16.msra.mxu0 %v4787
  %12447 = vmatpush.bf16.msra.mxu0 %v4783
  %12448 = vmatpush.bf16.msra.mxu0 %v4779
  %12449 = vmatpush.bf16.msra.mxu0 %v4775
  %12450 = vmatpush.bf16.msra.mxu0 %v4771
  %12451 = vmatpush.bf16.msra.mxu0 %v4767
  %12452 = vmatpush.bf16.msra.mxu0 %v4763
  %12453 = vmatmul.bf16.gmra.mxu0 %v10927
  %v12454 = vpop.f32.mrf.mxu0
  %v12455 = vadd.f32 %v12442, %v12454
  %v12456 = vpop.f32.mrf.mxu0
  %12457 = vdwg.mxu0
  %12458 = vmatpush.bf16.msra.mxu0 %v4823
  %12459 = vmatpush.bf16.msra.mxu0 %v4819
  %12460 = vmatpush.bf16.msra.mxu0 %v4815
  %12461 = vmatpush.bf16.msra.mxu0 %v4811
  %12462 = vmatpush.bf16.msra.mxu0 %v4807
  %12463 = vmatpush.bf16.msra.mxu0 %v4803
  %12464 = vmatpush.bf16.msra.mxu0 %v4799
  %12465 = vmatpush.bf16.msra.mxu0 %v4795
  %12466 = vmatmul.bf16.gmra.mxu0 %v10928
  %v12467 = vpop.f32.mrf.mxu0
  %v12468 = vadd.f32 %v12455, %v12467
  %v12469 = vpop.f32.mrf.mxu0
  %12470 = vdwg.mxu0
  %12471 = vmatpush.bf16.msra.mxu0 %v4855
  %12472 = vmatpush.bf16.msra.mxu0 %v4851
  %12473 = vmatpush.bf16.msra.mxu0 %v4847
  %12474 = vmatpush.bf16.msra.mxu0 %v4843
  %12475 = vmatpush.bf16.msra.mxu0 %v4839
  %12476 = vmatpush.bf16.msra.mxu0 %v4835
  %12477 = vmatpush.bf16.msra.mxu0 %v4831
  %12478 = vmatpush.bf16.msra.mxu0 %v4827
  %12479 = vmatmul.bf16.gmra.mxu0 %v10929
  %v12480 = vpop.f32.mrf.mxu0
  %v12481 = vadd.f32 %v12468, %v12480
  %v12482 = vpop.f32.mrf.mxu0
  %12483 = vdwg.mxu0
  %12484 = vmatpush.bf16.msra.mxu0 %v4887
  %12485 = vmatpush.bf16.msra.mxu0 %v4883
  %12486 = vmatpush.bf16.msra.mxu0 %v4879
  %12487 = vmatpush.bf16.msra.mxu0 %v4875
  %12488 = vmatpush.bf16.msra.mxu0 %v4871
  %12489 = vmatpush.bf16.msra.mxu0 %v4867
  %12490 = vmatpush.bf16.msra.mxu0 %v4863
  %12491 = vmatpush.bf16.msra.mxu0 %v4859
  %12492 = vmatmul.bf16.gmra.mxu0 %v10930
  %v12493 = vpop.f32.mrf.mxu0
  %v12494 = vadd.f32 %v12481, %v12493
  %v12495 = vpop.f32.mrf.mxu0
  %12496 = vdwg.mxu0
  %12497 = vmatpush.bf16.msra.mxu0 %v4919
  %12498 = vmatpush.bf16.msra.mxu0 %v4915
  %12499 = vmatpush.bf16.msra.mxu0 %v4911
  %12500 = vmatpush.bf16.msra.mxu0 %v4907
  %12501 = vmatpush.bf16.msra.mxu0 %v4903
  %12502 = vmatpush.bf16.msra.mxu0 %v4899
  %12503 = vmatpush.bf16.msra.mxu0 %v4895
  %12504 = vmatpush.bf16.msra.mxu0 %v4891
  %12505 = vmatmul.bf16.gmra.mxu0 %v10931
  %v12506 = vpop.f32.mrf.mxu0
  %v12507 = vadd.f32 %v12494, %v12506
  %v12508 = vpop.f32.mrf.mxu0
  %12509 = vdwg.mxu0
  %12510 = vmatpush.bf16.msra.mxu0 %v4951
  %12511 = vmatpush.bf16.msra.mxu0 %v4947
  %12512 = vmatpush.bf16.msra.mxu0 %v4943
  %12513 = vmatpush.bf16.msra.mxu0 %v4939
  %12514 = vmatpush.bf16.msra.mxu0 %v4935
  %12515 = vmatpush.bf16.msra.mxu0 %v4931
  %12516 = vmatpush.bf16.msra.mxu0 %v4927
  %12517 = vmatpush.bf16.msra.mxu0 %v4923
  %12518 = vmatmul.bf16.gmra.mxu0 %v10932
  %v12519 = vpop.f32.mrf.mxu0
  %v12520 = vadd.f32 %v12507, %v12519
  %v12521 = vpop.f32.mrf.mxu0
  %12522 = vdwg.mxu0
  %v12523 = vmax.f32 %v10838, %v11350
  %v12524 = vmax.f32 %v10839, %v11740
  %v12525 = vmax.f32 %v10840, %v12130
  %v12526 = vmax.f32 %v10841, %v12520
  %v12527 = vld [vmem:[%s2] sm:$0xf]
  %v12529 = vperm.slane %v12527, 0
  %v12530 = vperm.slane %v12527, 1
  %v12531 = vperm.slane %v12527, 2
  %v12532 = vperm.slane %v12527, 3
  %v12537 = vadd.f32 %v12523, %v12529
  %v12538 = vadd.f32 %v12524, %v12530
  %v12539 = vadd.f32 %v12525, %v12531
  %v12540 = vadd.f32 %v12526, %v12532
  %v12541 = vmax.f32 %v12537, 0.0
  %v12542 = vmax.f32 %v12538, 0.0
  %v12543 = vmax.f32 %v12539, 0.0
  %v12544 = vmax.f32 %v12540, 0.0
  %v12545 = vpack.c.bf16 %v12541, %v12541
  %v12546 = vpack.c.bf16 %v12542, %v12542
  %v12547 = vpack.c.bf16 %v12543, %v12543
  %v12548 = vpack.c.bf16 %v12544, %v12544
  %v12549 = vld [vmem:[%s3] sm:$0xf]
  %v12550 = vld [vmem:[%s3 + $0x4] sm:$0xf]
  %v12551 = vld [vmem:[%s3 + $0x8] sm:$0xf]
  %v12552 = vld [vmem:[%s3 + $0xc] sm:$0xf]
  %v12553 = vld [vmem:[%s3 + $0x10] sm:$0xf]
  %v12554 = vld [vmem:[%s3 + $0x14] sm:$0xf]
  %v12555 = vld [vmem:[%s3 + $0x18] sm:$0xf]
  %v12556 = vld [vmem:[%s3 + $0x1c] sm:$0xf]
  %v12557 = vld [vmem:[%s3 + $0x20] sm:$0xf]
  %v12558 = vld [vmem:[%s3 + $0x24] sm:$0xf]
  %v12559 = vld [vmem:[%s3 + $0x28] sm:$0xf]
  %v12560 = vld [vmem:[%s3 + $0x2c] sm:$0xf]
  %v12561 = vld [vmem:[%s3 + $0x30] sm:$0xf]
  %v12562 = vld [vmem:[%s3 + $0x34] sm:$0xf]
  %v12563 = vld [vmem:[%s3 + $0x38] sm:$0xf]
  %v12564 = vld [vmem:[%s3 + $0x3c] sm:$0xf]
  %v12565 = vld [vmem:[%s3 + $0x40] sm:$0xf]
  %v12566 = vld [vmem:[%s3 + $0x44] sm:$0xf]
  %v12567 = vld [vmem:[%s3 + $0x48] sm:$0xf]
  %v12568 = vld [vmem:[%s3 + $0x4c] sm:$0xf]
  %v12569 = vld [vmem:[%s3 + $0x50] sm:$0xf]
  %v12570 = vld [vmem:[%s3 + $0x54] sm:$0xf]
  %v12571 = vld [vmem:[%s3 + $0x58] sm:$0xf]
  %v12572 = vld [vmem:[%s3 + $0x5c] sm:$0xf]
  %v12573 = vld [vmem:[%s3 + $0x60] sm:$0xf]
  %v12574 = vld [vmem:[%s3 + $0x64] sm:$0xf]
  %v12575 = vld [vmem:[%s3 + $0x68] sm:$0xf]
  %v12576 = vld [vmem:[%s3 + $0x6c] sm:$0xf]
  %v12577 = vld [vmem:[%s3 + $0x70] sm:$0xf]
  %v12578 = vld [vmem:[%s3 + $0x74] sm:$0xf]
  %v12579 = vld [vmem:[%s3 + $0x78] sm:$0xf]
  %v12580 = vld [vmem:[%s3 + $0x7c] sm:$0xf]
  %v12581 = vld [vmem:[%s3 + $0x80] sm:$0xf]
  %v12582 = vld [vmem:[%s3 + $0x84] sm:$0xf]
  %v12583 = vld [vmem:[%s3 + $0x88] sm:$0xf]
  %v12584 = vld [vmem:[%s3 + $0x8c] sm:$0xf]
  %v12585 = vld [vmem:[%s3 + $0x90] sm:$0xf]
  %v12586 = vld [vmem:[%s3 + $0x94] sm:$0xf]
  %v12587 = vld [vmem:[%s3 + $0x98] sm:$0xf]
  %v12588 = vld [vmem:[%s3 + $0x9c] sm:$0xf]
  %v12589 = vld [vmem:[%s3 + $0xa0] sm:$0xf]
  %v12590 = vld [vmem:[%s3 + $0xa4] sm:$0xf]
  %v12591 = vld [vmem:[%s3 + $0xa8] sm:$0xf]
  %v12592 = vld [vmem:[%s3 + $0xac] sm:$0xf]
  %v12593 = vld [vmem:[%s3 + $0xb0] sm:$0xf]
  %v12594 = vld [vmem:[%s3 + $0xb4] sm:$0xf]
  %v12595 = vld [vmem:[%s3 + $0xb8] sm:$0xf]
  %v12596 = vld [vmem:[%s3 + $0xbc] sm:$0xf]
  %v12597 = vld [vmem:[%s3 + $0xc0] sm:$0xf]
  %v12598 = vld [vmem:[%s3 + $0xc4] sm:$0xf]
  %v12599 = vld [vmem:[%s3 + $0xc8] sm:$0xf]
  %v12600 = vld [vmem:[%s3 + $0xcc] sm:$0xf]
  %v12601 = vld [vmem:[%s3 + $0xd0] sm:$0xf]
  %v12602 = vld [vmem:[%s3 + $0xd4] sm:$0xf]
  %v12603 = vld [vmem:[%s3 + $0xd8] sm:$0xf]
  %v12604 = vld [vmem:[%s3 + $0xdc] sm:$0xf]
  %v12605 = vld [vmem:[%s3 + $0xe0] sm:$0xf]
  %v12606 = vld [vmem:[%s3 + $0xe4] sm:$0xf]
  %v12607 = vld [vmem:[%s3 + $0xe8] sm:$0xf]
  %v12608 = vld [vmem:[%s3 + $0xec] sm:$0xf]
  %v12609 = vld [vmem:[%s3 + $0xf0] sm:$0xf]
  %v12610 = vld [vmem:[%s3 + $0xf4] sm:$0xf]
  %v12611 = vld [vmem:[%s3 + $0xf8] sm:$0xf]
  %v12612 = vld [vmem:[%s3 + $0xfc] sm:$0xf]
  %v12613 = vld [vmem:[%s4] sm:$0x1]
  %v12615 = vperm.slane %v12613, 0
  %v12681 = vunpack.c.l.b16 %v12549
  %v12682 = vunpack.c.l.b16 %v12550
  %v12683 = vunpack.c.l.b16 %v12551
  %v12684 = vunpack.c.l.b16 %v12552
  %v12685 = vunpack.c.l.b16 %v12553
  %v12686 = vunpack.c.l.b16 %v12554
  %v12687 = vunpack.c.l.b16 %v12555
  %v12688 = vunpack.c.l.b16 %v12556
  %v12689 = vunpack.c.l.b16 %v12557
  %v12690 = vunpack.c.l.b16 %v12558
  %v12691 = vunpack.c.l.b16 %v12559
  %v12692 = vunpack.c.l.b16 %v12560
  %v12693 = vunpack.c.l.b16 %v12561
  %v12694 = vunpack.c.l.b16 %v12562
  %v12695 = vunpack.c.l.b16 %v12563
  %v12696 = vunpack.c.l.b16 %v12564
  %v12697 = vunpack.c.l.b16 %v12565
  %v12698 = vunpack.c.l.b16 %v12566
  %v12699 = vunpack.c.l.b16 %v12567
  %v12700 = vunpack.c.l.b16 %v12568
  %v12701 = vunpack.c.l.b16 %v12569
  %v12702 = vunpack.c.l.b16 %v12570
  %v12703 = vunpack.c.l.b16 %v12571
  %v12704 = vunpack.c.l.b16 %v12572
  %v12705 = vunpack.c.l.b16 %v12573
  %v12706 = vunpack.c.l.b16 %v12574
  %v12707 = vunpack.c.l.b16 %v12575
  %v12708 = vunpack.c.l.b16 %v12576
  %v12709 = vunpack.c.l.b16 %v12577
  %v12710 = vunpack.c.l.b16 %v12578
  %v12711 = vunpack.c.l.b16 %v12579
  %v12712 = vunpack.c.l.b16 %v12580
  %v12713 = vunpack.c.l.b16 %v12581
  %v12714 = vunpack.c.l.b16 %v12582
  %v12715 = vunpack.c.l.b16 %v12583
  %v12716 = vunpack.c.l.b16 %v12584
  %v12717 = vunpack.c.l.b16 %v12585
  %v12718 = vunpack.c.l.b16 %v12586
  %v12719 = vunpack.c.l.b16 %v12587
  %v12720 = vunpack.c.l.b16 %v12588
  %v12721 = vunpack.c.l.b16 %v12589
  %v12722 = vunpack.c.l.b16 %v12590
  %v12723 = vunpack.c.l.b16 %v12591
  %v12724 = vunpack.c.l.b16 %v12592
  %v12725 = vunpack.c.l.b16 %v12593
  %v12726 = vunpack.c.l.b16 %v12594
  %v12727 = vunpack.c.l.b16 %v12595
  %v12728 = vunpack.c.l.b16 %v12596
  %v12729 = vunpack.c.l.b16 %v12597
  %v12730 = vunpack.c.l.b16 %v12598
  %v12731 = vunpack.c.l.b16 %v12599
  %v12732 = vunpack.c.l.b16 %v12600
  %v12733 = vunpack.c.l.b16 %v12601
  %v12734 = vunpack.c.l.b16 %v12602
  %v12735 = vunpack.c.l.b16 %v12603
  %v12736 = vunpack.c.l.b16 %v12604
  %v12737 = vunpack.c.l.b16 %v12605
  %v12738 = vunpack.c.l.b16 %v12606
  %v12739 = vunpack.c.l.b16 %v12607
  %v12740 = vunpack.c.l.b16 %v12608
  %v12741 = vunpack.c.l.b16 %v12609
  %v12742 = vunpack.c.l.b16 %v12610
  %v12743 = vunpack.c.l.b16 %v12611
  %v12744 = vunpack.c.l.b16 %v12612
  %v12745 = vpack.c.b16 %v12682, %v12681
  %v12746 = vpack.c.b16 %v12684, %v12683
  %v12747 = vpack.c.b16 %v12686, %v12685
  %v12748 = vpack.c.b16 %v12688, %v12687
  %v12749 = vpack.c.b16 %v12690, %v12689
  %v12750 = vpack.c.b16 %v12692, %v12691
  %v12751 = vpack.c.b16 %v12694, %v12693
  %v12752 = vpack.c.b16 %v12696, %v12695
  %v12753 = vpack.c.b16 %v12698, %v12697
  %v12754 = vpack.c.b16 %v12700, %v12699
  %v12755 = vpack.c.b16 %v12702, %v12701
  %v12756 = vpack.c.b16 %v12704, %v12703
  %v12757 = vpack.c.b16 %v12706, %v12705
  %v12758 = vpack.c.b16 %v12708, %v12707
  %v12759 = vpack.c.b16 %v12710, %v12709
  %v12760 = vpack.c.b16 %v12712, %v12711
  %v12761 = vpack.c.b16 %v12714, %v12713
  %v12762 = vpack.c.b16 %v12716, %v12715
  %v12763 = vpack.c.b16 %v12718, %v12717
  %v12764 = vpack.c.b16 %v12720, %v12719
  %v12765 = vpack.c.b16 %v12722, %v12721
  %v12766 = vpack.c.b16 %v12724, %v12723
  %v12767 = vpack.c.b16 %v12726, %v12725
  %v12768 = vpack.c.b16 %v12728, %v12727
  %v12769 = vpack.c.b16 %v12730, %v12729
  %v12770 = vpack.c.b16 %v12732, %v12731
  %v12771 = vpack.c.b16 %v12734, %v12733
  %v12772 = vpack.c.b16 %v12736, %v12735
  %v12773 = vpack.c.b16 %v12738, %v12737
  %v12774 = vpack.c.b16 %v12740, %v12739
  %v12775 = vpack.c.b16 %v12742, %v12741
  %v12776 = vpack.c.b16 %v12744, %v12743
  %12809 = vmatpush.bf16.msra.mxu0 %v12752
  %12810 = vmatpush.bf16.msra.mxu0 %v12751
  %12811 = vmatpush.bf16.msra.mxu0 %v12750
  %12812 = vmatpush.bf16.msra.mxu0 %v12749
  %12813 = vmatpush.bf16.msra.mxu0 %v12748
  %12814 = vmatpush.bf16.msra.mxu0 %v12747
  %12815 = vmatpush.bf16.msra.mxu0 %v12746
  %12816 = vmatpush.bf16.msra.mxu0 %v12745
  %12817 = vmatmul.bf16.gmra.mxu0 %v12545
  %v12818 = vpop.f32.mrf.mxu0
  %v12819 = vadd.f32 %v12615, %v12818
  %v12820 = vpop.f32.mrf.mxu0
  %12821 = vdwg.mxu0
  %12822 = vmatpush.bf16.msra.mxu0 %v12760
  %12823 = vmatpush.bf16.msra.mxu0 %v12759
  %12824 = vmatpush.bf16.msra.mxu0 %v12758
  %12825 = vmatpush.bf16.msra.mxu0 %v12757
  %12826 = vmatpush.bf16.msra.mxu0 %v12756
  %12827 = vmatpush.bf16.msra.mxu0 %v12755
  %12828 = vmatpush.bf16.msra.mxu0 %v12754
  %12829 = vmatpush.bf16.msra.mxu0 %v12753
  %12830 = vmatmul.bf16.gmra.mxu0 %v12546
  %v12831 = vpop.f32.mrf.mxu0
  %v12832 = vadd.f32 %v12819, %v12831
  %v12833 = vpop.f32.mrf.mxu0
  %12834 = vdwg.mxu0
  %12835 = vmatpush.bf16.msra.mxu0 %v12768
  %12836 = vmatpush.bf16.msra.mxu0 %v12767
  %12837 = vmatpush.bf16.msra.mxu0 %v12766
  %12838 = vmatpush.bf16.msra.mxu0 %v12765
  %12839 = vmatpush.bf16.msra.mxu0 %v12764
  %12840 = vmatpush.bf16.msra.mxu0 %v12763
  %12841 = vmatpush.bf16.msra.mxu0 %v12762
  %12842 = vmatpush.bf16.msra.mxu0 %v12761
  %12843 = vmatmul.bf16.gmra.mxu0 %v12547
  %v12844 = vpop.f32.mrf.mxu0
  %v12845 = vadd.f32 %v12832, %v12844
  %v12846 = vpop.f32.mrf.mxu0
  %12847 = vdwg.mxu0
  %12848 = vmatpush.bf16.msra.mxu0 %v12776
  %12849 = vmatpush.bf16.msra.mxu0 %v12775
  %12850 = vmatpush.bf16.msra.mxu0 %v12774
  %12851 = vmatpush.bf16.msra.mxu0 %v12773
  %12852 = vmatpush.bf16.msra.mxu0 %v12772
  %12853 = vmatpush.bf16.msra.mxu0 %v12771
  %12854 = vmatpush.bf16.msra.mxu0 %v12770
  %12855 = vmatpush.bf16.msra.mxu0 %v12769
  %12856 = vmatmul.bf16.gmra.mxu0 %v12548
  %v12857 = vpop.f32.mrf.mxu0
  %v12858 = vadd.f32 %v12845, %v12857
  %v12859 = vpop.f32.mrf.mxu0
  %12860 = vdwg.mxu0
  %v12861 = vpack.c.bf16 %v12858, %v12858
  %v12862 = vld [vmem:[%s5] sm:$0xf]
  %v12863 = vld [vmem:[%s5 + $0x4] sm:$0xf]
  %v12864 = vld [vmem:[%s5 + $0x8] sm:$0xf]
  %v12865 = vld [vmem:[%s5 + $0xc] sm:$0xf]
  %v12866 = vld [vmem:[%s5 + $0x10] sm:$0xf]
  %v12867 = vld [vmem:[%s5 + $0x14] sm:$0xf]
  %v12868 = vld [vmem:[%s5 + $0x18] sm:$0xf]
  %v12869 = vld [vmem:[%s5 + $0x1c] sm:$0xf]
  %v12870 = vld [vmem:[%s5 + $0x20] sm:$0xf]
  %v12871 = vld [vmem:[%s5 + $0x24] sm:$0xf]
  %v12872 = vld [vmem:[%s5 + $0x28] sm:$0xf]
  %v12873 = vld [vmem:[%s5 + $0x2c] sm:$0xf]
  %v12874 = vld [vmem:[%s5 + $0x30] sm:$0xf]
  %v12875 = vld [vmem:[%s5 + $0x34] sm:$0xf]
  %v12876 = vld [vmem:[%s5 + $0x38] sm:$0xf]
  %v12877 = vld [vmem:[%s5 + $0x3c] sm:$0xf]
  %v12878 = vld [vmem:[%s6] sm:$0x1]
  %v12880 = vperm.slane %v12878, 0
  %v12898 = vunpack.c.l.b16 %v12862
  %v12899 = vunpack.c.l.b16 %v12863
  %v12900 = vunpack.c.l.b16 %v12864
  %v12901 = vunpack.c.l.b16 %v12865
  %v12902 = vunpack.c.l.b16 %v12866
  %v12903 = vunpack.c.l.b16 %v12867
  %v12904 = vunpack.c.l.b16 %v12868
  %v12905 = vunpack.c.l.b16 %v12869
  %v12906 = vunpack.c.l.b16 %v12870
  %v12907 = vunpack.c.l.b16 %v12871
  %v12908 = vunpack.c.l.b16 %v12872
  %v12909 = vunpack.c.l.b16 %v12873
  %v12910 = vunpack.c.l.b16 %v12874
  %v12911 = vunpack.c.l.b16 %v12875
  %v12912 = vunpack.c.l.b16 %v12876
  %v12913 = vunpack.c.l.b16 %v12877
  %v12914 = vpack.c.b16 %v12899, %v12898
  %v12915 = vpack.c.b16 %v12901, %v12900
  %v12916 = vpack.c.b16 %v12903, %v12902
  %v12917 = vpack.c.b16 %v12905, %v12904
  %v12918 = vpack.c.b16 %v12907, %v12906
  %v12919 = vpack.c.b16 %v12909, %v12908
  %v12920 = vpack.c.b16 %v12911, %v12910
  %v12921 = vpack.c.b16 %v12913, %v12912
  %12930 = vmatpush.bf16.msra.mxu0 %v12921
  %12931 = vmatpush.bf16.msra.mxu0 %v12920
  %12932 = vmatpush.bf16.msra.mxu0 %v12919
  %12933 = vmatpush.bf16.msra.mxu0 %v12918
  %12934 = vmatpush.bf16.msra.mxu0 %v12917
  %12935 = vmatpush.bf16.msra.mxu0 %v12916
  %12936 = vmatpush.bf16.msra.mxu0 %v12915
  %12937 = vmatpush.bf16.msra.mxu0 %v12914
  %12938 = vmatmul.bf16.gmra.mxu0 %v12861
  %v12939 = vpop.f32.mrf.mxu0
  %v12940 = vadd.f32 %v12880, %v12939
  %v12941 = vpop.f32.mrf.mxu0
  %12942 = vdwg.mxu0
  %v12943 = vpack.c.bf16 %v12940, %v12940
  %v12944 = vld [vmem:[%s7] sm:$0xf]
  %v12945 = vld [vmem:[%s7 + $0x4] sm:$0xf]
  %v12946 = vld [vmem:[%s7 + $0x8] sm:$0xf]
  %v12947 = vld [vmem:[%s7 + $0xc] sm:$0xf]
  %v12948 = vld [vmem:[%s7 + $0x10] sm:$0xf]
  %v12949 = vld [vmem:[%s7 + $0x14] sm:$0xf]
  %v12950 = vld [vmem:[%s7 + $0x18] sm:$0xf]
  %v12951 = vld [vmem:[%s7 + $0x1c] sm:$0xf]
  %v12952 = vld [vmem:[%s7 + $0x20] sm:$0xf]
  %v12953 = vld [vmem:[%s7 + $0x24] sm:$0xf]
  %v12954 = vld [vmem:[%s7 + $0x28] sm:$0xf]
  %v12955 = vld [vmem:[%s7 + $0x2c] sm:$0xf]
  %v12956 = vld [vmem:[%s7 + $0x30] sm:$0xf]
  %v12957 = vld [vmem:[%s7 + $0x34] sm:$0xf]
  %v12958 = vld [vmem:[%s7 + $0x38] sm:$0xf]
  %v12959 = vld [vmem:[%s7 + $0x3c] sm:$0xf]
  %v12960 = vld [vmem:[%s8] sm:$0x1]
  %v12962 = vperm.slane %v12960, 0
  %v12980 = vunpack.c.l.b16 %v12944
  %v12981 = vunpack.c.l.b16 %v12945
  %v12982 = vunpack.c.l.b16 %v12946
  %v12983 = vunpack.c.l.b16 %v12947
  %v12984 = vunpack.c.l.b16 %v12948
  %v12985 = vunpack.c.l.b16 %v12949
  %v12986 = vunpack.c.l.b16 %v12950
  %v12987 = vunpack.c.l.b16 %v12951
  %v12988 = vunpack.c.l.b16 %v12952
  %v12989 = vunpack.c.l.b16 %v12953
  %v12990 = vunpack.c.l.b16 %v12954
  %v12991 = vunpack.c.l.b16 %v12955
  %v12992 = vunpack.c.l.b16 %v12956
  %v12993 = vunpack.c.l.b16 %v12957
  %v12994 = vunpack.c.l.b16 %v12958
  %v12995 = vunpack.c.l.b16 %v12959
  %v12996 = vpack.c.b16 %v12981, %v12980
  %v12997 = vpack.c.b16 %v12983, %v12982
  %v12998 = vpack.c.b16 %v12985, %v12984
  %v12999 = vpack.c.b16 %v12987, %v12986
  %v13000 = vpack.c.b16 %v12989, %v12988
  %v13001 = vpack.c.b16 %v12991, %v12990
  %v13002 = vpack.c.b16 %v12993, %v12992
  %v13003 = vpack.c.b16 %v12995, %v12994
  %13012 = vmatpush.bf16.msra.mxu0 %v13003
  %13013 = vmatpush.bf16.msra.mxu0 %v13002
  %13014 = vmatpush.bf16.msra.mxu0 %v13001
  %13015 = vmatpush.bf16.msra.mxu0 %v13000
  %13016 = vmatpush.bf16.msra.mxu0 %v12999
  %13017 = vmatpush.bf16.msra.mxu0 %v12998
  %13018 = vmatpush.bf16.msra.mxu0 %v12997
  %13019 = vmatpush.bf16.msra.mxu0 %v12996
  %13020 = vmatmul.bf16.gmra.mxu0 %v12943
  %v13021 = vpop.f32.mrf.mxu0
  %v13022 = vadd.f32 %v12962, %v13021
  %v13023 = vpop.f32.mrf.mxu0
  %13024 = vdwg.mxu0
  %13025 = vst [vmem:[%s9] sm:$0xff] %v13022
  // Predicated region
  $region38: #{_lambda_.3} parent=0 // pred_check
    _
  $region39: #{_lambda_.3} parent=0 // pred_check_branch
    %13027 = sbr.rel (0) target = $region41
  $region40: #{_lambda_.3} parent=0 // pred_region
    _
  $region41: #{_lambda_.3} parent=0 // pred_fallthru
    _
  // Predicated region
  $region42: #{_lambda_.3} parent=0 // pred_check
    _
  $region43: #{_lambda_.3} parent=0 // pred_check_branch
    %13029 = sbr.rel (0) target = $region45
  $region44: #{_lambda_.3} parent=0 // pred_region
    _
  $region45: #{_lambda_.3} parent=0 // pred_fallthru
    _

</llo_original>
